<compile_context>
chip_gen: v5e
topology: v5e:2x2
jax: 0.10.0
libtpu: 0.0.40
codegen_flags: <defaults>
</compile_context>

<pallas_src>
import jax
import jax.numpy as jnp
from jax.experimental import pallas as pl
from jax.experimental.pallas import tpu as pltpu

IN_FEATURES = 3 * 32 * 32    # 3072
OUT_FEATURES = 1 * 28 * 28   # 784


def _linear_kernel(x_ref, w_ref, b_ref, o_ref):
    # x_ref: (B, K_split) f32, w_ref: (K_split, 784) bf16 (or f32),
    # b_ref: (1, 784) f32, o_ref: (B, 784) f32 (leading split axis squeezed).
    c = pl.program_id(0)
    w = w_ref[...]
    x = x_ref[...].astype(w.dtype)
    # bf16 path: single native MXU pass, f32 accumulation.
    # f32 path: force true f32 (default would silently use bf16 passes).
    prec = jax.lax.Precision.HIGHEST if w.dtype == jnp.float32 else None
    acc = jnp.dot(x, w, preferred_element_type=jnp.float32, precision=prec)
    # Add the bias exactly once (on the first K-split partial).
    bias_scale = jnp.where(c == 0, jnp.float32(1.0), jnp.float32(0.0))
    o_ref[...] = acc + bias_scale * b_ref[...]


def _default_num_splits():
    # v7x has 2 TensorCores per chip -> split the weight stream across both.
    # v5e / v6e have a single TC: splitting is pure overhead there.
    try:
        kind = jax.devices()[0].device_kind.lower()
    except Exception:
        return 1
    return 2 if "v7" in kind else 1


def prepare_params(weight, bias, weight_dtype=jnp.bfloat16):
    """One-time parameter prep (run once at init, NOT in the hot path).

    Converts the PyTorch nn.Linear layout (out, in) = (784, 3072) into the
    (in, out) = (3072, 784) layout the kernel consumes and casts the weight to
    `weight_dtype` (bf16 by default: halves the HBM-bound weight traffic,
    ~1e-3 relative error; pass jnp.float32 for exact f32 parity).
    """
    w_t = jnp.asarray(weight, jnp.float32).T.astype(weight_dtype)  # (3072, 784)
    b2d = jnp.asarray(bias, jnp.float32).reshape(1, OUT_FEATURES)
    return w_t, b2d


def my_model_forward(x, w_t, b2d, num_splits=None):
    """Equivalent of MyModel.forward.

    Args:
      x:   (B, 3, 32, 32) float32, NCHW.
      w_t: (3072, 784) bf16/f32 from prepare_params.
      b2d: (1, 784) float32 from prepare_params.
      num_splits: K-split count across TensorCores (None -> auto: 2 on v7x).
    Returns:
      (B, 1, 28, 28) float32.
    """
    if num_splits is None:
        num_splits = _default_num_splits()
    assert IN_FEATURES % num_splits == 0
    k_split = IN_FEATURES // num_splits

    B = x.shape[0]
    x_flat = x.reshape(B, IN_FEATURES)            # glue: flatten

    w_bytes = w_t.size * w_t.dtype.itemsize
    cost = pl.CostEstimate(
        flops=2 * B * IN_FEATURES * OUT_FEATURES,
        transcendentals=0,
        bytes_accessed=(w_bytes + 4 * x_flat.size + 4 * b2d.size
                        + 4 * num_splits * B * OUT_FEATURES),
    )

    partial = pl.pallas_call(
        _linear_kernel,
        out_shape=jax.ShapeDtypeStruct((num_splits, B, OUT_FEATURES),
                                       jnp.float32),
        grid_spec=pltpu.PrefetchScalarGridSpec(
            num_scalar_prefetch=0,
            grid=(num_splits,),                                   # K split axis
            in_specs=[
                pl.BlockSpec((B, k_split), lambda c: (0, c)),              # x
                pl.BlockSpec((k_split, OUT_FEATURES), lambda c: (c, 0)),   # w
                pl.BlockSpec((1, OUT_FEATURES), lambda c: (0, 0)),         # b
            ],
            out_specs=pl.BlockSpec((None, B, OUT_FEATURES),
                                   lambda c: (c, 0, 0)),
        ),
        compiler_params=pltpu.CompilerParams(
            dimension_semantics=("parallel",),   # shard across TCs on v7x
            vmem_limit_bytes=32 << 20,
        ),
        cost_estimate=cost,
    )(x_flat, w_t, b2d)

    # Combine per-core partial sums (no-op squeeze when num_splits == 1);
    # fuses with the final reshape under jit.
    out_flat = jnp.sum(partial, axis=0) if num_splits > 1 else partial[0]
    return out_flat.reshape(B, 1, 28, 28)         # glue: final reshape


def init_params(key):
    # Deterministic init mimicking nn.Linear default (uniform +/- 1/sqrt(fan_in)).
    kw, kb = jax.random.split(key)
    bound = 1.0 / (IN_FEATURES ** 0.5)
    weight = jax.random.uniform(
        kw, (OUT_FEATURES, IN_FEATURES), jnp.float32, minval=-bound, maxval=bound)
    bias = jax.random.uniform(
        kb, (OUT_FEATURES,), jnp.float32, minval=-bound, maxval=bound)
    return weight, bias


if __name__ == "__main__":
    key = jax.random.PRNGKey(0)
    k_x, k_p = jax.random.split(key)

    B = 2
    x = jax.random.normal(k_x, (B, 3, 32, 32), jnp.float32)
    weight, bias = init_params(k_p)

    # One-time param prep (transpose + bf16 cast folded out of the hot path).
    w_t, b2d = prepare_params(weight, bias)
    num_splits = _default_num_splits()

    fwd = jax.jit(lambda xx: my_model_forward(xx, w_t, b2d, num_splits))
    out = jax.block_until_ready(fwd(x))
    assert out.shape == (B, 1, 28, 28)

    # Check 1: against a reference using the same bf16-quantized operands
    # (validates the kernel logic itself; tight tolerance).
    x_flat = x.reshape(B, -1)
    xq = x_flat.astype(jnp.bfloat16).astype(jnp.float32)
    wq = w_t.astype(jnp.float32)
    ref_q = (xq @ wq + bias).reshape(B, 1, 28, 28)
    assert jnp.allclose(out, ref_q, atol=2e-3, rtol=2e-3)

    # Check 2: against the exact-f32 PyTorch-equivalent forward (loose
    # tolerance: bf16 weight storage costs ~1e-3 relative error).
    ref = (x_flat @ weight.T + bias).reshape(B, 1, 28, 28)
    assert jnp.allclose(out, ref, atol=5e-2, rtol=5e-2)

    print("KERNEL_OK")
</pallas_src>

<mosaic_0001>
module attributes {stable_mosaic.version = 11 : i64} {
  func.func @_linear_kernel(%arg0: i32, %arg1: memref<2x3072xf32, #tpu.memory_space<vmem>>, %arg2: memref<3072x784xbf16, #tpu.memory_space<vmem>>, %arg3: memref<1x784xf32, #tpu.memory_space<vmem>>, %arg4: memref<1x2x784xf32, #tpu.memory_space<vmem>>) attributes {dimension_semantics = [#tpu.dimension_semantics<parallel>], iteration_bounds = array<i64: 1>, scalar_prefetch = 0 : i64, scratch_operands = 0 : i64, tpu.core_type = #tpu.core_type<tc>, window_params = [{transform_indices = @transform_0, window_bounds = array<i64: 2, 3072>}, {transform_indices = @transform_1, window_bounds = array<i64: 3072, 784>}, {pipeline_mode = #tpu.pipeline_mode<synchronous>, transform_indices = @transform_2, window_bounds = array<i64: 1, 784>}, {transform_indices = @transform_3, window_bounds = array<i64: 1, 2, 784>}]} {
    %c0 = arith.constant 0 : index
    %c0_0 = arith.constant 0 : index
    %0 = vector.load %arg2[%c0, %c0_0] : memref<3072x784xbf16, #tpu.memory_space<vmem>>, vector<3072x784xbf16>
    %c0_1 = arith.constant 0 : index
    %c0_2 = arith.constant 0 : index
    %1 = vector.load %arg1[%c0_1, %c0_2] : memref<2x3072xf32, #tpu.memory_space<vmem>>, vector<2x3072xf32>
    %2 = arith.truncf %1 : vector<2x3072xf32> to vector<2x3072xbf16>
    %cst = arith.constant dense<0.000000e+00> : vector<2x784xf32>
    %3 = tpu.matmul %2, %0, %cst {dimension_numbers = #tpu.dot_dimension_numbers<[1], [0], [0], [1], [0, 0, 1, 1], [], []>} : vector<2x3072xbf16>, vector<3072x784xbf16>, vector<2x784xf32> -> vector<2x784xf32>
    %c0_i32 = arith.constant 0 : i32
    %4 = arith.cmpi eq, %arg0, %c0_i32 : i32
    %cst_3 = arith.constant 1.000000e+00 : f32
    %cst_4 = arith.constant 0.000000e+00 : f32
    %5 = arith.select %4, %cst_3, %cst_4 : f32
    %c0_5 = arith.constant 0 : index
    %c0_6 = arith.constant 0 : index
    %6 = vector.load %arg3[%c0_5, %c0_6] : memref<1x784xf32, #tpu.memory_space<vmem>>, vector<1x784xf32>
    %7 = vector.broadcast %5 : f32 to vector<1x784xf32>
    %8 = arith.mulf %7, %6 : vector<1x784xf32>
    %9 = vector.broadcast %8 : vector<1x784xf32> to vector<2x784xf32>
    %10 = arith.addf %3, %9 : vector<2x784xf32>
    %c0_7 = arith.constant 0 : index
    %c0_8 = arith.constant 0 : index
    %c0_9 = arith.constant 0 : index
    %11 = vector.load %arg4[%c0_7, %c0_8, %c0_9] : memref<1x2x784xf32, #tpu.memory_space<vmem>>, vector<1x2x784xf32>
    %12 = vector.shape_cast %11 : vector<1x2x784xf32> to vector<2x784xf32>
    %13 = vector.shape_cast %10 : vector<2x784xf32> to vector<1x2x784xf32>
    tpu.vector_store %arg4[%c0_7, %c0_8, %c0_9], %13 {strides = array<i32>} : memref<1x2x784xf32, #tpu.memory_space<vmem>>, vector<1x2x784xf32>,
    return
  }
  func.func @transform_0(%arg0: i32) -> (i32, i32) {
    %c0_i32 = arith.constant 0 : i32
    %c0_i32_0 = arith.constant 0 : i32
    return %c0_i32, %arg0 : i32, i32
  }
  func.func @transform_1(%arg0: i32) -> (i32, i32) {
    %c0_i32 = arith.constant 0 : i32
    %c0_i32_0 = arith.constant 0 : i32
    return %arg0, %c0_i32 : i32, i32
  }
  func.func @transform_2(%arg0: i32) -> (i32, i32) {
    %c0_i32 = arith.constant 0 : i32
    %c0_i32_0 = arith.constant 0 : i32
    %c0_i32_1 = arith.constant 0 : i32
    return %c0_i32, %c0_i32_0 : i32, i32
  }
  func.func @transform_3(%arg0: i32) -> (i32, i32, i32) {
    %c0_i32 = arith.constant 0 : i32
    %c0_i32_0 = arith.constant 0 : i32
    %c0_i32_1 = arith.constant 0 : i32
    return %arg0, %c0_i32, %c0_i32_0 : i32, i32, i32
  }
}

</mosaic_0001>

<llo_original>
// kernel: squeeze.0
$region0: #{squeeze.0}
  %s0 = inlined_call_operand.vmem [shape: f32[1,2,784], index: 0, kind: input, shape index: {}]
  %s1 = inlined_call_operand.hbm [shape: f32[2,1,28,28], index: 1, kind: output, shape index: {}]
  $region1: #{squeeze.0} parent=0
    #allocation0 [shape = 'u8[28672]{0}', space=vmem, size = 0x7000, scoped, tag = 'operand span for operand 1']
    #allocation1 [shape = 's32[1]{0}', space=sflag, size = 0x4, scoped, tag = 'scoped memory for squeeze.0']
    #allocation2 [shape = 'u8[229376]{0}', space=vmem, size = 0x38000, scoped, tag = 'scoped mem for output reshape']
    #allocation3 [shape = 'u8[28672]{0}', space=vmem, size = 0x7000, scoped, tag = 'scoped mem for input reshape']
    %2 = vsyncpa [#allocation1], 0
    %s4 = ssub.s32 4, 1
    %s5 = scalar_lea.vmem %s0, 12
    %v6 = vld [vmem:[%s5] sm:%s4]
    %s7 = scalar_lea.vmem [#allocation3], 48
    %8 = vst [vmem:[%s7] sm:%s4] %v6
    %s9 = scalar_lea.vmem %s0, 10
    %v10 = vld [vmem:[%s9] sm:%s4]
    %s11 = scalar_lea.vmem [#allocation3], 40
    %12 = vst [vmem:[%s11] sm:%s4] %v10
    %s13 = scalar_lea.vmem %s0, 8
    %v14 = vld [vmem:[%s13] sm:%s4]
    %s15 = scalar_lea.vmem [#allocation3], 32
    %16 = vst [vmem:[%s15] sm:%s4] %v14
    %s17 = scalar_lea.vmem %s0, 6
    %v18 = vld [vmem:[%s17] sm:%s4]
    %s19 = scalar_lea.vmem [#allocation3], 24
    %20 = vst [vmem:[%s19] sm:%s4] %v18
    %s21 = scalar_lea.vmem %s0, 4
    %v22 = vld [vmem:[%s21] sm:%s4]
    %s23 = scalar_lea.vmem [#allocation3], 16
    %24 = vst [vmem:[%s23] sm:%s4] %v22
    %s25 = scalar_lea.vmem %s0, 2
    %v26 = vld [vmem:[%s25] sm:%s4]
    %s27 = scalar_lea.vmem [#allocation3], 8
    %28 = vst [vmem:[%s27] sm:%s4] %v26
    %v29 = vld [vmem:[%s0] sm:%s4]
    %30 = vst [vmem:[#allocation3] sm:%s4] %v29
    %v31 = vld [vmem:[#allocation3] sm:$0x3]
    %vm32 = vcmask 228352
    %33 = vst.msk [vmem:[#allocation2] sm:$0x1] %vm32, %v31
    %s34 = scalar_lea.vmem [#allocation2], 223
    %35 = vst.msk [vmem:[%s34] sm:$0x2] %vm32, %v31
    %s36 = scalar_lea.vmem [#allocation3], 40
    %v37 = vld [vmem:[%s36] sm:$0x3]
    %38 = vrot.lane.b32.xlu0 %v37, 124
    %v39 = vpop.permute.xlu0 %38
    %vm40 = vcmask 228352
    %s41 = scalar_lea.vmem [#allocation2], 184
    %42 = vst.msk [vmem:[%s41] sm:$0x1] %vm40, %v39
    %s43 = scalar_lea.vmem [#allocation2], 407
    %44 = vst.msk [vmem:[%s43] sm:$0x2] %vm40, %v39
    %s45 = scalar_lea.vmem [#allocation3], 24
    %v46 = vld [vmem:[%s45] sm:$0x3]
    %47 = vrot.lane.b32.xlu0 %v46, 120
    %v48 = vpop.permute.xlu0 %47
    %vm49 = vcmask 228352
    %s50 = scalar_lea.vmem [#allocation2], 112
    %51 = vst.msk [vmem:[%s50] sm:$0x1] %vm49, %v48
    %s52 = scalar_lea.vmem [#allocation2], 335
    %53 = vst.msk [vmem:[%s52] sm:$0x2] %vm49, %v48
    %s54 = scalar_lea.vmem [#allocation3], 8
    %v55 = vld [vmem:[%s54] sm:$0x3]
    %56 = vrot.lane.b32.xlu0 %v55, 116
    %v57 = vpop.permute.xlu0 %56
    %vm58 = vcmask 228352
    %s59 = scalar_lea.vmem [#allocation2], 40
    %60 = vst.msk [vmem:[%s59] sm:$0x1] %vm58, %v57
    %s61 = scalar_lea.vmem [#allocation2], 263
    %62 = vst.msk [vmem:[%s61] sm:$0x2] %vm58, %v57
    %s63 = scalar_lea.vmem [#allocation3], 32
    %v64 = vld [vmem:[%s63] sm:$0x3]
    %65 = vrot.lane.b32.xlu0 %v64, 108
    %v66 = vpop.permute.xlu0 %65
    %vm67 = vcmask 228352
    %s68 = scalar_lea.vmem [#allocation2], 152
    %69 = vst.msk [vmem:[%s68] sm:$0x1] %vm67, %v66
    %s70 = scalar_lea.vmem [#allocation2], 375
    %71 = vst.msk [vmem:[%s70] sm:$0x2] %vm67, %v66
    %s72 = scalar_lea.vmem [#allocation3], 16
    %v73 = vld [vmem:[%s72] sm:$0x3]
    %74 = vrot.lane.b32.xlu0 %v73, 104
    %v75 = vpop.permute.xlu0 %74
    %vm76 = vcmask 228352
    %s77 = scalar_lea.vmem [#allocation2], 80
    %78 = vst.msk [vmem:[%s77] sm:$0x1] %vm76, %v75
    %s79 = scalar_lea.vmem [#allocation2], 303
    %80 = vst.msk [vmem:[%s79] sm:$0x2] %vm76, %v75
    %v81 = vld [vmem:[#allocation3] sm:$0x3]
    %82 = vrot.lane.b32.xlu0 %v81, 100
    %v83 = vpop.permute.xlu0 %82
    %vm84 = vcmask 228352
    %s85 = scalar_lea.vmem [#allocation2], 8
    %86 = vst.msk [vmem:[%s85] sm:$0x1] %vm84, %v83
    %s87 = scalar_lea.vmem [#allocation2], 231
    %88 = vst.msk [vmem:[%s87] sm:$0x2] %vm84, %v83
    %s89 = scalar_lea.vmem [#allocation3], 40
    %v90 = vld [vmem:[%s89] sm:$0x3]
    %91 = vrot.lane.b32.xlu0 %v90, 96
    %v92 = vpop.permute.xlu0 %91
    %vm93 = vcmask 228352
    %s94 = scalar_lea.vmem [#allocation2], 192
    %95 = vst.msk [vmem:[%s94] sm:$0x1] %vm93, %v92
    %s96 = scalar_lea.vmem [#allocation2], 415
    %97 = vst.msk [vmem:[%s96] sm:$0x2] %vm93, %v92
    %s98 = scalar_lea.vmem [#allocation3], 24
    %v99 = vld [vmem:[%s98] sm:$0x3]
    %100 = vrot.lane.b32.xlu0 %v99, 92
    %v101 = vpop.permute.xlu0 %100
    %vm102 = vcmask 228352
    %s103 = scalar_lea.vmem [#allocation2], 120
    %104 = vst.msk [vmem:[%s103] sm:$0x1] %vm102, %v101
    %s105 = scalar_lea.vmem [#allocation2], 343
    %106 = vst.msk [vmem:[%s105] sm:$0x2] %vm102, %v101
    %s107 = scalar_lea.vmem [#allocation3], 8
    %v108 = vld [vmem:[%s107] sm:$0x3]
    %109 = vrot.lane.b32.xlu0 %v108, 88
    %v110 = vpop.permute.xlu0 %109
    %vm111 = vcmask 228352
    %s112 = scalar_lea.vmem [#allocation2], 48
    %113 = vst.msk [vmem:[%s112] sm:$0x1] %vm111, %v110
    %s114 = scalar_lea.vmem [#allocation2], 271
    %115 = vst.msk [vmem:[%s114] sm:$0x2] %vm111, %v110
    %s116 = scalar_lea.vmem [#allocation3], 32
    %v117 = vld [vmem:[%s116] sm:$0x3]
    %118 = vrot.lane.b32.xlu0 %v117, 80
    %v119 = vpop.permute.xlu0 %118
    %vm120 = vcmask 228352
    %s121 = scalar_lea.vmem [#allocation2], 160
    %122 = vst.msk [vmem:[%s121] sm:$0x1] %vm120, %v119
    %s123 = scalar_lea.vmem [#allocation2], 383
    %124 = vst.msk [vmem:[%s123] sm:$0x2] %vm120, %v119
    %s125 = scalar_lea.vmem [#allocation3], 16
    %v126 = vld [vmem:[%s125] sm:$0x3]
    %127 = vrot.lane.b32.xlu0 %v126, 76
    %v128 = vpop.permute.xlu0 %127
    %vm129 = vcmask 228352
    %s130 = scalar_lea.vmem [#allocation2], 88
    %131 = vst.msk [vmem:[%s130] sm:$0x1] %vm129, %v128
    %s132 = scalar_lea.vmem [#allocation2], 311
    %133 = vst.msk [vmem:[%s132] sm:$0x2] %vm129, %v128
    %v134 = vld [vmem:[#allocation3] sm:$0x3]
    %135 = vrot.lane.b32.xlu0 %v134, 72
    %v136 = vpop.permute.xlu0 %135
    %vm137 = vcmask 228352
    %s138 = scalar_lea.vmem [#allocation2], 16
    %139 = vst.msk [vmem:[%s138] sm:$0x1] %vm137, %v136
    %s140 = scalar_lea.vmem [#allocation2], 239
    %141 = vst.msk [vmem:[%s140] sm:$0x2] %vm137, %v136
    %s142 = scalar_lea.vmem [#allocation3], 40
    %v143 = vld [vmem:[%s142] sm:$0x3]
    %144 = vrot.lane.b32.xlu0 %v143, 68
    %v145 = vpop.permute.xlu0 %144
    %vm146 = vcmask 228352
    %s147 = scalar_lea.vmem [#allocation2], 200
    %148 = vst.msk [vmem:[%s147] sm:$0x1] %vm146, %v145
    %s149 = scalar_lea.vmem [#allocation2], 423
    %150 = vst.msk [vmem:[%s149] sm:$0x2] %vm146, %v145
    %s151 = scalar_lea.vmem [#allocation3], 24
    %v152 = vld [vmem:[%s151] sm:$0x3]
    %153 = vrot.lane.b32.xlu0 %v152, 64
    %v154 = vpop.permute.xlu0 %153
    %vm155 = vcmask 228352
    %s156 = scalar_lea.vmem [#allocation2], 128
    %157 = vst.msk [vmem:[%s156] sm:$0x1] %vm155, %v154
    %s158 = scalar_lea.vmem [#allocation2], 351
    %159 = vst.msk [vmem:[%s158] sm:$0x2] %vm155, %v154
    %s160 = scalar_lea.vmem [#allocation3], 8
    %v161 = vld [vmem:[%s160] sm:$0x3]
    %162 = vrot.lane.b32.xlu0 %v161, 60
    %v163 = vpop.permute.xlu0 %162
    %vm164 = vcmask 228352
    %s165 = scalar_lea.vmem [#allocation2], 56
    %166 = vst.msk [vmem:[%s165] sm:$0x1] %vm164, %v163
    %s167 = scalar_lea.vmem [#allocation2], 279
    %168 = vst.msk [vmem:[%s167] sm:$0x2] %vm164, %v163
    %s169 = scalar_lea.vmem [#allocation3], 32
    %v170 = vld [vmem:[%s169] sm:$0x3]
    %171 = vrot.lane.b32.xlu0 %v170, 52
    %v172 = vpop.permute.xlu0 %171
    %vm173 = vcmask 228352
    %s174 = scalar_lea.vmem [#allocation2], 168
    %175 = vst.msk [vmem:[%s174] sm:$0x1] %vm173, %v172
    %s176 = scalar_lea.vmem [#allocation2], 391
    %177 = vst.msk [vmem:[%s176] sm:$0x2] %vm173, %v172
    %s178 = scalar_lea.vmem [#allocation3], 16
    %v179 = vld [vmem:[%s178] sm:$0x3]
    %180 = vrot.lane.b32.xlu0 %v179, 48
    %v181 = vpop.permute.xlu0 %180
    %vm182 = vcmask 228352
    %s183 = scalar_lea.vmem [#allocation2], 96
    %184 = vst.msk [vmem:[%s183] sm:$0x1] %vm182, %v181
    %s185 = scalar_lea.vmem [#allocation2], 319
    %186 = vst.msk [vmem:[%s185] sm:$0x2] %vm182, %v181
    %v187 = vld [vmem:[#allocation3] sm:$0x3]
    %188 = vrot.lane.b32.xlu0 %v187, 44
    %v189 = vpop.permute.xlu0 %188
    %vm190 = vcmask 228352
    %s191 = scalar_lea.vmem [#allocation2], 24
    %192 = vst.msk [vmem:[%s191] sm:$0x1] %vm190, %v189
    %s193 = scalar_lea.vmem [#allocation2], 247
    %194 = vst.msk [vmem:[%s193] sm:$0x2] %vm190, %v189
    %s195 = scalar_lea.vmem [#allocation3], 40
    %v196 = vld [vmem:[%s195] sm:$0x3]
    %197 = vrot.lane.b32.xlu0 %v196, 40
    %v198 = vpop.permute.xlu0 %197
    %vm199 = vcmask 228352
    %s200 = scalar_lea.vmem [#allocation2], 208
    %201 = vst.msk [vmem:[%s200] sm:$0x1] %vm199, %v198
    %s202 = scalar_lea.vmem [#allocation2], 431
    %203 = vst.msk [vmem:[%s202] sm:$0x2] %vm199, %v198
    %s204 = scalar_lea.vmem [#allocation3], 24
    %v205 = vld [vmem:[%s204] sm:$0x3]
    %206 = vrot.lane.b32.xlu0 %v205, 36
    %v207 = vpop.permute.xlu0 %206
    %vm208 = vcmask 228352
    %s209 = scalar_lea.vmem [#allocation2], 136
    %210 = vst.msk [vmem:[%s209] sm:$0x1] %vm208, %v207
    %s211 = scalar_lea.vmem [#allocation2], 359
    %212 = vst.msk [vmem:[%s211] sm:$0x2] %vm208, %v207
    %s213 = scalar_lea.vmem [#allocation3], 8
    %v214 = vld [vmem:[%s213] sm:$0x3]
    %215 = vrot.lane.b32.xlu0 %v214, 32
    %v216 = vpop.permute.xlu0 %215
    %vm217 = vcmask 228352
    %s218 = scalar_lea.vmem [#allocation2], 64
    %219 = vst.msk [vmem:[%s218] sm:$0x1] %vm217, %v216
    %s220 = scalar_lea.vmem [#allocation2], 287
    %221 = vst.msk [vmem:[%s220] sm:$0x2] %vm217, %v216
    %s222 = scalar_lea.vmem [#allocation3], 32
    %v223 = vld [vmem:[%s222] sm:$0x3]
    %s224 = scalar_lea.vmem [#allocation3], 40
    %v225 = vld [vmem:[%s224] sm:$0x3]
    %vm226 = vcmask 850944
    %v227 = vsel %vm226, %v225, %v223
    %228 = vrot.lane.b32.xlu0 %v227, 24
    %v229 = vpop.permute.xlu0 %228
    %vm230 = vcmask 195584
    %s231 = scalar_lea.vmem [#allocation2], 176
    %232 = vst.msk [vmem:[%s231] sm:$0x1] %vm230, %v229
    %s233 = scalar_lea.vmem [#allocation2], 399
    %234 = vst.msk [vmem:[%s233] sm:$0x2] %vm230, %v229
    %vm235 = vcmask 228544
    %s236 = scalar_lea.vmem [#allocation2], 176
    %237 = vst.msk [vmem:[%s236] sm:$0x1] %vm235, %v229
    %s238 = scalar_lea.vmem [#allocation2], 399
    %239 = vst.msk [vmem:[%s238] sm:$0x2] %vm235, %v229
    %s240 = scalar_lea.vmem [#allocation3], 16
    %v241 = vld [vmem:[%s240] sm:$0x3]
    %s242 = scalar_lea.vmem [#allocation3], 24
    %v243 = vld [vmem:[%s242] sm:$0x3]
    %vm244 = vcmask 883712
    %v245 = vsel %vm244, %v243, %v241
    %246 = vrot.lane.b32.xlu0 %v245, 20
    %v247 = vpop.permute.xlu0 %246
    %vm248 = vcmask 162816
    %s249 = scalar_lea.vmem [#allocation2], 104
    %250 = vst.msk [vmem:[%s249] sm:$0x1] %vm248, %v247
    %s251 = scalar_lea.vmem [#allocation2], 327
    %252 = vst.msk [vmem:[%s251] sm:$0x2] %vm248, %v247
    %vm253 = vcmask 228512
    %s254 = scalar_lea.vmem [#allocation2], 104
    %255 = vst.msk [vmem:[%s254] sm:$0x1] %vm253, %v247
    %s256 = scalar_lea.vmem [#allocation2], 327
    %257 = vst.msk [vmem:[%s256] sm:$0x2] %vm253, %v247
    %v258 = vld [vmem:[#allocation3] sm:$0x3]
    %s259 = scalar_lea.vmem [#allocation3], 8
    %v260 = vld [vmem:[%s259] sm:$0x3]
    %vm261 = vcmask 916480
    %v262 = vsel %vm261, %v260, %v258
    %263 = vrot.lane.b32.xlu0 %v262, 16
    %v264 = vpop.permute.xlu0 %263
    %vm265 = vcmask 130048
    %s266 = scalar_lea.vmem [#allocation2], 32
    %267 = vst.msk [vmem:[%s266] sm:$0x1] %vm265, %v264
    %s268 = scalar_lea.vmem [#allocation2], 255
    %269 = vst.msk [vmem:[%s268] sm:$0x2] %vm265, %v264
    %vm270 = vcmask 228480
    %s271 = scalar_lea.vmem [#allocation2], 32
    %272 = vst.msk [vmem:[%s271] sm:$0x1] %vm270, %v264
    %s273 = scalar_lea.vmem [#allocation2], 255
    %274 = vst.msk [vmem:[%s273] sm:$0x2] %vm270, %v264
    %s275 = scalar_lea.vmem [#allocation3], 40
    %v276 = vld [vmem:[%s275] sm:$0x3]
    %s277 = scalar_lea.vmem [#allocation3], 48
    %v278 = vld [vmem:[%s277] sm:$0x3]
    %vm279 = vcmask 949248
    %v280 = vsel %vm279, %v278, %v276
    %281 = vrot.lane.b32.xlu0 %v280, 12
    %v282 = vpop.permute.xlu0 %281
    %vm283 = vcmask 97280
    %s284 = scalar_lea.vmem [#allocation2], 216
    %285 = vst.msk [vmem:[%s284] sm:$0x1] %vm283, %v282
    %s286 = scalar_lea.vmem [#allocation2], 439
    %287 = vst.msk [vmem:[%s286] sm:$0x2] %vm283, %v282
    %vm288 = vcmask 228448
    %s289 = scalar_lea.vmem [#allocation2], 216
    %290 = vst.msk [vmem:[%s289] sm:$0x1] %vm288, %v282
    %s291 = scalar_lea.vmem [#allocation2], 439
    %292 = vst.msk [vmem:[%s291] sm:$0x2] %vm288, %v282
    %s293 = scalar_lea.vmem [#allocation3], 24
    %v294 = vld [vmem:[%s293] sm:$0x3]
    %s295 = scalar_lea.vmem [#allocation3], 32
    %v296 = vld [vmem:[%s295] sm:$0x3]
    %vm297 = vcmask 982016
    %v298 = vsel %vm297, %v296, %v294
    %299 = vrot.lane.b32.xlu0 %v298, 8
    %v300 = vpop.permute.xlu0 %299
    %vm301 = vcmask 64512
    %s302 = scalar_lea.vmem [#allocation2], 144
    %303 = vst.msk [vmem:[%s302] sm:$0x1] %vm301, %v300
    %s304 = scalar_lea.vmem [#allocation2], 367
    %305 = vst.msk [vmem:[%s304] sm:$0x2] %vm301, %v300
    %vm306 = vcmask 228416
    %s307 = scalar_lea.vmem [#allocation2], 144
    %308 = vst.msk [vmem:[%s307] sm:$0x1] %vm306, %v300
    %s309 = scalar_lea.vmem [#allocation2], 367
    %310 = vst.msk [vmem:[%s309] sm:$0x2] %vm306, %v300
    %s311 = scalar_lea.vmem [#allocation3], 8
    %v312 = vld [vmem:[%s311] sm:$0x3]
    %s313 = scalar_lea.vmem [#allocation3], 16
    %v314 = vld [vmem:[%s313] sm:$0x3]
    %vm315 = vcmask 1014784
    %v316 = vsel %vm315, %v314, %v312
    %317 = vrot.lane.b32.xlu0 %v316, 4
    %v318 = vpop.permute.xlu0 %317
    %vm319 = vcmask 31744
    %s320 = scalar_lea.vmem [#allocation2], 72
    %321 = vst.msk [vmem:[%s320] sm:$0x1] %vm319, %v318
    %s322 = scalar_lea.vmem [#allocation2], 295
    %323 = vst.msk [vmem:[%s322] sm:$0x2] %vm319, %v318
    %vm324 = vcmask 228384
    %s325 = scalar_lea.vmem [#allocation2], 72
    %326 = vst.msk [vmem:[%s325] sm:$0x1] %vm324, %v318
    %s327 = scalar_lea.vmem [#allocation2], 295
    %328 = vst.msk [vmem:[%s327] sm:$0x2] %vm324, %v318
    %s330 = ssub.s32 2, 1
    %v331 = vld [vmem:[#allocation2] sm:%s330]
    %s333 = ssub.s32 2, 1
    %334 = vst [vmem:[#allocation0] sm:%s333] %v331
    %s335 = scalar_lea.vmem [#allocation2], 8
    %v336 = vld [vmem:[%s335] sm:%s330]
    %s338 = ssub.s32 2, 1
    %s339 = scalar_lea.vmem [#allocation0], 1
    %340 = vst [vmem:[%s339] sm:%s338] %v336
    %s341 = scalar_lea.vmem [#allocation2], 16
    %v342 = vld [vmem:[%s341] sm:%s330]
    %s344 = ssub.s32 2, 1
    %s345 = scalar_lea.vmem [#allocation0], 2
    %346 = vst [vmem:[%s345] sm:%s344] %v342
    %s347 = scalar_lea.vmem [#allocation2], 24
    %v348 = vld [vmem:[%s347] sm:%s330]
    %s350 = ssub.s32 2, 1
    %s351 = scalar_lea.vmem [#allocation0], 3
    %352 = vst [vmem:[%s351] sm:%s350] %v348
    %s353 = scalar_lea.vmem [#allocation2], 32
    %v354 = vld [vmem:[%s353] sm:%s330]
    %s356 = ssub.s32 2, 1
    %s357 = scalar_lea.vmem [#allocation0], 4
    %358 = vst [vmem:[%s357] sm:%s356] %v354
    %s359 = scalar_lea.vmem [#allocation2], 40
    %v360 = vld [vmem:[%s359] sm:%s330]
    %s362 = ssub.s32 2, 1
    %s363 = scalar_lea.vmem [#allocation0], 5
    %364 = vst [vmem:[%s363] sm:%s362] %v360
    %s365 = scalar_lea.vmem [#allocation2], 48
    %v366 = vld [vmem:[%s365] sm:%s330]
    %s368 = ssub.s32 2, 1
    %s369 = scalar_lea.vmem [#allocation0], 6
    %370 = vst [vmem:[%s369] sm:%s368] %v366
    %s371 = scalar_lea.vmem [#allocation2], 56
    %v372 = vld [vmem:[%s371] sm:%s330]
    %s374 = ssub.s32 2, 1
    %s375 = scalar_lea.vmem [#allocation0], 7
    %376 = vst [vmem:[%s375] sm:%s374] %v372
    %s377 = scalar_lea.vmem [#allocation2], 64
    %v378 = vld [vmem:[%s377] sm:%s330]
    %s380 = ssub.s32 2, 1
    %s381 = scalar_lea.vmem [#allocation0], 8
    %382 = vst [vmem:[%s381] sm:%s380] %v378
    %s383 = scalar_lea.vmem [#allocation2], 72
    %v384 = vld [vmem:[%s383] sm:%s330]
    %s386 = ssub.s32 2, 1
    %s387 = scalar_lea.vmem [#allocation0], 9
    %388 = vst [vmem:[%s387] sm:%s386] %v384
    %s389 = scalar_lea.vmem [#allocation2], 80
    %v390 = vld [vmem:[%s389] sm:%s330]
    %s392 = ssub.s32 2, 1
    %s393 = scalar_lea.vmem [#allocation0], 10
    %394 = vst [vmem:[%s393] sm:%s392] %v390
    %s395 = scalar_lea.vmem [#allocation2], 88
    %v396 = vld [vmem:[%s395] sm:%s330]
    %s398 = ssub.s32 2, 1
    %s399 = scalar_lea.vmem [#allocation0], 11
    %400 = vst [vmem:[%s399] sm:%s398] %v396
    %s401 = scalar_lea.vmem [#allocation2], 96
    %v402 = vld [vmem:[%s401] sm:%s330]
    %s404 = ssub.s32 2, 1
    %s405 = scalar_lea.vmem [#allocation0], 12
    %406 = vst [vmem:[%s405] sm:%s404] %v402
    %s407 = scalar_lea.vmem [#allocation2], 104
    %v408 = vld [vmem:[%s407] sm:%s330]
    %s410 = ssub.s32 2, 1
    %s411 = scalar_lea.vmem [#allocation0], 13
    %412 = vst [vmem:[%s411] sm:%s410] %v408
    %s413 = scalar_lea.vmem [#allocation2], 112
    %v414 = vld [vmem:[%s413] sm:%s330]
    %s416 = ssub.s32 2, 1
    %s417 = scalar_lea.vmem [#allocation0], 14
    %418 = vst [vmem:[%s417] sm:%s416] %v414
    %s419 = scalar_lea.vmem [#allocation2], 120
    %v420 = vld [vmem:[%s419] sm:%s330]
    %s422 = ssub.s32 2, 1
    %s423 = scalar_lea.vmem [#allocation0], 15
    %424 = vst [vmem:[%s423] sm:%s422] %v420
    %s425 = scalar_lea.vmem [#allocation2], 128
    %v426 = vld [vmem:[%s425] sm:%s330]
    %s428 = ssub.s32 2, 1
    %s429 = scalar_lea.vmem [#allocation0], 16
    %430 = vst [vmem:[%s429] sm:%s428] %v426
    %s431 = scalar_lea.vmem [#allocation2], 136
    %v432 = vld [vmem:[%s431] sm:%s330]
    %s434 = ssub.s32 2, 1
    %s435 = scalar_lea.vmem [#allocation0], 17
    %436 = vst [vmem:[%s435] sm:%s434] %v432
    %s437 = scalar_lea.vmem [#allocation2], 144
    %v438 = vld [vmem:[%s437] sm:%s330]
    %s440 = ssub.s32 2, 1
    %s441 = scalar_lea.vmem [#allocation0], 18
    %442 = vst [vmem:[%s441] sm:%s440] %v438
    %s443 = scalar_lea.vmem [#allocation2], 152
    %v444 = vld [vmem:[%s443] sm:%s330]
    %s446 = ssub.s32 2, 1
    %s447 = scalar_lea.vmem [#allocation0], 19
    %448 = vst [vmem:[%s447] sm:%s446] %v444
    %s449 = scalar_lea.vmem [#allocation2], 160
    %v450 = vld [vmem:[%s449] sm:%s330]
    %s452 = ssub.s32 2, 1
    %s453 = scalar_lea.vmem [#allocation0], 20
    %454 = vst [vmem:[%s453] sm:%s452] %v450
    %s455 = scalar_lea.vmem [#allocation2], 168
    %v456 = vld [vmem:[%s455] sm:%s330]
    %s458 = ssub.s32 2, 1
    %s459 = scalar_lea.vmem [#allocation0], 21
    %460 = vst [vmem:[%s459] sm:%s458] %v456
    %s461 = scalar_lea.vmem [#allocation2], 176
    %v462 = vld [vmem:[%s461] sm:%s330]
    %s464 = ssub.s32 2, 1
    %s465 = scalar_lea.vmem [#allocation0], 22
    %466 = vst [vmem:[%s465] sm:%s464] %v462
    %s467 = scalar_lea.vmem [#allocation2], 184
    %v468 = vld [vmem:[%s467] sm:%s330]
    %s470 = ssub.s32 2, 1
    %s471 = scalar_lea.vmem [#allocation0], 23
    %472 = vst [vmem:[%s471] sm:%s470] %v468
    %s473 = scalar_lea.vmem [#allocation2], 192
    %v474 = vld [vmem:[%s473] sm:%s330]
    %s476 = ssub.s32 2, 1
    %s477 = scalar_lea.vmem [#allocation0], 24
    %478 = vst [vmem:[%s477] sm:%s476] %v474
    %s479 = scalar_lea.vmem [#allocation2], 200
    %v480 = vld [vmem:[%s479] sm:%s330]
    %s482 = ssub.s32 2, 1
    %s483 = scalar_lea.vmem [#allocation0], 25
    %484 = vst [vmem:[%s483] sm:%s482] %v480
    %s485 = scalar_lea.vmem [#allocation2], 208
    %v486 = vld [vmem:[%s485] sm:%s330]
    %s488 = ssub.s32 2, 1
    %s489 = scalar_lea.vmem [#allocation0], 26
    %490 = vst [vmem:[%s489] sm:%s488] %v486
    %s491 = scalar_lea.vmem [#allocation2], 216
    %v492 = vld [vmem:[%s491] sm:%s330]
    %s494 = ssub.s32 2, 1
    %s495 = scalar_lea.vmem [#allocation0], 27
    %496 = vst [vmem:[%s495] sm:%s494] %v492
    %s497 = scalar_lea.vmem [#allocation2], 224
    %v498 = vld [vmem:[%s497] sm:%s330]
    %s500 = ssub.s32 2, 1
    %s501 = scalar_lea.vmem [#allocation0], 28
    %502 = vst [vmem:[%s501] sm:%s500] %v498
    %s503 = scalar_lea.vmem [#allocation2], 232
    %v504 = vld [vmem:[%s503] sm:%s330]
    %s506 = ssub.s32 2, 1
    %s507 = scalar_lea.vmem [#allocation0], 29
    %508 = vst [vmem:[%s507] sm:%s506] %v504
    %s509 = scalar_lea.vmem [#allocation2], 240
    %v510 = vld [vmem:[%s509] sm:%s330]
    %s512 = ssub.s32 2, 1
    %s513 = scalar_lea.vmem [#allocation0], 30
    %514 = vst [vmem:[%s513] sm:%s512] %v510
    %s515 = scalar_lea.vmem [#allocation2], 248
    %v516 = vld [vmem:[%s515] sm:%s330]
    %s518 = ssub.s32 2, 1
    %s519 = scalar_lea.vmem [#allocation0], 31
    %520 = vst [vmem:[%s519] sm:%s518] %v516
    %s521 = scalar_lea.vmem [#allocation2], 256
    %v522 = vld [vmem:[%s521] sm:%s330]
    %s524 = ssub.s32 2, 1
    %s525 = scalar_lea.vmem [#allocation0], 32
    %526 = vst [vmem:[%s525] sm:%s524] %v522
    %s527 = scalar_lea.vmem [#allocation2], 264
    %v528 = vld [vmem:[%s527] sm:%s330]
    %s530 = ssub.s32 2, 1
    %s531 = scalar_lea.vmem [#allocation0], 33
    %532 = vst [vmem:[%s531] sm:%s530] %v528
    %s533 = scalar_lea.vmem [#allocation2], 272
    %v534 = vld [vmem:[%s533] sm:%s330]
    %s536 = ssub.s32 2, 1
    %s537 = scalar_lea.vmem [#allocation0], 34
    %538 = vst [vmem:[%s537] sm:%s536] %v534
    %s539 = scalar_lea.vmem [#allocation2], 280
    %v540 = vld [vmem:[%s539] sm:%s330]
    %s542 = ssub.s32 2, 1
    %s543 = scalar_lea.vmem [#allocation0], 35
    %544 = vst [vmem:[%s543] sm:%s542] %v540
    %s545 = scalar_lea.vmem [#allocation2], 288
    %v546 = vld [vmem:[%s545] sm:%s330]
    %s548 = ssub.s32 2, 1
    %s549 = scalar_lea.vmem [#allocation0], 36
    %550 = vst [vmem:[%s549] sm:%s548] %v546
    %s551 = scalar_lea.vmem [#allocation2], 296
    %v552 = vld [vmem:[%s551] sm:%s330]
    %s554 = ssub.s32 2, 1
    %s555 = scalar_lea.vmem [#allocation0], 37
    %556 = vst [vmem:[%s555] sm:%s554] %v552
    %s557 = scalar_lea.vmem [#allocation2], 304
    %v558 = vld [vmem:[%s557] sm:%s330]
    %s560 = ssub.s32 2, 1
    %s561 = scalar_lea.vmem [#allocation0], 38
    %562 = vst [vmem:[%s561] sm:%s560] %v558
    %s563 = scalar_lea.vmem [#allocation2], 312
    %v564 = vld [vmem:[%s563] sm:%s330]
    %s566 = ssub.s32 2, 1
    %s567 = scalar_lea.vmem [#allocation0], 39
    %568 = vst [vmem:[%s567] sm:%s566] %v564
    %s569 = scalar_lea.vmem [#allocation2], 320
    %v570 = vld [vmem:[%s569] sm:%s330]
    %s572 = ssub.s32 2, 1
    %s573 = scalar_lea.vmem [#allocation0], 40
    %574 = vst [vmem:[%s573] sm:%s572] %v570
    %s575 = scalar_lea.vmem [#allocation2], 328
    %v576 = vld [vmem:[%s575] sm:%s330]
    %s578 = ssub.s32 2, 1
    %s579 = scalar_lea.vmem [#allocation0], 41
    %580 = vst [vmem:[%s579] sm:%s578] %v576
    %s581 = scalar_lea.vmem [#allocation2], 336
    %v582 = vld [vmem:[%s581] sm:%s330]
    %s584 = ssub.s32 2, 1
    %s585 = scalar_lea.vmem [#allocation0], 42
    %586 = vst [vmem:[%s585] sm:%s584] %v582
    %s587 = scalar_lea.vmem [#allocation2], 344
    %v588 = vld [vmem:[%s587] sm:%s330]
    %s590 = ssub.s32 2, 1
    %s591 = scalar_lea.vmem [#allocation0], 43
    %592 = vst [vmem:[%s591] sm:%s590] %v588
    %s593 = scalar_lea.vmem [#allocation2], 352
    %v594 = vld [vmem:[%s593] sm:%s330]
    %s596 = ssub.s32 2, 1
    %s597 = scalar_lea.vmem [#allocation0], 44
    %598 = vst [vmem:[%s597] sm:%s596] %v594
    %s599 = scalar_lea.vmem [#allocation2], 360
    %v600 = vld [vmem:[%s599] sm:%s330]
    %s602 = ssub.s32 2, 1
    %s603 = scalar_lea.vmem [#allocation0], 45
    %604 = vst [vmem:[%s603] sm:%s602] %v600
    %s605 = scalar_lea.vmem [#allocation2], 368
    %v606 = vld [vmem:[%s605] sm:%s330]
    %s608 = ssub.s32 2, 1
    %s609 = scalar_lea.vmem [#allocation0], 46
    %610 = vst [vmem:[%s609] sm:%s608] %v606
    %s611 = scalar_lea.vmem [#allocation2], 376
    %v612 = vld [vmem:[%s611] sm:%s330]
    %s614 = ssub.s32 2, 1
    %s615 = scalar_lea.vmem [#allocation0], 47
    %616 = vst [vmem:[%s615] sm:%s614] %v612
    %s617 = scalar_lea.vmem [#allocation2], 384
    %v618 = vld [vmem:[%s617] sm:%s330]
    %s620 = ssub.s32 2, 1
    %s621 = scalar_lea.vmem [#allocation0], 48
    %622 = vst [vmem:[%s621] sm:%s620] %v618
    %s623 = scalar_lea.vmem [#allocation2], 392
    %v624 = vld [vmem:[%s623] sm:%s330]
    %s626 = ssub.s32 2, 1
    %s627 = scalar_lea.vmem [#allocation0], 49
    %628 = vst [vmem:[%s627] sm:%s626] %v624
    %s629 = scalar_lea.vmem [#allocation2], 400
    %v630 = vld [vmem:[%s629] sm:%s330]
    %s632 = ssub.s32 2, 1
    %s633 = scalar_lea.vmem [#allocation0], 50
    %634 = vst [vmem:[%s633] sm:%s632] %v630
    %s635 = scalar_lea.vmem [#allocation2], 408
    %v636 = vld [vmem:[%s635] sm:%s330]
    %s638 = ssub.s32 2, 1
    %s639 = scalar_lea.vmem [#allocation0], 51
    %640 = vst [vmem:[%s639] sm:%s638] %v636
    %s641 = scalar_lea.vmem [#allocation2], 416
    %v642 = vld [vmem:[%s641] sm:%s330]
    %s644 = ssub.s32 2, 1
    %s645 = scalar_lea.vmem [#allocation0], 52
    %646 = vst [vmem:[%s645] sm:%s644] %v642
    %s647 = scalar_lea.vmem [#allocation2], 424
    %v648 = vld [vmem:[%s647] sm:%s330]
    %s650 = ssub.s32 2, 1
    %s651 = scalar_lea.vmem [#allocation0], 53
    %652 = vst [vmem:[%s651] sm:%s650] %v648
    %s653 = scalar_lea.vmem [#allocation2], 432
    %v654 = vld [vmem:[%s653] sm:%s330]
    %s656 = ssub.s32 2, 1
    %s657 = scalar_lea.vmem [#allocation0], 54
    %658 = vst [vmem:[%s657] sm:%s656] %v654
    %s659 = scalar_lea.vmem [#allocation2], 440
    %v660 = vld [vmem:[%s659] sm:%s330]
    %s662 = ssub.s32 2, 1
    %s663 = scalar_lea.vmem [#allocation0], 55
    %664 = vst [vmem:[%s663] sm:%s662] %v660
    %666 = vsyncadd [#allocation1], 0
    %s668 = sshll.u32 [#allocation0], 4
    %s669 = int_to_ptr.vmem [resolvable:$true] %s668
    %s670 = sshll.u32 %s1, 4
    %s671 = int_to_ptr.hbm [resolvable:$true] %s670
    %673 = dma.vmem_to_hbm [thread:$0]  %s669, 896, %s671, [#allocation1]
    %675 = dma.done [#allocation1], 896
    %676 = vsyncpa [#allocation1], 1

// kernel: _lambda_.1
$region0: #{_lambda_.1}
  #allocation0 [shape = 'u32[]', space=smem, size = 0x4, offset = 0x4, fixed_abs, tag = 'smem constant byte address 0x4 - core index']
  #allocation1 [shape = 'u32[72,128]{1,0:T(1,128)}', space=vmem, size = 0x9000, scoped, tag = 'internal scratch']
  %s0 = inlined_call_operand.vmem [shape: f32[2,3072], index: 0, kind: input, shape index: {}]
  %s1 = inlined_call_operand.hbm [shape: bf16[3072,784], index: 1, kind: input, shape index: {}]
  %s2 = inlined_call_operand.hbm [shape: f32[1,784], index: 2, kind: input, shape index: {}]
  %s3 = inlined_call_operand.vmem [shape: f32[1,2,784], index: 3, kind: output, shape index: {}]
  %s4 = sld [smem:[#allocation0]]
  $region30: #{_lambda_.1} parent=0
    _
  %s6 = ssub.s32 1, %s4
  %s7 = scalar_select 0, %s6, %s4
  $region1: #{_lambda_.1} parent=0
    #allocation2 [shape = 'u8[5505024]{0}', space=vmem, size = 0x540000, scoped, tag = 'input window, operand 1, single buffered']
    #allocation3 [shape = 's32[1]{0}', space=sflag, size = 0x4, scoped, tag = 'scoped memory for _lambda_.1']
    #allocation4 [shape = 'u8[3584]{0}', space=vmem, size = 0x1000, scoped, tag = 'input window, operand 2, single buffered']
    #allocation5 [shape = 's32[1]{0}', space=sflag, size = 0x4, scoped, tag = 'scoped memory for _lambda_.1']
    %8 = vsyncpa [#allocation3], 0
    %9 = vsyncpa [#allocation5], 0
    // Predicated region
    $region2: #{_lambda_.1} parent=1 // pred_check
      _
    $region3: #{_lambda_.1} parent=1 // pred_check_branch
      %11 = sbr.rel (0) target = $region5
    $region4: #{_lambda_.1} parent=1 // pred_region
      _
    $region5: #{_lambda_.1} parent=1 // pred_fallthru
      _
    // Predicated region
    $region6: #{_lambda_.1} parent=1 // pred_check
      _
    $region7: #{_lambda_.1} parent=1 // pred_check_branch
      %13 = sbr.rel (0) target = $region9
    $region8: #{_lambda_.1} parent=1 // pred_region
      %15 = vsyncadd [#allocation3], 0
      %s16 = sshll.u32 %s1, 4
      %s17 = int_to_ptr.hbm [resolvable:$true] %s16
      %s18 = sshll.u32 [#allocation2], 4
      %s19 = int_to_ptr.vmem [resolvable:$true] %s18
      %24 = dma.hbm_to_vmem [thread:$0]  %s17, 172032, %s19, [#allocation3], 448, 448, 28
    $region9: #{_lambda_.1} parent=1 // pred_fallthru
      _
    // Predicated region
    $region10: #{_lambda_.1} parent=1 // pred_check
      _
    $region11: #{_lambda_.1} parent=1 // pred_check_branch
      %26 = sbr.rel (0) target = $region13
    $region12: #{_lambda_.1} parent=1 // pred_region
      %28 = vsyncadd [#allocation5], 0
      %s30 = sshll.u32 %s2, 4
      %s31 = int_to_ptr.hbm [resolvable:$true] %s30
      %s32 = sshll.u32 [#allocation4], 4
      %s33 = int_to_ptr.vmem [resolvable:$true] %s32
      %35 = dma.hbm_to_vmem [thread:$0]  %s31, 112, %s33, [#allocation5]
    $region13: #{_lambda_.1} parent=1 // pred_fallthru
      _
    // Predicated region
    $region14: #{_lambda_.1} parent=1 // pred_check
      _
    $region15: #{_lambda_.1} parent=1 // pred_check_branch
      %37 = sbr.rel (0) target = $region17
    $region16: #{_lambda_.1} parent=1 // pred_region
      %39 = dma.done [#allocation3], 172032
    $region17: #{_lambda_.1} parent=1 // pred_fallthru
      _
    // Predicated region
    $region18: #{_lambda_.1} parent=1 // pred_check
      _
    $region19: #{_lambda_.1} parent=1 // pred_check_branch
      %41 = sbr.rel (0) target = $region21
    $region20: #{_lambda_.1} parent=1 // pred_region
      %43 = dma.done [#allocation5], 112
    $region21: #{_lambda_.1} parent=1 // pred_fallthru
      _
    %v44 = vld [vmem:[#allocation2] sm:$0xff]
    %v45 = vld [vmem:[#allocation2 + $0x8] sm:$0xff]
    %v46 = vld [vmem:[#allocation2 + $0x10] sm:$0xff]
    %v47 = vld [vmem:[#allocation2 + $0x18] sm:$0xf]
    %v48 = vld [vmem:[#allocation2 + $0x1c] sm:$0xff]
    %v49 = vld [vmem:[#allocation2 + $0x24] sm:$0xff]
    %v50 = vld [vmem:[#allocation2 + $0x2c] sm:$0xff]
    %v51 = vld [vmem:[#allocation2 + $0x34] sm:$0xf]
    %v52 = vld [vmem:[#allocation2 + $0x38] sm:$0xff]
    %v53 = vld [vmem:[#allocation2 + $0x40] sm:$0xff]
    %v54 = vld [vmem:[#allocation2 + $0x48] sm:$0xff]
    %v55 = vld [vmem:[#allocation2 + $0x50] sm:$0xf]
    %v56 = vld [vmem:[#allocation2 + $0x54] sm:$0xff]
    %v57 = vld [vmem:[#allocation2 + $0x5c] sm:$0xff]
    %v58 = vld [vmem:[#allocation2 + $0x64] sm:$0xff]
    %v59 = vld [vmem:[#allocation2 + $0x6c] sm:$0xf]
    %v60 = vld [vmem:[#allocation2 + $0x70] sm:$0xff]
    %v61 = vld [vmem:[#allocation2 + $0x78] sm:$0xff]
    %v62 = vld [vmem:[#allocation2 + $0x80] sm:$0xff]
    %v63 = vld [vmem:[#allocation2 + $0x88] sm:$0xf]
    %v64 = vld [vmem:[#allocation2 + $0x8c] sm:$0xff]
    %v65 = vld [vmem:[#allocation2 + $0x94] sm:$0xff]
    %v66 = vld [vmem:[#allocation2 + $0x9c] sm:$0xff]
    %v67 = vld [vmem:[#allocation2 + $0xa4] sm:$0xf]
    %v68 = vld [vmem:[#allocation2 + $0xa8] sm:$0xff]
    %v69 = vld [vmem:[#allocation2 + $0xb0] sm:$0xff]
    %v70 = vld [vmem:[#allocation2 + $0xb8] sm:$0xff]
    %v71 = vld [vmem:[#allocation2 + $0xc0] sm:$0xf]
    %v72 = vld [vmem:[#allocation2 + $0xc4] sm:$0xff]
    %v73 = vld [vmem:[#allocation2 + $0xcc] sm:$0xff]
    %v74 = vld [vmem:[#allocation2 + $0xd4] sm:$0xff]
    %v75 = vld [vmem:[#allocation2 + $0xdc] sm:$0xf]
    %v76 = vld [vmem:[#allocation2 + $0xe0] sm:$0xff]
    %v77 = vld [vmem:[#allocation2 + $0xe8] sm:$0xff]
    %v78 = vld [vmem:[#allocation2 + $0xf0] sm:$0xff]
    %v79 = vld [vmem:[#allocation2 + $0xf8] sm:$0xf]
    %v80 = vld [vmem:[#allocation2 + $0xfc] sm:$0xff]
    %v81 = vld [vmem:[#allocation2 + $0x104] sm:$0xff]
    %v82 = vld [vmem:[#allocation2 + $0x10c] sm:$0xff]
    %v83 = vld [vmem:[#allocation2 + $0x114] sm:$0xf]
    %v84 = vld [vmem:[#allocation2 + $0x118] sm:$0xff]
    %v85 = vld [vmem:[#allocation2 + $0x120] sm:$0xff]
    %v86 = vld [vmem:[#allocation2 + $0x128] sm:$0xff]
    %v87 = vld [vmem:[#allocation2 + $0x130] sm:$0xf]
    %v88 = vld [vmem:[#allocation2 + $0x134] sm:$0xff]
    %v89 = vld [vmem:[#allocation2 + $0x13c] sm:$0xff]
    %v90 = vld [vmem:[#allocation2 + $0x144] sm:$0xff]
    %v91 = vld [vmem:[#allocation2 + $0x14c] sm:$0xf]
    %v92 = vld [vmem:[#allocation2 + $0x150] sm:$0xff]
    %v93 = vld [vmem:[#allocation2 + $0x158] sm:$0xff]
    %v94 = vld [vmem:[#allocation2 + $0x160] sm:$0xff]
    %v95 = vld [vmem:[#allocation2 + $0x168] sm:$0xf]
    %v96 = vld [vmem:[#allocation2 + $0x16c] sm:$0xff]
    %v97 = vld [vmem:[#allocation2 + $0x174] sm:$0xff]
    %v98 = vld [vmem:[#allocation2 + $0x17c] sm:$0xff]
    %v99 = vld [vmem:[#allocation2 + $0x184] sm:$0xf]
    %v100 = vld [vmem:[#allocation2 + $0x188] sm:$0xff]
    %v101 = vld [vmem:[#allocation2 + $0x190] sm:$0xff]
    %v102 = vld [vmem:[#allocation2 + $0x198] sm:$0xff]
    %v103 = vld [vmem:[#allocation2 + $0x1a0] sm:$0xf]
    %v104 = vld [vmem:[#allocation2 + $0x1a4] sm:$0xff]
    %v105 = vld [vmem:[#allocation2 + $0x1ac] sm:$0xff]
    %v106 = vld [vmem:[#allocation2 + $0x1b4] sm:$0xff]
    %v107 = vld [vmem:[#allocation2 + $0x1bc] sm:$0xf]
    %v108 = vld [vmem:[#allocation2 + $0x1c0] sm:$0xff]
    %v109 = vld [vmem:[#allocation2 + $0x1c8] sm:$0xff]
    %v110 = vld [vmem:[#allocation2 + $0x1d0] sm:$0xff]
    %v111 = vld [vmem:[#allocation2 + $0x1d8] sm:$0xf]
    %v112 = vld [vmem:[#allocation2 + $0x1dc] sm:$0xff]
    %v113 = vld [vmem:[#allocation2 + $0x1e4] sm:$0xff]
    %v114 = vld [vmem:[#allocation2 + $0x1ec] sm:$0xff]
    %v115 = vld [vmem:[#allocation2 + $0x1f4] sm:$0xf]
    %v116 = vld [vmem:[#allocation2 + $0x1f8] sm:$0xff]
    %v117 = vld [vmem:[#allocation2 + $0x200] sm:$0xff]
    %v118 = vld [vmem:[#allocation2 + $0x208] sm:$0xff]
    %v119 = vld [vmem:[#allocation2 + $0x210] sm:$0xf]
    %v120 = vld [vmem:[#allocation2 + $0x214] sm:$0xff]
    %v121 = vld [vmem:[#allocation2 + $0x21c] sm:$0xff]
    %v122 = vld [vmem:[#allocation2 + $0x224] sm:$0xff]
    %v123 = vld [vmem:[#allocation2 + $0x22c] sm:$0xf]
    %v124 = vld [vmem:[#allocation2 + $0x230] sm:$0xff]
    %v125 = vld [vmem:[#allocation2 + $0x238] sm:$0xff]
    %v126 = vld [vmem:[#allocation2 + $0x240] sm:$0xff]
    %v127 = vld [vmem:[#allocation2 + $0x248] sm:$0xf]
    %v128 = vld [vmem:[#allocation2 + $0x24c] sm:$0xff]
    %v129 = vld [vmem:[#allocation2 + $0x254] sm:$0xff]
    %v130 = vld [vmem:[#allocation2 + $0x25c] sm:$0xff]
    %v131 = vld [vmem:[#allocation2 + $0x264] sm:$0xf]
    %v132 = vld [vmem:[#allocation2 + $0x268] sm:$0xff]
    %v133 = vld [vmem:[#allocation2 + $0x270] sm:$0xff]
    %v134 = vld [vmem:[#allocation2 + $0x278] sm:$0xff]
    %v135 = vld [vmem:[#allocation2 + $0x280] sm:$0xf]
    %v136 = vld [vmem:[#allocation2 + $0x284] sm:$0xff]
    %v137 = vld [vmem:[#allocation2 + $0x28c] sm:$0xff]
    %v138 = vld [vmem:[#allocation2 + $0x294] sm:$0xff]
    %v139 = vld [vmem:[#allocation2 + $0x29c] sm:$0xf]
    %v140 = vld [vmem:[#allocation2 + $0x2a0] sm:$0xff]
    %v141 = vld [vmem:[#allocation2 + $0x2a8] sm:$0xff]
    %v142 = vld [vmem:[#allocation2 + $0x2b0] sm:$0xff]
    %v143 = vld [vmem:[#allocation2 + $0x2b8] sm:$0xf]
    %v144 = vld [vmem:[#allocation2 + $0x2bc] sm:$0xff]
    %v145 = vld [vmem:[#allocation2 + $0x2c4] sm:$0xff]
    %v146 = vld [vmem:[#allocation2 + $0x2cc] sm:$0xff]
    %v147 = vld [vmem:[#allocation2 + $0x2d4] sm:$0xf]
    %v148 = vld [vmem:[#allocation2 + $0x2d8] sm:$0xff]
    %v149 = vld [vmem:[#allocation2 + $0x2e0] sm:$0xff]
    %v150 = vld [vmem:[#allocation2 + $0x2e8] sm:$0xff]
    %v151 = vld [vmem:[#allocation2 + $0x2f0] sm:$0xf]
    %v152 = vld [vmem:[#allocation2 + $0x2f4] sm:$0xff]
    %v153 = vld [vmem:[#allocation2 + $0x2fc] sm:$0xff]
    %v154 = vld [vmem:[#allocation2 + $0x304] sm:$0xff]
    %v155 = vld [vmem:[#allocation2 + $0x30c] sm:$0xf]
    %v156 = vld [vmem:[#allocation2 + $0x310] sm:$0xff]
    %v157 = vld [vmem:[#allocation2 + $0x318] sm:$0xff]
    %v158 = vld [vmem:[#allocation2 + $0x320] sm:$0xff]
    %v159 = vld [vmem:[#allocation2 + $0x328] sm:$0xf]
    %v160 = vld [vmem:[#allocation2 + $0x32c] sm:$0xff]
    %v161 = vld [vmem:[#allocation2 + $0x334] sm:$0xff]
    %v162 = vld [vmem:[#allocation2 + $0x33c] sm:$0xff]
    %v163 = vld [vmem:[#allocation2 + $0x344] sm:$0xf]
    %v164 = vld [vmem:[#allocation2 + $0x348] sm:$0xff]
    %v165 = vld [vmem:[#allocation2 + $0x350] sm:$0xff]
    %v166 = vld [vmem:[#allocation2 + $0x358] sm:$0xff]
    %v167 = vld [vmem:[#allocation2 + $0x360] sm:$0xf]
    %v168 = vld [vmem:[#allocation2 + $0x364] sm:$0xff]
    %v169 = vld [vmem:[#allocation2 + $0x36c] sm:$0xff]
    %v170 = vld [vmem:[#allocation2 + $0x374] sm:$0xff]
    %v171 = vld [vmem:[#allocation2 + $0x37c] sm:$0xf]
    %v172 = vld [vmem:[#allocation2 + $0x380] sm:$0xff]
    %v173 = vld [vmem:[#allocation2 + $0x388] sm:$0xff]
    %v174 = vld [vmem:[#allocation2 + $0x390] sm:$0xff]
    %v175 = vld [vmem:[#allocation2 + $0x398] sm:$0xf]
    %v176 = vld [vmem:[#allocation2 + $0x39c] sm:$0xff]
    %v177 = vld [vmem:[#allocation2 + $0x3a4] sm:$0xff]
    %v178 = vld [vmem:[#allocation2 + $0x3ac] sm:$0xff]
    %v179 = vld [vmem:[#allocation2 + $0x3b4] sm:$0xf]
    %v180 = vld [vmem:[#allocation2 + $0x3b8] sm:$0xff]
    %v181 = vld [vmem:[#allocation2 + $0x3c0] sm:$0xff]
    %v182 = vld [vmem:[#allocation2 + $0x3c8] sm:$0xff]
    %v183 = vld [vmem:[#allocation2 + $0x3d0] sm:$0xf]
    %v184 = vld [vmem:[#allocation2 + $0x3d4] sm:$0xff]
    %v185 = vld [vmem:[#allocation2 + $0x3dc] sm:$0xff]
    %v186 = vld [vmem:[#allocation2 + $0x3e4] sm:$0xff]
    %v187 = vld [vmem:[#allocation2 + $0x3ec] sm:$0xf]
    %v188 = vld [vmem:[#allocation2 + $0x3f0] sm:$0xff]
    %v189 = vld [vmem:[#allocation2 + $0x3f8] sm:$0xff]
    %v190 = vld [vmem:[#allocation2 + $0x400] sm:$0xff]
    %v191 = vld [vmem:[#allocation2 + $0x408] sm:$0xf]
    %v192 = vld [vmem:[#allocation2 + $0x40c] sm:$0xff]
    %v193 = vld [vmem:[#allocation2 + $0x414] sm:$0xff]
    %v194 = vld [vmem:[#allocation2 + $0x41c] sm:$0xff]
    %v195 = vld [vmem:[#allocation2 + $0x424] sm:$0xf]
    %v196 = vld [vmem:[#allocation2 + $0x428] sm:$0xff]
    %v197 = vld [vmem:[#allocation2 + $0x430] sm:$0xff]
    %v198 = vld [vmem:[#allocation2 + $0x438] sm:$0xff]
    %v199 = vld [vmem:[#allocation2 + $0x440] sm:$0xf]
    %v200 = vld [vmem:[#allocation2 + $0x444] sm:$0xff]
    %v201 = vld [vmem:[#allocation2 + $0x44c] sm:$0xff]
    %v202 = vld [vmem:[#allocation2 + $0x454] sm:$0xff]
    %v203 = vld [vmem:[#allocation2 + $0x45c] sm:$0xf]
    %v204 = vld [vmem:[#allocation2 + $0x460] sm:$0xff]
    %v205 = vld [vmem:[#allocation2 + $0x468] sm:$0xff]
    %v206 = vld [vmem:[#allocation2 + $0x470] sm:$0xff]
    %v207 = vld [vmem:[#allocation2 + $0x478] sm:$0xf]
    %v208 = vld [vmem:[#allocation2 + $0x47c] sm:$0xff]
    %v209 = vld [vmem:[#allocation2 + $0x484] sm:$0xff]
    %v210 = vld [vmem:[#allocation2 + $0x48c] sm:$0xff]
    %v211 = vld [vmem:[#allocation2 + $0x494] sm:$0xf]
    %v212 = vld [vmem:[#allocation2 + $0x498] sm:$0xff]
    %v213 = vld [vmem:[#allocation2 + $0x4a0] sm:$0xff]
    %v214 = vld [vmem:[#allocation2 + $0x4a8] sm:$0xff]
    %v215 = vld [vmem:[#allocation2 + $0x4b0] sm:$0xf]
    %v216 = vld [vmem:[#allocation2 + $0x4b4] sm:$0xff]
    %v217 = vld [vmem:[#allocation2 + $0x4bc] sm:$0xff]
    %v218 = vld [vmem:[#allocation2 + $0x4c4] sm:$0xff]
    %v219 = vld [vmem:[#allocation2 + $0x4cc] sm:$0xf]
    %v220 = vld [vmem:[#allocation2 + $0x4d0] sm:$0xff]
    %v221 = vld [vmem:[#allocation2 + $0x4d8] sm:$0xff]
    %v222 = vld [vmem:[#allocation2 + $0x4e0] sm:$0xff]
    %v223 = vld [vmem:[#allocation2 + $0x4e8] sm:$0xf]
    %v224 = vld [vmem:[#allocation2 + $0x4ec] sm:$0xff]
    %v225 = vld [vmem:[#allocation2 + $0x4f4] sm:$0xff]
    %v226 = vld [vmem:[#allocation2 + $0x4fc] sm:$0xff]
    %v227 = vld [vmem:[#allocation2 + $0x504] sm:$0xf]
    %v228 = vld [vmem:[#allocation2 + $0x508] sm:$0xff]
    %v229 = vld [vmem:[#allocation2 + $0x510] sm:$0xff]
    %v230 = vld [vmem:[#allocation2 + $0x518] sm:$0xff]
    %v231 = vld [vmem:[#allocation2 + $0x520] sm:$0xf]
    %v232 = vld [vmem:[#allocation2 + $0x524] sm:$0xff]
    %v233 = vld [vmem:[#allocation2 + $0x52c] sm:$0xff]
    %v234 = vld [vmem:[#allocation2 + $0x534] sm:$0xff]
    %v235 = vld [vmem:[#allocation2 + $0x53c] sm:$0xf]
    %v236 = vld [vmem:[#allocation2 + $0x540] sm:$0xff]
    %v237 = vld [vmem:[#allocation2 + $0x548] sm:$0xff]
    %v238 = vld [vmem:[#allocation2 + $0x550] sm:$0xff]
    %v239 = vld [vmem:[#allocation2 + $0x558] sm:$0xf]
    %v240 = vld [vmem:[#allocation2 + $0x55c] sm:$0xff]
    %v241 = vld [vmem:[#allocation2 + $0x564] sm:$0xff]
    %v242 = vld [vmem:[#allocation2 + $0x56c] sm:$0xff]
    %v243 = vld [vmem:[#allocation2 + $0x574] sm:$0xf]
    %v244 = vld [vmem:[#allocation2 + $0x578] sm:$0xff]
    %v245 = vld [vmem:[#allocation2 + $0x580] sm:$0xff]
    %v246 = vld [vmem:[#allocation2 + $0x588] sm:$0xff]
    %v247 = vld [vmem:[#allocation2 + $0x590] sm:$0xf]
    %v248 = vld [vmem:[#allocation2 + $0x594] sm:$0xff]
    %v249 = vld [vmem:[#allocation2 + $0x59c] sm:$0xff]
    %v250 = vld [vmem:[#allocation2 + $0x5a4] sm:$0xff]
    %v251 = vld [vmem:[#allocation2 + $0x5ac] sm:$0xf]
    %v252 = vld [vmem:[#allocation2 + $0x5b0] sm:$0xff]
    %v253 = vld [vmem:[#allocation2 + $0x5b8] sm:$0xff]
    %v254 = vld [vmem:[#allocation2 + $0x5c0] sm:$0xff]
    %v255 = vld [vmem:[#allocation2 + $0x5c8] sm:$0xf]
    %v256 = vld [vmem:[#allocation2 + $0x5cc] sm:$0xff]
    %v257 = vld [vmem:[#allocation2 + $0x5d4] sm:$0xff]
    %v258 = vld [vmem:[#allocation2 + $0x5dc] sm:$0xff]
    %v259 = vld [vmem:[#allocation2 + $0x5e4] sm:$0xf]
    %v260 = vld [vmem:[#allocation2 + $0x5e8] sm:$0xff]
    %v261 = vld [vmem:[#allocation2 + $0x5f0] sm:$0xff]
    %v262 = vld [vmem:[#allocation2 + $0x5f8] sm:$0xff]
    %v263 = vld [vmem:[#allocation2 + $0x600] sm:$0xf]
    %v264 = vld [vmem:[#allocation2 + $0x604] sm:$0xff]
    %v265 = vld [vmem:[#allocation2 + $0x60c] sm:$0xff]
    %v266 = vld [vmem:[#allocation2 + $0x614] sm:$0xff]
    %v267 = vld [vmem:[#allocation2 + $0x61c] sm:$0xf]
    %v268 = vld [vmem:[#allocation2 + $0x620] sm:$0xff]
    %v269 = vld [vmem:[#allocation2 + $0x628] sm:$0xff]
    %v270 = vld [vmem:[#allocation2 + $0x630] sm:$0xff]
    %v271 = vld [vmem:[#allocation2 + $0x638] sm:$0xf]
    %v272 = vld [vmem:[#allocation2 + $0x63c] sm:$0xff]
    %v273 = vld [vmem:[#allocation2 + $0x644] sm:$0xff]
    %v274 = vld [vmem:[#allocation2 + $0x64c] sm:$0xff]
    %v275 = vld [vmem:[#allocation2 + $0x654] sm:$0xf]
    %v276 = vld [vmem:[#allocation2 + $0x658] sm:$0xff]
    %v277 = vld [vmem:[#allocation2 + $0x660] sm:$0xff]
    %v278 = vld [vmem:[#allocation2 + $0x668] sm:$0xff]
    %v279 = vld [vmem:[#allocation2 + $0x670] sm:$0xf]
    %v280 = vld [vmem:[#allocation2 + $0x674] sm:$0xff]
    %v281 = vld [vmem:[#allocation2 + $0x67c] sm:$0xff]
    %v282 = vld [vmem:[#allocation2 + $0x684] sm:$0xff]
    %v283 = vld [vmem:[#allocation2 + $0x68c] sm:$0xf]
    %v284 = vld [vmem:[#allocation2 + $0x690] sm:$0xff]
    %v285 = vld [vmem:[#allocation2 + $0x698] sm:$0xff]
    %v286 = vld [vmem:[#allocation2 + $0x6a0] sm:$0xff]
    %v287 = vld [vmem:[#allocation2 + $0x6a8] sm:$0xf]
    %v288 = vld [vmem:[#allocation2 + $0x6ac] sm:$0xff]
    %v289 = vld [vmem:[#allocation2 + $0x6b4] sm:$0xff]
    %v290 = vld [vmem:[#allocation2 + $0x6bc] sm:$0xff]
    %v291 = vld [vmem:[#allocation2 + $0x6c4] sm:$0xf]
    %v292 = vld [vmem:[#allocation2 + $0x6c8] sm:$0xff]
    %v293 = vld [vmem:[#allocation2 + $0x6d0] sm:$0xff]
    %v294 = vld [vmem:[#allocation2 + $0x6d8] sm:$0xff]
    %v295 = vld [vmem:[#allocation2 + $0x6e0] sm:$0xf]
    %v296 = vld [vmem:[#allocation2 + $0x6e4] sm:$0xff]
    %v297 = vld [vmem:[#allocation2 + $0x6ec] sm:$0xff]
    %v298 = vld [vmem:[#allocation2 + $0x6f4] sm:$0xff]
    %v299 = vld [vmem:[#allocation2 + $0x6fc] sm:$0xf]
    %v300 = vld [vmem:[#allocation2 + $0x700] sm:$0xff]
    %v301 = vld [vmem:[#allocation2 + $0x708] sm:$0xff]
    %v302 = vld [vmem:[#allocation2 + $0x710] sm:$0xff]
    %v303 = vld [vmem:[#allocation2 + $0x718] sm:$0xf]
    %v304 = vld [vmem:[#allocation2 + $0x71c] sm:$0xff]
    %v305 = vld [vmem:[#allocation2 + $0x724] sm:$0xff]
    %v306 = vld [vmem:[#allocation2 + $0x72c] sm:$0xff]
    %v307 = vld [vmem:[#allocation2 + $0x734] sm:$0xf]
    %v308 = vld [vmem:[#allocation2 + $0x738] sm:$0xff]
    %v309 = vld [vmem:[#allocation2 + $0x740] sm:$0xff]
    %v310 = vld [vmem:[#allocation2 + $0x748] sm:$0xff]
    %v311 = vld [vmem:[#allocation2 + $0x750] sm:$0xf]
    %v312 = vld [vmem:[#allocation2 + $0x754] sm:$0xff]
    %v313 = vld [vmem:[#allocation2 + $0x75c] sm:$0xff]
    %v314 = vld [vmem:[#allocation2 + $0x764] sm:$0xff]
    %v315 = vld [vmem:[#allocation2 + $0x76c] sm:$0xf]
    %v316 = vld [vmem:[#allocation2 + $0x770] sm:$0xff]
    %v317 = vld [vmem:[#allocation2 + $0x778] sm:$0xff]
    %v318 = vld [vmem:[#allocation2 + $0x780] sm:$0xff]
    %v319 = vld [vmem:[#allocation2 + $0x788] sm:$0xf]
    %v320 = vld [vmem:[#allocation2 + $0x78c] sm:$0xff]
    %v321 = vld [vmem:[#allocation2 + $0x794] sm:$0xff]
    %v322 = vld [vmem:[#allocation2 + $0x79c] sm:$0xff]
    %v323 = vld [vmem:[#allocation2 + $0x7a4] sm:$0xf]
    %v324 = vld [vmem:[#allocation2 + $0x7a8] sm:$0xff]
    %v325 = vld [vmem:[#allocation2 + $0x7b0] sm:$0xff]
    %v326 = vld [vmem:[#allocation2 + $0x7b8] sm:$0xff]
    %v327 = vld [vmem:[#allocation2 + $0x7c0] sm:$0xf]
    %v328 = vld [vmem:[#allocation2 + $0x7c4] sm:$0xff]
    %v329 = vld [vmem:[#allocation2 + $0x7cc] sm:$0xff]
    %v330 = vld [vmem:[#allocation2 + $0x7d4] sm:$0xff]
    %v331 = vld [vmem:[#allocation2 + $0x7dc] sm:$0xf]
    %v332 = vld [vmem:[#allocation2 + $0x7e0] sm:$0xff]
    %v333 = vld [vmem:[#allocation2 + $0x7e8] sm:$0xff]
    %v334 = vld [vmem:[#allocation2 + $0x7f0] sm:$0xff]
    %v335 = vld [vmem:[#allocation2 + $0x7f8] sm:$0xf]
    %v336 = vld [vmem:[#allocation2 + $0x7fc] sm:$0xff]
    %v337 = vld [vmem:[#allocation2 + $0x804] sm:$0xff]
    %v338 = vld [vmem:[#allocation2 + $0x80c] sm:$0xff]
    %v339 = vld [vmem:[#allocation2 + $0x814] sm:$0xf]
    %v340 = vld [vmem:[#allocation2 + $0x818] sm:$0xff]
    %v341 = vld [vmem:[#allocation2 + $0x820] sm:$0xff]
    %v342 = vld [vmem:[#allocation2 + $0x828] sm:$0xff]
    %v343 = vld [vmem:[#allocation2 + $0x830] sm:$0xf]
    %v344 = vld [vmem:[#allocation2 + $0x834] sm:$0xff]
    %v345 = vld [vmem:[#allocation2 + $0x83c] sm:$0xff]
    %v346 = vld [vmem:[#allocation2 + $0x844] sm:$0xff]
    %v347 = vld [vmem:[#allocation2 + $0x84c] sm:$0xf]
    %v348 = vld [vmem:[#allocation2 + $0x850] sm:$0xff]
    %v349 = vld [vmem:[#allocation2 + $0x858] sm:$0xff]
    %v350 = vld [vmem:[#allocation2 + $0x860] sm:$0xff]
    %v351 = vld [vmem:[#allocation2 + $0x868] sm:$0xf]
    %v352 = vld [vmem:[#allocation2 + $0x86c] sm:$0xff]
    %v353 = vld [vmem:[#allocation2 + $0x874] sm:$0xff]
    %v354 = vld [vmem:[#allocation2 + $0x87c] sm:$0xff]
    %v355 = vld [vmem:[#allocation2 + $0x884] sm:$0xf]
    %v356 = vld [vmem:[#allocation2 + $0x888] sm:$0xff]
    %v357 = vld [vmem:[#allocation2 + $0x890] sm:$0xff]
    %v358 = vld [vmem:[#allocation2 + $0x898] sm:$0xff]
    %v359 = vld [vmem:[#allocation2 + $0x8a0] sm:$0xf]
    %v360 = vld [vmem:[#allocation2 + $0x8a4] sm:$0xff]
    %v361 = vld [vmem:[#allocation2 + $0x8ac] sm:$0xff]
    %v362 = vld [vmem:[#allocation2 + $0x8b4] sm:$0xff]
    %v363 = vld [vmem:[#allocation2 + $0x8bc] sm:$0xf]
    %v364 = vld [vmem:[#allocation2 + $0x8c0] sm:$0xff]
    %v365 = vld [vmem:[#allocation2 + $0x8c8] sm:$0xff]
    %v366 = vld [vmem:[#allocation2 + $0x8d0] sm:$0xff]
    %v367 = vld [vmem:[#allocation2 + $0x8d8] sm:$0xf]
    %v368 = vld [vmem:[#allocation2 + $0x8dc] sm:$0xff]
    %v369 = vld [vmem:[#allocation2 + $0x8e4] sm:$0xff]
    %v370 = vld [vmem:[#allocation2 + $0x8ec] sm:$0xff]
    %v371 = vld [vmem:[#allocation2 + $0x8f4] sm:$0xf]
    %v372 = vld [vmem:[#allocation2 + $0x8f8] sm:$0xff]
    %v373 = vld [vmem:[#allocation2 + $0x900] sm:$0xff]
    %v374 = vld [vmem:[#allocation2 + $0x908] sm:$0xff]
    %v375 = vld [vmem:[#allocation2 + $0x910] sm:$0xf]
    %v376 = vld [vmem:[#allocation2 + $0x914] sm:$0xff]
    %v377 = vld [vmem:[#allocation2 + $0x91c] sm:$0xff]
    %v378 = vld [vmem:[#allocation2 + $0x924] sm:$0xff]
    %v379 = vld [vmem:[#allocation2 + $0x92c] sm:$0xf]
    %v380 = vld [vmem:[#allocation2 + $0x930] sm:$0xff]
    %v381 = vld [vmem:[#allocation2 + $0x938] sm:$0xff]
    %v382 = vld [vmem:[#allocation2 + $0x940] sm:$0xff]
    %v383 = vld [vmem:[#allocation2 + $0x948] sm:$0xf]
    %v384 = vld [vmem:[#allocation2 + $0x94c] sm:$0xff]
    %v385 = vld [vmem:[#allocation2 + $0x954] sm:$0xff]
    %v386 = vld [vmem:[#allocation2 + $0x95c] sm:$0xff]
    %v387 = vld [vmem:[#allocation2 + $0x964] sm:$0xf]
    %v388 = vld [vmem:[#allocation2 + $0x968] sm:$0xff]
    %v389 = vld [vmem:[#allocation2 + $0x970] sm:$0xff]
    %v390 = vld [vmem:[#allocation2 + $0x978] sm:$0xff]
    %v391 = vld [vmem:[#allocation2 + $0x980] sm:$0xf]
    %v392 = vld [vmem:[#allocation2 + $0x984] sm:$0xff]
    %v393 = vld [vmem:[#allocation2 + $0x98c] sm:$0xff]
    %v394 = vld [vmem:[#allocation2 + $0x994] sm:$0xff]
    %v395 = vld [vmem:[#allocation2 + $0x99c] sm:$0xf]
    %v396 = vld [vmem:[#allocation2 + $0x9a0] sm:$0xff]
    %v397 = vld [vmem:[#allocation2 + $0x9a8] sm:$0xff]
    %v398 = vld [vmem:[#allocation2 + $0x9b0] sm:$0xff]
    %v399 = vld [vmem:[#allocation2 + $0x9b8] sm:$0xf]
    %v400 = vld [vmem:[#allocation2 + $0x9bc] sm:$0xff]
    %v401 = vld [vmem:[#allocation2 + $0x9c4] sm:$0xff]
    %v402 = vld [vmem:[#allocation2 + $0x9cc] sm:$0xff]
    %v403 = vld [vmem:[#allocation2 + $0x9d4] sm:$0xf]
    %v404 = vld [vmem:[#allocation2 + $0x9d8] sm:$0xff]
    %v405 = vld [vmem:[#allocation2 + $0x9e0] sm:$0xff]
    %v406 = vld [vmem:[#allocation2 + $0x9e8] sm:$0xff]
    %v407 = vld [vmem:[#allocation2 + $0x9f0] sm:$0xf]
    %v408 = vld [vmem:[#allocation2 + $0x9f4] sm:$0xff]
    %v409 = vld [vmem:[#allocation2 + $0x9fc] sm:$0xff]
    %v410 = vld [vmem:[#allocation2 + $0xa04] sm:$0xff]
    %v411 = vld [vmem:[#allocation2 + $0xa0c] sm:$0xf]
    %v412 = vld [vmem:[#allocation2 + $0xa10] sm:$0xff]
    %v413 = vld [vmem:[#allocation2 + $0xa18] sm:$0xff]
    %v414 = vld [vmem:[#allocation2 + $0xa20] sm:$0xff]
    %v415 = vld [vmem:[#allocation2 + $0xa28] sm:$0xf]
    %v416 = vld [vmem:[#allocation2 + $0xa2c] sm:$0xff]
    %v417 = vld [vmem:[#allocation2 + $0xa34] sm:$0xff]
    %v418 = vld [vmem:[#allocation2 + $0xa3c] sm:$0xff]
    %v419 = vld [vmem:[#allocation2 + $0xa44] sm:$0xf]
    %v420 = vld [vmem:[#allocation2 + $0xa48] sm:$0xff]
    %v421 = vld [vmem:[#allocation2 + $0xa50] sm:$0xff]
    %v422 = vld [vmem:[#allocation2 + $0xa58] sm:$0xff]
    %v423 = vld [vmem:[#allocation2 + $0xa60] sm:$0xf]
    %v424 = vld [vmem:[#allocation2 + $0xa64] sm:$0xff]
    %v425 = vld [vmem:[#allocation2 + $0xa6c] sm:$0xff]
    %v426 = vld [vmem:[#allocation2 + $0xa74] sm:$0xff]
    %v427 = vld [vmem:[#allocation2 + $0xa7c] sm:$0xf]
    %v428 = vld [vmem:[#allocation2 + $0xa80] sm:$0xff]
    %v429 = vld [vmem:[#allocation2 + $0xa88] sm:$0xff]
    %v430 = vld [vmem:[#allocation2 + $0xa90] sm:$0xff]
    %v431 = vld [vmem:[#allocation2 + $0xa98] sm:$0xf]
    %v432 = vld [vmem:[#allocation2 + $0xa9c] sm:$0xff]
    %v433 = vld [vmem:[#allocation2 + $0xaa4] sm:$0xff]
    %v434 = vld [vmem:[#allocation2 + $0xaac] sm:$0xff]
    %v435 = vld [vmem:[#allocation2 + $0xab4] sm:$0xf]
    %v436 = vld [vmem:[#allocation2 + $0xab8] sm:$0xff]
    %v437 = vld [vmem:[#allocation2 + $0xac0] sm:$0xff]
    %v438 = vld [vmem:[#allocation2 + $0xac8] sm:$0xff]
    %v439 = vld [vmem:[#allocation2 + $0xad0] sm:$0xf]
    %v440 = vld [vmem:[#allocation2 + $0xad4] sm:$0xff]
    %v441 = vld [vmem:[#allocation2 + $0xadc] sm:$0xff]
    %v442 = vld [vmem:[#allocation2 + $0xae4] sm:$0xff]
    %v443 = vld [vmem:[#allocation2 + $0xaec] sm:$0xf]
    %v444 = vld [vmem:[#allocation2 + $0xaf0] sm:$0xff]
    %v445 = vld [vmem:[#allocation2 + $0xaf8] sm:$0xff]
    %v446 = vld [vmem:[#allocation2 + $0xb00] sm:$0xff]
    %v447 = vld [vmem:[#allocation2 + $0xb08] sm:$0xf]
    %v448 = vld [vmem:[#allocation2 + $0xb0c] sm:$0xff]
    %v449 = vld [vmem:[#allocation2 + $0xb14] sm:$0xff]
    %v450 = vld [vmem:[#allocation2 + $0xb1c] sm:$0xff]
    %v451 = vld [vmem:[#allocation2 + $0xb24] sm:$0xf]
    %v452 = vld [vmem:[#allocation2 + $0xb28] sm:$0xff]
    %v453 = vld [vmem:[#allocation2 + $0xb30] sm:$0xff]
    %v454 = vld [vmem:[#allocation2 + $0xb38] sm:$0xff]
    %v455 = vld [vmem:[#allocation2 + $0xb40] sm:$0xf]
    %v456 = vld [vmem:[#allocation2 + $0xb44] sm:$0xff]
    %v457 = vld [vmem:[#allocation2 + $0xb4c] sm:$0xff]
    %v458 = vld [vmem:[#allocation2 + $0xb54] sm:$0xff]
    %v459 = vld [vmem:[#allocation2 + $0xb5c] sm:$0xf]
    %v460 = vld [vmem:[#allocation2 + $0xb60] sm:$0xff]
    %v461 = vld [vmem:[#allocation2 + $0xb68] sm:$0xff]
    %v462 = vld [vmem:[#allocation2 + $0xb70] sm:$0xff]
    %v463 = vld [vmem:[#allocation2 + $0xb78] sm:$0xf]
    %v464 = vld [vmem:[#allocation2 + $0xb7c] sm:$0xff]
    %v465 = vld [vmem:[#allocation2 + $0xb84] sm:$0xff]
    %v466 = vld [vmem:[#allocation2 + $0xb8c] sm:$0xff]
    %v467 = vld [vmem:[#allocation2 + $0xb94] sm:$0xf]
    %v468 = vld [vmem:[#allocation2 + $0xb98] sm:$0xff]
    %v469 = vld [vmem:[#allocation2 + $0xba0] sm:$0xff]
    %v470 = vld [vmem:[#allocation2 + $0xba8] sm:$0xff]
    %v471 = vld [vmem:[#allocation2 + $0xbb0] sm:$0xf]
    %v472 = vld [vmem:[#allocation2 + $0xbb4] sm:$0xff]
    %v473 = vld [vmem:[#allocation2 + $0xbbc] sm:$0xff]
    %v474 = vld [vmem:[#allocation2 + $0xbc4] sm:$0xff]
    %v475 = vld [vmem:[#allocation2 + $0xbcc] sm:$0xf]
    %v476 = vld [vmem:[#allocation2 + $0xbd0] sm:$0xff]
    %v477 = vld [vmem:[#allocation2 + $0xbd8] sm:$0xff]
    %v478 = vld [vmem:[#allocation2 + $0xbe0] sm:$0xff]
    %v479 = vld [vmem:[#allocation2 + $0xbe8] sm:$0xf]
    %v480 = vld [vmem:[#allocation2 + $0xbec] sm:$0xff]
    %v481 = vld [vmem:[#allocation2 + $0xbf4] sm:$0xff]
    %v482 = vld [vmem:[#allocation2 + $0xbfc] sm:$0xff]
    %v483 = vld [vmem:[#allocation2 + $0xc04] sm:$0xf]
    %v484 = vld [vmem:[#allocation2 + $0xc08] sm:$0xff]
    %v485 = vld [vmem:[#allocation2 + $0xc10] sm:$0xff]
    %v486 = vld [vmem:[#allocation2 + $0xc18] sm:$0xff]
    %v487 = vld [vmem:[#allocation2 + $0xc20] sm:$0xf]
    %v488 = vld [vmem:[#allocation2 + $0xc24] sm:$0xff]
    %v489 = vld [vmem:[#allocation2 + $0xc2c] sm:$0xff]
    %v490 = vld [vmem:[#allocation2 + $0xc34] sm:$0xff]
    %v491 = vld [vmem:[#allocation2 + $0xc3c] sm:$0xf]
    %v492 = vld [vmem:[#allocation2 + $0xc40] sm:$0xff]
    %v493 = vld [vmem:[#allocation2 + $0xc48] sm:$0xff]
    %v494 = vld [vmem:[#allocation2 + $0xc50] sm:$0xff]
    %v495 = vld [vmem:[#allocation2 + $0xc58] sm:$0xf]
    %v496 = vld [vmem:[#allocation2 + $0xc5c] sm:$0xff]
    %v497 = vld [vmem:[#allocation2 + $0xc64] sm:$0xff]
    %v498 = vld [vmem:[#allocation2 + $0xc6c] sm:$0xff]
    %v499 = vld [vmem:[#allocation2 + $0xc74] sm:$0xf]
    %v500 = vld [vmem:[#allocation2 + $0xc78] sm:$0xff]
    %v501 = vld [vmem:[#allocation2 + $0xc80] sm:$0xff]
    %v502 = vld [vmem:[#allocation2 + $0xc88] sm:$0xff]
    %v503 = vld [vmem:[#allocation2 + $0xc90] sm:$0xf]
    %v504 = vld [vmem:[#allocation2 + $0xc94] sm:$0xff]
    %v505 = vld [vmem:[#allocation2 + $0xc9c] sm:$0xff]
    %v506 = vld [vmem:[#allocation2 + $0xca4] sm:$0xff]
    %v507 = vld [vmem:[#allocation2 + $0xcac] sm:$0xf]
    %v508 = vld [vmem:[#allocation2 + $0xcb0] sm:$0xff]
    %v509 = vld [vmem:[#allocation2 + $0xcb8] sm:$0xff]
    %v510 = vld [vmem:[#allocation2 + $0xcc0] sm:$0xff]
    %v511 = vld [vmem:[#allocation2 + $0xcc8] sm:$0xf]
    %v512 = vld [vmem:[#allocation2 + $0xccc] sm:$0xff]
    %v513 = vld [vmem:[#allocation2 + $0xcd4] sm:$0xff]
    %v514 = vld [vmem:[#allocation2 + $0xcdc] sm:$0xff]
    %v515 = vld [vmem:[#allocation2 + $0xce4] sm:$0xf]
    %v516 = vld [vmem:[#allocation2 + $0xce8] sm:$0xff]
    %v517 = vld [vmem:[#allocation2 + $0xcf0] sm:$0xff]
    %v518 = vld [vmem:[#allocation2 + $0xcf8] sm:$0xff]
    %v519 = vld [vmem:[#allocation2 + $0xd00] sm:$0xf]
    %v520 = vld [vmem:[#allocation2 + $0xd04] sm:$0xff]
    %v521 = vld [vmem:[#allocation2 + $0xd0c] sm:$0xff]
    %v522 = vld [vmem:[#allocation2 + $0xd14] sm:$0xff]
    %v523 = vld [vmem:[#allocation2 + $0xd1c] sm:$0xf]
    %v524 = vld [vmem:[#allocation2 + $0xd20] sm:$0xff]
    %v525 = vld [vmem:[#allocation2 + $0xd28] sm:$0xff]
    %v526 = vld [vmem:[#allocation2 + $0xd30] sm:$0xff]
    %v527 = vld [vmem:[#allocation2 + $0xd38] sm:$0xf]
    %v528 = vld [vmem:[#allocation2 + $0xd3c] sm:$0xff]
    %v529 = vld [vmem:[#allocation2 + $0xd44] sm:$0xff]
    %v530 = vld [vmem:[#allocation2 + $0xd4c] sm:$0xff]
    %v531 = vld [vmem:[#allocation2 + $0xd54] sm:$0xf]
    %v532 = vld [vmem:[#allocation2 + $0xd58] sm:$0xff]
    %v533 = vld [vmem:[#allocation2 + $0xd60] sm:$0xff]
    %v534 = vld [vmem:[#allocation2 + $0xd68] sm:$0xff]
    %v535 = vld [vmem:[#allocation2 + $0xd70] sm:$0xf]
    %v536 = vld [vmem:[#allocation2 + $0xd74] sm:$0xff]
    %v537 = vld [vmem:[#allocation2 + $0xd7c] sm:$0xff]
    %v538 = vld [vmem:[#allocation2 + $0xd84] sm:$0xff]
    %v539 = vld [vmem:[#allocation2 + $0xd8c] sm:$0xf]
    %v540 = vld [vmem:[#allocation2 + $0xd90] sm:$0xff]
    %v541 = vld [vmem:[#allocation2 + $0xd98] sm:$0xff]
    %v542 = vld [vmem:[#allocation2 + $0xda0] sm:$0xff]
    %v543 = vld [vmem:[#allocation2 + $0xda8] sm:$0xf]
    %v544 = vld [vmem:[#allocation2 + $0xdac] sm:$0xff]
    %v545 = vld [vmem:[#allocation2 + $0xdb4] sm:$0xff]
    %v546 = vld [vmem:[#allocation2 + $0xdbc] sm:$0xff]
    %v547 = vld [vmem:[#allocation2 + $0xdc4] sm:$0xf]
    %v548 = vld [vmem:[#allocation2 + $0xdc8] sm:$0xff]
    %v549 = vld [vmem:[#allocation2 + $0xdd0] sm:$0xff]
    %v550 = vld [vmem:[#allocation2 + $0xdd8] sm:$0xff]
    %v551 = vld [vmem:[#allocation2 + $0xde0] sm:$0xf]
    %v552 = vld [vmem:[#allocation2 + $0xde4] sm:$0xff]
    %v553 = vld [vmem:[#allocation2 + $0xdec] sm:$0xff]
    %v554 = vld [vmem:[#allocation2 + $0xdf4] sm:$0xff]
    %v555 = vld [vmem:[#allocation2 + $0xdfc] sm:$0xf]
    %v556 = vld [vmem:[#allocation2 + $0xe00] sm:$0xff]
    %v557 = vld [vmem:[#allocation2 + $0xe08] sm:$0xff]
    %v558 = vld [vmem:[#allocation2 + $0xe10] sm:$0xff]
    %v559 = vld [vmem:[#allocation2 + $0xe18] sm:$0xf]
    %v560 = vld [vmem:[#allocation2 + $0xe1c] sm:$0xff]
    %v561 = vld [vmem:[#allocation2 + $0xe24] sm:$0xff]
    %v562 = vld [vmem:[#allocation2 + $0xe2c] sm:$0xff]
    %v563 = vld [vmem:[#allocation2 + $0xe34] sm:$0xf]
    %v564 = vld [vmem:[#allocation2 + $0xe38] sm:$0xff]
    %v565 = vld [vmem:[#allocation2 + $0xe40] sm:$0xff]
    %v566 = vld [vmem:[#allocation2 + $0xe48] sm:$0xff]
    %v567 = vld [vmem:[#allocation2 + $0xe50] sm:$0xf]
    %v568 = vld [vmem:[#allocation2 + $0xe54] sm:$0xff]
    %v569 = vld [vmem:[#allocation2 + $0xe5c] sm:$0xff]
    %v570 = vld [vmem:[#allocation2 + $0xe64] sm:$0xff]
    %v571 = vld [vmem:[#allocation2 + $0xe6c] sm:$0xf]
    %v572 = vld [vmem:[#allocation2 + $0xe70] sm:$0xff]
    %v573 = vld [vmem:[#allocation2 + $0xe78] sm:$0xff]
    %v574 = vld [vmem:[#allocation2 + $0xe80] sm:$0xff]
    %v575 = vld [vmem:[#allocation2 + $0xe88] sm:$0xf]
    %v576 = vld [vmem:[#allocation2 + $0xe8c] sm:$0xff]
    %v577 = vld [vmem:[#allocation2 + $0xe94] sm:$0xff]
    %v578 = vld [vmem:[#allocation2 + $0xe9c] sm:$0xff]
    %v579 = vld [vmem:[#allocation2 + $0xea4] sm:$0xf]
    %v580 = vld [vmem:[#allocation2 + $0xea8] sm:$0xff]
    %v581 = vld [vmem:[#allocation2 + $0xeb0] sm:$0xff]
    %v582 = vld [vmem:[#allocation2 + $0xeb8] sm:$0xff]
    %v583 = vld [vmem:[#allocation2 + $0xec0] sm:$0xf]
    %v584 = vld [vmem:[#allocation2 + $0xec4] sm:$0xff]
    %v585 = vld [vmem:[#allocation2 + $0xecc] sm:$0xff]
    %v586 = vld [vmem:[#allocation2 + $0xed4] sm:$0xff]
    %v587 = vld [vmem:[#allocation2 + $0xedc] sm:$0xf]
    %v588 = vld [vmem:[#allocation2 + $0xee0] sm:$0xff]
    %v589 = vld [vmem:[#allocation2 + $0xee8] sm:$0xff]
    %v590 = vld [vmem:[#allocation2 + $0xef0] sm:$0xff]
    %v591 = vld [vmem:[#allocation2 + $0xef8] sm:$0xf]
    %v592 = vld [vmem:[#allocation2 + $0xefc] sm:$0xff]
    %v593 = vld [vmem:[#allocation2 + $0xf04] sm:$0xff]
    %v594 = vld [vmem:[#allocation2 + $0xf0c] sm:$0xff]
    %v595 = vld [vmem:[#allocation2 + $0xf14] sm:$0xf]
    %v596 = vld [vmem:[#allocation2 + $0xf18] sm:$0xff]
    %v597 = vld [vmem:[#allocation2 + $0xf20] sm:$0xff]
    %v598 = vld [vmem:[#allocation2 + $0xf28] sm:$0xff]
    %v599 = vld [vmem:[#allocation2 + $0xf30] sm:$0xf]
    %v600 = vld [vmem:[#allocation2 + $0xf34] sm:$0xff]
    %v601 = vld [vmem:[#allocation2 + $0xf3c] sm:$0xff]
    %v602 = vld [vmem:[#allocation2 + $0xf44] sm:$0xff]
    %v603 = vld [vmem:[#allocation2 + $0xf4c] sm:$0xf]
    %v604 = vld [vmem:[#allocation2 + $0xf50] sm:$0xff]
    %v605 = vld [vmem:[#allocation2 + $0xf58] sm:$0xff]
    %v606 = vld [vmem:[#allocation2 + $0xf60] sm:$0xff]
    %v607 = vld [vmem:[#allocation2 + $0xf68] sm:$0xf]
    %v608 = vld [vmem:[#allocation2 + $0xf6c] sm:$0xff]
    %v609 = vld [vmem:[#allocation2 + $0xf74] sm:$0xff]
    %v610 = vld [vmem:[#allocation2 + $0xf7c] sm:$0xff]
    %v611 = vld [vmem:[#allocation2 + $0xf84] sm:$0xf]
    %v612 = vld [vmem:[#allocation2 + $0xf88] sm:$0xff]
    %v613 = vld [vmem:[#allocation2 + $0xf90] sm:$0xff]
    %v614 = vld [vmem:[#allocation2 + $0xf98] sm:$0xff]
    %v615 = vld [vmem:[#allocation2 + $0xfa0] sm:$0xf]
    %v616 = vld [vmem:[#allocation2 + $0xfa4] sm:$0xff]
    %v617 = vld [vmem:[#allocation2 + $0xfac] sm:$0xff]
    %v618 = vld [vmem:[#allocation2 + $0xfb4] sm:$0xff]
    %v619 = vld [vmem:[#allocation2 + $0xfbc] sm:$0xf]
    %v620 = vld [vmem:[#allocation2 + $0xfc0] sm:$0xff]
    %v621 = vld [vmem:[#allocation2 + $0xfc8] sm:$0xff]
    %v622 = vld [vmem:[#allocation2 + $0xfd0] sm:$0xff]
    %v623 = vld [vmem:[#allocation2 + $0xfd8] sm:$0xf]
    %v624 = vld [vmem:[#allocation2 + $0xfdc] sm:$0xff]
    %v625 = vld [vmem:[#allocation2 + $0xfe4] sm:$0xff]
    %v626 = vld [vmem:[#allocation2 + $0xfec] sm:$0xff]
    %v627 = vld [vmem:[#allocation2 + $0xff4] sm:$0xf]
    %v628 = vld [vmem:[#allocation2 + $0xff8] sm:$0xff]
    %v629 = vld [vmem:[#allocation2 + $0x1000] sm:$0xff]
    %v630 = vld [vmem:[#allocation2 + $0x1008] sm:$0xff]
    %v631 = vld [vmem:[#allocation2 + $0x1010] sm:$0xf]
    %v632 = vld [vmem:[#allocation2 + $0x1014] sm:$0xff]
    %v633 = vld [vmem:[#allocation2 + $0x101c] sm:$0xff]
    %v634 = vld [vmem:[#allocation2 + $0x1024] sm:$0xff]
    %v635 = vld [vmem:[#allocation2 + $0x102c] sm:$0xf]
    %v636 = vld [vmem:[#allocation2 + $0x1030] sm:$0xff]
    %v637 = vld [vmem:[#allocation2 + $0x1038] sm:$0xff]
    %v638 = vld [vmem:[#allocation2 + $0x1040] sm:$0xff]
    %v639 = vld [vmem:[#allocation2 + $0x1048] sm:$0xf]
    %v640 = vld [vmem:[#allocation2 + $0x104c] sm:$0xff]
    %v641 = vld [vmem:[#allocation2 + $0x1054] sm:$0xff]
    %v642 = vld [vmem:[#allocation2 + $0x105c] sm:$0xff]
    %v643 = vld [vmem:[#allocation2 + $0x1064] sm:$0xf]
    %v644 = vld [vmem:[#allocation2 + $0x1068] sm:$0xff]
    %v645 = vld [vmem:[#allocation2 + $0x1070] sm:$0xff]
    %v646 = vld [vmem:[#allocation2 + $0x1078] sm:$0xff]
    %v647 = vld [vmem:[#allocation2 + $0x1080] sm:$0xf]
    %v648 = vld [vmem:[#allocation2 + $0x1084] sm:$0xff]
    %v649 = vld [vmem:[#allocation2 + $0x108c] sm:$0xff]
    %v650 = vld [vmem:[#allocation2 + $0x1094] sm:$0xff]
    %v651 = vld [vmem:[#allocation2 + $0x109c] sm:$0xf]
    %v652 = vld [vmem:[#allocation2 + $0x10a0] sm:$0xff]
    %v653 = vld [vmem:[#allocation2 + $0x10a8] sm:$0xff]
    %v654 = vld [vmem:[#allocation2 + $0x10b0] sm:$0xff]
    %v655 = vld [vmem:[#allocation2 + $0x10b8] sm:$0xf]
    %v656 = vld [vmem:[#allocation2 + $0x10bc] sm:$0xff]
    %v657 = vld [vmem:[#allocation2 + $0x10c4] sm:$0xff]
    %v658 = vld [vmem:[#allocation2 + $0x10cc] sm:$0xff]
    %v659 = vld [vmem:[#allocation2 + $0x10d4] sm:$0xf]
    %v660 = vld [vmem:[#allocation2 + $0x10d8] sm:$0xff]
    %v661 = vld [vmem:[#allocation2 + $0x10e0] sm:$0xff]
    %v662 = vld [vmem:[#allocation2 + $0x10e8] sm:$0xff]
    %v663 = vld [vmem:[#allocation2 + $0x10f0] sm:$0xf]
    %v664 = vld [vmem:[#allocation2 + $0x10f4] sm:$0xff]
    %v665 = vld [vmem:[#allocation2 + $0x10fc] sm:$0xff]
    %v666 = vld [vmem:[#allocation2 + $0x1104] sm:$0xff]
    %v667 = vld [vmem:[#allocation2 + $0x110c] sm:$0xf]
    %v668 = vld [vmem:[#allocation2 + $0x1110] sm:$0xff]
    %v669 = vld [vmem:[#allocation2 + $0x1118] sm:$0xff]
    %v670 = vld [vmem:[#allocation2 + $0x1120] sm:$0xff]
    %v671 = vld [vmem:[#allocation2 + $0x1128] sm:$0xf]
    %v672 = vld [vmem:[#allocation2 + $0x112c] sm:$0xff]
    %v673 = vld [vmem:[#allocation2 + $0x1134] sm:$0xff]
    %v674 = vld [vmem:[#allocation2 + $0x113c] sm:$0xff]
    %v675 = vld [vmem:[#allocation2 + $0x1144] sm:$0xf]
    %v676 = vld [vmem:[#allocation2 + $0x1148] sm:$0xff]
    %v677 = vld [vmem:[#allocation2 + $0x1150] sm:$0xff]
    %v678 = vld [vmem:[#allocation2 + $0x1158] sm:$0xff]
    %v679 = vld [vmem:[#allocation2 + $0x1160] sm:$0xf]
    %v680 = vld [vmem:[#allocation2 + $0x1164] sm:$0xff]
    %v681 = vld [vmem:[#allocation2 + $0x116c] sm:$0xff]
    %v682 = vld [vmem:[#allocation2 + $0x1174] sm:$0xff]
    %v683 = vld [vmem:[#allocation2 + $0x117c] sm:$0xf]
    %v684 = vld [vmem:[#allocation2 + $0x1180] sm:$0xff]
    %v685 = vld [vmem:[#allocation2 + $0x1188] sm:$0xff]
    %v686 = vld [vmem:[#allocation2 + $0x1190] sm:$0xff]
    %v687 = vld [vmem:[#allocation2 + $0x1198] sm:$0xf]
    %v688 = vld [vmem:[#allocation2 + $0x119c] sm:$0xff]
    %v689 = vld [vmem:[#allocation2 + $0x11a4] sm:$0xff]
    %v690 = vld [vmem:[#allocation2 + $0x11ac] sm:$0xff]
    %v691 = vld [vmem:[#allocation2 + $0x11b4] sm:$0xf]
    %v692 = vld [vmem:[#allocation2 + $0x11b8] sm:$0xff]
    %v693 = vld [vmem:[#allocation2 + $0x11c0] sm:$0xff]
    %v694 = vld [vmem:[#allocation2 + $0x11c8] sm:$0xff]
    %v695 = vld [vmem:[#allocation2 + $0x11d0] sm:$0xf]
    %v696 = vld [vmem:[#allocation2 + $0x11d4] sm:$0xff]
    %v697 = vld [vmem:[#allocation2 + $0x11dc] sm:$0xff]
    %v698 = vld [vmem:[#allocation2 + $0x11e4] sm:$0xff]
    %v699 = vld [vmem:[#allocation2 + $0x11ec] sm:$0xf]
    %v700 = vld [vmem:[#allocation2 + $0x11f0] sm:$0xff]
    %v701 = vld [vmem:[#allocation2 + $0x11f8] sm:$0xff]
    %v702 = vld [vmem:[#allocation2 + $0x1200] sm:$0xff]
    %v703 = vld [vmem:[#allocation2 + $0x1208] sm:$0xf]
    %v704 = vld [vmem:[#allocation2 + $0x120c] sm:$0xff]
    %v705 = vld [vmem:[#allocation2 + $0x1214] sm:$0xff]
    %v706 = vld [vmem:[#allocation2 + $0x121c] sm:$0xff]
    %v707 = vld [vmem:[#allocation2 + $0x1224] sm:$0xf]
    %v708 = vld [vmem:[#allocation2 + $0x1228] sm:$0xff]
    %v709 = vld [vmem:[#allocation2 + $0x1230] sm:$0xff]
    %v710 = vld [vmem:[#allocation2 + $0x1238] sm:$0xff]
    %v711 = vld [vmem:[#allocation2 + $0x1240] sm:$0xf]
    %v712 = vld [vmem:[#allocation2 + $0x1244] sm:$0xff]
    %v713 = vld [vmem:[#allocation2 + $0x124c] sm:$0xff]
    %v714 = vld [vmem:[#allocation2 + $0x1254] sm:$0xff]
    %v715 = vld [vmem:[#allocation2 + $0x125c] sm:$0xf]
    %v716 = vld [vmem:[#allocation2 + $0x1260] sm:$0xff]
    %v717 = vld [vmem:[#allocation2 + $0x1268] sm:$0xff]
    %v718 = vld [vmem:[#allocation2 + $0x1270] sm:$0xff]
    %v719 = vld [vmem:[#allocation2 + $0x1278] sm:$0xf]
    %v720 = vld [vmem:[#allocation2 + $0x127c] sm:$0xff]
    %v721 = vld [vmem:[#allocation2 + $0x1284] sm:$0xff]
    %v722 = vld [vmem:[#allocation2 + $0x128c] sm:$0xff]
    %v723 = vld [vmem:[#allocation2 + $0x1294] sm:$0xf]
    %v724 = vld [vmem:[#allocation2 + $0x1298] sm:$0xff]
    %v725 = vld [vmem:[#allocation2 + $0x12a0] sm:$0xff]
    %v726 = vld [vmem:[#allocation2 + $0x12a8] sm:$0xff]
    %v727 = vld [vmem:[#allocation2 + $0x12b0] sm:$0xf]
    %v728 = vld [vmem:[#allocation2 + $0x12b4] sm:$0xff]
    %v729 = vld [vmem:[#allocation2 + $0x12bc] sm:$0xff]
    %v730 = vld [vmem:[#allocation2 + $0x12c4] sm:$0xff]
    %v731 = vld [vmem:[#allocation2 + $0x12cc] sm:$0xf]
    %v732 = vld [vmem:[#allocation2 + $0x12d0] sm:$0xff]
    %v733 = vld [vmem:[#allocation2 + $0x12d8] sm:$0xff]
    %v734 = vld [vmem:[#allocation2 + $0x12e0] sm:$0xff]
    %v735 = vld [vmem:[#allocation2 + $0x12e8] sm:$0xf]
    %v736 = vld [vmem:[#allocation2 + $0x12ec] sm:$0xff]
    %v737 = vld [vmem:[#allocation2 + $0x12f4] sm:$0xff]
    %v738 = vld [vmem:[#allocation2 + $0x12fc] sm:$0xff]
    %v739 = vld [vmem:[#allocation2 + $0x1304] sm:$0xf]
    %v740 = vld [vmem:[#allocation2 + $0x1308] sm:$0xff]
    %v741 = vld [vmem:[#allocation2 + $0x1310] sm:$0xff]
    %v742 = vld [vmem:[#allocation2 + $0x1318] sm:$0xff]
    %v743 = vld [vmem:[#allocation2 + $0x1320] sm:$0xf]
    %v744 = vld [vmem:[#allocation2 + $0x1324] sm:$0xff]
    %v745 = vld [vmem:[#allocation2 + $0x132c] sm:$0xff]
    %v746 = vld [vmem:[#allocation2 + $0x1334] sm:$0xff]
    %v747 = vld [vmem:[#allocation2 + $0x133c] sm:$0xf]
    %v748 = vld [vmem:[#allocation2 + $0x1340] sm:$0xff]
    %v749 = vld [vmem:[#allocation2 + $0x1348] sm:$0xff]
    %v750 = vld [vmem:[#allocation2 + $0x1350] sm:$0xff]
    %v751 = vld [vmem:[#allocation2 + $0x1358] sm:$0xf]
    %v752 = vld [vmem:[#allocation2 + $0x135c] sm:$0xff]
    %v753 = vld [vmem:[#allocation2 + $0x1364] sm:$0xff]
    %v754 = vld [vmem:[#allocation2 + $0x136c] sm:$0xff]
    %v755 = vld [vmem:[#allocation2 + $0x1374] sm:$0xf]
    %v756 = vld [vmem:[#allocation2 + $0x1378] sm:$0xff]
    %v757 = vld [vmem:[#allocation2 + $0x1380] sm:$0xff]
    %v758 = vld [vmem:[#allocation2 + $0x1388] sm:$0xff]
    %v759 = vld [vmem:[#allocation2 + $0x1390] sm:$0xf]
    %v760 = vld [vmem:[#allocation2 + $0x1394] sm:$0xff]
    %v761 = vld [vmem:[#allocation2 + $0x139c] sm:$0xff]
    %v762 = vld [vmem:[#allocation2 + $0x13a4] sm:$0xff]
    %v763 = vld [vmem:[#allocation2 + $0x13ac] sm:$0xf]
    %v764 = vld [vmem:[#allocation2 + $0x13b0] sm:$0xff]
    %v765 = vld [vmem:[#allocation2 + $0x13b8] sm:$0xff]
    %v766 = vld [vmem:[#allocation2 + $0x13c0] sm:$0xff]
    %v767 = vld [vmem:[#allocation2 + $0x13c8] sm:$0xf]
    %v768 = vld [vmem:[#allocation2 + $0x13cc] sm:$0xff]
    %v769 = vld [vmem:[#allocation2 + $0x13d4] sm:$0xff]
    %v770 = vld [vmem:[#allocation2 + $0x13dc] sm:$0xff]
    %v771 = vld [vmem:[#allocation2 + $0x13e4] sm:$0xf]
    %v772 = vld [vmem:[#allocation2 + $0x13e8] sm:$0xff]
    %v773 = vld [vmem:[#allocation2 + $0x13f0] sm:$0xff]
    %v774 = vld [vmem:[#allocation2 + $0x13f8] sm:$0xff]
    %v775 = vld [vmem:[#allocation2 + $0x1400] sm:$0xf]
    %v776 = vld [vmem:[#allocation2 + $0x1404] sm:$0xff]
    %v777 = vld [vmem:[#allocation2 + $0x140c] sm:$0xff]
    %v778 = vld [vmem:[#allocation2 + $0x1414] sm:$0xff]
    %v779 = vld [vmem:[#allocation2 + $0x141c] sm:$0xf]
    %v780 = vld [vmem:[#allocation2 + $0x1420] sm:$0xff]
    %v781 = vld [vmem:[#allocation2 + $0x1428] sm:$0xff]
    %v782 = vld [vmem:[#allocation2 + $0x1430] sm:$0xff]
    %v783 = vld [vmem:[#allocation2 + $0x1438] sm:$0xf]
    %v784 = vld [vmem:[#allocation2 + $0x143c] sm:$0xff]
    %v785 = vld [vmem:[#allocation2 + $0x1444] sm:$0xff]
    %v786 = vld [vmem:[#allocation2 + $0x144c] sm:$0xff]
    %v787 = vld [vmem:[#allocation2 + $0x1454] sm:$0xf]
    %v788 = vld [vmem:[#allocation2 + $0x1458] sm:$0xff]
    %v789 = vld [vmem:[#allocation2 + $0x1460] sm:$0xff]
    %v790 = vld [vmem:[#allocation2 + $0x1468] sm:$0xff]
    %v791 = vld [vmem:[#allocation2 + $0x1470] sm:$0xf]
    %v792 = vld [vmem:[#allocation2 + $0x1474] sm:$0xff]
    %v793 = vld [vmem:[#allocation2 + $0x147c] sm:$0xff]
    %v794 = vld [vmem:[#allocation2 + $0x1484] sm:$0xff]
    %v795 = vld [vmem:[#allocation2 + $0x148c] sm:$0xf]
    %v796 = vld [vmem:[#allocation2 + $0x1490] sm:$0xff]
    %v797 = vld [vmem:[#allocation2 + $0x1498] sm:$0xff]
    %v798 = vld [vmem:[#allocation2 + $0x14a0] sm:$0xff]
    %v799 = vld [vmem:[#allocation2 + $0x14a8] sm:$0xf]
    %v800 = vld [vmem:[#allocation2 + $0x14ac] sm:$0xff]
    %v801 = vld [vmem:[#allocation2 + $0x14b4] sm:$0xff]
    %v802 = vld [vmem:[#allocation2 + $0x14bc] sm:$0xff]
    %v803 = vld [vmem:[#allocation2 + $0x14c4] sm:$0xf]
    %v804 = vld [vmem:[#allocation2 + $0x14c8] sm:$0xff]
    %v805 = vld [vmem:[#allocation2 + $0x14d0] sm:$0xff]
    %v806 = vld [vmem:[#allocation2 + $0x14d8] sm:$0xff]
    %v807 = vld [vmem:[#allocation2 + $0x14e0] sm:$0xf]
    %v808 = vld [vmem:[#allocation2 + $0x14e4] sm:$0xff]
    %v809 = vld [vmem:[#allocation2 + $0x14ec] sm:$0xff]
    %v810 = vld [vmem:[#allocation2 + $0x14f4] sm:$0xff]
    %v811 = vld [vmem:[#allocation2 + $0x14fc] sm:$0xf]
    %v812 = vld [vmem:[#allocation2 + $0x1500] sm:$0xff]
    %v813 = vld [vmem:[#allocation2 + $0x1508] sm:$0xff]
    %v814 = vld [vmem:[#allocation2 + $0x1510] sm:$0xff]
    %v815 = vld [vmem:[#allocation2 + $0x1518] sm:$0xf]
    %v816 = vld [vmem:[#allocation2 + $0x151c] sm:$0xff]
    %v817 = vld [vmem:[#allocation2 + $0x1524] sm:$0xff]
    %v818 = vld [vmem:[#allocation2 + $0x152c] sm:$0xff]
    %v819 = vld [vmem:[#allocation2 + $0x1534] sm:$0xf]
    %v820 = vld [vmem:[#allocation2 + $0x1538] sm:$0xff]
    %v821 = vld [vmem:[#allocation2 + $0x1540] sm:$0xff]
    %v822 = vld [vmem:[#allocation2 + $0x1548] sm:$0xff]
    %v823 = vld [vmem:[#allocation2 + $0x1550] sm:$0xf]
    %v824 = vld [vmem:[#allocation2 + $0x1554] sm:$0xff]
    %v825 = vld [vmem:[#allocation2 + $0x155c] sm:$0xff]
    %v826 = vld [vmem:[#allocation2 + $0x1564] sm:$0xff]
    %v827 = vld [vmem:[#allocation2 + $0x156c] sm:$0xf]
    %v828 = vld [vmem:[#allocation2 + $0x1570] sm:$0xff]
    %v829 = vld [vmem:[#allocation2 + $0x1578] sm:$0xff]
    %v830 = vld [vmem:[#allocation2 + $0x1580] sm:$0xff]
    %v831 = vld [vmem:[#allocation2 + $0x1588] sm:$0xf]
    %v832 = vld [vmem:[#allocation2 + $0x158c] sm:$0xff]
    %v833 = vld [vmem:[#allocation2 + $0x1594] sm:$0xff]
    %v834 = vld [vmem:[#allocation2 + $0x159c] sm:$0xff]
    %v835 = vld [vmem:[#allocation2 + $0x15a4] sm:$0xf]
    %v836 = vld [vmem:[#allocation2 + $0x15a8] sm:$0xff]
    %v837 = vld [vmem:[#allocation2 + $0x15b0] sm:$0xff]
    %v838 = vld [vmem:[#allocation2 + $0x15b8] sm:$0xff]
    %v839 = vld [vmem:[#allocation2 + $0x15c0] sm:$0xf]
    %v840 = vld [vmem:[#allocation2 + $0x15c4] sm:$0xff]
    %v841 = vld [vmem:[#allocation2 + $0x15cc] sm:$0xff]
    %v842 = vld [vmem:[#allocation2 + $0x15d4] sm:$0xff]
    %v843 = vld [vmem:[#allocation2 + $0x15dc] sm:$0xf]
    %v844 = vld [vmem:[#allocation2 + $0x15e0] sm:$0xff]
    %v845 = vld [vmem:[#allocation2 + $0x15e8] sm:$0xff]
    %v846 = vld [vmem:[#allocation2 + $0x15f0] sm:$0xff]
    %v847 = vld [vmem:[#allocation2 + $0x15f8] sm:$0xf]
    %v848 = vld [vmem:[#allocation2 + $0x15fc] sm:$0xff]
    %v849 = vld [vmem:[#allocation2 + $0x1604] sm:$0xff]
    %v850 = vld [vmem:[#allocation2 + $0x160c] sm:$0xff]
    %v851 = vld [vmem:[#allocation2 + $0x1614] sm:$0xf]
    %v852 = vld [vmem:[#allocation2 + $0x1618] sm:$0xff]
    %v853 = vld [vmem:[#allocation2 + $0x1620] sm:$0xff]
    %v854 = vld [vmem:[#allocation2 + $0x1628] sm:$0xff]
    %v855 = vld [vmem:[#allocation2 + $0x1630] sm:$0xf]
    %v856 = vld [vmem:[#allocation2 + $0x1634] sm:$0xff]
    %v857 = vld [vmem:[#allocation2 + $0x163c] sm:$0xff]
    %v858 = vld [vmem:[#allocation2 + $0x1644] sm:$0xff]
    %v859 = vld [vmem:[#allocation2 + $0x164c] sm:$0xf]
    %v860 = vld [vmem:[#allocation2 + $0x1650] sm:$0xff]
    %v861 = vld [vmem:[#allocation2 + $0x1658] sm:$0xff]
    %v862 = vld [vmem:[#allocation2 + $0x1660] sm:$0xff]
    %v863 = vld [vmem:[#allocation2 + $0x1668] sm:$0xf]
    %v864 = vld [vmem:[#allocation2 + $0x166c] sm:$0xff]
    %v865 = vld [vmem:[#allocation2 + $0x1674] sm:$0xff]
    %v866 = vld [vmem:[#allocation2 + $0x167c] sm:$0xff]
    %v867 = vld [vmem:[#allocation2 + $0x1684] sm:$0xf]
    %v868 = vld [vmem:[#allocation2 + $0x1688] sm:$0xff]
    %v869 = vld [vmem:[#allocation2 + $0x1690] sm:$0xff]
    %v870 = vld [vmem:[#allocation2 + $0x1698] sm:$0xff]
    %v871 = vld [vmem:[#allocation2 + $0x16a0] sm:$0xf]
    %v872 = vld [vmem:[#allocation2 + $0x16a4] sm:$0xff]
    %v873 = vld [vmem:[#allocation2 + $0x16ac] sm:$0xff]
    %v874 = vld [vmem:[#allocation2 + $0x16b4] sm:$0xff]
    %v875 = vld [vmem:[#allocation2 + $0x16bc] sm:$0xf]
    %v876 = vld [vmem:[#allocation2 + $0x16c0] sm:$0xff]
    %v877 = vld [vmem:[#allocation2 + $0x16c8] sm:$0xff]
    %v878 = vld [vmem:[#allocation2 + $0x16d0] sm:$0xff]
    %v879 = vld [vmem:[#allocation2 + $0x16d8] sm:$0xf]
    %v880 = vld [vmem:[#allocation2 + $0x16dc] sm:$0xff]
    %v881 = vld [vmem:[#allocation2 + $0x16e4] sm:$0xff]
    %v882 = vld [vmem:[#allocation2 + $0x16ec] sm:$0xff]
    %v883 = vld [vmem:[#allocation2 + $0x16f4] sm:$0xf]
    %v884 = vld [vmem:[#allocation2 + $0x16f8] sm:$0xff]
    %v885 = vld [vmem:[#allocation2 + $0x1700] sm:$0xff]
    %v886 = vld [vmem:[#allocation2 + $0x1708] sm:$0xff]
    %v887 = vld [vmem:[#allocation2 + $0x1710] sm:$0xf]
    %v888 = vld [vmem:[#allocation2 + $0x1714] sm:$0xff]
    %v889 = vld [vmem:[#allocation2 + $0x171c] sm:$0xff]
    %v890 = vld [vmem:[#allocation2 + $0x1724] sm:$0xff]
    %v891 = vld [vmem:[#allocation2 + $0x172c] sm:$0xf]
    %v892 = vld [vmem:[#allocation2 + $0x1730] sm:$0xff]
    %v893 = vld [vmem:[#allocation2 + $0x1738] sm:$0xff]
    %v894 = vld [vmem:[#allocation2 + $0x1740] sm:$0xff]
    %v895 = vld [vmem:[#allocation2 + $0x1748] sm:$0xf]
    %v896 = vld [vmem:[#allocation2 + $0x174c] sm:$0xff]
    %v897 = vld [vmem:[#allocation2 + $0x1754] sm:$0xff]
    %v898 = vld [vmem:[#allocation2 + $0x175c] sm:$0xff]
    %v899 = vld [vmem:[#allocation2 + $0x1764] sm:$0xf]
    %v900 = vld [vmem:[#allocation2 + $0x1768] sm:$0xff]
    %v901 = vld [vmem:[#allocation2 + $0x1770] sm:$0xff]
    %v902 = vld [vmem:[#allocation2 + $0x1778] sm:$0xff]
    %v903 = vld [vmem:[#allocation2 + $0x1780] sm:$0xf]
    %v904 = vld [vmem:[#allocation2 + $0x1784] sm:$0xff]
    %v905 = vld [vmem:[#allocation2 + $0x178c] sm:$0xff]
    %v906 = vld [vmem:[#allocation2 + $0x1794] sm:$0xff]
    %v907 = vld [vmem:[#allocation2 + $0x179c] sm:$0xf]
    %v908 = vld [vmem:[#allocation2 + $0x17a0] sm:$0xff]
    %v909 = vld [vmem:[#allocation2 + $0x17a8] sm:$0xff]
    %v910 = vld [vmem:[#allocation2 + $0x17b0] sm:$0xff]
    %v911 = vld [vmem:[#allocation2 + $0x17b8] sm:$0xf]
    %v912 = vld [vmem:[#allocation2 + $0x17bc] sm:$0xff]
    %v913 = vld [vmem:[#allocation2 + $0x17c4] sm:$0xff]
    %v914 = vld [vmem:[#allocation2 + $0x17cc] sm:$0xff]
    %v915 = vld [vmem:[#allocation2 + $0x17d4] sm:$0xf]
    %v916 = vld [vmem:[#allocation2 + $0x17d8] sm:$0xff]
    %v917 = vld [vmem:[#allocation2 + $0x17e0] sm:$0xff]
    %v918 = vld [vmem:[#allocation2 + $0x17e8] sm:$0xff]
    %v919 = vld [vmem:[#allocation2 + $0x17f0] sm:$0xf]
    %v920 = vld [vmem:[#allocation2 + $0x17f4] sm:$0xff]
    %v921 = vld [vmem:[#allocation2 + $0x17fc] sm:$0xff]
    %v922 = vld [vmem:[#allocation2 + $0x1804] sm:$0xff]
    %v923 = vld [vmem:[#allocation2 + $0x180c] sm:$0xf]
    %v924 = vld [vmem:[#allocation2 + $0x1810] sm:$0xff]
    %v925 = vld [vmem:[#allocation2 + $0x1818] sm:$0xff]
    %v926 = vld [vmem:[#allocation2 + $0x1820] sm:$0xff]
    %v927 = vld [vmem:[#allocation2 + $0x1828] sm:$0xf]
    %v928 = vld [vmem:[#allocation2 + $0x182c] sm:$0xff]
    %v929 = vld [vmem:[#allocation2 + $0x1834] sm:$0xff]
    %v930 = vld [vmem:[#allocation2 + $0x183c] sm:$0xff]
    %v931 = vld [vmem:[#allocation2 + $0x1844] sm:$0xf]
    %v932 = vld [vmem:[#allocation2 + $0x1848] sm:$0xff]
    %v933 = vld [vmem:[#allocation2 + $0x1850] sm:$0xff]
    %v934 = vld [vmem:[#allocation2 + $0x1858] sm:$0xff]
    %v935 = vld [vmem:[#allocation2 + $0x1860] sm:$0xf]
    %v936 = vld [vmem:[#allocation2 + $0x1864] sm:$0xff]
    %v937 = vld [vmem:[#allocation2 + $0x186c] sm:$0xff]
    %v938 = vld [vmem:[#allocation2 + $0x1874] sm:$0xff]
    %v939 = vld [vmem:[#allocation2 + $0x187c] sm:$0xf]
    %v940 = vld [vmem:[#allocation2 + $0x1880] sm:$0xff]
    %v941 = vld [vmem:[#allocation2 + $0x1888] sm:$0xff]
    %v942 = vld [vmem:[#allocation2 + $0x1890] sm:$0xff]
    %v943 = vld [vmem:[#allocation2 + $0x1898] sm:$0xf]
    %v944 = vld [vmem:[#allocation2 + $0x189c] sm:$0xff]
    %v945 = vld [vmem:[#allocation2 + $0x18a4] sm:$0xff]
    %v946 = vld [vmem:[#allocation2 + $0x18ac] sm:$0xff]
    %v947 = vld [vmem:[#allocation2 + $0x18b4] sm:$0xf]
    %v948 = vld [vmem:[#allocation2 + $0x18b8] sm:$0xff]
    %v949 = vld [vmem:[#allocation2 + $0x18c0] sm:$0xff]
    %v950 = vld [vmem:[#allocation2 + $0x18c8] sm:$0xff]
    %v951 = vld [vmem:[#allocation2 + $0x18d0] sm:$0xf]
    %v952 = vld [vmem:[#allocation2 + $0x18d4] sm:$0xff]
    %v953 = vld [vmem:[#allocation2 + $0x18dc] sm:$0xff]
    %v954 = vld [vmem:[#allocation2 + $0x18e4] sm:$0xff]
    %v955 = vld [vmem:[#allocation2 + $0x18ec] sm:$0xf]
    %v956 = vld [vmem:[#allocation2 + $0x18f0] sm:$0xff]
    %v957 = vld [vmem:[#allocation2 + $0x18f8] sm:$0xff]
    %v958 = vld [vmem:[#allocation2 + $0x1900] sm:$0xff]
    %v959 = vld [vmem:[#allocation2 + $0x1908] sm:$0xf]
    %v960 = vld [vmem:[#allocation2 + $0x190c] sm:$0xff]
    %v961 = vld [vmem:[#allocation2 + $0x1914] sm:$0xff]
    %v962 = vld [vmem:[#allocation2 + $0x191c] sm:$0xff]
    %v963 = vld [vmem:[#allocation2 + $0x1924] sm:$0xf]
    %v964 = vld [vmem:[#allocation2 + $0x1928] sm:$0xff]
    %v965 = vld [vmem:[#allocation2 + $0x1930] sm:$0xff]
    %v966 = vld [vmem:[#allocation2 + $0x1938] sm:$0xff]
    %v967 = vld [vmem:[#allocation2 + $0x1940] sm:$0xf]
    %v968 = vld [vmem:[#allocation2 + $0x1944] sm:$0xff]
    %v969 = vld [vmem:[#allocation2 + $0x194c] sm:$0xff]
    %v970 = vld [vmem:[#allocation2 + $0x1954] sm:$0xff]
    %v971 = vld [vmem:[#allocation2 + $0x195c] sm:$0xf]
    %v972 = vld [vmem:[#allocation2 + $0x1960] sm:$0xff]
    %v973 = vld [vmem:[#allocation2 + $0x1968] sm:$0xff]
    %v974 = vld [vmem:[#allocation2 + $0x1970] sm:$0xff]
    %v975 = vld [vmem:[#allocation2 + $0x1978] sm:$0xf]
    %v976 = vld [vmem:[#allocation2 + $0x197c] sm:$0xff]
    %v977 = vld [vmem:[#allocation2 + $0x1984] sm:$0xff]
    %v978 = vld [vmem:[#allocation2 + $0x198c] sm:$0xff]
    %v979 = vld [vmem:[#allocation2 + $0x1994] sm:$0xf]
    %v980 = vld [vmem:[#allocation2 + $0x1998] sm:$0xff]
    %v981 = vld [vmem:[#allocation2 + $0x19a0] sm:$0xff]
    %v982 = vld [vmem:[#allocation2 + $0x19a8] sm:$0xff]
    %v983 = vld [vmem:[#allocation2 + $0x19b0] sm:$0xf]
    %v984 = vld [vmem:[#allocation2 + $0x19b4] sm:$0xff]
    %v985 = vld [vmem:[#allocation2 + $0x19bc] sm:$0xff]
    %v986 = vld [vmem:[#allocation2 + $0x19c4] sm:$0xff]
    %v987 = vld [vmem:[#allocation2 + $0x19cc] sm:$0xf]
    %v988 = vld [vmem:[#allocation2 + $0x19d0] sm:$0xff]
    %v989 = vld [vmem:[#allocation2 + $0x19d8] sm:$0xff]
    %v990 = vld [vmem:[#allocation2 + $0x19e0] sm:$0xff]
    %v991 = vld [vmem:[#allocation2 + $0x19e8] sm:$0xf]
    %v992 = vld [vmem:[#allocation2 + $0x19ec] sm:$0xff]
    %v993 = vld [vmem:[#allocation2 + $0x19f4] sm:$0xff]
    %v994 = vld [vmem:[#allocation2 + $0x19fc] sm:$0xff]
    %v995 = vld [vmem:[#allocation2 + $0x1a04] sm:$0xf]
    %v996 = vld [vmem:[#allocation2 + $0x1a08] sm:$0xff]
    %v997 = vld [vmem:[#allocation2 + $0x1a10] sm:$0xff]
    %v998 = vld [vmem:[#allocation2 + $0x1a18] sm:$0xff]
    %v999 = vld [vmem:[#allocation2 + $0x1a20] sm:$0xf]
    %v1000 = vld [vmem:[#allocation2 + $0x1a24] sm:$0xff]
    %v1001 = vld [vmem:[#allocation2 + $0x1a2c] sm:$0xff]
    %v1002 = vld [vmem:[#allocation2 + $0x1a34] sm:$0xff]
    %v1003 = vld [vmem:[#allocation2 + $0x1a3c] sm:$0xf]
    %v1004 = vld [vmem:[#allocation2 + $0x1a40] sm:$0xff]
    %v1005 = vld [vmem:[#allocation2 + $0x1a48] sm:$0xff]
    %v1006 = vld [vmem:[#allocation2 + $0x1a50] sm:$0xff]
    %v1007 = vld [vmem:[#allocation2 + $0x1a58] sm:$0xf]
    %v1008 = vld [vmem:[#allocation2 + $0x1a5c] sm:$0xff]
    %v1009 = vld [vmem:[#allocation2 + $0x1a64] sm:$0xff]
    %v1010 = vld [vmem:[#allocation2 + $0x1a6c] sm:$0xff]
    %v1011 = vld [vmem:[#allocation2 + $0x1a74] sm:$0xf]
    %v1012 = vld [vmem:[#allocation2 + $0x1a78] sm:$0xff]
    %v1013 = vld [vmem:[#allocation2 + $0x1a80] sm:$0xff]
    %v1014 = vld [vmem:[#allocation2 + $0x1a88] sm:$0xff]
    %v1015 = vld [vmem:[#allocation2 + $0x1a90] sm:$0xf]
    %v1016 = vld [vmem:[#allocation2 + $0x1a94] sm:$0xff]
    %v1017 = vld [vmem:[#allocation2 + $0x1a9c] sm:$0xff]
    %v1018 = vld [vmem:[#allocation2 + $0x1aa4] sm:$0xff]
    %v1019 = vld [vmem:[#allocation2 + $0x1aac] sm:$0xf]
    %v1020 = vld [vmem:[#allocation2 + $0x1ab0] sm:$0xff]
    %v1021 = vld [vmem:[#allocation2 + $0x1ab8] sm:$0xff]
    %v1022 = vld [vmem:[#allocation2 + $0x1ac0] sm:$0xff]
    %v1023 = vld [vmem:[#allocation2 + $0x1ac8] sm:$0xf]
    %v1024 = vld [vmem:[#allocation2 + $0x1acc] sm:$0xff]
    %v1025 = vld [vmem:[#allocation2 + $0x1ad4] sm:$0xff]
    %v1026 = vld [vmem:[#allocation2 + $0x1adc] sm:$0xff]
    %v1027 = vld [vmem:[#allocation2 + $0x1ae4] sm:$0xf]
    %v1028 = vld [vmem:[#allocation2 + $0x1ae8] sm:$0xff]
    %v1029 = vld [vmem:[#allocation2 + $0x1af0] sm:$0xff]
    %v1030 = vld [vmem:[#allocation2 + $0x1af8] sm:$0xff]
    %v1031 = vld [vmem:[#allocation2 + $0x1b00] sm:$0xf]
    %v1032 = vld [vmem:[#allocation2 + $0x1b04] sm:$0xff]
    %v1033 = vld [vmem:[#allocation2 + $0x1b0c] sm:$0xff]
    %v1034 = vld [vmem:[#allocation2 + $0x1b14] sm:$0xff]
    %v1035 = vld [vmem:[#allocation2 + $0x1b1c] sm:$0xf]
    %v1036 = vld [vmem:[#allocation2 + $0x1b20] sm:$0xff]
    %v1037 = vld [vmem:[#allocation2 + $0x1b28] sm:$0xff]
    %v1038 = vld [vmem:[#allocation2 + $0x1b30] sm:$0xff]
    %v1039 = vld [vmem:[#allocation2 + $0x1b38] sm:$0xf]
    %v1040 = vld [vmem:[#allocation2 + $0x1b3c] sm:$0xff]
    %v1041 = vld [vmem:[#allocation2 + $0x1b44] sm:$0xff]
    %v1042 = vld [vmem:[#allocation2 + $0x1b4c] sm:$0xff]
    %v1043 = vld [vmem:[#allocation2 + $0x1b54] sm:$0xf]
    %v1044 = vld [vmem:[#allocation2 + $0x1b58] sm:$0xff]
    %v1045 = vld [vmem:[#allocation2 + $0x1b60] sm:$0xff]
    %v1046 = vld [vmem:[#allocation2 + $0x1b68] sm:$0xff]
    %v1047 = vld [vmem:[#allocation2 + $0x1b70] sm:$0xf]
    %v1048 = vld [vmem:[#allocation2 + $0x1b74] sm:$0xff]
    %v1049 = vld [vmem:[#allocation2 + $0x1b7c] sm:$0xff]
    %v1050 = vld [vmem:[#allocation2 + $0x1b84] sm:$0xff]
    %v1051 = vld [vmem:[#allocation2 + $0x1b8c] sm:$0xf]
    %v1052 = vld [vmem:[#allocation2 + $0x1b90] sm:$0xff]
    %v1053 = vld [vmem:[#allocation2 + $0x1b98] sm:$0xff]
    %v1054 = vld [vmem:[#allocation2 + $0x1ba0] sm:$0xff]
    %v1055 = vld [vmem:[#allocation2 + $0x1ba8] sm:$0xf]
    %v1056 = vld [vmem:[#allocation2 + $0x1bac] sm:$0xff]
    %v1057 = vld [vmem:[#allocation2 + $0x1bb4] sm:$0xff]
    %v1058 = vld [vmem:[#allocation2 + $0x1bbc] sm:$0xff]
    %v1059 = vld [vmem:[#allocation2 + $0x1bc4] sm:$0xf]
    %v1060 = vld [vmem:[#allocation2 + $0x1bc8] sm:$0xff]
    %v1061 = vld [vmem:[#allocation2 + $0x1bd0] sm:$0xff]
    %v1062 = vld [vmem:[#allocation2 + $0x1bd8] sm:$0xff]
    %v1063 = vld [vmem:[#allocation2 + $0x1be0] sm:$0xf]
    %v1064 = vld [vmem:[#allocation2 + $0x1be4] sm:$0xff]
    %v1065 = vld [vmem:[#allocation2 + $0x1bec] sm:$0xff]
    %v1066 = vld [vmem:[#allocation2 + $0x1bf4] sm:$0xff]
    %v1067 = vld [vmem:[#allocation2 + $0x1bfc] sm:$0xf]
    %v1068 = vld [vmem:[#allocation2 + $0x1c00] sm:$0xff]
    %v1069 = vld [vmem:[#allocation2 + $0x1c08] sm:$0xff]
    %v1070 = vld [vmem:[#allocation2 + $0x1c10] sm:$0xff]
    %v1071 = vld [vmem:[#allocation2 + $0x1c18] sm:$0xf]
    %v1072 = vld [vmem:[#allocation2 + $0x1c1c] sm:$0xff]
    %v1073 = vld [vmem:[#allocation2 + $0x1c24] sm:$0xff]
    %v1074 = vld [vmem:[#allocation2 + $0x1c2c] sm:$0xff]
    %v1075 = vld [vmem:[#allocation2 + $0x1c34] sm:$0xf]
    %v1076 = vld [vmem:[#allocation2 + $0x1c38] sm:$0xff]
    %v1077 = vld [vmem:[#allocation2 + $0x1c40] sm:$0xff]
    %v1078 = vld [vmem:[#allocation2 + $0x1c48] sm:$0xff]
    %v1079 = vld [vmem:[#allocation2 + $0x1c50] sm:$0xf]
    %v1080 = vld [vmem:[#allocation2 + $0x1c54] sm:$0xff]
    %v1081 = vld [vmem:[#allocation2 + $0x1c5c] sm:$0xff]
    %v1082 = vld [vmem:[#allocation2 + $0x1c64] sm:$0xff]
    %v1083 = vld [vmem:[#allocation2 + $0x1c6c] sm:$0xf]
    %v1084 = vld [vmem:[#allocation2 + $0x1c70] sm:$0xff]
    %v1085 = vld [vmem:[#allocation2 + $0x1c78] sm:$0xff]
    %v1086 = vld [vmem:[#allocation2 + $0x1c80] sm:$0xff]
    %v1087 = vld [vmem:[#allocation2 + $0x1c88] sm:$0xf]
    %v1088 = vld [vmem:[#allocation2 + $0x1c8c] sm:$0xff]
    %v1089 = vld [vmem:[#allocation2 + $0x1c94] sm:$0xff]
    %v1090 = vld [vmem:[#allocation2 + $0x1c9c] sm:$0xff]
    %v1091 = vld [vmem:[#allocation2 + $0x1ca4] sm:$0xf]
    %v1092 = vld [vmem:[#allocation2 + $0x1ca8] sm:$0xff]
    %v1093 = vld [vmem:[#allocation2 + $0x1cb0] sm:$0xff]
    %v1094 = vld [vmem:[#allocation2 + $0x1cb8] sm:$0xff]
    %v1095 = vld [vmem:[#allocation2 + $0x1cc0] sm:$0xf]
    %v1096 = vld [vmem:[#allocation2 + $0x1cc4] sm:$0xff]
    %v1097 = vld [vmem:[#allocation2 + $0x1ccc] sm:$0xff]
    %v1098 = vld [vmem:[#allocation2 + $0x1cd4] sm:$0xff]
    %v1099 = vld [vmem:[#allocation2 + $0x1cdc] sm:$0xf]
    %v1100 = vld [vmem:[#allocation2 + $0x1ce0] sm:$0xff]
    %v1101 = vld [vmem:[#allocation2 + $0x1ce8] sm:$0xff]
    %v1102 = vld [vmem:[#allocation2 + $0x1cf0] sm:$0xff]
    %v1103 = vld [vmem:[#allocation2 + $0x1cf8] sm:$0xf]
    %v1104 = vld [vmem:[#allocation2 + $0x1cfc] sm:$0xff]
    %v1105 = vld [vmem:[#allocation2 + $0x1d04] sm:$0xff]
    %v1106 = vld [vmem:[#allocation2 + $0x1d0c] sm:$0xff]
    %v1107 = vld [vmem:[#allocation2 + $0x1d14] sm:$0xf]
    %v1108 = vld [vmem:[#allocation2 + $0x1d18] sm:$0xff]
    %v1109 = vld [vmem:[#allocation2 + $0x1d20] sm:$0xff]
    %v1110 = vld [vmem:[#allocation2 + $0x1d28] sm:$0xff]
    %v1111 = vld [vmem:[#allocation2 + $0x1d30] sm:$0xf]
    %v1112 = vld [vmem:[#allocation2 + $0x1d34] sm:$0xff]
    %v1113 = vld [vmem:[#allocation2 + $0x1d3c] sm:$0xff]
    %v1114 = vld [vmem:[#allocation2 + $0x1d44] sm:$0xff]
    %v1115 = vld [vmem:[#allocation2 + $0x1d4c] sm:$0xf]
    %v1116 = vld [vmem:[#allocation2 + $0x1d50] sm:$0xff]
    %v1117 = vld [vmem:[#allocation2 + $0x1d58] sm:$0xff]
    %v1118 = vld [vmem:[#allocation2 + $0x1d60] sm:$0xff]
    %v1119 = vld [vmem:[#allocation2 + $0x1d68] sm:$0xf]
    %v1120 = vld [vmem:[#allocation2 + $0x1d6c] sm:$0xff]
    %v1121 = vld [vmem:[#allocation2 + $0x1d74] sm:$0xff]
    %v1122 = vld [vmem:[#allocation2 + $0x1d7c] sm:$0xff]
    %v1123 = vld [vmem:[#allocation2 + $0x1d84] sm:$0xf]
    %v1124 = vld [vmem:[#allocation2 + $0x1d88] sm:$0xff]
    %v1125 = vld [vmem:[#allocation2 + $0x1d90] sm:$0xff]
    %v1126 = vld [vmem:[#allocation2 + $0x1d98] sm:$0xff]
    %v1127 = vld [vmem:[#allocation2 + $0x1da0] sm:$0xf]
    %v1128 = vld [vmem:[#allocation2 + $0x1da4] sm:$0xff]
    %v1129 = vld [vmem:[#allocation2 + $0x1dac] sm:$0xff]
    %v1130 = vld [vmem:[#allocation2 + $0x1db4] sm:$0xff]
    %v1131 = vld [vmem:[#allocation2 + $0x1dbc] sm:$0xf]
    %v1132 = vld [vmem:[#allocation2 + $0x1dc0] sm:$0xff]
    %v1133 = vld [vmem:[#allocation2 + $0x1dc8] sm:$0xff]
    %v1134 = vld [vmem:[#allocation2 + $0x1dd0] sm:$0xff]
    %v1135 = vld [vmem:[#allocation2 + $0x1dd8] sm:$0xf]
    %v1136 = vld [vmem:[#allocation2 + $0x1ddc] sm:$0xff]
    %v1137 = vld [vmem:[#allocation2 + $0x1de4] sm:$0xff]
    %v1138 = vld [vmem:[#allocation2 + $0x1dec] sm:$0xff]
    %v1139 = vld [vmem:[#allocation2 + $0x1df4] sm:$0xf]
    %v1140 = vld [vmem:[#allocation2 + $0x1df8] sm:$0xff]
    %v1141 = vld [vmem:[#allocation2 + $0x1e00] sm:$0xff]
    %v1142 = vld [vmem:[#allocation2 + $0x1e08] sm:$0xff]
    %v1143 = vld [vmem:[#allocation2 + $0x1e10] sm:$0xf]
    %v1144 = vld [vmem:[#allocation2 + $0x1e14] sm:$0xff]
    %v1145 = vld [vmem:[#allocation2 + $0x1e1c] sm:$0xff]
    %v1146 = vld [vmem:[#allocation2 + $0x1e24] sm:$0xff]
    %v1147 = vld [vmem:[#allocation2 + $0x1e2c] sm:$0xf]
    %v1148 = vld [vmem:[#allocation2 + $0x1e30] sm:$0xff]
    %v1149 = vld [vmem:[#allocation2 + $0x1e38] sm:$0xff]
    %v1150 = vld [vmem:[#allocation2 + $0x1e40] sm:$0xff]
    %v1151 = vld [vmem:[#allocation2 + $0x1e48] sm:$0xf]
    %v1152 = vld [vmem:[#allocation2 + $0x1e4c] sm:$0xff]
    %v1153 = vld [vmem:[#allocation2 + $0x1e54] sm:$0xff]
    %v1154 = vld [vmem:[#allocation2 + $0x1e5c] sm:$0xff]
    %v1155 = vld [vmem:[#allocation2 + $0x1e64] sm:$0xf]
    %v1156 = vld [vmem:[#allocation2 + $0x1e68] sm:$0xff]
    %v1157 = vld [vmem:[#allocation2 + $0x1e70] sm:$0xff]
    %v1158 = vld [vmem:[#allocation2 + $0x1e78] sm:$0xff]
    %v1159 = vld [vmem:[#allocation2 + $0x1e80] sm:$0xf]
    %v1160 = vld [vmem:[#allocation2 + $0x1e84] sm:$0xff]
    %v1161 = vld [vmem:[#allocation2 + $0x1e8c] sm:$0xff]
    %v1162 = vld [vmem:[#allocation2 + $0x1e94] sm:$0xff]
    %v1163 = vld [vmem:[#allocation2 + $0x1e9c] sm:$0xf]
    %v1164 = vld [vmem:[#allocation2 + $0x1ea0] sm:$0xff]
    %v1165 = vld [vmem:[#allocation2 + $0x1ea8] sm:$0xff]
    %v1166 = vld [vmem:[#allocation2 + $0x1eb0] sm:$0xff]
    %v1167 = vld [vmem:[#allocation2 + $0x1eb8] sm:$0xf]
    %v1168 = vld [vmem:[#allocation2 + $0x1ebc] sm:$0xff]
    %v1169 = vld [vmem:[#allocation2 + $0x1ec4] sm:$0xff]
    %v1170 = vld [vmem:[#allocation2 + $0x1ecc] sm:$0xff]
    %v1171 = vld [vmem:[#allocation2 + $0x1ed4] sm:$0xf]
    %v1172 = vld [vmem:[#allocation2 + $0x1ed8] sm:$0xff]
    %v1173 = vld [vmem:[#allocation2 + $0x1ee0] sm:$0xff]
    %v1174 = vld [vmem:[#allocation2 + $0x1ee8] sm:$0xff]
    %v1175 = vld [vmem:[#allocation2 + $0x1ef0] sm:$0xf]
    %v1176 = vld [vmem:[#allocation2 + $0x1ef4] sm:$0xff]
    %v1177 = vld [vmem:[#allocation2 + $0x1efc] sm:$0xff]
    %v1178 = vld [vmem:[#allocation2 + $0x1f04] sm:$0xff]
    %v1179 = vld [vmem:[#allocation2 + $0x1f0c] sm:$0xf]
    %v1180 = vld [vmem:[#allocation2 + $0x1f10] sm:$0xff]
    %v1181 = vld [vmem:[#allocation2 + $0x1f18] sm:$0xff]
    %v1182 = vld [vmem:[#allocation2 + $0x1f20] sm:$0xff]
    %v1183 = vld [vmem:[#allocation2 + $0x1f28] sm:$0xf]
    %v1184 = vld [vmem:[#allocation2 + $0x1f2c] sm:$0xff]
    %v1185 = vld [vmem:[#allocation2 + $0x1f34] sm:$0xff]
    %v1186 = vld [vmem:[#allocation2 + $0x1f3c] sm:$0xff]
    %v1187 = vld [vmem:[#allocation2 + $0x1f44] sm:$0xf]
    %v1188 = vld [vmem:[#allocation2 + $0x1f48] sm:$0xff]
    %v1189 = vld [vmem:[#allocation2 + $0x1f50] sm:$0xff]
    %v1190 = vld [vmem:[#allocation2 + $0x1f58] sm:$0xff]
    %v1191 = vld [vmem:[#allocation2 + $0x1f60] sm:$0xf]
    %v1192 = vld [vmem:[#allocation2 + $0x1f64] sm:$0xff]
    %v1193 = vld [vmem:[#allocation2 + $0x1f6c] sm:$0xff]
    %v1194 = vld [vmem:[#allocation2 + $0x1f74] sm:$0xff]
    %v1195 = vld [vmem:[#allocation2 + $0x1f7c] sm:$0xf]
    %v1196 = vld [vmem:[#allocation2 + $0x1f80] sm:$0xff]
    %v1197 = vld [vmem:[#allocation2 + $0x1f88] sm:$0xff]
    %v1198 = vld [vmem:[#allocation2 + $0x1f90] sm:$0xff]
    %v1199 = vld [vmem:[#allocation2 + $0x1f98] sm:$0xf]
    %v1200 = vld [vmem:[#allocation2 + $0x1f9c] sm:$0xff]
    %v1201 = vld [vmem:[#allocation2 + $0x1fa4] sm:$0xff]
    %v1202 = vld [vmem:[#allocation2 + $0x1fac] sm:$0xff]
    %v1203 = vld [vmem:[#allocation2 + $0x1fb4] sm:$0xf]
    %v1204 = vld [vmem:[#allocation2 + $0x1fb8] sm:$0xff]
    %v1205 = vld [vmem:[#allocation2 + $0x1fc0] sm:$0xff]
    %v1206 = vld [vmem:[#allocation2 + $0x1fc8] sm:$0xff]
    %v1207 = vld [vmem:[#allocation2 + $0x1fd0] sm:$0xf]
    %v1208 = vld [vmem:[#allocation2 + $0x1fd4] sm:$0xff]
    %v1209 = vld [vmem:[#allocation2 + $0x1fdc] sm:$0xff]
    %v1210 = vld [vmem:[#allocation2 + $0x1fe4] sm:$0xff]
    %v1211 = vld [vmem:[#allocation2 + $0x1fec] sm:$0xf]
    %v1212 = vld [vmem:[#allocation2 + $0x1ff0] sm:$0xff]
    %v1213 = vld [vmem:[#allocation2 + $0x1ff8] sm:$0xff]
    %v1214 = vld [vmem:[#allocation2 + $0x2000] sm:$0xff]
    %v1215 = vld [vmem:[#allocation2 + $0x2008] sm:$0xf]
    %v1216 = vld [vmem:[#allocation2 + $0x200c] sm:$0xff]
    %v1217 = vld [vmem:[#allocation2 + $0x2014] sm:$0xff]
    %v1218 = vld [vmem:[#allocation2 + $0x201c] sm:$0xff]
    %v1219 = vld [vmem:[#allocation2 + $0x2024] sm:$0xf]
    %v1220 = vld [vmem:[#allocation2 + $0x2028] sm:$0xff]
    %v1221 = vld [vmem:[#allocation2 + $0x2030] sm:$0xff]
    %v1222 = vld [vmem:[#allocation2 + $0x2038] sm:$0xff]
    %v1223 = vld [vmem:[#allocation2 + $0x2040] sm:$0xf]
    %v1224 = vld [vmem:[#allocation2 + $0x2044] sm:$0xff]
    %v1225 = vld [vmem:[#allocation2 + $0x204c] sm:$0xff]
    %v1226 = vld [vmem:[#allocation2 + $0x2054] sm:$0xff]
    %v1227 = vld [vmem:[#allocation2 + $0x205c] sm:$0xf]
    %v1228 = vld [vmem:[#allocation2 + $0x2060] sm:$0xff]
    %v1229 = vld [vmem:[#allocation2 + $0x2068] sm:$0xff]
    %v1230 = vld [vmem:[#allocation2 + $0x2070] sm:$0xff]
    %v1231 = vld [vmem:[#allocation2 + $0x2078] sm:$0xf]
    %v1232 = vld [vmem:[#allocation2 + $0x207c] sm:$0xff]
    %v1233 = vld [vmem:[#allocation2 + $0x2084] sm:$0xff]
    %v1234 = vld [vmem:[#allocation2 + $0x208c] sm:$0xff]
    %v1235 = vld [vmem:[#allocation2 + $0x2094] sm:$0xf]
    %v1236 = vld [vmem:[#allocation2 + $0x2098] sm:$0xff]
    %v1237 = vld [vmem:[#allocation2 + $0x20a0] sm:$0xff]
    %v1238 = vld [vmem:[#allocation2 + $0x20a8] sm:$0xff]
    %v1239 = vld [vmem:[#allocation2 + $0x20b0] sm:$0xf]
    %v1240 = vld [vmem:[#allocation2 + $0x20b4] sm:$0xff]
    %v1241 = vld [vmem:[#allocation2 + $0x20bc] sm:$0xff]
    %v1242 = vld [vmem:[#allocation2 + $0x20c4] sm:$0xff]
    %v1243 = vld [vmem:[#allocation2 + $0x20cc] sm:$0xf]
    %v1244 = vld [vmem:[#allocation2 + $0x20d0] sm:$0xff]
    %v1245 = vld [vmem:[#allocation2 + $0x20d8] sm:$0xff]
    %v1246 = vld [vmem:[#allocation2 + $0x20e0] sm:$0xff]
    %v1247 = vld [vmem:[#allocation2 + $0x20e8] sm:$0xf]
    %v1248 = vld [vmem:[#allocation2 + $0x20ec] sm:$0xff]
    %v1249 = vld [vmem:[#allocation2 + $0x20f4] sm:$0xff]
    %v1250 = vld [vmem:[#allocation2 + $0x20fc] sm:$0xff]
    %v1251 = vld [vmem:[#allocation2 + $0x2104] sm:$0xf]
    %v1252 = vld [vmem:[#allocation2 + $0x2108] sm:$0xff]
    %v1253 = vld [vmem:[#allocation2 + $0x2110] sm:$0xff]
    %v1254 = vld [vmem:[#allocation2 + $0x2118] sm:$0xff]
    %v1255 = vld [vmem:[#allocation2 + $0x2120] sm:$0xf]
    %v1256 = vld [vmem:[#allocation2 + $0x2124] sm:$0xff]
    %v1257 = vld [vmem:[#allocation2 + $0x212c] sm:$0xff]
    %v1258 = vld [vmem:[#allocation2 + $0x2134] sm:$0xff]
    %v1259 = vld [vmem:[#allocation2 + $0x213c] sm:$0xf]
    %v1260 = vld [vmem:[#allocation2 + $0x2140] sm:$0xff]
    %v1261 = vld [vmem:[#allocation2 + $0x2148] sm:$0xff]
    %v1262 = vld [vmem:[#allocation2 + $0x2150] sm:$0xff]
    %v1263 = vld [vmem:[#allocation2 + $0x2158] sm:$0xf]
    %v1264 = vld [vmem:[#allocation2 + $0x215c] sm:$0xff]
    %v1265 = vld [vmem:[#allocation2 + $0x2164] sm:$0xff]
    %v1266 = vld [vmem:[#allocation2 + $0x216c] sm:$0xff]
    %v1267 = vld [vmem:[#allocation2 + $0x2174] sm:$0xf]
    %v1268 = vld [vmem:[#allocation2 + $0x2178] sm:$0xff]
    %v1269 = vld [vmem:[#allocation2 + $0x2180] sm:$0xff]
    %v1270 = vld [vmem:[#allocation2 + $0x2188] sm:$0xff]
    %v1271 = vld [vmem:[#allocation2 + $0x2190] sm:$0xf]
    %v1272 = vld [vmem:[#allocation2 + $0x2194] sm:$0xff]
    %v1273 = vld [vmem:[#allocation2 + $0x219c] sm:$0xff]
    %v1274 = vld [vmem:[#allocation2 + $0x21a4] sm:$0xff]
    %v1275 = vld [vmem:[#allocation2 + $0x21ac] sm:$0xf]
    %v1276 = vld [vmem:[#allocation2 + $0x21b0] sm:$0xff]
    %v1277 = vld [vmem:[#allocation2 + $0x21b8] sm:$0xff]
    %v1278 = vld [vmem:[#allocation2 + $0x21c0] sm:$0xff]
    %v1279 = vld [vmem:[#allocation2 + $0x21c8] sm:$0xf]
    %v1280 = vld [vmem:[#allocation2 + $0x21cc] sm:$0xff]
    %v1281 = vld [vmem:[#allocation2 + $0x21d4] sm:$0xff]
    %v1282 = vld [vmem:[#allocation2 + $0x21dc] sm:$0xff]
    %v1283 = vld [vmem:[#allocation2 + $0x21e4] sm:$0xf]
    %v1284 = vld [vmem:[#allocation2 + $0x21e8] sm:$0xff]
    %v1285 = vld [vmem:[#allocation2 + $0x21f0] sm:$0xff]
    %v1286 = vld [vmem:[#allocation2 + $0x21f8] sm:$0xff]
    %v1287 = vld [vmem:[#allocation2 + $0x2200] sm:$0xf]
    %v1288 = vld [vmem:[#allocation2 + $0x2204] sm:$0xff]
    %v1289 = vld [vmem:[#allocation2 + $0x220c] sm:$0xff]
    %v1290 = vld [vmem:[#allocation2 + $0x2214] sm:$0xff]
    %v1291 = vld [vmem:[#allocation2 + $0x221c] sm:$0xf]
    %v1292 = vld [vmem:[#allocation2 + $0x2220] sm:$0xff]
    %v1293 = vld [vmem:[#allocation2 + $0x2228] sm:$0xff]
    %v1294 = vld [vmem:[#allocation2 + $0x2230] sm:$0xff]
    %v1295 = vld [vmem:[#allocation2 + $0x2238] sm:$0xf]
    %v1296 = vld [vmem:[#allocation2 + $0x223c] sm:$0xff]
    %v1297 = vld [vmem:[#allocation2 + $0x2244] sm:$0xff]
    %v1298 = vld [vmem:[#allocation2 + $0x224c] sm:$0xff]
    %v1299 = vld [vmem:[#allocation2 + $0x2254] sm:$0xf]
    %v1300 = vld [vmem:[#allocation2 + $0x2258] sm:$0xff]
    %v1301 = vld [vmem:[#allocation2 + $0x2260] sm:$0xff]
    %v1302 = vld [vmem:[#allocation2 + $0x2268] sm:$0xff]
    %v1303 = vld [vmem:[#allocation2 + $0x2270] sm:$0xf]
    %v1304 = vld [vmem:[#allocation2 + $0x2274] sm:$0xff]
    %v1305 = vld [vmem:[#allocation2 + $0x227c] sm:$0xff]
    %v1306 = vld [vmem:[#allocation2 + $0x2284] sm:$0xff]
    %v1307 = vld [vmem:[#allocation2 + $0x228c] sm:$0xf]
    %v1308 = vld [vmem:[#allocation2 + $0x2290] sm:$0xff]
    %v1309 = vld [vmem:[#allocation2 + $0x2298] sm:$0xff]
    %v1310 = vld [vmem:[#allocation2 + $0x22a0] sm:$0xff]
    %v1311 = vld [vmem:[#allocation2 + $0x22a8] sm:$0xf]
    %v1312 = vld [vmem:[#allocation2 + $0x22ac] sm:$0xff]
    %v1313 = vld [vmem:[#allocation2 + $0x22b4] sm:$0xff]
    %v1314 = vld [vmem:[#allocation2 + $0x22bc] sm:$0xff]
    %v1315 = vld [vmem:[#allocation2 + $0x22c4] sm:$0xf]
    %v1316 = vld [vmem:[#allocation2 + $0x22c8] sm:$0xff]
    %v1317 = vld [vmem:[#allocation2 + $0x22d0] sm:$0xff]
    %v1318 = vld [vmem:[#allocation2 + $0x22d8] sm:$0xff]
    %v1319 = vld [vmem:[#allocation2 + $0x22e0] sm:$0xf]
    %v1320 = vld [vmem:[#allocation2 + $0x22e4] sm:$0xff]
    %v1321 = vld [vmem:[#allocation2 + $0x22ec] sm:$0xff]
    %v1322 = vld [vmem:[#allocation2 + $0x22f4] sm:$0xff]
    %v1323 = vld [vmem:[#allocation2 + $0x22fc] sm:$0xf]
    %v1324 = vld [vmem:[#allocation2 + $0x2300] sm:$0xff]
    %v1325 = vld [vmem:[#allocation2 + $0x2308] sm:$0xff]
    %v1326 = vld [vmem:[#allocation2 + $0x2310] sm:$0xff]
    %v1327 = vld [vmem:[#allocation2 + $0x2318] sm:$0xf]
    %v1328 = vld [vmem:[#allocation2 + $0x231c] sm:$0xff]
    %v1329 = vld [vmem:[#allocation2 + $0x2324] sm:$0xff]
    %v1330 = vld [vmem:[#allocation2 + $0x232c] sm:$0xff]
    %v1331 = vld [vmem:[#allocation2 + $0x2334] sm:$0xf]
    %v1332 = vld [vmem:[#allocation2 + $0x2338] sm:$0xff]
    %v1333 = vld [vmem:[#allocation2 + $0x2340] sm:$0xff]
    %v1334 = vld [vmem:[#allocation2 + $0x2348] sm:$0xff]
    %v1335 = vld [vmem:[#allocation2 + $0x2350] sm:$0xf]
    %v1336 = vld [vmem:[#allocation2 + $0x2354] sm:$0xff]
    %v1337 = vld [vmem:[#allocation2 + $0x235c] sm:$0xff]
    %v1338 = vld [vmem:[#allocation2 + $0x2364] sm:$0xff]
    %v1339 = vld [vmem:[#allocation2 + $0x236c] sm:$0xf]
    %v1340 = vld [vmem:[#allocation2 + $0x2370] sm:$0xff]
    %v1341 = vld [vmem:[#allocation2 + $0x2378] sm:$0xff]
    %v1342 = vld [vmem:[#allocation2 + $0x2380] sm:$0xff]
    %v1343 = vld [vmem:[#allocation2 + $0x2388] sm:$0xf]
    %v1344 = vld [vmem:[#allocation2 + $0x238c] sm:$0xff]
    %v1345 = vld [vmem:[#allocation2 + $0x2394] sm:$0xff]
    %v1346 = vld [vmem:[#allocation2 + $0x239c] sm:$0xff]
    %v1347 = vld [vmem:[#allocation2 + $0x23a4] sm:$0xf]
    %v1348 = vld [vmem:[#allocation2 + $0x23a8] sm:$0xff]
    %v1349 = vld [vmem:[#allocation2 + $0x23b0] sm:$0xff]
    %v1350 = vld [vmem:[#allocation2 + $0x23b8] sm:$0xff]
    %v1351 = vld [vmem:[#allocation2 + $0x23c0] sm:$0xf]
    %v1352 = vld [vmem:[#allocation2 + $0x23c4] sm:$0xff]
    %v1353 = vld [vmem:[#allocation2 + $0x23cc] sm:$0xff]
    %v1354 = vld [vmem:[#allocation2 + $0x23d4] sm:$0xff]
    %v1355 = vld [vmem:[#allocation2 + $0x23dc] sm:$0xf]
    %v1356 = vld [vmem:[#allocation2 + $0x23e0] sm:$0xff]
    %v1357 = vld [vmem:[#allocation2 + $0x23e8] sm:$0xff]
    %v1358 = vld [vmem:[#allocation2 + $0x23f0] sm:$0xff]
    %v1359 = vld [vmem:[#allocation2 + $0x23f8] sm:$0xf]
    %v1360 = vld [vmem:[#allocation2 + $0x23fc] sm:$0xff]
    %v1361 = vld [vmem:[#allocation2 + $0x2404] sm:$0xff]
    %v1362 = vld [vmem:[#allocation2 + $0x240c] sm:$0xff]
    %v1363 = vld [vmem:[#allocation2 + $0x2414] sm:$0xf]
    %v1364 = vld [vmem:[#allocation2 + $0x2418] sm:$0xff]
    %v1365 = vld [vmem:[#allocation2 + $0x2420] sm:$0xff]
    %v1366 = vld [vmem:[#allocation2 + $0x2428] sm:$0xff]
    %v1367 = vld [vmem:[#allocation2 + $0x2430] sm:$0xf]
    %v1368 = vld [vmem:[#allocation2 + $0x2434] sm:$0xff]
    %v1369 = vld [vmem:[#allocation2 + $0x243c] sm:$0xff]
    %v1370 = vld [vmem:[#allocation2 + $0x2444] sm:$0xff]
    %v1371 = vld [vmem:[#allocation2 + $0x244c] sm:$0xf]
    %v1372 = vld [vmem:[#allocation2 + $0x2450] sm:$0xff]
    %v1373 = vld [vmem:[#allocation2 + $0x2458] sm:$0xff]
    %v1374 = vld [vmem:[#allocation2 + $0x2460] sm:$0xff]
    %v1375 = vld [vmem:[#allocation2 + $0x2468] sm:$0xf]
    %v1376 = vld [vmem:[#allocation2 + $0x246c] sm:$0xff]
    %v1377 = vld [vmem:[#allocation2 + $0x2474] sm:$0xff]
    %v1378 = vld [vmem:[#allocation2 + $0x247c] sm:$0xff]
    %v1379 = vld [vmem:[#allocation2 + $0x2484] sm:$0xf]
    %v1380 = vld [vmem:[#allocation2 + $0x2488] sm:$0xff]
    %v1381 = vld [vmem:[#allocation2 + $0x2490] sm:$0xff]
    %v1382 = vld [vmem:[#allocation2 + $0x2498] sm:$0xff]
    %v1383 = vld [vmem:[#allocation2 + $0x24a0] sm:$0xf]
    %v1384 = vld [vmem:[#allocation2 + $0x24a4] sm:$0xff]
    %v1385 = vld [vmem:[#allocation2 + $0x24ac] sm:$0xff]
    %v1386 = vld [vmem:[#allocation2 + $0x24b4] sm:$0xff]
    %v1387 = vld [vmem:[#allocation2 + $0x24bc] sm:$0xf]
    %v1388 = vld [vmem:[#allocation2 + $0x24c0] sm:$0xff]
    %v1389 = vld [vmem:[#allocation2 + $0x24c8] sm:$0xff]
    %v1390 = vld [vmem:[#allocation2 + $0x24d0] sm:$0xff]
    %v1391 = vld [vmem:[#allocation2 + $0x24d8] sm:$0xf]
    %v1392 = vld [vmem:[#allocation2 + $0x24dc] sm:$0xff]
    %v1393 = vld [vmem:[#allocation2 + $0x24e4] sm:$0xff]
    %v1394 = vld [vmem:[#allocation2 + $0x24ec] sm:$0xff]
    %v1395 = vld [vmem:[#allocation2 + $0x24f4] sm:$0xf]
    %v1396 = vld [vmem:[#allocation2 + $0x24f8] sm:$0xff]
    %v1397 = vld [vmem:[#allocation2 + $0x2500] sm:$0xff]
    %v1398 = vld [vmem:[#allocation2 + $0x2508] sm:$0xff]
    %v1399 = vld [vmem:[#allocation2 + $0x2510] sm:$0xf]
    %v1400 = vld [vmem:[#allocation2 + $0x2514] sm:$0xff]
    %v1401 = vld [vmem:[#allocation2 + $0x251c] sm:$0xff]
    %v1402 = vld [vmem:[#allocation2 + $0x2524] sm:$0xff]
    %v1403 = vld [vmem:[#allocation2 + $0x252c] sm:$0xf]
    %v1404 = vld [vmem:[#allocation2 + $0x2530] sm:$0xff]
    %v1405 = vld [vmem:[#allocation2 + $0x2538] sm:$0xff]
    %v1406 = vld [vmem:[#allocation2 + $0x2540] sm:$0xff]
    %v1407 = vld [vmem:[#allocation2 + $0x2548] sm:$0xf]
    %v1408 = vld [vmem:[#allocation2 + $0x254c] sm:$0xff]
    %v1409 = vld [vmem:[#allocation2 + $0x2554] sm:$0xff]
    %v1410 = vld [vmem:[#allocation2 + $0x255c] sm:$0xff]
    %v1411 = vld [vmem:[#allocation2 + $0x2564] sm:$0xf]
    %v1412 = vld [vmem:[#allocation2 + $0x2568] sm:$0xff]
    %v1413 = vld [vmem:[#allocation2 + $0x2570] sm:$0xff]
    %v1414 = vld [vmem:[#allocation2 + $0x2578] sm:$0xff]
    %v1415 = vld [vmem:[#allocation2 + $0x2580] sm:$0xf]
    %v1416 = vld [vmem:[#allocation2 + $0x2584] sm:$0xff]
    %v1417 = vld [vmem:[#allocation2 + $0x258c] sm:$0xff]
    %v1418 = vld [vmem:[#allocation2 + $0x2594] sm:$0xff]
    %v1419 = vld [vmem:[#allocation2 + $0x259c] sm:$0xf]
    %v1420 = vld [vmem:[#allocation2 + $0x25a0] sm:$0xff]
    %v1421 = vld [vmem:[#allocation2 + $0x25a8] sm:$0xff]
    %v1422 = vld [vmem:[#allocation2 + $0x25b0] sm:$0xff]
    %v1423 = vld [vmem:[#allocation2 + $0x25b8] sm:$0xf]
    %v1424 = vld [vmem:[#allocation2 + $0x25bc] sm:$0xff]
    %v1425 = vld [vmem:[#allocation2 + $0x25c4] sm:$0xff]
    %v1426 = vld [vmem:[#allocation2 + $0x25cc] sm:$0xff]
    %v1427 = vld [vmem:[#allocation2 + $0x25d4] sm:$0xf]
    %v1428 = vld [vmem:[#allocation2 + $0x25d8] sm:$0xff]
    %v1429 = vld [vmem:[#allocation2 + $0x25e0] sm:$0xff]
    %v1430 = vld [vmem:[#allocation2 + $0x25e8] sm:$0xff]
    %v1431 = vld [vmem:[#allocation2 + $0x25f0] sm:$0xf]
    %v1432 = vld [vmem:[#allocation2 + $0x25f4] sm:$0xff]
    %v1433 = vld [vmem:[#allocation2 + $0x25fc] sm:$0xff]
    %v1434 = vld [vmem:[#allocation2 + $0x2604] sm:$0xff]
    %v1435 = vld [vmem:[#allocation2 + $0x260c] sm:$0xf]
    %v1436 = vld [vmem:[#allocation2 + $0x2610] sm:$0xff]
    %v1437 = vld [vmem:[#allocation2 + $0x2618] sm:$0xff]
    %v1438 = vld [vmem:[#allocation2 + $0x2620] sm:$0xff]
    %v1439 = vld [vmem:[#allocation2 + $0x2628] sm:$0xf]
    %v1440 = vld [vmem:[#allocation2 + $0x262c] sm:$0xff]
    %v1441 = vld [vmem:[#allocation2 + $0x2634] sm:$0xff]
    %v1442 = vld [vmem:[#allocation2 + $0x263c] sm:$0xff]
    %v1443 = vld [vmem:[#allocation2 + $0x2644] sm:$0xf]
    %v1444 = vld [vmem:[#allocation2 + $0x2648] sm:$0xff]
    %v1445 = vld [vmem:[#allocation2 + $0x2650] sm:$0xff]
    %v1446 = vld [vmem:[#allocation2 + $0x2658] sm:$0xff]
    %v1447 = vld [vmem:[#allocation2 + $0x2660] sm:$0xf]
    %v1448 = vld [vmem:[#allocation2 + $0x2664] sm:$0xff]
    %v1449 = vld [vmem:[#allocation2 + $0x266c] sm:$0xff]
    %v1450 = vld [vmem:[#allocation2 + $0x2674] sm:$0xff]
    %v1451 = vld [vmem:[#allocation2 + $0x267c] sm:$0xf]
    %v1452 = vld [vmem:[#allocation2 + $0x2680] sm:$0xff]
    %v1453 = vld [vmem:[#allocation2 + $0x2688] sm:$0xff]
    %v1454 = vld [vmem:[#allocation2 + $0x2690] sm:$0xff]
    %v1455 = vld [vmem:[#allocation2 + $0x2698] sm:$0xf]
    %v1456 = vld [vmem:[#allocation2 + $0x269c] sm:$0xff]
    %v1457 = vld [vmem:[#allocation2 + $0x26a4] sm:$0xff]
    %v1458 = vld [vmem:[#allocation2 + $0x26ac] sm:$0xff]
    %v1459 = vld [vmem:[#allocation2 + $0x26b4] sm:$0xf]
    %v1460 = vld [vmem:[#allocation2 + $0x26b8] sm:$0xff]
    %v1461 = vld [vmem:[#allocation2 + $0x26c0] sm:$0xff]
    %v1462 = vld [vmem:[#allocation2 + $0x26c8] sm:$0xff]
    %v1463 = vld [vmem:[#allocation2 + $0x26d0] sm:$0xf]
    %v1464 = vld [vmem:[#allocation2 + $0x26d4] sm:$0xff]
    %v1465 = vld [vmem:[#allocation2 + $0x26dc] sm:$0xff]
    %v1466 = vld [vmem:[#allocation2 + $0x26e4] sm:$0xff]
    %v1467 = vld [vmem:[#allocation2 + $0x26ec] sm:$0xf]
    %v1468 = vld [vmem:[#allocation2 + $0x26f0] sm:$0xff]
    %v1469 = vld [vmem:[#allocation2 + $0x26f8] sm:$0xff]
    %v1470 = vld [vmem:[#allocation2 + $0x2700] sm:$0xff]
    %v1471 = vld [vmem:[#allocation2 + $0x2708] sm:$0xf]
    %v1472 = vld [vmem:[#allocation2 + $0x270c] sm:$0xff]
    %v1473 = vld [vmem:[#allocation2 + $0x2714] sm:$0xff]
    %v1474 = vld [vmem:[#allocation2 + $0x271c] sm:$0xff]
    %v1475 = vld [vmem:[#allocation2 + $0x2724] sm:$0xf]
    %v1476 = vld [vmem:[#allocation2 + $0x2728] sm:$0xff]
    %v1477 = vld [vmem:[#allocation2 + $0x2730] sm:$0xff]
    %v1478 = vld [vmem:[#allocation2 + $0x2738] sm:$0xff]
    %v1479 = vld [vmem:[#allocation2 + $0x2740] sm:$0xf]
    %v1480 = vld [vmem:[#allocation2 + $0x2744] sm:$0xff]
    %v1481 = vld [vmem:[#allocation2 + $0x274c] sm:$0xff]
    %v1482 = vld [vmem:[#allocation2 + $0x2754] sm:$0xff]
    %v1483 = vld [vmem:[#allocation2 + $0x275c] sm:$0xf]
    %v1484 = vld [vmem:[#allocation2 + $0x2760] sm:$0xff]
    %v1485 = vld [vmem:[#allocation2 + $0x2768] sm:$0xff]
    %v1486 = vld [vmem:[#allocation2 + $0x2770] sm:$0xff]
    %v1487 = vld [vmem:[#allocation2 + $0x2778] sm:$0xf]
    %v1488 = vld [vmem:[#allocation2 + $0x277c] sm:$0xff]
    %v1489 = vld [vmem:[#allocation2 + $0x2784] sm:$0xff]
    %v1490 = vld [vmem:[#allocation2 + $0x278c] sm:$0xff]
    %v1491 = vld [vmem:[#allocation2 + $0x2794] sm:$0xf]
    %v1492 = vld [vmem:[#allocation2 + $0x2798] sm:$0xff]
    %v1493 = vld [vmem:[#allocation2 + $0x27a0] sm:$0xff]
    %v1494 = vld [vmem:[#allocation2 + $0x27a8] sm:$0xff]
    %v1495 = vld [vmem:[#allocation2 + $0x27b0] sm:$0xf]
    %v1496 = vld [vmem:[#allocation2 + $0x27b4] sm:$0xff]
    %v1497 = vld [vmem:[#allocation2 + $0x27bc] sm:$0xff]
    %v1498 = vld [vmem:[#allocation2 + $0x27c4] sm:$0xff]
    %v1499 = vld [vmem:[#allocation2 + $0x27cc] sm:$0xf]
    %v1500 = vld [vmem:[#allocation2 + $0x27d0] sm:$0xff]
    %v1501 = vld [vmem:[#allocation2 + $0x27d8] sm:$0xff]
    %v1502 = vld [vmem:[#allocation2 + $0x27e0] sm:$0xff]
    %v1503 = vld [vmem:[#allocation2 + $0x27e8] sm:$0xf]
    %v1504 = vld [vmem:[#allocation2 + $0x27ec] sm:$0xff]
    %v1505 = vld [vmem:[#allocation2 + $0x27f4] sm:$0xff]
    %v1506 = vld [vmem:[#allocation2 + $0x27fc] sm:$0xff]
    %v1507 = vld [vmem:[#allocation2 + $0x2804] sm:$0xf]
    %v1508 = vld [vmem:[#allocation2 + $0x2808] sm:$0xff]
    %v1509 = vld [vmem:[#allocation2 + $0x2810] sm:$0xff]
    %v1510 = vld [vmem:[#allocation2 + $0x2818] sm:$0xff]
    %v1511 = vld [vmem:[#allocation2 + $0x2820] sm:$0xf]
    %v1512 = vld [vmem:[#allocation2 + $0x2824] sm:$0xff]
    %v1513 = vld [vmem:[#allocation2 + $0x282c] sm:$0xff]
    %v1514 = vld [vmem:[#allocation2 + $0x2834] sm:$0xff]
    %v1515 = vld [vmem:[#allocation2 + $0x283c] sm:$0xf]
    %v1516 = vld [vmem:[#allocation2 + $0x2840] sm:$0xff]
    %v1517 = vld [vmem:[#allocation2 + $0x2848] sm:$0xff]
    %v1518 = vld [vmem:[#allocation2 + $0x2850] sm:$0xff]
    %v1519 = vld [vmem:[#allocation2 + $0x2858] sm:$0xf]
    %v1520 = vld [vmem:[#allocation2 + $0x285c] sm:$0xff]
    %v1521 = vld [vmem:[#allocation2 + $0x2864] sm:$0xff]
    %v1522 = vld [vmem:[#allocation2 + $0x286c] sm:$0xff]
    %v1523 = vld [vmem:[#allocation2 + $0x2874] sm:$0xf]
    %v1524 = vld [vmem:[#allocation2 + $0x2878] sm:$0xff]
    %v1525 = vld [vmem:[#allocation2 + $0x2880] sm:$0xff]
    %v1526 = vld [vmem:[#allocation2 + $0x2888] sm:$0xff]
    %v1527 = vld [vmem:[#allocation2 + $0x2890] sm:$0xf]
    %v1528 = vld [vmem:[#allocation2 + $0x2894] sm:$0xff]
    %v1529 = vld [vmem:[#allocation2 + $0x289c] sm:$0xff]
    %v1530 = vld [vmem:[#allocation2 + $0x28a4] sm:$0xff]
    %v1531 = vld [vmem:[#allocation2 + $0x28ac] sm:$0xf]
    %v1532 = vld [vmem:[#allocation2 + $0x28b0] sm:$0xff]
    %v1533 = vld [vmem:[#allocation2 + $0x28b8] sm:$0xff]
    %v1534 = vld [vmem:[#allocation2 + $0x28c0] sm:$0xff]
    %v1535 = vld [vmem:[#allocation2 + $0x28c8] sm:$0xf]
    %v1536 = vld [vmem:[#allocation2 + $0x28cc] sm:$0xff]
    %v1537 = vld [vmem:[#allocation2 + $0x28d4] sm:$0xff]
    %v1538 = vld [vmem:[#allocation2 + $0x28dc] sm:$0xff]
    %v1539 = vld [vmem:[#allocation2 + $0x28e4] sm:$0xf]
    %v1540 = vld [vmem:[#allocation2 + $0x28e8] sm:$0xff]
    %v1541 = vld [vmem:[#allocation2 + $0x28f0] sm:$0xff]
    %v1542 = vld [vmem:[#allocation2 + $0x28f8] sm:$0xff]
    %v1543 = vld [vmem:[#allocation2 + $0x2900] sm:$0xf]
    %v1544 = vld [vmem:[#allocation2 + $0x2904] sm:$0xff]
    %v1545 = vld [vmem:[#allocation2 + $0x290c] sm:$0xff]
    %v1546 = vld [vmem:[#allocation2 + $0x2914] sm:$0xff]
    %v1547 = vld [vmem:[#allocation2 + $0x291c] sm:$0xf]
    %v1548 = vld [vmem:[#allocation2 + $0x2920] sm:$0xff]
    %v1549 = vld [vmem:[#allocation2 + $0x2928] sm:$0xff]
    %v1550 = vld [vmem:[#allocation2 + $0x2930] sm:$0xff]
    %v1551 = vld [vmem:[#allocation2 + $0x2938] sm:$0xf]
    %v1552 = vld [vmem:[#allocation2 + $0x293c] sm:$0xff]
    %v1553 = vld [vmem:[#allocation2 + $0x2944] sm:$0xff]
    %v1554 = vld [vmem:[#allocation2 + $0x294c] sm:$0xff]
    %v1555 = vld [vmem:[#allocation2 + $0x2954] sm:$0xf]
    %v1556 = vld [vmem:[#allocation2 + $0x2958] sm:$0xff]
    %v1557 = vld [vmem:[#allocation2 + $0x2960] sm:$0xff]
    %v1558 = vld [vmem:[#allocation2 + $0x2968] sm:$0xff]
    %v1559 = vld [vmem:[#allocation2 + $0x2970] sm:$0xf]
    %v1560 = vld [vmem:[#allocation2 + $0x2974] sm:$0xff]
    %v1561 = vld [vmem:[#allocation2 + $0x297c] sm:$0xff]
    %v1562 = vld [vmem:[#allocation2 + $0x2984] sm:$0xff]
    %v1563 = vld [vmem:[#allocation2 + $0x298c] sm:$0xf]
    %v1564 = vld [vmem:[#allocation2 + $0x2990] sm:$0xff]
    %v1565 = vld [vmem:[#allocation2 + $0x2998] sm:$0xff]
    %v1566 = vld [vmem:[#allocation2 + $0x29a0] sm:$0xff]
    %v1567 = vld [vmem:[#allocation2 + $0x29a8] sm:$0xf]
    %v1568 = vld [vmem:[#allocation2 + $0x29ac] sm:$0xff]
    %v1569 = vld [vmem:[#allocation2 + $0x29b4] sm:$0xff]
    %v1570 = vld [vmem:[#allocation2 + $0x29bc] sm:$0xff]
    %v1571 = vld [vmem:[#allocation2 + $0x29c4] sm:$0xf]
    %v1572 = vld [vmem:[#allocation2 + $0x29c8] sm:$0xff]
    %v1573 = vld [vmem:[#allocation2 + $0x29d0] sm:$0xff]
    %v1574 = vld [vmem:[#allocation2 + $0x29d8] sm:$0xff]
    %v1575 = vld [vmem:[#allocation2 + $0x29e0] sm:$0xf]
    %v1576 = vld [vmem:[#allocation2 + $0x29e4] sm:$0xff]
    %v1577 = vld [vmem:[#allocation2 + $0x29ec] sm:$0xff]
    %v1578 = vld [vmem:[#allocation2 + $0x29f4] sm:$0xff]
    %v1579 = vld [vmem:[#allocation2 + $0x29fc] sm:$0xf]
    %v1580 = vld [vmem:[%s0] sm:$0xff]
    %v1581 = vld [vmem:[%s0 + $0x8] sm:$0xff]
    %v1582 = vld [vmem:[%s0 + $0x10] sm:$0xff]
    %v1583 = vld [vmem:[%s0 + $0x18] sm:$0xff]
    %v1584 = vld [vmem:[%s0 + $0x20] sm:$0xff]
    %v1585 = vld [vmem:[%s0 + $0x28] sm:$0xff]
    %1592 = vst [vmem:[#allocation1] ss:$4 sm:$0xff] %v1580
    %s1593 = scalar_lea.vmem [#allocation1], 32
    %1594 = vst [vmem:[%s1593] ss:$4 sm:$0xff] %v1581
    %v1595 = vld.sshfl [vmem:[#allocation1] sm:$0xff pattern:$0x73625140]
    %v1596 = vld.sshfl [vmem:[#allocation1 + $0x8] sm:$0xff pattern:$0x73625140]
    %v1597 = vld.sshfl [vmem:[#allocation1 + $0x10] sm:$0xff pattern:$0x73625140]
    %v1598 = vld.sshfl [vmem:[#allocation1 + $0x18] sm:$0xff pattern:$0x73625140]
    %v1599 = vld.sshfl [vmem:[#allocation1 + $0x20] sm:$0xff pattern:$0x73625140]
    %v1600 = vld.sshfl [vmem:[#allocation1 + $0x28] sm:$0xff pattern:$0x73625140]
    %v1601 = vld.sshfl [vmem:[#allocation1 + $0x30] sm:$0xff pattern:$0x73625140]
    %v1602 = vld.sshfl [vmem:[#allocation1 + $0x38] sm:$0xff pattern:$0x73625140]
    %1603 = vst [vmem:[#allocation1] ss:$4 sm:$0xff] %v1582
    %1604 = vst [vmem:[%s1593] ss:$4 sm:$0xff] %v1583
    %v1605 = vld.sshfl [vmem:[#allocation1] sm:$0xff pattern:$0x73625140]
    %v1606 = vld.sshfl [vmem:[#allocation1 + $0x8] sm:$0xff pattern:$0x73625140]
    %v1607 = vld.sshfl [vmem:[#allocation1 + $0x10] sm:$0xff pattern:$0x73625140]
    %v1608 = vld.sshfl [vmem:[#allocation1 + $0x18] sm:$0xff pattern:$0x73625140]
    %v1609 = vld.sshfl [vmem:[#allocation1 + $0x20] sm:$0xff pattern:$0x73625140]
    %v1610 = vld.sshfl [vmem:[#allocation1 + $0x28] sm:$0xff pattern:$0x73625140]
    %v1611 = vld.sshfl [vmem:[#allocation1 + $0x30] sm:$0xff pattern:$0x73625140]
    %v1612 = vld.sshfl [vmem:[#allocation1 + $0x38] sm:$0xff pattern:$0x73625140]
    %1613 = vst [vmem:[#allocation1] ss:$4 sm:$0xff] %v1584
    %1614 = vst [vmem:[%s1593] ss:$4 sm:$0xff] %v1585
    %v1615 = vld.sshfl [vmem:[#allocation1] sm:$0xff pattern:$0x73625140]
    %v1616 = vld.sshfl [vmem:[#allocation1 + $0x8] sm:$0xff pattern:$0x73625140]
    %v1617 = vld.sshfl [vmem:[#allocation1 + $0x10] sm:$0xff pattern:$0x73625140]
    %v1618 = vld.sshfl [vmem:[#allocation1 + $0x18] sm:$0xff pattern:$0x73625140]
    %v1619 = vld.sshfl [vmem:[#allocation1 + $0x20] sm:$0xff pattern:$0x73625140]
    %v1620 = vld.sshfl [vmem:[#allocation1 + $0x28] sm:$0xff pattern:$0x73625140]
    %v1621 = vld.sshfl [vmem:[#allocation1 + $0x30] sm:$0xff pattern:$0x73625140]
    %v1622 = vld.sshfl [vmem:[#allocation1 + $0x38] sm:$0xff pattern:$0x73625140]
    %v1647 = vpack.c.bf16 %v1595, %v1595
    %v1648 = vpack.c.bf16 %v1596, %v1596
    %v1649 = vpack.c.bf16 %v1597, %v1597
    %v1650 = vpack.c.bf16 %v1598, %v1598
    %v1651 = vpack.c.bf16 %v1599, %v1599
    %v1652 = vpack.c.bf16 %v1600, %v1600
    %v1653 = vpack.c.bf16 %v1601, %v1601
    %v1654 = vpack.c.bf16 %v1602, %v1602
    %v1655 = vpack.c.bf16 %v1605, %v1605
    %v1656 = vpack.c.bf16 %v1606, %v1606
    %v1657 = vpack.c.bf16 %v1607, %v1607
    %v1658 = vpack.c.bf16 %v1608, %v1608
    %v1659 = vpack.c.bf16 %v1609, %v1609
    %v1660 = vpack.c.bf16 %v1610, %v1610
    %v1661 = vpack.c.bf16 %v1611, %v1611
    %v1662 = vpack.c.bf16 %v1612, %v1612
    %v1663 = vpack.c.bf16 %v1615, %v1615
    %v1664 = vpack.c.bf16 %v1616, %v1616
    %v1665 = vpack.c.bf16 %v1617, %v1617
    %v1666 = vpack.c.bf16 %v1618, %v1618
    %v1667 = vpack.c.bf16 %v1619, %v1619
    %v1668 = vpack.c.bf16 %v1620, %v1620
    %v1669 = vpack.c.bf16 %v1621, %v1621
    %v1670 = vpack.c.bf16 %v1622, %v1622
    %p1671 = scmp.eq.s32.totalorder 0, 0
    %s1672 = scalar_select %p1671, 1.0, 0.0
    %v1673 = vld [vmem:[#allocation4] sm:$0x7f]
    %v1674 = vstv %s1672
    %v1675 = vmul.f32 %v1674, %v1673
    %v1677 = vperm.slane %v1675, 0
    %v1678 = vperm.slane %v1675, 1
    %v1679 = vperm.slane %v1675, 2
    %v1680 = vperm.slane %v1675, 3
    %v1681 = vperm.slane %v1675, 4
    %v1682 = vperm.slane %v1675, 5
    %v1683 = vperm.slane %v1675, 6
    %v3227 = vunpack.c.l.b16 %v44
    %v3228 = vunpack.c.h.b16 %v44
    %v3229 = vunpack.c.l.b16 %v45
    %v3230 = vunpack.c.h.b16 %v45
    %v3231 = vunpack.c.l.b16 %v46
    %v3232 = vunpack.c.h.b16 %v46
    %v3233 = vunpack.c.l.b16 %v47
    %v3234 = vunpack.c.l.b16 %v48
    %v3235 = vunpack.c.h.b16 %v48
    %v3236 = vunpack.c.l.b16 %v49
    %v3237 = vunpack.c.h.b16 %v49
    %v3238 = vunpack.c.l.b16 %v50
    %v3239 = vunpack.c.h.b16 %v50
    %v3240 = vunpack.c.l.b16 %v51
    %v3241 = vunpack.c.l.b16 %v52
    %v3242 = vunpack.c.h.b16 %v52
    %v3243 = vunpack.c.l.b16 %v53
    %v3244 = vunpack.c.h.b16 %v53
    %v3245 = vunpack.c.l.b16 %v54
    %v3246 = vunpack.c.h.b16 %v54
    %v3247 = vunpack.c.l.b16 %v55
    %v3248 = vunpack.c.l.b16 %v56
    %v3249 = vunpack.c.h.b16 %v56
    %v3250 = vunpack.c.l.b16 %v57
    %v3251 = vunpack.c.h.b16 %v57
    %v3252 = vunpack.c.l.b16 %v58
    %v3253 = vunpack.c.h.b16 %v58
    %v3254 = vunpack.c.l.b16 %v59
    %v3255 = vunpack.c.l.b16 %v60
    %v3256 = vunpack.c.h.b16 %v60
    %v3257 = vunpack.c.l.b16 %v61
    %v3258 = vunpack.c.h.b16 %v61
    %v3259 = vunpack.c.l.b16 %v62
    %v3260 = vunpack.c.h.b16 %v62
    %v3261 = vunpack.c.l.b16 %v63
    %v3262 = vunpack.c.l.b16 %v64
    %v3263 = vunpack.c.h.b16 %v64
    %v3264 = vunpack.c.l.b16 %v65
    %v3265 = vunpack.c.h.b16 %v65
    %v3266 = vunpack.c.l.b16 %v66
    %v3267 = vunpack.c.h.b16 %v66
    %v3268 = vunpack.c.l.b16 %v67
    %v3269 = vunpack.c.l.b16 %v68
    %v3270 = vunpack.c.h.b16 %v68
    %v3271 = vunpack.c.l.b16 %v69
    %v3272 = vunpack.c.h.b16 %v69
    %v3273 = vunpack.c.l.b16 %v70
    %v3274 = vunpack.c.h.b16 %v70
    %v3275 = vunpack.c.l.b16 %v71
    %v3276 = vunpack.c.l.b16 %v72
    %v3277 = vunpack.c.h.b16 %v72
    %v3278 = vunpack.c.l.b16 %v73
    %v3279 = vunpack.c.h.b16 %v73
    %v3280 = vunpack.c.l.b16 %v74
    %v3281 = vunpack.c.h.b16 %v74
    %v3282 = vunpack.c.l.b16 %v75
    %v3283 = vunpack.c.l.b16 %v76
    %v3284 = vunpack.c.h.b16 %v76
    %v3285 = vunpack.c.l.b16 %v77
    %v3286 = vunpack.c.h.b16 %v77
    %v3287 = vunpack.c.l.b16 %v78
    %v3288 = vunpack.c.h.b16 %v78
    %v3289 = vunpack.c.l.b16 %v79
    %v3290 = vunpack.c.l.b16 %v80
    %v3291 = vunpack.c.h.b16 %v80
    %v3292 = vunpack.c.l.b16 %v81
    %v3293 = vunpack.c.h.b16 %v81
    %v3294 = vunpack.c.l.b16 %v82
    %v3295 = vunpack.c.h.b16 %v82
    %v3296 = vunpack.c.l.b16 %v83
    %v3297 = vunpack.c.l.b16 %v84
    %v3298 = vunpack.c.h.b16 %v84
    %v3299 = vunpack.c.l.b16 %v85
    %v3300 = vunpack.c.h.b16 %v85
    %v3301 = vunpack.c.l.b16 %v86
    %v3302 = vunpack.c.h.b16 %v86
    %v3303 = vunpack.c.l.b16 %v87
    %v3304 = vunpack.c.l.b16 %v88
    %v3305 = vunpack.c.h.b16 %v88
    %v3306 = vunpack.c.l.b16 %v89
    %v3307 = vunpack.c.h.b16 %v89
    %v3308 = vunpack.c.l.b16 %v90
    %v3309 = vunpack.c.h.b16 %v90
    %v3310 = vunpack.c.l.b16 %v91
    %v3311 = vunpack.c.l.b16 %v92
    %v3312 = vunpack.c.h.b16 %v92
    %v3313 = vunpack.c.l.b16 %v93
    %v3314 = vunpack.c.h.b16 %v93
    %v3315 = vunpack.c.l.b16 %v94
    %v3316 = vunpack.c.h.b16 %v94
    %v3317 = vunpack.c.l.b16 %v95
    %v3318 = vunpack.c.l.b16 %v96
    %v3319 = vunpack.c.h.b16 %v96
    %v3320 = vunpack.c.l.b16 %v97
    %v3321 = vunpack.c.h.b16 %v97
    %v3322 = vunpack.c.l.b16 %v98
    %v3323 = vunpack.c.h.b16 %v98
    %v3324 = vunpack.c.l.b16 %v99
    %v3325 = vunpack.c.l.b16 %v100
    %v3326 = vunpack.c.h.b16 %v100
    %v3327 = vunpack.c.l.b16 %v101
    %v3328 = vunpack.c.h.b16 %v101
    %v3329 = vunpack.c.l.b16 %v102
    %v3330 = vunpack.c.h.b16 %v102
    %v3331 = vunpack.c.l.b16 %v103
    %v3332 = vunpack.c.l.b16 %v104
    %v3333 = vunpack.c.h.b16 %v104
    %v3334 = vunpack.c.l.b16 %v105
    %v3335 = vunpack.c.h.b16 %v105
    %v3336 = vunpack.c.l.b16 %v106
    %v3337 = vunpack.c.h.b16 %v106
    %v3338 = vunpack.c.l.b16 %v107
    %v3339 = vunpack.c.l.b16 %v108
    %v3340 = vunpack.c.h.b16 %v108
    %v3341 = vunpack.c.l.b16 %v109
    %v3342 = vunpack.c.h.b16 %v109
    %v3343 = vunpack.c.l.b16 %v110
    %v3344 = vunpack.c.h.b16 %v110
    %v3345 = vunpack.c.l.b16 %v111
    %v3346 = vunpack.c.l.b16 %v112
    %v3347 = vunpack.c.h.b16 %v112
    %v3348 = vunpack.c.l.b16 %v113
    %v3349 = vunpack.c.h.b16 %v113
    %v3350 = vunpack.c.l.b16 %v114
    %v3351 = vunpack.c.h.b16 %v114
    %v3352 = vunpack.c.l.b16 %v115
    %v3353 = vunpack.c.l.b16 %v116
    %v3354 = vunpack.c.h.b16 %v116
    %v3355 = vunpack.c.l.b16 %v117
    %v3356 = vunpack.c.h.b16 %v117
    %v3357 = vunpack.c.l.b16 %v118
    %v3358 = vunpack.c.h.b16 %v118
    %v3359 = vunpack.c.l.b16 %v119
    %v3360 = vunpack.c.l.b16 %v120
    %v3361 = vunpack.c.h.b16 %v120
    %v3362 = vunpack.c.l.b16 %v121
    %v3363 = vunpack.c.h.b16 %v121
    %v3364 = vunpack.c.l.b16 %v122
    %v3365 = vunpack.c.h.b16 %v122
    %v3366 = vunpack.c.l.b16 %v123
    %v3367 = vunpack.c.l.b16 %v124
    %v3368 = vunpack.c.h.b16 %v124
    %v3369 = vunpack.c.l.b16 %v125
    %v3370 = vunpack.c.h.b16 %v125
    %v3371 = vunpack.c.l.b16 %v126
    %v3372 = vunpack.c.h.b16 %v126
    %v3373 = vunpack.c.l.b16 %v127
    %v3374 = vunpack.c.l.b16 %v128
    %v3375 = vunpack.c.h.b16 %v128
    %v3376 = vunpack.c.l.b16 %v129
    %v3377 = vunpack.c.h.b16 %v129
    %v3378 = vunpack.c.l.b16 %v130
    %v3379 = vunpack.c.h.b16 %v130
    %v3380 = vunpack.c.l.b16 %v131
    %v3381 = vunpack.c.l.b16 %v132
    %v3382 = vunpack.c.h.b16 %v132
    %v3383 = vunpack.c.l.b16 %v133
    %v3384 = vunpack.c.h.b16 %v133
    %v3385 = vunpack.c.l.b16 %v134
    %v3386 = vunpack.c.h.b16 %v134
    %v3387 = vunpack.c.l.b16 %v135
    %v3388 = vunpack.c.l.b16 %v136
    %v3389 = vunpack.c.h.b16 %v136
    %v3390 = vunpack.c.l.b16 %v137
    %v3391 = vunpack.c.h.b16 %v137
    %v3392 = vunpack.c.l.b16 %v138
    %v3393 = vunpack.c.h.b16 %v138
    %v3394 = vunpack.c.l.b16 %v139
    %v3395 = vunpack.c.l.b16 %v140
    %v3396 = vunpack.c.h.b16 %v140
    %v3397 = vunpack.c.l.b16 %v141
    %v3398 = vunpack.c.h.b16 %v141
    %v3399 = vunpack.c.l.b16 %v142
    %v3400 = vunpack.c.h.b16 %v142
    %v3401 = vunpack.c.l.b16 %v143
    %v3402 = vunpack.c.l.b16 %v144
    %v3403 = vunpack.c.h.b16 %v144
    %v3404 = vunpack.c.l.b16 %v145
    %v3405 = vunpack.c.h.b16 %v145
    %v3406 = vunpack.c.l.b16 %v146
    %v3407 = vunpack.c.h.b16 %v146
    %v3408 = vunpack.c.l.b16 %v147
    %v3409 = vunpack.c.l.b16 %v148
    %v3410 = vunpack.c.h.b16 %v148
    %v3411 = vunpack.c.l.b16 %v149
    %v3412 = vunpack.c.h.b16 %v149
    %v3413 = vunpack.c.l.b16 %v150
    %v3414 = vunpack.c.h.b16 %v150
    %v3415 = vunpack.c.l.b16 %v151
    %v3416 = vunpack.c.l.b16 %v152
    %v3417 = vunpack.c.h.b16 %v152
    %v3418 = vunpack.c.l.b16 %v153
    %v3419 = vunpack.c.h.b16 %v153
    %v3420 = vunpack.c.l.b16 %v154
    %v3421 = vunpack.c.h.b16 %v154
    %v3422 = vunpack.c.l.b16 %v155
    %v3423 = vunpack.c.l.b16 %v156
    %v3424 = vunpack.c.h.b16 %v156
    %v3425 = vunpack.c.l.b16 %v157
    %v3426 = vunpack.c.h.b16 %v157
    %v3427 = vunpack.c.l.b16 %v158
    %v3428 = vunpack.c.h.b16 %v158
    %v3429 = vunpack.c.l.b16 %v159
    %v3430 = vunpack.c.l.b16 %v160
    %v3431 = vunpack.c.h.b16 %v160
    %v3432 = vunpack.c.l.b16 %v161
    %v3433 = vunpack.c.h.b16 %v161
    %v3434 = vunpack.c.l.b16 %v162
    %v3435 = vunpack.c.h.b16 %v162
    %v3436 = vunpack.c.l.b16 %v163
    %v3437 = vunpack.c.l.b16 %v164
    %v3438 = vunpack.c.h.b16 %v164
    %v3439 = vunpack.c.l.b16 %v165
    %v3440 = vunpack.c.h.b16 %v165
    %v3441 = vunpack.c.l.b16 %v166
    %v3442 = vunpack.c.h.b16 %v166
    %v3443 = vunpack.c.l.b16 %v167
    %v3444 = vunpack.c.l.b16 %v168
    %v3445 = vunpack.c.h.b16 %v168
    %v3446 = vunpack.c.l.b16 %v169
    %v3447 = vunpack.c.h.b16 %v169
    %v3448 = vunpack.c.l.b16 %v170
    %v3449 = vunpack.c.h.b16 %v170
    %v3450 = vunpack.c.l.b16 %v171
    %v3451 = vunpack.c.l.b16 %v172
    %v3452 = vunpack.c.h.b16 %v172
    %v3453 = vunpack.c.l.b16 %v173
    %v3454 = vunpack.c.h.b16 %v173
    %v3455 = vunpack.c.l.b16 %v174
    %v3456 = vunpack.c.h.b16 %v174
    %v3457 = vunpack.c.l.b16 %v175
    %v3458 = vunpack.c.l.b16 %v176
    %v3459 = vunpack.c.h.b16 %v176
    %v3460 = vunpack.c.l.b16 %v177
    %v3461 = vunpack.c.h.b16 %v177
    %v3462 = vunpack.c.l.b16 %v178
    %v3463 = vunpack.c.h.b16 %v178
    %v3464 = vunpack.c.l.b16 %v179
    %v3465 = vunpack.c.l.b16 %v180
    %v3466 = vunpack.c.h.b16 %v180
    %v3467 = vunpack.c.l.b16 %v181
    %v3468 = vunpack.c.h.b16 %v181
    %v3469 = vunpack.c.l.b16 %v182
    %v3470 = vunpack.c.h.b16 %v182
    %v3471 = vunpack.c.l.b16 %v183
    %v3472 = vunpack.c.l.b16 %v184
    %v3473 = vunpack.c.h.b16 %v184
    %v3474 = vunpack.c.l.b16 %v185
    %v3475 = vunpack.c.h.b16 %v185
    %v3476 = vunpack.c.l.b16 %v186
    %v3477 = vunpack.c.h.b16 %v186
    %v3478 = vunpack.c.l.b16 %v187
    %v3479 = vunpack.c.l.b16 %v188
    %v3480 = vunpack.c.h.b16 %v188
    %v3481 = vunpack.c.l.b16 %v189
    %v3482 = vunpack.c.h.b16 %v189
    %v3483 = vunpack.c.l.b16 %v190
    %v3484 = vunpack.c.h.b16 %v190
    %v3485 = vunpack.c.l.b16 %v191
    %v3486 = vunpack.c.l.b16 %v192
    %v3487 = vunpack.c.h.b16 %v192
    %v3488 = vunpack.c.l.b16 %v193
    %v3489 = vunpack.c.h.b16 %v193
    %v3490 = vunpack.c.l.b16 %v194
    %v3491 = vunpack.c.h.b16 %v194
    %v3492 = vunpack.c.l.b16 %v195
    %v3493 = vunpack.c.l.b16 %v196
    %v3494 = vunpack.c.h.b16 %v196
    %v3495 = vunpack.c.l.b16 %v197
    %v3496 = vunpack.c.h.b16 %v197
    %v3497 = vunpack.c.l.b16 %v198
    %v3498 = vunpack.c.h.b16 %v198
    %v3499 = vunpack.c.l.b16 %v199
    %v3500 = vunpack.c.l.b16 %v200
    %v3501 = vunpack.c.h.b16 %v200
    %v3502 = vunpack.c.l.b16 %v201
    %v3503 = vunpack.c.h.b16 %v201
    %v3504 = vunpack.c.l.b16 %v202
    %v3505 = vunpack.c.h.b16 %v202
    %v3506 = vunpack.c.l.b16 %v203
    %v3507 = vunpack.c.l.b16 %v204
    %v3508 = vunpack.c.h.b16 %v204
    %v3509 = vunpack.c.l.b16 %v205
    %v3510 = vunpack.c.h.b16 %v205
    %v3511 = vunpack.c.l.b16 %v206
    %v3512 = vunpack.c.h.b16 %v206
    %v3513 = vunpack.c.l.b16 %v207
    %v3514 = vunpack.c.l.b16 %v208
    %v3515 = vunpack.c.h.b16 %v208
    %v3516 = vunpack.c.l.b16 %v209
    %v3517 = vunpack.c.h.b16 %v209
    %v3518 = vunpack.c.l.b16 %v210
    %v3519 = vunpack.c.h.b16 %v210
    %v3520 = vunpack.c.l.b16 %v211
    %v3521 = vunpack.c.l.b16 %v212
    %v3522 = vunpack.c.h.b16 %v212
    %v3523 = vunpack.c.l.b16 %v213
    %v3524 = vunpack.c.h.b16 %v213
    %v3525 = vunpack.c.l.b16 %v214
    %v3526 = vunpack.c.h.b16 %v214
    %v3527 = vunpack.c.l.b16 %v215
    %v3528 = vunpack.c.l.b16 %v216
    %v3529 = vunpack.c.h.b16 %v216
    %v3530 = vunpack.c.l.b16 %v217
    %v3531 = vunpack.c.h.b16 %v217
    %v3532 = vunpack.c.l.b16 %v218
    %v3533 = vunpack.c.h.b16 %v218
    %v3534 = vunpack.c.l.b16 %v219
    %v3535 = vunpack.c.l.b16 %v220
    %v3536 = vunpack.c.h.b16 %v220
    %v3537 = vunpack.c.l.b16 %v221
    %v3538 = vunpack.c.h.b16 %v221
    %v3539 = vunpack.c.l.b16 %v222
    %v3540 = vunpack.c.h.b16 %v222
    %v3541 = vunpack.c.l.b16 %v223
    %v3542 = vunpack.c.l.b16 %v224
    %v3543 = vunpack.c.h.b16 %v224
    %v3544 = vunpack.c.l.b16 %v225
    %v3545 = vunpack.c.h.b16 %v225
    %v3546 = vunpack.c.l.b16 %v226
    %v3547 = vunpack.c.h.b16 %v226
    %v3548 = vunpack.c.l.b16 %v227
    %v3549 = vunpack.c.l.b16 %v228
    %v3550 = vunpack.c.h.b16 %v228
    %v3551 = vunpack.c.l.b16 %v229
    %v3552 = vunpack.c.h.b16 %v229
    %v3553 = vunpack.c.l.b16 %v230
    %v3554 = vunpack.c.h.b16 %v230
    %v3555 = vunpack.c.l.b16 %v231
    %v3556 = vunpack.c.l.b16 %v232
    %v3557 = vunpack.c.h.b16 %v232
    %v3558 = vunpack.c.l.b16 %v233
    %v3559 = vunpack.c.h.b16 %v233
    %v3560 = vunpack.c.l.b16 %v234
    %v3561 = vunpack.c.h.b16 %v234
    %v3562 = vunpack.c.l.b16 %v235
    %v3563 = vunpack.c.l.b16 %v236
    %v3564 = vunpack.c.h.b16 %v236
    %v3565 = vunpack.c.l.b16 %v237
    %v3566 = vunpack.c.h.b16 %v237
    %v3567 = vunpack.c.l.b16 %v238
    %v3568 = vunpack.c.h.b16 %v238
    %v3569 = vunpack.c.l.b16 %v239
    %v3570 = vunpack.c.l.b16 %v240
    %v3571 = vunpack.c.h.b16 %v240
    %v3572 = vunpack.c.l.b16 %v241
    %v3573 = vunpack.c.h.b16 %v241
    %v3574 = vunpack.c.l.b16 %v242
    %v3575 = vunpack.c.h.b16 %v242
    %v3576 = vunpack.c.l.b16 %v243
    %v3577 = vunpack.c.l.b16 %v244
    %v3578 = vunpack.c.h.b16 %v244
    %v3579 = vunpack.c.l.b16 %v245
    %v3580 = vunpack.c.h.b16 %v245
    %v3581 = vunpack.c.l.b16 %v246
    %v3582 = vunpack.c.h.b16 %v246
    %v3583 = vunpack.c.l.b16 %v247
    %v3584 = vunpack.c.l.b16 %v248
    %v3585 = vunpack.c.h.b16 %v248
    %v3586 = vunpack.c.l.b16 %v249
    %v3587 = vunpack.c.h.b16 %v249
    %v3588 = vunpack.c.l.b16 %v250
    %v3589 = vunpack.c.h.b16 %v250
    %v3590 = vunpack.c.l.b16 %v251
    %v3591 = vunpack.c.l.b16 %v252
    %v3592 = vunpack.c.h.b16 %v252
    %v3593 = vunpack.c.l.b16 %v253
    %v3594 = vunpack.c.h.b16 %v253
    %v3595 = vunpack.c.l.b16 %v254
    %v3596 = vunpack.c.h.b16 %v254
    %v3597 = vunpack.c.l.b16 %v255
    %v3598 = vunpack.c.l.b16 %v256
    %v3599 = vunpack.c.h.b16 %v256
    %v3600 = vunpack.c.l.b16 %v257
    %v3601 = vunpack.c.h.b16 %v257
    %v3602 = vunpack.c.l.b16 %v258
    %v3603 = vunpack.c.h.b16 %v258
    %v3604 = vunpack.c.l.b16 %v259
    %v3605 = vunpack.c.l.b16 %v260
    %v3606 = vunpack.c.h.b16 %v260
    %v3607 = vunpack.c.l.b16 %v261
    %v3608 = vunpack.c.h.b16 %v261
    %v3609 = vunpack.c.l.b16 %v262
    %v3610 = vunpack.c.h.b16 %v262
    %v3611 = vunpack.c.l.b16 %v263
    %v3612 = vunpack.c.l.b16 %v264
    %v3613 = vunpack.c.h.b16 %v264
    %v3614 = vunpack.c.l.b16 %v265
    %v3615 = vunpack.c.h.b16 %v265
    %v3616 = vunpack.c.l.b16 %v266
    %v3617 = vunpack.c.h.b16 %v266
    %v3618 = vunpack.c.l.b16 %v267
    %v3619 = vunpack.c.l.b16 %v268
    %v3620 = vunpack.c.h.b16 %v268
    %v3621 = vunpack.c.l.b16 %v269
    %v3622 = vunpack.c.h.b16 %v269
    %v3623 = vunpack.c.l.b16 %v270
    %v3624 = vunpack.c.h.b16 %v270
    %v3625 = vunpack.c.l.b16 %v271
    %v3626 = vunpack.c.l.b16 %v272
    %v3627 = vunpack.c.h.b16 %v272
    %v3628 = vunpack.c.l.b16 %v273
    %v3629 = vunpack.c.h.b16 %v273
    %v3630 = vunpack.c.l.b16 %v274
    %v3631 = vunpack.c.h.b16 %v274
    %v3632 = vunpack.c.l.b16 %v275
    %v3633 = vunpack.c.l.b16 %v276
    %v3634 = vunpack.c.h.b16 %v276
    %v3635 = vunpack.c.l.b16 %v277
    %v3636 = vunpack.c.h.b16 %v277
    %v3637 = vunpack.c.l.b16 %v278
    %v3638 = vunpack.c.h.b16 %v278
    %v3639 = vunpack.c.l.b16 %v279
    %v3640 = vunpack.c.l.b16 %v280
    %v3641 = vunpack.c.h.b16 %v280
    %v3642 = vunpack.c.l.b16 %v281
    %v3643 = vunpack.c.h.b16 %v281
    %v3644 = vunpack.c.l.b16 %v282
    %v3645 = vunpack.c.h.b16 %v282
    %v3646 = vunpack.c.l.b16 %v283
    %v3647 = vunpack.c.l.b16 %v284
    %v3648 = vunpack.c.h.b16 %v284
    %v3649 = vunpack.c.l.b16 %v285
    %v3650 = vunpack.c.h.b16 %v285
    %v3651 = vunpack.c.l.b16 %v286
    %v3652 = vunpack.c.h.b16 %v286
    %v3653 = vunpack.c.l.b16 %v287
    %v3654 = vunpack.c.l.b16 %v288
    %v3655 = vunpack.c.h.b16 %v288
    %v3656 = vunpack.c.l.b16 %v289
    %v3657 = vunpack.c.h.b16 %v289
    %v3658 = vunpack.c.l.b16 %v290
    %v3659 = vunpack.c.h.b16 %v290
    %v3660 = vunpack.c.l.b16 %v291
    %v3661 = vunpack.c.l.b16 %v292
    %v3662 = vunpack.c.h.b16 %v292
    %v3663 = vunpack.c.l.b16 %v293
    %v3664 = vunpack.c.h.b16 %v293
    %v3665 = vunpack.c.l.b16 %v294
    %v3666 = vunpack.c.h.b16 %v294
    %v3667 = vunpack.c.l.b16 %v295
    %v3668 = vunpack.c.l.b16 %v296
    %v3669 = vunpack.c.h.b16 %v296
    %v3670 = vunpack.c.l.b16 %v297
    %v3671 = vunpack.c.h.b16 %v297
    %v3672 = vunpack.c.l.b16 %v298
    %v3673 = vunpack.c.h.b16 %v298
    %v3674 = vunpack.c.l.b16 %v299
    %v3675 = vunpack.c.l.b16 %v300
    %v3676 = vunpack.c.h.b16 %v300
    %v3677 = vunpack.c.l.b16 %v301
    %v3678 = vunpack.c.h.b16 %v301
    %v3679 = vunpack.c.l.b16 %v302
    %v3680 = vunpack.c.h.b16 %v302
    %v3681 = vunpack.c.l.b16 %v303
    %v3682 = vunpack.c.l.b16 %v304
    %v3683 = vunpack.c.h.b16 %v304
    %v3684 = vunpack.c.l.b16 %v305
    %v3685 = vunpack.c.h.b16 %v305
    %v3686 = vunpack.c.l.b16 %v306
    %v3687 = vunpack.c.h.b16 %v306
    %v3688 = vunpack.c.l.b16 %v307
    %v3689 = vunpack.c.l.b16 %v308
    %v3690 = vunpack.c.h.b16 %v308
    %v3691 = vunpack.c.l.b16 %v309
    %v3692 = vunpack.c.h.b16 %v309
    %v3693 = vunpack.c.l.b16 %v310
    %v3694 = vunpack.c.h.b16 %v310
    %v3695 = vunpack.c.l.b16 %v311
    %v3696 = vunpack.c.l.b16 %v312
    %v3697 = vunpack.c.h.b16 %v312
    %v3698 = vunpack.c.l.b16 %v313
    %v3699 = vunpack.c.h.b16 %v313
    %v3700 = vunpack.c.l.b16 %v314
    %v3701 = vunpack.c.h.b16 %v314
    %v3702 = vunpack.c.l.b16 %v315
    %v3703 = vunpack.c.l.b16 %v316
    %v3704 = vunpack.c.h.b16 %v316
    %v3705 = vunpack.c.l.b16 %v317
    %v3706 = vunpack.c.h.b16 %v317
    %v3707 = vunpack.c.l.b16 %v318
    %v3708 = vunpack.c.h.b16 %v318
    %v3709 = vunpack.c.l.b16 %v319
    %v3710 = vunpack.c.l.b16 %v320
    %v3711 = vunpack.c.h.b16 %v320
    %v3712 = vunpack.c.l.b16 %v321
    %v3713 = vunpack.c.h.b16 %v321
    %v3714 = vunpack.c.l.b16 %v322
    %v3715 = vunpack.c.h.b16 %v322
    %v3716 = vunpack.c.l.b16 %v323
    %v3717 = vunpack.c.l.b16 %v324
    %v3718 = vunpack.c.h.b16 %v324
    %v3719 = vunpack.c.l.b16 %v325
    %v3720 = vunpack.c.h.b16 %v325
    %v3721 = vunpack.c.l.b16 %v326
    %v3722 = vunpack.c.h.b16 %v326
    %v3723 = vunpack.c.l.b16 %v327
    %v3724 = vunpack.c.l.b16 %v328
    %v3725 = vunpack.c.h.b16 %v328
    %v3726 = vunpack.c.l.b16 %v329
    %v3727 = vunpack.c.h.b16 %v329
    %v3728 = vunpack.c.l.b16 %v330
    %v3729 = vunpack.c.h.b16 %v330
    %v3730 = vunpack.c.l.b16 %v331
    %v3731 = vunpack.c.l.b16 %v332
    %v3732 = vunpack.c.h.b16 %v332
    %v3733 = vunpack.c.l.b16 %v333
    %v3734 = vunpack.c.h.b16 %v333
    %v3735 = vunpack.c.l.b16 %v334
    %v3736 = vunpack.c.h.b16 %v334
    %v3737 = vunpack.c.l.b16 %v335
    %v3738 = vunpack.c.l.b16 %v336
    %v3739 = vunpack.c.h.b16 %v336
    %v3740 = vunpack.c.l.b16 %v337
    %v3741 = vunpack.c.h.b16 %v337
    %v3742 = vunpack.c.l.b16 %v338
    %v3743 = vunpack.c.h.b16 %v338
    %v3744 = vunpack.c.l.b16 %v339
    %v3745 = vunpack.c.l.b16 %v340
    %v3746 = vunpack.c.h.b16 %v340
    %v3747 = vunpack.c.l.b16 %v341
    %v3748 = vunpack.c.h.b16 %v341
    %v3749 = vunpack.c.l.b16 %v342
    %v3750 = vunpack.c.h.b16 %v342
    %v3751 = vunpack.c.l.b16 %v343
    %v3752 = vunpack.c.l.b16 %v344
    %v3753 = vunpack.c.h.b16 %v344
    %v3754 = vunpack.c.l.b16 %v345
    %v3755 = vunpack.c.h.b16 %v345
    %v3756 = vunpack.c.l.b16 %v346
    %v3757 = vunpack.c.h.b16 %v346
    %v3758 = vunpack.c.l.b16 %v347
    %v3759 = vunpack.c.l.b16 %v348
    %v3760 = vunpack.c.h.b16 %v348
    %v3761 = vunpack.c.l.b16 %v349
    %v3762 = vunpack.c.h.b16 %v349
    %v3763 = vunpack.c.l.b16 %v350
    %v3764 = vunpack.c.h.b16 %v350
    %v3765 = vunpack.c.l.b16 %v351
    %v3766 = vunpack.c.l.b16 %v352
    %v3767 = vunpack.c.h.b16 %v352
    %v3768 = vunpack.c.l.b16 %v353
    %v3769 = vunpack.c.h.b16 %v353
    %v3770 = vunpack.c.l.b16 %v354
    %v3771 = vunpack.c.h.b16 %v354
    %v3772 = vunpack.c.l.b16 %v355
    %v3773 = vunpack.c.l.b16 %v356
    %v3774 = vunpack.c.h.b16 %v356
    %v3775 = vunpack.c.l.b16 %v357
    %v3776 = vunpack.c.h.b16 %v357
    %v3777 = vunpack.c.l.b16 %v358
    %v3778 = vunpack.c.h.b16 %v358
    %v3779 = vunpack.c.l.b16 %v359
    %v3780 = vunpack.c.l.b16 %v360
    %v3781 = vunpack.c.h.b16 %v360
    %v3782 = vunpack.c.l.b16 %v361
    %v3783 = vunpack.c.h.b16 %v361
    %v3784 = vunpack.c.l.b16 %v362
    %v3785 = vunpack.c.h.b16 %v362
    %v3786 = vunpack.c.l.b16 %v363
    %v3787 = vunpack.c.l.b16 %v364
    %v3788 = vunpack.c.h.b16 %v364
    %v3789 = vunpack.c.l.b16 %v365
    %v3790 = vunpack.c.h.b16 %v365
    %v3791 = vunpack.c.l.b16 %v366
    %v3792 = vunpack.c.h.b16 %v366
    %v3793 = vunpack.c.l.b16 %v367
    %v3794 = vunpack.c.l.b16 %v368
    %v3795 = vunpack.c.h.b16 %v368
    %v3796 = vunpack.c.l.b16 %v369
    %v3797 = vunpack.c.h.b16 %v369
    %v3798 = vunpack.c.l.b16 %v370
    %v3799 = vunpack.c.h.b16 %v370
    %v3800 = vunpack.c.l.b16 %v371
    %v3801 = vunpack.c.l.b16 %v372
    %v3802 = vunpack.c.h.b16 %v372
    %v3803 = vunpack.c.l.b16 %v373
    %v3804 = vunpack.c.h.b16 %v373
    %v3805 = vunpack.c.l.b16 %v374
    %v3806 = vunpack.c.h.b16 %v374
    %v3807 = vunpack.c.l.b16 %v375
    %v3808 = vunpack.c.l.b16 %v376
    %v3809 = vunpack.c.h.b16 %v376
    %v3810 = vunpack.c.l.b16 %v377
    %v3811 = vunpack.c.h.b16 %v377
    %v3812 = vunpack.c.l.b16 %v378
    %v3813 = vunpack.c.h.b16 %v378
    %v3814 = vunpack.c.l.b16 %v379
    %v3815 = vunpack.c.l.b16 %v380
    %v3816 = vunpack.c.h.b16 %v380
    %v3817 = vunpack.c.l.b16 %v381
    %v3818 = vunpack.c.h.b16 %v381
    %v3819 = vunpack.c.l.b16 %v382
    %v3820 = vunpack.c.h.b16 %v382
    %v3821 = vunpack.c.l.b16 %v383
    %v3822 = vunpack.c.l.b16 %v384
    %v3823 = vunpack.c.h.b16 %v384
    %v3824 = vunpack.c.l.b16 %v385
    %v3825 = vunpack.c.h.b16 %v385
    %v3826 = vunpack.c.l.b16 %v386
    %v3827 = vunpack.c.h.b16 %v386
    %v3828 = vunpack.c.l.b16 %v387
    %v3829 = vunpack.c.l.b16 %v388
    %v3830 = vunpack.c.h.b16 %v388
    %v3831 = vunpack.c.l.b16 %v389
    %v3832 = vunpack.c.h.b16 %v389
    %v3833 = vunpack.c.l.b16 %v390
    %v3834 = vunpack.c.h.b16 %v390
    %v3835 = vunpack.c.l.b16 %v391
    %v3836 = vunpack.c.l.b16 %v392
    %v3837 = vunpack.c.h.b16 %v392
    %v3838 = vunpack.c.l.b16 %v393
    %v3839 = vunpack.c.h.b16 %v393
    %v3840 = vunpack.c.l.b16 %v394
    %v3841 = vunpack.c.h.b16 %v394
    %v3842 = vunpack.c.l.b16 %v395
    %v3843 = vunpack.c.l.b16 %v396
    %v3844 = vunpack.c.h.b16 %v396
    %v3845 = vunpack.c.l.b16 %v397
    %v3846 = vunpack.c.h.b16 %v397
    %v3847 = vunpack.c.l.b16 %v398
    %v3848 = vunpack.c.h.b16 %v398
    %v3849 = vunpack.c.l.b16 %v399
    %v3850 = vunpack.c.l.b16 %v400
    %v3851 = vunpack.c.h.b16 %v400
    %v3852 = vunpack.c.l.b16 %v401
    %v3853 = vunpack.c.h.b16 %v401
    %v3854 = vunpack.c.l.b16 %v402
    %v3855 = vunpack.c.h.b16 %v402
    %v3856 = vunpack.c.l.b16 %v403
    %v3857 = vunpack.c.l.b16 %v404
    %v3858 = vunpack.c.h.b16 %v404
    %v3859 = vunpack.c.l.b16 %v405
    %v3860 = vunpack.c.h.b16 %v405
    %v3861 = vunpack.c.l.b16 %v406
    %v3862 = vunpack.c.h.b16 %v406
    %v3863 = vunpack.c.l.b16 %v407
    %v3864 = vunpack.c.l.b16 %v408
    %v3865 = vunpack.c.h.b16 %v408
    %v3866 = vunpack.c.l.b16 %v409
    %v3867 = vunpack.c.h.b16 %v409
    %v3868 = vunpack.c.l.b16 %v410
    %v3869 = vunpack.c.h.b16 %v410
    %v3870 = vunpack.c.l.b16 %v411
    %v3871 = vunpack.c.l.b16 %v412
    %v3872 = vunpack.c.h.b16 %v412
    %v3873 = vunpack.c.l.b16 %v413
    %v3874 = vunpack.c.h.b16 %v413
    %v3875 = vunpack.c.l.b16 %v414
    %v3876 = vunpack.c.h.b16 %v414
    %v3877 = vunpack.c.l.b16 %v415
    %v3878 = vunpack.c.l.b16 %v416
    %v3879 = vunpack.c.h.b16 %v416
    %v3880 = vunpack.c.l.b16 %v417
    %v3881 = vunpack.c.h.b16 %v417
    %v3882 = vunpack.c.l.b16 %v418
    %v3883 = vunpack.c.h.b16 %v418
    %v3884 = vunpack.c.l.b16 %v419
    %v3885 = vunpack.c.l.b16 %v420
    %v3886 = vunpack.c.h.b16 %v420
    %v3887 = vunpack.c.l.b16 %v421
    %v3888 = vunpack.c.h.b16 %v421
    %v3889 = vunpack.c.l.b16 %v422
    %v3890 = vunpack.c.h.b16 %v422
    %v3891 = vunpack.c.l.b16 %v423
    %v3892 = vunpack.c.l.b16 %v424
    %v3893 = vunpack.c.h.b16 %v424
    %v3894 = vunpack.c.l.b16 %v425
    %v3895 = vunpack.c.h.b16 %v425
    %v3896 = vunpack.c.l.b16 %v426
    %v3897 = vunpack.c.h.b16 %v426
    %v3898 = vunpack.c.l.b16 %v427
    %v3899 = vunpack.c.l.b16 %v428
    %v3900 = vunpack.c.h.b16 %v428
    %v3901 = vunpack.c.l.b16 %v429
    %v3902 = vunpack.c.h.b16 %v429
    %v3903 = vunpack.c.l.b16 %v430
    %v3904 = vunpack.c.h.b16 %v430
    %v3905 = vunpack.c.l.b16 %v431
    %v3906 = vunpack.c.l.b16 %v432
    %v3907 = vunpack.c.h.b16 %v432
    %v3908 = vunpack.c.l.b16 %v433
    %v3909 = vunpack.c.h.b16 %v433
    %v3910 = vunpack.c.l.b16 %v434
    %v3911 = vunpack.c.h.b16 %v434
    %v3912 = vunpack.c.l.b16 %v435
    %v3913 = vunpack.c.l.b16 %v436
    %v3914 = vunpack.c.h.b16 %v436
    %v3915 = vunpack.c.l.b16 %v437
    %v3916 = vunpack.c.h.b16 %v437
    %v3917 = vunpack.c.l.b16 %v438
    %v3918 = vunpack.c.h.b16 %v438
    %v3919 = vunpack.c.l.b16 %v439
    %v3920 = vunpack.c.l.b16 %v440
    %v3921 = vunpack.c.h.b16 %v440
    %v3922 = vunpack.c.l.b16 %v441
    %v3923 = vunpack.c.h.b16 %v441
    %v3924 = vunpack.c.l.b16 %v442
    %v3925 = vunpack.c.h.b16 %v442
    %v3926 = vunpack.c.l.b16 %v443
    %v3927 = vunpack.c.l.b16 %v444
    %v3928 = vunpack.c.h.b16 %v444
    %v3929 = vunpack.c.l.b16 %v445
    %v3930 = vunpack.c.h.b16 %v445
    %v3931 = vunpack.c.l.b16 %v446
    %v3932 = vunpack.c.h.b16 %v446
    %v3933 = vunpack.c.l.b16 %v447
    %v3934 = vunpack.c.l.b16 %v448
    %v3935 = vunpack.c.h.b16 %v448
    %v3936 = vunpack.c.l.b16 %v449
    %v3937 = vunpack.c.h.b16 %v449
    %v3938 = vunpack.c.l.b16 %v450
    %v3939 = vunpack.c.h.b16 %v450
    %v3940 = vunpack.c.l.b16 %v451
    %v3941 = vunpack.c.l.b16 %v452
    %v3942 = vunpack.c.h.b16 %v452
    %v3943 = vunpack.c.l.b16 %v453
    %v3944 = vunpack.c.h.b16 %v453
    %v3945 = vunpack.c.l.b16 %v454
    %v3946 = vunpack.c.h.b16 %v454
    %v3947 = vunpack.c.l.b16 %v455
    %v3948 = vunpack.c.l.b16 %v456
    %v3949 = vunpack.c.h.b16 %v456
    %v3950 = vunpack.c.l.b16 %v457
    %v3951 = vunpack.c.h.b16 %v457
    %v3952 = vunpack.c.l.b16 %v458
    %v3953 = vunpack.c.h.b16 %v458
    %v3954 = vunpack.c.l.b16 %v459
    %v3955 = vunpack.c.l.b16 %v460
    %v3956 = vunpack.c.h.b16 %v460
    %v3957 = vunpack.c.l.b16 %v461
    %v3958 = vunpack.c.h.b16 %v461
    %v3959 = vunpack.c.l.b16 %v462
    %v3960 = vunpack.c.h.b16 %v462
    %v3961 = vunpack.c.l.b16 %v463
    %v3962 = vunpack.c.l.b16 %v464
    %v3963 = vunpack.c.h.b16 %v464
    %v3964 = vunpack.c.l.b16 %v465
    %v3965 = vunpack.c.h.b16 %v465
    %v3966 = vunpack.c.l.b16 %v466
    %v3967 = vunpack.c.h.b16 %v466
    %v3968 = vunpack.c.l.b16 %v467
    %v3969 = vunpack.c.l.b16 %v468
    %v3970 = vunpack.c.h.b16 %v468
    %v3971 = vunpack.c.l.b16 %v469
    %v3972 = vunpack.c.h.b16 %v469
    %v3973 = vunpack.c.l.b16 %v470
    %v3974 = vunpack.c.h.b16 %v470
    %v3975 = vunpack.c.l.b16 %v471
    %v3976 = vunpack.c.l.b16 %v472
    %v3977 = vunpack.c.h.b16 %v472
    %v3978 = vunpack.c.l.b16 %v473
    %v3979 = vunpack.c.h.b16 %v473
    %v3980 = vunpack.c.l.b16 %v474
    %v3981 = vunpack.c.h.b16 %v474
    %v3982 = vunpack.c.l.b16 %v475
    %v3983 = vunpack.c.l.b16 %v476
    %v3984 = vunpack.c.h.b16 %v476
    %v3985 = vunpack.c.l.b16 %v477
    %v3986 = vunpack.c.h.b16 %v477
    %v3987 = vunpack.c.l.b16 %v478
    %v3988 = vunpack.c.h.b16 %v478
    %v3989 = vunpack.c.l.b16 %v479
    %v3990 = vunpack.c.l.b16 %v480
    %v3991 = vunpack.c.h.b16 %v480
    %v3992 = vunpack.c.l.b16 %v481
    %v3993 = vunpack.c.h.b16 %v481
    %v3994 = vunpack.c.l.b16 %v482
    %v3995 = vunpack.c.h.b16 %v482
    %v3996 = vunpack.c.l.b16 %v483
    %v3997 = vunpack.c.l.b16 %v484
    %v3998 = vunpack.c.h.b16 %v484
    %v3999 = vunpack.c.l.b16 %v485
    %v4000 = vunpack.c.h.b16 %v485
    %v4001 = vunpack.c.l.b16 %v486
    %v4002 = vunpack.c.h.b16 %v486
    %v4003 = vunpack.c.l.b16 %v487
    %v4004 = vunpack.c.l.b16 %v488
    %v4005 = vunpack.c.h.b16 %v488
    %v4006 = vunpack.c.l.b16 %v489
    %v4007 = vunpack.c.h.b16 %v489
    %v4008 = vunpack.c.l.b16 %v490
    %v4009 = vunpack.c.h.b16 %v490
    %v4010 = vunpack.c.l.b16 %v491
    %v4011 = vunpack.c.l.b16 %v492
    %v4012 = vunpack.c.h.b16 %v492
    %v4013 = vunpack.c.l.b16 %v493
    %v4014 = vunpack.c.h.b16 %v493
    %v4015 = vunpack.c.l.b16 %v494
    %v4016 = vunpack.c.h.b16 %v494
    %v4017 = vunpack.c.l.b16 %v495
    %v4018 = vunpack.c.l.b16 %v496
    %v4019 = vunpack.c.h.b16 %v496
    %v4020 = vunpack.c.l.b16 %v497
    %v4021 = vunpack.c.h.b16 %v497
    %v4022 = vunpack.c.l.b16 %v498
    %v4023 = vunpack.c.h.b16 %v498
    %v4024 = vunpack.c.l.b16 %v499
    %v4025 = vunpack.c.l.b16 %v500
    %v4026 = vunpack.c.h.b16 %v500
    %v4027 = vunpack.c.l.b16 %v501
    %v4028 = vunpack.c.h.b16 %v501
    %v4029 = vunpack.c.l.b16 %v502
    %v4030 = vunpack.c.h.b16 %v502
    %v4031 = vunpack.c.l.b16 %v503
    %v4032 = vunpack.c.l.b16 %v504
    %v4033 = vunpack.c.h.b16 %v504
    %v4034 = vunpack.c.l.b16 %v505
    %v4035 = vunpack.c.h.b16 %v505
    %v4036 = vunpack.c.l.b16 %v506
    %v4037 = vunpack.c.h.b16 %v506
    %v4038 = vunpack.c.l.b16 %v507
    %v4039 = vunpack.c.l.b16 %v508
    %v4040 = vunpack.c.h.b16 %v508
    %v4041 = vunpack.c.l.b16 %v509
    %v4042 = vunpack.c.h.b16 %v509
    %v4043 = vunpack.c.l.b16 %v510
    %v4044 = vunpack.c.h.b16 %v510
    %v4045 = vunpack.c.l.b16 %v511
    %v4046 = vunpack.c.l.b16 %v512
    %v4047 = vunpack.c.h.b16 %v512
    %v4048 = vunpack.c.l.b16 %v513
    %v4049 = vunpack.c.h.b16 %v513
    %v4050 = vunpack.c.l.b16 %v514
    %v4051 = vunpack.c.h.b16 %v514
    %v4052 = vunpack.c.l.b16 %v515
    %v4053 = vunpack.c.l.b16 %v516
    %v4054 = vunpack.c.h.b16 %v516
    %v4055 = vunpack.c.l.b16 %v517
    %v4056 = vunpack.c.h.b16 %v517
    %v4057 = vunpack.c.l.b16 %v518
    %v4058 = vunpack.c.h.b16 %v518
    %v4059 = vunpack.c.l.b16 %v519
    %v4060 = vunpack.c.l.b16 %v520
    %v4061 = vunpack.c.h.b16 %v520
    %v4062 = vunpack.c.l.b16 %v521
    %v4063 = vunpack.c.h.b16 %v521
    %v4064 = vunpack.c.l.b16 %v522
    %v4065 = vunpack.c.h.b16 %v522
    %v4066 = vunpack.c.l.b16 %v523
    %v4067 = vunpack.c.l.b16 %v524
    %v4068 = vunpack.c.h.b16 %v524
    %v4069 = vunpack.c.l.b16 %v525
    %v4070 = vunpack.c.h.b16 %v525
    %v4071 = vunpack.c.l.b16 %v526
    %v4072 = vunpack.c.h.b16 %v526
    %v4073 = vunpack.c.l.b16 %v527
    %v4074 = vunpack.c.l.b16 %v528
    %v4075 = vunpack.c.h.b16 %v528
    %v4076 = vunpack.c.l.b16 %v529
    %v4077 = vunpack.c.h.b16 %v529
    %v4078 = vunpack.c.l.b16 %v530
    %v4079 = vunpack.c.h.b16 %v530
    %v4080 = vunpack.c.l.b16 %v531
    %v4081 = vunpack.c.l.b16 %v532
    %v4082 = vunpack.c.h.b16 %v532
    %v4083 = vunpack.c.l.b16 %v533
    %v4084 = vunpack.c.h.b16 %v533
    %v4085 = vunpack.c.l.b16 %v534
    %v4086 = vunpack.c.h.b16 %v534
    %v4087 = vunpack.c.l.b16 %v535
    %v4088 = vunpack.c.l.b16 %v536
    %v4089 = vunpack.c.h.b16 %v536
    %v4090 = vunpack.c.l.b16 %v537
    %v4091 = vunpack.c.h.b16 %v537
    %v4092 = vunpack.c.l.b16 %v538
    %v4093 = vunpack.c.h.b16 %v538
    %v4094 = vunpack.c.l.b16 %v539
    %v4095 = vunpack.c.l.b16 %v540
    %v4096 = vunpack.c.h.b16 %v540
    %v4097 = vunpack.c.l.b16 %v541
    %v4098 = vunpack.c.h.b16 %v541
    %v4099 = vunpack.c.l.b16 %v542
    %v4100 = vunpack.c.h.b16 %v542
    %v4101 = vunpack.c.l.b16 %v543
    %v4102 = vunpack.c.l.b16 %v544
    %v4103 = vunpack.c.h.b16 %v544
    %v4104 = vunpack.c.l.b16 %v545
    %v4105 = vunpack.c.h.b16 %v545
    %v4106 = vunpack.c.l.b16 %v546
    %v4107 = vunpack.c.h.b16 %v546
    %v4108 = vunpack.c.l.b16 %v547
    %v4109 = vunpack.c.l.b16 %v548
    %v4110 = vunpack.c.h.b16 %v548
    %v4111 = vunpack.c.l.b16 %v549
    %v4112 = vunpack.c.h.b16 %v549
    %v4113 = vunpack.c.l.b16 %v550
    %v4114 = vunpack.c.h.b16 %v550
    %v4115 = vunpack.c.l.b16 %v551
    %v4116 = vunpack.c.l.b16 %v552
    %v4117 = vunpack.c.h.b16 %v552
    %v4118 = vunpack.c.l.b16 %v553
    %v4119 = vunpack.c.h.b16 %v553
    %v4120 = vunpack.c.l.b16 %v554
    %v4121 = vunpack.c.h.b16 %v554
    %v4122 = vunpack.c.l.b16 %v555
    %v4123 = vunpack.c.l.b16 %v556
    %v4124 = vunpack.c.h.b16 %v556
    %v4125 = vunpack.c.l.b16 %v557
    %v4126 = vunpack.c.h.b16 %v557
    %v4127 = vunpack.c.l.b16 %v558
    %v4128 = vunpack.c.h.b16 %v558
    %v4129 = vunpack.c.l.b16 %v559
    %v4130 = vunpack.c.l.b16 %v560
    %v4131 = vunpack.c.h.b16 %v560
    %v4132 = vunpack.c.l.b16 %v561
    %v4133 = vunpack.c.h.b16 %v561
    %v4134 = vunpack.c.l.b16 %v562
    %v4135 = vunpack.c.h.b16 %v562
    %v4136 = vunpack.c.l.b16 %v563
    %v4137 = vunpack.c.l.b16 %v564
    %v4138 = vunpack.c.h.b16 %v564
    %v4139 = vunpack.c.l.b16 %v565
    %v4140 = vunpack.c.h.b16 %v565
    %v4141 = vunpack.c.l.b16 %v566
    %v4142 = vunpack.c.h.b16 %v566
    %v4143 = vunpack.c.l.b16 %v567
    %v4144 = vunpack.c.l.b16 %v568
    %v4145 = vunpack.c.h.b16 %v568
    %v4146 = vunpack.c.l.b16 %v569
    %v4147 = vunpack.c.h.b16 %v569
    %v4148 = vunpack.c.l.b16 %v570
    %v4149 = vunpack.c.h.b16 %v570
    %v4150 = vunpack.c.l.b16 %v571
    %v4151 = vunpack.c.l.b16 %v572
    %v4152 = vunpack.c.h.b16 %v572
    %v4153 = vunpack.c.l.b16 %v573
    %v4154 = vunpack.c.h.b16 %v573
    %v4155 = vunpack.c.l.b16 %v574
    %v4156 = vunpack.c.h.b16 %v574
    %v4157 = vunpack.c.l.b16 %v575
    %v4158 = vunpack.c.l.b16 %v576
    %v4159 = vunpack.c.h.b16 %v576
    %v4160 = vunpack.c.l.b16 %v577
    %v4161 = vunpack.c.h.b16 %v577
    %v4162 = vunpack.c.l.b16 %v578
    %v4163 = vunpack.c.h.b16 %v578
    %v4164 = vunpack.c.l.b16 %v579
    %v4165 = vunpack.c.l.b16 %v580
    %v4166 = vunpack.c.h.b16 %v580
    %v4167 = vunpack.c.l.b16 %v581
    %v4168 = vunpack.c.h.b16 %v581
    %v4169 = vunpack.c.l.b16 %v582
    %v4170 = vunpack.c.h.b16 %v582
    %v4171 = vunpack.c.l.b16 %v583
    %v4172 = vunpack.c.l.b16 %v584
    %v4173 = vunpack.c.h.b16 %v584
    %v4174 = vunpack.c.l.b16 %v585
    %v4175 = vunpack.c.h.b16 %v585
    %v4176 = vunpack.c.l.b16 %v586
    %v4177 = vunpack.c.h.b16 %v586
    %v4178 = vunpack.c.l.b16 %v587
    %v4179 = vunpack.c.l.b16 %v588
    %v4180 = vunpack.c.h.b16 %v588
    %v4181 = vunpack.c.l.b16 %v589
    %v4182 = vunpack.c.h.b16 %v589
    %v4183 = vunpack.c.l.b16 %v590
    %v4184 = vunpack.c.h.b16 %v590
    %v4185 = vunpack.c.l.b16 %v591
    %v4186 = vunpack.c.l.b16 %v592
    %v4187 = vunpack.c.h.b16 %v592
    %v4188 = vunpack.c.l.b16 %v593
    %v4189 = vunpack.c.h.b16 %v593
    %v4190 = vunpack.c.l.b16 %v594
    %v4191 = vunpack.c.h.b16 %v594
    %v4192 = vunpack.c.l.b16 %v595
    %v4193 = vunpack.c.l.b16 %v596
    %v4194 = vunpack.c.h.b16 %v596
    %v4195 = vunpack.c.l.b16 %v597
    %v4196 = vunpack.c.h.b16 %v597
    %v4197 = vunpack.c.l.b16 %v598
    %v4198 = vunpack.c.h.b16 %v598
    %v4199 = vunpack.c.l.b16 %v599
    %v4200 = vunpack.c.l.b16 %v600
    %v4201 = vunpack.c.h.b16 %v600
    %v4202 = vunpack.c.l.b16 %v601
    %v4203 = vunpack.c.h.b16 %v601
    %v4204 = vunpack.c.l.b16 %v602
    %v4205 = vunpack.c.h.b16 %v602
    %v4206 = vunpack.c.l.b16 %v603
    %v4207 = vunpack.c.l.b16 %v604
    %v4208 = vunpack.c.h.b16 %v604
    %v4209 = vunpack.c.l.b16 %v605
    %v4210 = vunpack.c.h.b16 %v605
    %v4211 = vunpack.c.l.b16 %v606
    %v4212 = vunpack.c.h.b16 %v606
    %v4213 = vunpack.c.l.b16 %v607
    %v4214 = vunpack.c.l.b16 %v608
    %v4215 = vunpack.c.h.b16 %v608
    %v4216 = vunpack.c.l.b16 %v609
    %v4217 = vunpack.c.h.b16 %v609
    %v4218 = vunpack.c.l.b16 %v610
    %v4219 = vunpack.c.h.b16 %v610
    %v4220 = vunpack.c.l.b16 %v611
    %v4221 = vunpack.c.l.b16 %v612
    %v4222 = vunpack.c.h.b16 %v612
    %v4223 = vunpack.c.l.b16 %v613
    %v4224 = vunpack.c.h.b16 %v613
    %v4225 = vunpack.c.l.b16 %v614
    %v4226 = vunpack.c.h.b16 %v614
    %v4227 = vunpack.c.l.b16 %v615
    %v4228 = vunpack.c.l.b16 %v616
    %v4229 = vunpack.c.h.b16 %v616
    %v4230 = vunpack.c.l.b16 %v617
    %v4231 = vunpack.c.h.b16 %v617
    %v4232 = vunpack.c.l.b16 %v618
    %v4233 = vunpack.c.h.b16 %v618
    %v4234 = vunpack.c.l.b16 %v619
    %v4235 = vunpack.c.l.b16 %v620
    %v4236 = vunpack.c.h.b16 %v620
    %v4237 = vunpack.c.l.b16 %v621
    %v4238 = vunpack.c.h.b16 %v621
    %v4239 = vunpack.c.l.b16 %v622
    %v4240 = vunpack.c.h.b16 %v622
    %v4241 = vunpack.c.l.b16 %v623
    %v4242 = vunpack.c.l.b16 %v624
    %v4243 = vunpack.c.h.b16 %v624
    %v4244 = vunpack.c.l.b16 %v625
    %v4245 = vunpack.c.h.b16 %v625
    %v4246 = vunpack.c.l.b16 %v626
    %v4247 = vunpack.c.h.b16 %v626
    %v4248 = vunpack.c.l.b16 %v627
    %v4249 = vunpack.c.l.b16 %v628
    %v4250 = vunpack.c.h.b16 %v628
    %v4251 = vunpack.c.l.b16 %v629
    %v4252 = vunpack.c.h.b16 %v629
    %v4253 = vunpack.c.l.b16 %v630
    %v4254 = vunpack.c.h.b16 %v630
    %v4255 = vunpack.c.l.b16 %v631
    %v4256 = vunpack.c.l.b16 %v632
    %v4257 = vunpack.c.h.b16 %v632
    %v4258 = vunpack.c.l.b16 %v633
    %v4259 = vunpack.c.h.b16 %v633
    %v4260 = vunpack.c.l.b16 %v634
    %v4261 = vunpack.c.h.b16 %v634
    %v4262 = vunpack.c.l.b16 %v635
    %v4263 = vunpack.c.l.b16 %v636
    %v4264 = vunpack.c.h.b16 %v636
    %v4265 = vunpack.c.l.b16 %v637
    %v4266 = vunpack.c.h.b16 %v637
    %v4267 = vunpack.c.l.b16 %v638
    %v4268 = vunpack.c.h.b16 %v638
    %v4269 = vunpack.c.l.b16 %v639
    %v4270 = vunpack.c.l.b16 %v640
    %v4271 = vunpack.c.h.b16 %v640
    %v4272 = vunpack.c.l.b16 %v641
    %v4273 = vunpack.c.h.b16 %v641
    %v4274 = vunpack.c.l.b16 %v642
    %v4275 = vunpack.c.h.b16 %v642
    %v4276 = vunpack.c.l.b16 %v643
    %v4277 = vunpack.c.l.b16 %v644
    %v4278 = vunpack.c.h.b16 %v644
    %v4279 = vunpack.c.l.b16 %v645
    %v4280 = vunpack.c.h.b16 %v645
    %v4281 = vunpack.c.l.b16 %v646
    %v4282 = vunpack.c.h.b16 %v646
    %v4283 = vunpack.c.l.b16 %v647
    %v4284 = vunpack.c.l.b16 %v648
    %v4285 = vunpack.c.h.b16 %v648
    %v4286 = vunpack.c.l.b16 %v649
    %v4287 = vunpack.c.h.b16 %v649
    %v4288 = vunpack.c.l.b16 %v650
    %v4289 = vunpack.c.h.b16 %v650
    %v4290 = vunpack.c.l.b16 %v651
    %v4291 = vunpack.c.l.b16 %v652
    %v4292 = vunpack.c.h.b16 %v652
    %v4293 = vunpack.c.l.b16 %v653
    %v4294 = vunpack.c.h.b16 %v653
    %v4295 = vunpack.c.l.b16 %v654
    %v4296 = vunpack.c.h.b16 %v654
    %v4297 = vunpack.c.l.b16 %v655
    %v4298 = vunpack.c.l.b16 %v656
    %v4299 = vunpack.c.h.b16 %v656
    %v4300 = vunpack.c.l.b16 %v657
    %v4301 = vunpack.c.h.b16 %v657
    %v4302 = vunpack.c.l.b16 %v658
    %v4303 = vunpack.c.h.b16 %v658
    %v4304 = vunpack.c.l.b16 %v659
    %v4305 = vunpack.c.l.b16 %v660
    %v4306 = vunpack.c.h.b16 %v660
    %v4307 = vunpack.c.l.b16 %v661
    %v4308 = vunpack.c.h.b16 %v661
    %v4309 = vunpack.c.l.b16 %v662
    %v4310 = vunpack.c.h.b16 %v662
    %v4311 = vunpack.c.l.b16 %v663
    %v4312 = vunpack.c.l.b16 %v664
    %v4313 = vunpack.c.h.b16 %v664
    %v4314 = vunpack.c.l.b16 %v665
    %v4315 = vunpack.c.h.b16 %v665
    %v4316 = vunpack.c.l.b16 %v666
    %v4317 = vunpack.c.h.b16 %v666
    %v4318 = vunpack.c.l.b16 %v667
    %v4319 = vunpack.c.l.b16 %v668
    %v4320 = vunpack.c.h.b16 %v668
    %v4321 = vunpack.c.l.b16 %v669
    %v4322 = vunpack.c.h.b16 %v669
    %v4323 = vunpack.c.l.b16 %v670
    %v4324 = vunpack.c.h.b16 %v670
    %v4325 = vunpack.c.l.b16 %v671
    %v4326 = vunpack.c.l.b16 %v672
    %v4327 = vunpack.c.h.b16 %v672
    %v4328 = vunpack.c.l.b16 %v673
    %v4329 = vunpack.c.h.b16 %v673
    %v4330 = vunpack.c.l.b16 %v674
    %v4331 = vunpack.c.h.b16 %v674
    %v4332 = vunpack.c.l.b16 %v675
    %v4333 = vunpack.c.l.b16 %v676
    %v4334 = vunpack.c.h.b16 %v676
    %v4335 = vunpack.c.l.b16 %v677
    %v4336 = vunpack.c.h.b16 %v677
    %v4337 = vunpack.c.l.b16 %v678
    %v4338 = vunpack.c.h.b16 %v678
    %v4339 = vunpack.c.l.b16 %v679
    %v4340 = vunpack.c.l.b16 %v680
    %v4341 = vunpack.c.h.b16 %v680
    %v4342 = vunpack.c.l.b16 %v681
    %v4343 = vunpack.c.h.b16 %v681
    %v4344 = vunpack.c.l.b16 %v682
    %v4345 = vunpack.c.h.b16 %v682
    %v4346 = vunpack.c.l.b16 %v683
    %v4347 = vunpack.c.l.b16 %v684
    %v4348 = vunpack.c.h.b16 %v684
    %v4349 = vunpack.c.l.b16 %v685
    %v4350 = vunpack.c.h.b16 %v685
    %v4351 = vunpack.c.l.b16 %v686
    %v4352 = vunpack.c.h.b16 %v686
    %v4353 = vunpack.c.l.b16 %v687
    %v4354 = vunpack.c.l.b16 %v688
    %v4355 = vunpack.c.h.b16 %v688
    %v4356 = vunpack.c.l.b16 %v689
    %v4357 = vunpack.c.h.b16 %v689
    %v4358 = vunpack.c.l.b16 %v690
    %v4359 = vunpack.c.h.b16 %v690
    %v4360 = vunpack.c.l.b16 %v691
    %v4361 = vunpack.c.l.b16 %v692
    %v4362 = vunpack.c.h.b16 %v692
    %v4363 = vunpack.c.l.b16 %v693
    %v4364 = vunpack.c.h.b16 %v693
    %v4365 = vunpack.c.l.b16 %v694
    %v4366 = vunpack.c.h.b16 %v694
    %v4367 = vunpack.c.l.b16 %v695
    %v4368 = vunpack.c.l.b16 %v696
    %v4369 = vunpack.c.h.b16 %v696
    %v4370 = vunpack.c.l.b16 %v697
    %v4371 = vunpack.c.h.b16 %v697
    %v4372 = vunpack.c.l.b16 %v698
    %v4373 = vunpack.c.h.b16 %v698
    %v4374 = vunpack.c.l.b16 %v699
    %v4375 = vunpack.c.l.b16 %v700
    %v4376 = vunpack.c.h.b16 %v700
    %v4377 = vunpack.c.l.b16 %v701
    %v4378 = vunpack.c.h.b16 %v701
    %v4379 = vunpack.c.l.b16 %v702
    %v4380 = vunpack.c.h.b16 %v702
    %v4381 = vunpack.c.l.b16 %v703
    %v4382 = vunpack.c.l.b16 %v704
    %v4383 = vunpack.c.h.b16 %v704
    %v4384 = vunpack.c.l.b16 %v705
    %v4385 = vunpack.c.h.b16 %v705
    %v4386 = vunpack.c.l.b16 %v706
    %v4387 = vunpack.c.h.b16 %v706
    %v4388 = vunpack.c.l.b16 %v707
    %v4389 = vunpack.c.l.b16 %v708
    %v4390 = vunpack.c.h.b16 %v708
    %v4391 = vunpack.c.l.b16 %v709
    %v4392 = vunpack.c.h.b16 %v709
    %v4393 = vunpack.c.l.b16 %v710
    %v4394 = vunpack.c.h.b16 %v710
    %v4395 = vunpack.c.l.b16 %v711
    %v4396 = vunpack.c.l.b16 %v712
    %v4397 = vunpack.c.h.b16 %v712
    %v4398 = vunpack.c.l.b16 %v713
    %v4399 = vunpack.c.h.b16 %v713
    %v4400 = vunpack.c.l.b16 %v714
    %v4401 = vunpack.c.h.b16 %v714
    %v4402 = vunpack.c.l.b16 %v715
    %v4403 = vunpack.c.l.b16 %v716
    %v4404 = vunpack.c.h.b16 %v716
    %v4405 = vunpack.c.l.b16 %v717
    %v4406 = vunpack.c.h.b16 %v717
    %v4407 = vunpack.c.l.b16 %v718
    %v4408 = vunpack.c.h.b16 %v718
    %v4409 = vunpack.c.l.b16 %v719
    %v4410 = vunpack.c.l.b16 %v720
    %v4411 = vunpack.c.h.b16 %v720
    %v4412 = vunpack.c.l.b16 %v721
    %v4413 = vunpack.c.h.b16 %v721
    %v4414 = vunpack.c.l.b16 %v722
    %v4415 = vunpack.c.h.b16 %v722
    %v4416 = vunpack.c.l.b16 %v723
    %v4417 = vunpack.c.l.b16 %v724
    %v4418 = vunpack.c.h.b16 %v724
    %v4419 = vunpack.c.l.b16 %v725
    %v4420 = vunpack.c.h.b16 %v725
    %v4421 = vunpack.c.l.b16 %v726
    %v4422 = vunpack.c.h.b16 %v726
    %v4423 = vunpack.c.l.b16 %v727
    %v4424 = vunpack.c.l.b16 %v728
    %v4425 = vunpack.c.h.b16 %v728
    %v4426 = vunpack.c.l.b16 %v729
    %v4427 = vunpack.c.h.b16 %v729
    %v4428 = vunpack.c.l.b16 %v730
    %v4429 = vunpack.c.h.b16 %v730
    %v4430 = vunpack.c.l.b16 %v731
    %v4431 = vunpack.c.l.b16 %v732
    %v4432 = vunpack.c.h.b16 %v732
    %v4433 = vunpack.c.l.b16 %v733
    %v4434 = vunpack.c.h.b16 %v733
    %v4435 = vunpack.c.l.b16 %v734
    %v4436 = vunpack.c.h.b16 %v734
    %v4437 = vunpack.c.l.b16 %v735
    %v4438 = vunpack.c.l.b16 %v736
    %v4439 = vunpack.c.h.b16 %v736
    %v4440 = vunpack.c.l.b16 %v737
    %v4441 = vunpack.c.h.b16 %v737
    %v4442 = vunpack.c.l.b16 %v738
    %v4443 = vunpack.c.h.b16 %v738
    %v4444 = vunpack.c.l.b16 %v739
    %v4445 = vunpack.c.l.b16 %v740
    %v4446 = vunpack.c.h.b16 %v740
    %v4447 = vunpack.c.l.b16 %v741
    %v4448 = vunpack.c.h.b16 %v741
    %v4449 = vunpack.c.l.b16 %v742
    %v4450 = vunpack.c.h.b16 %v742
    %v4451 = vunpack.c.l.b16 %v743
    %v4452 = vunpack.c.l.b16 %v744
    %v4453 = vunpack.c.h.b16 %v744
    %v4454 = vunpack.c.l.b16 %v745
    %v4455 = vunpack.c.h.b16 %v745
    %v4456 = vunpack.c.l.b16 %v746
    %v4457 = vunpack.c.h.b16 %v746
    %v4458 = vunpack.c.l.b16 %v747
    %v4459 = vunpack.c.l.b16 %v748
    %v4460 = vunpack.c.h.b16 %v748
    %v4461 = vunpack.c.l.b16 %v749
    %v4462 = vunpack.c.h.b16 %v749
    %v4463 = vunpack.c.l.b16 %v750
    %v4464 = vunpack.c.h.b16 %v750
    %v4465 = vunpack.c.l.b16 %v751
    %v4466 = vunpack.c.l.b16 %v752
    %v4467 = vunpack.c.h.b16 %v752
    %v4468 = vunpack.c.l.b16 %v753
    %v4469 = vunpack.c.h.b16 %v753
    %v4470 = vunpack.c.l.b16 %v754
    %v4471 = vunpack.c.h.b16 %v754
    %v4472 = vunpack.c.l.b16 %v755
    %v4473 = vunpack.c.l.b16 %v756
    %v4474 = vunpack.c.h.b16 %v756
    %v4475 = vunpack.c.l.b16 %v757
    %v4476 = vunpack.c.h.b16 %v757
    %v4477 = vunpack.c.l.b16 %v758
    %v4478 = vunpack.c.h.b16 %v758
    %v4479 = vunpack.c.l.b16 %v759
    %v4480 = vunpack.c.l.b16 %v760
    %v4481 = vunpack.c.h.b16 %v760
    %v4482 = vunpack.c.l.b16 %v761
    %v4483 = vunpack.c.h.b16 %v761
    %v4484 = vunpack.c.l.b16 %v762
    %v4485 = vunpack.c.h.b16 %v762
    %v4486 = vunpack.c.l.b16 %v763
    %v4487 = vunpack.c.l.b16 %v764
    %v4488 = vunpack.c.h.b16 %v764
    %v4489 = vunpack.c.l.b16 %v765
    %v4490 = vunpack.c.h.b16 %v765
    %v4491 = vunpack.c.l.b16 %v766
    %v4492 = vunpack.c.h.b16 %v766
    %v4493 = vunpack.c.l.b16 %v767
    %v4494 = vunpack.c.l.b16 %v768
    %v4495 = vunpack.c.h.b16 %v768
    %v4496 = vunpack.c.l.b16 %v769
    %v4497 = vunpack.c.h.b16 %v769
    %v4498 = vunpack.c.l.b16 %v770
    %v4499 = vunpack.c.h.b16 %v770
    %v4500 = vunpack.c.l.b16 %v771
    %v4501 = vunpack.c.l.b16 %v772
    %v4502 = vunpack.c.h.b16 %v772
    %v4503 = vunpack.c.l.b16 %v773
    %v4504 = vunpack.c.h.b16 %v773
    %v4505 = vunpack.c.l.b16 %v774
    %v4506 = vunpack.c.h.b16 %v774
    %v4507 = vunpack.c.l.b16 %v775
    %v4508 = vunpack.c.l.b16 %v776
    %v4509 = vunpack.c.h.b16 %v776
    %v4510 = vunpack.c.l.b16 %v777
    %v4511 = vunpack.c.h.b16 %v777
    %v4512 = vunpack.c.l.b16 %v778
    %v4513 = vunpack.c.h.b16 %v778
    %v4514 = vunpack.c.l.b16 %v779
    %v4515 = vunpack.c.l.b16 %v780
    %v4516 = vunpack.c.h.b16 %v780
    %v4517 = vunpack.c.l.b16 %v781
    %v4518 = vunpack.c.h.b16 %v781
    %v4519 = vunpack.c.l.b16 %v782
    %v4520 = vunpack.c.h.b16 %v782
    %v4521 = vunpack.c.l.b16 %v783
    %v4522 = vunpack.c.l.b16 %v784
    %v4523 = vunpack.c.h.b16 %v784
    %v4524 = vunpack.c.l.b16 %v785
    %v4525 = vunpack.c.h.b16 %v785
    %v4526 = vunpack.c.l.b16 %v786
    %v4527 = vunpack.c.h.b16 %v786
    %v4528 = vunpack.c.l.b16 %v787
    %v4529 = vunpack.c.l.b16 %v788
    %v4530 = vunpack.c.h.b16 %v788
    %v4531 = vunpack.c.l.b16 %v789
    %v4532 = vunpack.c.h.b16 %v789
    %v4533 = vunpack.c.l.b16 %v790
    %v4534 = vunpack.c.h.b16 %v790
    %v4535 = vunpack.c.l.b16 %v791
    %v4536 = vunpack.c.l.b16 %v792
    %v4537 = vunpack.c.h.b16 %v792
    %v4538 = vunpack.c.l.b16 %v793
    %v4539 = vunpack.c.h.b16 %v793
    %v4540 = vunpack.c.l.b16 %v794
    %v4541 = vunpack.c.h.b16 %v794
    %v4542 = vunpack.c.l.b16 %v795
    %v4543 = vunpack.c.l.b16 %v796
    %v4544 = vunpack.c.h.b16 %v796
    %v4545 = vunpack.c.l.b16 %v797
    %v4546 = vunpack.c.h.b16 %v797
    %v4547 = vunpack.c.l.b16 %v798
    %v4548 = vunpack.c.h.b16 %v798
    %v4549 = vunpack.c.l.b16 %v799
    %v4550 = vunpack.c.l.b16 %v800
    %v4551 = vunpack.c.h.b16 %v800
    %v4552 = vunpack.c.l.b16 %v801
    %v4553 = vunpack.c.h.b16 %v801
    %v4554 = vunpack.c.l.b16 %v802
    %v4555 = vunpack.c.h.b16 %v802
    %v4556 = vunpack.c.l.b16 %v803
    %v4557 = vunpack.c.l.b16 %v804
    %v4558 = vunpack.c.h.b16 %v804
    %v4559 = vunpack.c.l.b16 %v805
    %v4560 = vunpack.c.h.b16 %v805
    %v4561 = vunpack.c.l.b16 %v806
    %v4562 = vunpack.c.h.b16 %v806
    %v4563 = vunpack.c.l.b16 %v807
    %v4564 = vunpack.c.l.b16 %v808
    %v4565 = vunpack.c.h.b16 %v808
    %v4566 = vunpack.c.l.b16 %v809
    %v4567 = vunpack.c.h.b16 %v809
    %v4568 = vunpack.c.l.b16 %v810
    %v4569 = vunpack.c.h.b16 %v810
    %v4570 = vunpack.c.l.b16 %v811
    %v4571 = vunpack.c.l.b16 %v812
    %v4572 = vunpack.c.h.b16 %v812
    %v4573 = vunpack.c.l.b16 %v813
    %v4574 = vunpack.c.h.b16 %v813
    %v4575 = vunpack.c.l.b16 %v814
    %v4576 = vunpack.c.h.b16 %v814
    %v4577 = vunpack.c.l.b16 %v815
    %v4578 = vunpack.c.l.b16 %v816
    %v4579 = vunpack.c.h.b16 %v816
    %v4580 = vunpack.c.l.b16 %v817
    %v4581 = vunpack.c.h.b16 %v817
    %v4582 = vunpack.c.l.b16 %v818
    %v4583 = vunpack.c.h.b16 %v818
    %v4584 = vunpack.c.l.b16 %v819
    %v4585 = vunpack.c.l.b16 %v820
    %v4586 = vunpack.c.h.b16 %v820
    %v4587 = vunpack.c.l.b16 %v821
    %v4588 = vunpack.c.h.b16 %v821
    %v4589 = vunpack.c.l.b16 %v822
    %v4590 = vunpack.c.h.b16 %v822
    %v4591 = vunpack.c.l.b16 %v823
    %v4592 = vunpack.c.l.b16 %v824
    %v4593 = vunpack.c.h.b16 %v824
    %v4594 = vunpack.c.l.b16 %v825
    %v4595 = vunpack.c.h.b16 %v825
    %v4596 = vunpack.c.l.b16 %v826
    %v4597 = vunpack.c.h.b16 %v826
    %v4598 = vunpack.c.l.b16 %v827
    %v4599 = vunpack.c.l.b16 %v828
    %v4600 = vunpack.c.h.b16 %v828
    %v4601 = vunpack.c.l.b16 %v829
    %v4602 = vunpack.c.h.b16 %v829
    %v4603 = vunpack.c.l.b16 %v830
    %v4604 = vunpack.c.h.b16 %v830
    %v4605 = vunpack.c.l.b16 %v831
    %v4606 = vunpack.c.l.b16 %v832
    %v4607 = vunpack.c.h.b16 %v832
    %v4608 = vunpack.c.l.b16 %v833
    %v4609 = vunpack.c.h.b16 %v833
    %v4610 = vunpack.c.l.b16 %v834
    %v4611 = vunpack.c.h.b16 %v834
    %v4612 = vunpack.c.l.b16 %v835
    %v4613 = vunpack.c.l.b16 %v836
    %v4614 = vunpack.c.h.b16 %v836
    %v4615 = vunpack.c.l.b16 %v837
    %v4616 = vunpack.c.h.b16 %v837
    %v4617 = vunpack.c.l.b16 %v838
    %v4618 = vunpack.c.h.b16 %v838
    %v4619 = vunpack.c.l.b16 %v839
    %v4620 = vunpack.c.l.b16 %v840
    %v4621 = vunpack.c.h.b16 %v840
    %v4622 = vunpack.c.l.b16 %v841
    %v4623 = vunpack.c.h.b16 %v841
    %v4624 = vunpack.c.l.b16 %v842
    %v4625 = vunpack.c.h.b16 %v842
    %v4626 = vunpack.c.l.b16 %v843
    %v4627 = vunpack.c.l.b16 %v844
    %v4628 = vunpack.c.h.b16 %v844
    %v4629 = vunpack.c.l.b16 %v845
    %v4630 = vunpack.c.h.b16 %v845
    %v4631 = vunpack.c.l.b16 %v846
    %v4632 = vunpack.c.h.b16 %v846
    %v4633 = vunpack.c.l.b16 %v847
    %v4634 = vunpack.c.l.b16 %v848
    %v4635 = vunpack.c.h.b16 %v848
    %v4636 = vunpack.c.l.b16 %v849
    %v4637 = vunpack.c.h.b16 %v849
    %v4638 = vunpack.c.l.b16 %v850
    %v4639 = vunpack.c.h.b16 %v850
    %v4640 = vunpack.c.l.b16 %v851
    %v4641 = vunpack.c.l.b16 %v852
    %v4642 = vunpack.c.h.b16 %v852
    %v4643 = vunpack.c.l.b16 %v853
    %v4644 = vunpack.c.h.b16 %v853
    %v4645 = vunpack.c.l.b16 %v854
    %v4646 = vunpack.c.h.b16 %v854
    %v4647 = vunpack.c.l.b16 %v855
    %v4648 = vunpack.c.l.b16 %v856
    %v4649 = vunpack.c.h.b16 %v856
    %v4650 = vunpack.c.l.b16 %v857
    %v4651 = vunpack.c.h.b16 %v857
    %v4652 = vunpack.c.l.b16 %v858
    %v4653 = vunpack.c.h.b16 %v858
    %v4654 = vunpack.c.l.b16 %v859
    %v4655 = vunpack.c.l.b16 %v860
    %v4656 = vunpack.c.h.b16 %v860
    %v4657 = vunpack.c.l.b16 %v861
    %v4658 = vunpack.c.h.b16 %v861
    %v4659 = vunpack.c.l.b16 %v862
    %v4660 = vunpack.c.h.b16 %v862
    %v4661 = vunpack.c.l.b16 %v863
    %v4662 = vunpack.c.l.b16 %v864
    %v4663 = vunpack.c.h.b16 %v864
    %v4664 = vunpack.c.l.b16 %v865
    %v4665 = vunpack.c.h.b16 %v865
    %v4666 = vunpack.c.l.b16 %v866
    %v4667 = vunpack.c.h.b16 %v866
    %v4668 = vunpack.c.l.b16 %v867
    %v4669 = vunpack.c.l.b16 %v868
    %v4670 = vunpack.c.h.b16 %v868
    %v4671 = vunpack.c.l.b16 %v869
    %v4672 = vunpack.c.h.b16 %v869
    %v4673 = vunpack.c.l.b16 %v870
    %v4674 = vunpack.c.h.b16 %v870
    %v4675 = vunpack.c.l.b16 %v871
    %v4676 = vunpack.c.l.b16 %v872
    %v4677 = vunpack.c.h.b16 %v872
    %v4678 = vunpack.c.l.b16 %v873
    %v4679 = vunpack.c.h.b16 %v873
    %v4680 = vunpack.c.l.b16 %v874
    %v4681 = vunpack.c.h.b16 %v874
    %v4682 = vunpack.c.l.b16 %v875
    %v4683 = vunpack.c.l.b16 %v876
    %v4684 = vunpack.c.h.b16 %v876
    %v4685 = vunpack.c.l.b16 %v877
    %v4686 = vunpack.c.h.b16 %v877
    %v4687 = vunpack.c.l.b16 %v878
    %v4688 = vunpack.c.h.b16 %v878
    %v4689 = vunpack.c.l.b16 %v879
    %v4690 = vunpack.c.l.b16 %v880
    %v4691 = vunpack.c.h.b16 %v880
    %v4692 = vunpack.c.l.b16 %v881
    %v4693 = vunpack.c.h.b16 %v881
    %v4694 = vunpack.c.l.b16 %v882
    %v4695 = vunpack.c.h.b16 %v882
    %v4696 = vunpack.c.l.b16 %v883
    %v4697 = vunpack.c.l.b16 %v884
    %v4698 = vunpack.c.h.b16 %v884
    %v4699 = vunpack.c.l.b16 %v885
    %v4700 = vunpack.c.h.b16 %v885
    %v4701 = vunpack.c.l.b16 %v886
    %v4702 = vunpack.c.h.b16 %v886
    %v4703 = vunpack.c.l.b16 %v887
    %v4704 = vunpack.c.l.b16 %v888
    %v4705 = vunpack.c.h.b16 %v888
    %v4706 = vunpack.c.l.b16 %v889
    %v4707 = vunpack.c.h.b16 %v889
    %v4708 = vunpack.c.l.b16 %v890
    %v4709 = vunpack.c.h.b16 %v890
    %v4710 = vunpack.c.l.b16 %v891
    %v4711 = vunpack.c.l.b16 %v892
    %v4712 = vunpack.c.h.b16 %v892
    %v4713 = vunpack.c.l.b16 %v893
    %v4714 = vunpack.c.h.b16 %v893
    %v4715 = vunpack.c.l.b16 %v894
    %v4716 = vunpack.c.h.b16 %v894
    %v4717 = vunpack.c.l.b16 %v895
    %v4718 = vunpack.c.l.b16 %v896
    %v4719 = vunpack.c.h.b16 %v896
    %v4720 = vunpack.c.l.b16 %v897
    %v4721 = vunpack.c.h.b16 %v897
    %v4722 = vunpack.c.l.b16 %v898
    %v4723 = vunpack.c.h.b16 %v898
    %v4724 = vunpack.c.l.b16 %v899
    %v4725 = vunpack.c.l.b16 %v900
    %v4726 = vunpack.c.h.b16 %v900
    %v4727 = vunpack.c.l.b16 %v901
    %v4728 = vunpack.c.h.b16 %v901
    %v4729 = vunpack.c.l.b16 %v902
    %v4730 = vunpack.c.h.b16 %v902
    %v4731 = vunpack.c.l.b16 %v903
    %v4732 = vunpack.c.l.b16 %v904
    %v4733 = vunpack.c.h.b16 %v904
    %v4734 = vunpack.c.l.b16 %v905
    %v4735 = vunpack.c.h.b16 %v905
    %v4736 = vunpack.c.l.b16 %v906
    %v4737 = vunpack.c.h.b16 %v906
    %v4738 = vunpack.c.l.b16 %v907
    %v4739 = vunpack.c.l.b16 %v908
    %v4740 = vunpack.c.h.b16 %v908
    %v4741 = vunpack.c.l.b16 %v909
    %v4742 = vunpack.c.h.b16 %v909
    %v4743 = vunpack.c.l.b16 %v910
    %v4744 = vunpack.c.h.b16 %v910
    %v4745 = vunpack.c.l.b16 %v911
    %v4746 = vunpack.c.l.b16 %v912
    %v4747 = vunpack.c.h.b16 %v912
    %v4748 = vunpack.c.l.b16 %v913
    %v4749 = vunpack.c.h.b16 %v913
    %v4750 = vunpack.c.l.b16 %v914
    %v4751 = vunpack.c.h.b16 %v914
    %v4752 = vunpack.c.l.b16 %v915
    %v4753 = vunpack.c.l.b16 %v916
    %v4754 = vunpack.c.h.b16 %v916
    %v4755 = vunpack.c.l.b16 %v917
    %v4756 = vunpack.c.h.b16 %v917
    %v4757 = vunpack.c.l.b16 %v918
    %v4758 = vunpack.c.h.b16 %v918
    %v4759 = vunpack.c.l.b16 %v919
    %v4760 = vunpack.c.l.b16 %v920
    %v4761 = vunpack.c.h.b16 %v920
    %v4762 = vunpack.c.l.b16 %v921
    %v4763 = vunpack.c.h.b16 %v921
    %v4764 = vunpack.c.l.b16 %v922
    %v4765 = vunpack.c.h.b16 %v922
    %v4766 = vunpack.c.l.b16 %v923
    %v4767 = vunpack.c.l.b16 %v924
    %v4768 = vunpack.c.h.b16 %v924
    %v4769 = vunpack.c.l.b16 %v925
    %v4770 = vunpack.c.h.b16 %v925
    %v4771 = vunpack.c.l.b16 %v926
    %v4772 = vunpack.c.h.b16 %v926
    %v4773 = vunpack.c.l.b16 %v927
    %v4774 = vunpack.c.l.b16 %v928
    %v4775 = vunpack.c.h.b16 %v928
    %v4776 = vunpack.c.l.b16 %v929
    %v4777 = vunpack.c.h.b16 %v929
    %v4778 = vunpack.c.l.b16 %v930
    %v4779 = vunpack.c.h.b16 %v930
    %v4780 = vunpack.c.l.b16 %v931
    %v4781 = vunpack.c.l.b16 %v932
    %v4782 = vunpack.c.h.b16 %v932
    %v4783 = vunpack.c.l.b16 %v933
    %v4784 = vunpack.c.h.b16 %v933
    %v4785 = vunpack.c.l.b16 %v934
    %v4786 = vunpack.c.h.b16 %v934
    %v4787 = vunpack.c.l.b16 %v935
    %v4788 = vunpack.c.l.b16 %v936
    %v4789 = vunpack.c.h.b16 %v936
    %v4790 = vunpack.c.l.b16 %v937
    %v4791 = vunpack.c.h.b16 %v937
    %v4792 = vunpack.c.l.b16 %v938
    %v4793 = vunpack.c.h.b16 %v938
    %v4794 = vunpack.c.l.b16 %v939
    %v4795 = vunpack.c.l.b16 %v940
    %v4796 = vunpack.c.h.b16 %v940
    %v4797 = vunpack.c.l.b16 %v941
    %v4798 = vunpack.c.h.b16 %v941
    %v4799 = vunpack.c.l.b16 %v942
    %v4800 = vunpack.c.h.b16 %v942
    %v4801 = vunpack.c.l.b16 %v943
    %v4802 = vunpack.c.l.b16 %v944
    %v4803 = vunpack.c.h.b16 %v944
    %v4804 = vunpack.c.l.b16 %v945
    %v4805 = vunpack.c.h.b16 %v945
    %v4806 = vunpack.c.l.b16 %v946
    %v4807 = vunpack.c.h.b16 %v946
    %v4808 = vunpack.c.l.b16 %v947
    %v4809 = vunpack.c.l.b16 %v948
    %v4810 = vunpack.c.h.b16 %v948
    %v4811 = vunpack.c.l.b16 %v949
    %v4812 = vunpack.c.h.b16 %v949
    %v4813 = vunpack.c.l.b16 %v950
    %v4814 = vunpack.c.h.b16 %v950
    %v4815 = vunpack.c.l.b16 %v951
    %v4816 = vunpack.c.l.b16 %v952
    %v4817 = vunpack.c.h.b16 %v952
    %v4818 = vunpack.c.l.b16 %v953
    %v4819 = vunpack.c.h.b16 %v953
    %v4820 = vunpack.c.l.b16 %v954
    %v4821 = vunpack.c.h.b16 %v954
    %v4822 = vunpack.c.l.b16 %v955
    %v4823 = vunpack.c.l.b16 %v956
    %v4824 = vunpack.c.h.b16 %v956
    %v4825 = vunpack.c.l.b16 %v957
    %v4826 = vunpack.c.h.b16 %v957
    %v4827 = vunpack.c.l.b16 %v958
    %v4828 = vunpack.c.h.b16 %v958
    %v4829 = vunpack.c.l.b16 %v959
    %v4830 = vunpack.c.l.b16 %v960
    %v4831 = vunpack.c.h.b16 %v960
    %v4832 = vunpack.c.l.b16 %v961
    %v4833 = vunpack.c.h.b16 %v961
    %v4834 = vunpack.c.l.b16 %v962
    %v4835 = vunpack.c.h.b16 %v962
    %v4836 = vunpack.c.l.b16 %v963
    %v4837 = vunpack.c.l.b16 %v964
    %v4838 = vunpack.c.h.b16 %v964
    %v4839 = vunpack.c.l.b16 %v965
    %v4840 = vunpack.c.h.b16 %v965
    %v4841 = vunpack.c.l.b16 %v966
    %v4842 = vunpack.c.h.b16 %v966
    %v4843 = vunpack.c.l.b16 %v967
    %v4844 = vunpack.c.l.b16 %v968
    %v4845 = vunpack.c.h.b16 %v968
    %v4846 = vunpack.c.l.b16 %v969
    %v4847 = vunpack.c.h.b16 %v969
    %v4848 = vunpack.c.l.b16 %v970
    %v4849 = vunpack.c.h.b16 %v970
    %v4850 = vunpack.c.l.b16 %v971
    %v4851 = vunpack.c.l.b16 %v972
    %v4852 = vunpack.c.h.b16 %v972
    %v4853 = vunpack.c.l.b16 %v973
    %v4854 = vunpack.c.h.b16 %v973
    %v4855 = vunpack.c.l.b16 %v974
    %v4856 = vunpack.c.h.b16 %v974
    %v4857 = vunpack.c.l.b16 %v975
    %v4858 = vunpack.c.l.b16 %v976
    %v4859 = vunpack.c.h.b16 %v976
    %v4860 = vunpack.c.l.b16 %v977
    %v4861 = vunpack.c.h.b16 %v977
    %v4862 = vunpack.c.l.b16 %v978
    %v4863 = vunpack.c.h.b16 %v978
    %v4864 = vunpack.c.l.b16 %v979
    %v4865 = vunpack.c.l.b16 %v980
    %v4866 = vunpack.c.h.b16 %v980
    %v4867 = vunpack.c.l.b16 %v981
    %v4868 = vunpack.c.h.b16 %v981
    %v4869 = vunpack.c.l.b16 %v982
    %v4870 = vunpack.c.h.b16 %v982
    %v4871 = vunpack.c.l.b16 %v983
    %v4872 = vunpack.c.l.b16 %v984
    %v4873 = vunpack.c.h.b16 %v984
    %v4874 = vunpack.c.l.b16 %v985
    %v4875 = vunpack.c.h.b16 %v985
    %v4876 = vunpack.c.l.b16 %v986
    %v4877 = vunpack.c.h.b16 %v986
    %v4878 = vunpack.c.l.b16 %v987
    %v4879 = vunpack.c.l.b16 %v988
    %v4880 = vunpack.c.h.b16 %v988
    %v4881 = vunpack.c.l.b16 %v989
    %v4882 = vunpack.c.h.b16 %v989
    %v4883 = vunpack.c.l.b16 %v990
    %v4884 = vunpack.c.h.b16 %v990
    %v4885 = vunpack.c.l.b16 %v991
    %v4886 = vunpack.c.l.b16 %v992
    %v4887 = vunpack.c.h.b16 %v992
    %v4888 = vunpack.c.l.b16 %v993
    %v4889 = vunpack.c.h.b16 %v993
    %v4890 = vunpack.c.l.b16 %v994
    %v4891 = vunpack.c.h.b16 %v994
    %v4892 = vunpack.c.l.b16 %v995
    %v4893 = vunpack.c.l.b16 %v996
    %v4894 = vunpack.c.h.b16 %v996
    %v4895 = vunpack.c.l.b16 %v997
    %v4896 = vunpack.c.h.b16 %v997
    %v4897 = vunpack.c.l.b16 %v998
    %v4898 = vunpack.c.h.b16 %v998
    %v4899 = vunpack.c.l.b16 %v999
    %v4900 = vunpack.c.l.b16 %v1000
    %v4901 = vunpack.c.h.b16 %v1000
    %v4902 = vunpack.c.l.b16 %v1001
    %v4903 = vunpack.c.h.b16 %v1001
    %v4904 = vunpack.c.l.b16 %v1002
    %v4905 = vunpack.c.h.b16 %v1002
    %v4906 = vunpack.c.l.b16 %v1003
    %v4907 = vunpack.c.l.b16 %v1004
    %v4908 = vunpack.c.h.b16 %v1004
    %v4909 = vunpack.c.l.b16 %v1005
    %v4910 = vunpack.c.h.b16 %v1005
    %v4911 = vunpack.c.l.b16 %v1006
    %v4912 = vunpack.c.h.b16 %v1006
    %v4913 = vunpack.c.l.b16 %v1007
    %v4914 = vunpack.c.l.b16 %v1008
    %v4915 = vunpack.c.h.b16 %v1008
    %v4916 = vunpack.c.l.b16 %v1009
    %v4917 = vunpack.c.h.b16 %v1009
    %v4918 = vunpack.c.l.b16 %v1010
    %v4919 = vunpack.c.h.b16 %v1010
    %v4920 = vunpack.c.l.b16 %v1011
    %v4921 = vunpack.c.l.b16 %v1012
    %v4922 = vunpack.c.h.b16 %v1012
    %v4923 = vunpack.c.l.b16 %v1013
    %v4924 = vunpack.c.h.b16 %v1013
    %v4925 = vunpack.c.l.b16 %v1014
    %v4926 = vunpack.c.h.b16 %v1014
    %v4927 = vunpack.c.l.b16 %v1015
    %v4928 = vunpack.c.l.b16 %v1016
    %v4929 = vunpack.c.h.b16 %v1016
    %v4930 = vunpack.c.l.b16 %v1017
    %v4931 = vunpack.c.h.b16 %v1017
    %v4932 = vunpack.c.l.b16 %v1018
    %v4933 = vunpack.c.h.b16 %v1018
    %v4934 = vunpack.c.l.b16 %v1019
    %v4935 = vunpack.c.l.b16 %v1020
    %v4936 = vunpack.c.h.b16 %v1020
    %v4937 = vunpack.c.l.b16 %v1021
    %v4938 = vunpack.c.h.b16 %v1021
    %v4939 = vunpack.c.l.b16 %v1022
    %v4940 = vunpack.c.h.b16 %v1022
    %v4941 = vunpack.c.l.b16 %v1023
    %v4942 = vunpack.c.l.b16 %v1024
    %v4943 = vunpack.c.h.b16 %v1024
    %v4944 = vunpack.c.l.b16 %v1025
    %v4945 = vunpack.c.h.b16 %v1025
    %v4946 = vunpack.c.l.b16 %v1026
    %v4947 = vunpack.c.h.b16 %v1026
    %v4948 = vunpack.c.l.b16 %v1027
    %v4949 = vunpack.c.l.b16 %v1028
    %v4950 = vunpack.c.h.b16 %v1028
    %v4951 = vunpack.c.l.b16 %v1029
    %v4952 = vunpack.c.h.b16 %v1029
    %v4953 = vunpack.c.l.b16 %v1030
    %v4954 = vunpack.c.h.b16 %v1030
    %v4955 = vunpack.c.l.b16 %v1031
    %v4956 = vunpack.c.l.b16 %v1032
    %v4957 = vunpack.c.h.b16 %v1032
    %v4958 = vunpack.c.l.b16 %v1033
    %v4959 = vunpack.c.h.b16 %v1033
    %v4960 = vunpack.c.l.b16 %v1034
    %v4961 = vunpack.c.h.b16 %v1034
    %v4962 = vunpack.c.l.b16 %v1035
    %v4963 = vunpack.c.l.b16 %v1036
    %v4964 = vunpack.c.h.b16 %v1036
    %v4965 = vunpack.c.l.b16 %v1037
    %v4966 = vunpack.c.h.b16 %v1037
    %v4967 = vunpack.c.l.b16 %v1038
    %v4968 = vunpack.c.h.b16 %v1038
    %v4969 = vunpack.c.l.b16 %v1039
    %v4970 = vunpack.c.l.b16 %v1040
    %v4971 = vunpack.c.h.b16 %v1040
    %v4972 = vunpack.c.l.b16 %v1041
    %v4973 = vunpack.c.h.b16 %v1041
    %v4974 = vunpack.c.l.b16 %v1042
    %v4975 = vunpack.c.h.b16 %v1042
    %v4976 = vunpack.c.l.b16 %v1043
    %v4977 = vunpack.c.l.b16 %v1044
    %v4978 = vunpack.c.h.b16 %v1044
    %v4979 = vunpack.c.l.b16 %v1045
    %v4980 = vunpack.c.h.b16 %v1045
    %v4981 = vunpack.c.l.b16 %v1046
    %v4982 = vunpack.c.h.b16 %v1046
    %v4983 = vunpack.c.l.b16 %v1047
    %v4984 = vunpack.c.l.b16 %v1048
    %v4985 = vunpack.c.h.b16 %v1048
    %v4986 = vunpack.c.l.b16 %v1049
    %v4987 = vunpack.c.h.b16 %v1049
    %v4988 = vunpack.c.l.b16 %v1050
    %v4989 = vunpack.c.h.b16 %v1050
    %v4990 = vunpack.c.l.b16 %v1051
    %v4991 = vunpack.c.l.b16 %v1052
    %v4992 = vunpack.c.h.b16 %v1052
    %v4993 = vunpack.c.l.b16 %v1053
    %v4994 = vunpack.c.h.b16 %v1053
    %v4995 = vunpack.c.l.b16 %v1054
    %v4996 = vunpack.c.h.b16 %v1054
    %v4997 = vunpack.c.l.b16 %v1055
    %v4998 = vunpack.c.l.b16 %v1056
    %v4999 = vunpack.c.h.b16 %v1056
    %v5000 = vunpack.c.l.b16 %v1057
    %v5001 = vunpack.c.h.b16 %v1057
    %v5002 = vunpack.c.l.b16 %v1058
    %v5003 = vunpack.c.h.b16 %v1058
    %v5004 = vunpack.c.l.b16 %v1059
    %v5005 = vunpack.c.l.b16 %v1060
    %v5006 = vunpack.c.h.b16 %v1060
    %v5007 = vunpack.c.l.b16 %v1061
    %v5008 = vunpack.c.h.b16 %v1061
    %v5009 = vunpack.c.l.b16 %v1062
    %v5010 = vunpack.c.h.b16 %v1062
    %v5011 = vunpack.c.l.b16 %v1063
    %v5012 = vunpack.c.l.b16 %v1064
    %v5013 = vunpack.c.h.b16 %v1064
    %v5014 = vunpack.c.l.b16 %v1065
    %v5015 = vunpack.c.h.b16 %v1065
    %v5016 = vunpack.c.l.b16 %v1066
    %v5017 = vunpack.c.h.b16 %v1066
    %v5018 = vunpack.c.l.b16 %v1067
    %v5019 = vunpack.c.l.b16 %v1068
    %v5020 = vunpack.c.h.b16 %v1068
    %v5021 = vunpack.c.l.b16 %v1069
    %v5022 = vunpack.c.h.b16 %v1069
    %v5023 = vunpack.c.l.b16 %v1070
    %v5024 = vunpack.c.h.b16 %v1070
    %v5025 = vunpack.c.l.b16 %v1071
    %v5026 = vunpack.c.l.b16 %v1072
    %v5027 = vunpack.c.h.b16 %v1072
    %v5028 = vunpack.c.l.b16 %v1073
    %v5029 = vunpack.c.h.b16 %v1073
    %v5030 = vunpack.c.l.b16 %v1074
    %v5031 = vunpack.c.h.b16 %v1074
    %v5032 = vunpack.c.l.b16 %v1075
    %v5033 = vunpack.c.l.b16 %v1076
    %v5034 = vunpack.c.h.b16 %v1076
    %v5035 = vunpack.c.l.b16 %v1077
    %v5036 = vunpack.c.h.b16 %v1077
    %v5037 = vunpack.c.l.b16 %v1078
    %v5038 = vunpack.c.h.b16 %v1078
    %v5039 = vunpack.c.l.b16 %v1079
    %v5040 = vunpack.c.l.b16 %v1080
    %v5041 = vunpack.c.h.b16 %v1080
    %v5042 = vunpack.c.l.b16 %v1081
    %v5043 = vunpack.c.h.b16 %v1081
    %v5044 = vunpack.c.l.b16 %v1082
    %v5045 = vunpack.c.h.b16 %v1082
    %v5046 = vunpack.c.l.b16 %v1083
    %v5047 = vunpack.c.l.b16 %v1084
    %v5048 = vunpack.c.h.b16 %v1084
    %v5049 = vunpack.c.l.b16 %v1085
    %v5050 = vunpack.c.h.b16 %v1085
    %v5051 = vunpack.c.l.b16 %v1086
    %v5052 = vunpack.c.h.b16 %v1086
    %v5053 = vunpack.c.l.b16 %v1087
    %v5054 = vunpack.c.l.b16 %v1088
    %v5055 = vunpack.c.h.b16 %v1088
    %v5056 = vunpack.c.l.b16 %v1089
    %v5057 = vunpack.c.h.b16 %v1089
    %v5058 = vunpack.c.l.b16 %v1090
    %v5059 = vunpack.c.h.b16 %v1090
    %v5060 = vunpack.c.l.b16 %v1091
    %v5061 = vunpack.c.l.b16 %v1092
    %v5062 = vunpack.c.h.b16 %v1092
    %v5063 = vunpack.c.l.b16 %v1093
    %v5064 = vunpack.c.h.b16 %v1093
    %v5065 = vunpack.c.l.b16 %v1094
    %v5066 = vunpack.c.h.b16 %v1094
    %v5067 = vunpack.c.l.b16 %v1095
    %v5068 = vunpack.c.l.b16 %v1096
    %v5069 = vunpack.c.h.b16 %v1096
    %v5070 = vunpack.c.l.b16 %v1097
    %v5071 = vunpack.c.h.b16 %v1097
    %v5072 = vunpack.c.l.b16 %v1098
    %v5073 = vunpack.c.h.b16 %v1098
    %v5074 = vunpack.c.l.b16 %v1099
    %v5075 = vunpack.c.l.b16 %v1100
    %v5076 = vunpack.c.h.b16 %v1100
    %v5077 = vunpack.c.l.b16 %v1101
    %v5078 = vunpack.c.h.b16 %v1101
    %v5079 = vunpack.c.l.b16 %v1102
    %v5080 = vunpack.c.h.b16 %v1102
    %v5081 = vunpack.c.l.b16 %v1103
    %v5082 = vunpack.c.l.b16 %v1104
    %v5083 = vunpack.c.h.b16 %v1104
    %v5084 = vunpack.c.l.b16 %v1105
    %v5085 = vunpack.c.h.b16 %v1105
    %v5086 = vunpack.c.l.b16 %v1106
    %v5087 = vunpack.c.h.b16 %v1106
    %v5088 = vunpack.c.l.b16 %v1107
    %v5089 = vunpack.c.l.b16 %v1108
    %v5090 = vunpack.c.h.b16 %v1108
    %v5091 = vunpack.c.l.b16 %v1109
    %v5092 = vunpack.c.h.b16 %v1109
    %v5093 = vunpack.c.l.b16 %v1110
    %v5094 = vunpack.c.h.b16 %v1110
    %v5095 = vunpack.c.l.b16 %v1111
    %v5096 = vunpack.c.l.b16 %v1112
    %v5097 = vunpack.c.h.b16 %v1112
    %v5098 = vunpack.c.l.b16 %v1113
    %v5099 = vunpack.c.h.b16 %v1113
    %v5100 = vunpack.c.l.b16 %v1114
    %v5101 = vunpack.c.h.b16 %v1114
    %v5102 = vunpack.c.l.b16 %v1115
    %v5103 = vunpack.c.l.b16 %v1116
    %v5104 = vunpack.c.h.b16 %v1116
    %v5105 = vunpack.c.l.b16 %v1117
    %v5106 = vunpack.c.h.b16 %v1117
    %v5107 = vunpack.c.l.b16 %v1118
    %v5108 = vunpack.c.h.b16 %v1118
    %v5109 = vunpack.c.l.b16 %v1119
    %v5110 = vunpack.c.l.b16 %v1120
    %v5111 = vunpack.c.h.b16 %v1120
    %v5112 = vunpack.c.l.b16 %v1121
    %v5113 = vunpack.c.h.b16 %v1121
    %v5114 = vunpack.c.l.b16 %v1122
    %v5115 = vunpack.c.h.b16 %v1122
    %v5116 = vunpack.c.l.b16 %v1123
    %v5117 = vunpack.c.l.b16 %v1124
    %v5118 = vunpack.c.h.b16 %v1124
    %v5119 = vunpack.c.l.b16 %v1125
    %v5120 = vunpack.c.h.b16 %v1125
    %v5121 = vunpack.c.l.b16 %v1126
    %v5122 = vunpack.c.h.b16 %v1126
    %v5123 = vunpack.c.l.b16 %v1127
    %v5124 = vunpack.c.l.b16 %v1128
    %v5125 = vunpack.c.h.b16 %v1128
    %v5126 = vunpack.c.l.b16 %v1129
    %v5127 = vunpack.c.h.b16 %v1129
    %v5128 = vunpack.c.l.b16 %v1130
    %v5129 = vunpack.c.h.b16 %v1130
    %v5130 = vunpack.c.l.b16 %v1131
    %v5131 = vunpack.c.l.b16 %v1132
    %v5132 = vunpack.c.h.b16 %v1132
    %v5133 = vunpack.c.l.b16 %v1133
    %v5134 = vunpack.c.h.b16 %v1133
    %v5135 = vunpack.c.l.b16 %v1134
    %v5136 = vunpack.c.h.b16 %v1134
    %v5137 = vunpack.c.l.b16 %v1135
    %v5138 = vunpack.c.l.b16 %v1136
    %v5139 = vunpack.c.h.b16 %v1136
    %v5140 = vunpack.c.l.b16 %v1137
    %v5141 = vunpack.c.h.b16 %v1137
    %v5142 = vunpack.c.l.b16 %v1138
    %v5143 = vunpack.c.h.b16 %v1138
    %v5144 = vunpack.c.l.b16 %v1139
    %v5145 = vunpack.c.l.b16 %v1140
    %v5146 = vunpack.c.h.b16 %v1140
    %v5147 = vunpack.c.l.b16 %v1141
    %v5148 = vunpack.c.h.b16 %v1141
    %v5149 = vunpack.c.l.b16 %v1142
    %v5150 = vunpack.c.h.b16 %v1142
    %v5151 = vunpack.c.l.b16 %v1143
    %v5152 = vunpack.c.l.b16 %v1144
    %v5153 = vunpack.c.h.b16 %v1144
    %v5154 = vunpack.c.l.b16 %v1145
    %v5155 = vunpack.c.h.b16 %v1145
    %v5156 = vunpack.c.l.b16 %v1146
    %v5157 = vunpack.c.h.b16 %v1146
    %v5158 = vunpack.c.l.b16 %v1147
    %v5159 = vunpack.c.l.b16 %v1148
    %v5160 = vunpack.c.h.b16 %v1148
    %v5161 = vunpack.c.l.b16 %v1149
    %v5162 = vunpack.c.h.b16 %v1149
    %v5163 = vunpack.c.l.b16 %v1150
    %v5164 = vunpack.c.h.b16 %v1150
    %v5165 = vunpack.c.l.b16 %v1151
    %v5166 = vunpack.c.l.b16 %v1152
    %v5167 = vunpack.c.h.b16 %v1152
    %v5168 = vunpack.c.l.b16 %v1153
    %v5169 = vunpack.c.h.b16 %v1153
    %v5170 = vunpack.c.l.b16 %v1154
    %v5171 = vunpack.c.h.b16 %v1154
    %v5172 = vunpack.c.l.b16 %v1155
    %v5173 = vunpack.c.l.b16 %v1156
    %v5174 = vunpack.c.h.b16 %v1156
    %v5175 = vunpack.c.l.b16 %v1157
    %v5176 = vunpack.c.h.b16 %v1157
    %v5177 = vunpack.c.l.b16 %v1158
    %v5178 = vunpack.c.h.b16 %v1158
    %v5179 = vunpack.c.l.b16 %v1159
    %v5180 = vunpack.c.l.b16 %v1160
    %v5181 = vunpack.c.h.b16 %v1160
    %v5182 = vunpack.c.l.b16 %v1161
    %v5183 = vunpack.c.h.b16 %v1161
    %v5184 = vunpack.c.l.b16 %v1162
    %v5185 = vunpack.c.h.b16 %v1162
    %v5186 = vunpack.c.l.b16 %v1163
    %v5187 = vunpack.c.l.b16 %v1164
    %v5188 = vunpack.c.h.b16 %v1164
    %v5189 = vunpack.c.l.b16 %v1165
    %v5190 = vunpack.c.h.b16 %v1165
    %v5191 = vunpack.c.l.b16 %v1166
    %v5192 = vunpack.c.h.b16 %v1166
    %v5193 = vunpack.c.l.b16 %v1167
    %v5194 = vunpack.c.l.b16 %v1168
    %v5195 = vunpack.c.h.b16 %v1168
    %v5196 = vunpack.c.l.b16 %v1169
    %v5197 = vunpack.c.h.b16 %v1169
    %v5198 = vunpack.c.l.b16 %v1170
    %v5199 = vunpack.c.h.b16 %v1170
    %v5200 = vunpack.c.l.b16 %v1171
    %v5201 = vunpack.c.l.b16 %v1172
    %v5202 = vunpack.c.h.b16 %v1172
    %v5203 = vunpack.c.l.b16 %v1173
    %v5204 = vunpack.c.h.b16 %v1173
    %v5205 = vunpack.c.l.b16 %v1174
    %v5206 = vunpack.c.h.b16 %v1174
    %v5207 = vunpack.c.l.b16 %v1175
    %v5208 = vunpack.c.l.b16 %v1176
    %v5209 = vunpack.c.h.b16 %v1176
    %v5210 = vunpack.c.l.b16 %v1177
    %v5211 = vunpack.c.h.b16 %v1177
    %v5212 = vunpack.c.l.b16 %v1178
    %v5213 = vunpack.c.h.b16 %v1178
    %v5214 = vunpack.c.l.b16 %v1179
    %v5215 = vunpack.c.l.b16 %v1180
    %v5216 = vunpack.c.h.b16 %v1180
    %v5217 = vunpack.c.l.b16 %v1181
    %v5218 = vunpack.c.h.b16 %v1181
    %v5219 = vunpack.c.l.b16 %v1182
    %v5220 = vunpack.c.h.b16 %v1182
    %v5221 = vunpack.c.l.b16 %v1183
    %v5222 = vunpack.c.l.b16 %v1184
    %v5223 = vunpack.c.h.b16 %v1184
    %v5224 = vunpack.c.l.b16 %v1185
    %v5225 = vunpack.c.h.b16 %v1185
    %v5226 = vunpack.c.l.b16 %v1186
    %v5227 = vunpack.c.h.b16 %v1186
    %v5228 = vunpack.c.l.b16 %v1187
    %v5229 = vunpack.c.l.b16 %v1188
    %v5230 = vunpack.c.h.b16 %v1188
    %v5231 = vunpack.c.l.b16 %v1189
    %v5232 = vunpack.c.h.b16 %v1189
    %v5233 = vunpack.c.l.b16 %v1190
    %v5234 = vunpack.c.h.b16 %v1190
    %v5235 = vunpack.c.l.b16 %v1191
    %v5236 = vunpack.c.l.b16 %v1192
    %v5237 = vunpack.c.h.b16 %v1192
    %v5238 = vunpack.c.l.b16 %v1193
    %v5239 = vunpack.c.h.b16 %v1193
    %v5240 = vunpack.c.l.b16 %v1194
    %v5241 = vunpack.c.h.b16 %v1194
    %v5242 = vunpack.c.l.b16 %v1195
    %v5243 = vunpack.c.l.b16 %v1196
    %v5244 = vunpack.c.h.b16 %v1196
    %v5245 = vunpack.c.l.b16 %v1197
    %v5246 = vunpack.c.h.b16 %v1197
    %v5247 = vunpack.c.l.b16 %v1198
    %v5248 = vunpack.c.h.b16 %v1198
    %v5249 = vunpack.c.l.b16 %v1199
    %v5250 = vunpack.c.l.b16 %v1200
    %v5251 = vunpack.c.h.b16 %v1200
    %v5252 = vunpack.c.l.b16 %v1201
    %v5253 = vunpack.c.h.b16 %v1201
    %v5254 = vunpack.c.l.b16 %v1202
    %v5255 = vunpack.c.h.b16 %v1202
    %v5256 = vunpack.c.l.b16 %v1203
    %v5257 = vunpack.c.l.b16 %v1204
    %v5258 = vunpack.c.h.b16 %v1204
    %v5259 = vunpack.c.l.b16 %v1205
    %v5260 = vunpack.c.h.b16 %v1205
    %v5261 = vunpack.c.l.b16 %v1206
    %v5262 = vunpack.c.h.b16 %v1206
    %v5263 = vunpack.c.l.b16 %v1207
    %v5264 = vunpack.c.l.b16 %v1208
    %v5265 = vunpack.c.h.b16 %v1208
    %v5266 = vunpack.c.l.b16 %v1209
    %v5267 = vunpack.c.h.b16 %v1209
    %v5268 = vunpack.c.l.b16 %v1210
    %v5269 = vunpack.c.h.b16 %v1210
    %v5270 = vunpack.c.l.b16 %v1211
    %v5271 = vunpack.c.l.b16 %v1212
    %v5272 = vunpack.c.h.b16 %v1212
    %v5273 = vunpack.c.l.b16 %v1213
    %v5274 = vunpack.c.h.b16 %v1213
    %v5275 = vunpack.c.l.b16 %v1214
    %v5276 = vunpack.c.h.b16 %v1214
    %v5277 = vunpack.c.l.b16 %v1215
    %v5278 = vunpack.c.l.b16 %v1216
    %v5279 = vunpack.c.h.b16 %v1216
    %v5280 = vunpack.c.l.b16 %v1217
    %v5281 = vunpack.c.h.b16 %v1217
    %v5282 = vunpack.c.l.b16 %v1218
    %v5283 = vunpack.c.h.b16 %v1218
    %v5284 = vunpack.c.l.b16 %v1219
    %v5285 = vunpack.c.l.b16 %v1220
    %v5286 = vunpack.c.h.b16 %v1220
    %v5287 = vunpack.c.l.b16 %v1221
    %v5288 = vunpack.c.h.b16 %v1221
    %v5289 = vunpack.c.l.b16 %v1222
    %v5290 = vunpack.c.h.b16 %v1222
    %v5291 = vunpack.c.l.b16 %v1223
    %v5292 = vunpack.c.l.b16 %v1224
    %v5293 = vunpack.c.h.b16 %v1224
    %v5294 = vunpack.c.l.b16 %v1225
    %v5295 = vunpack.c.h.b16 %v1225
    %v5296 = vunpack.c.l.b16 %v1226
    %v5297 = vunpack.c.h.b16 %v1226
    %v5298 = vunpack.c.l.b16 %v1227
    %v5299 = vunpack.c.l.b16 %v1228
    %v5300 = vunpack.c.h.b16 %v1228
    %v5301 = vunpack.c.l.b16 %v1229
    %v5302 = vunpack.c.h.b16 %v1229
    %v5303 = vunpack.c.l.b16 %v1230
    %v5304 = vunpack.c.h.b16 %v1230
    %v5305 = vunpack.c.l.b16 %v1231
    %v5306 = vunpack.c.l.b16 %v1232
    %v5307 = vunpack.c.h.b16 %v1232
    %v5308 = vunpack.c.l.b16 %v1233
    %v5309 = vunpack.c.h.b16 %v1233
    %v5310 = vunpack.c.l.b16 %v1234
    %v5311 = vunpack.c.h.b16 %v1234
    %v5312 = vunpack.c.l.b16 %v1235
    %v5313 = vunpack.c.l.b16 %v1236
    %v5314 = vunpack.c.h.b16 %v1236
    %v5315 = vunpack.c.l.b16 %v1237
    %v5316 = vunpack.c.h.b16 %v1237
    %v5317 = vunpack.c.l.b16 %v1238
    %v5318 = vunpack.c.h.b16 %v1238
    %v5319 = vunpack.c.l.b16 %v1239
    %v5320 = vunpack.c.l.b16 %v1240
    %v5321 = vunpack.c.h.b16 %v1240
    %v5322 = vunpack.c.l.b16 %v1241
    %v5323 = vunpack.c.h.b16 %v1241
    %v5324 = vunpack.c.l.b16 %v1242
    %v5325 = vunpack.c.h.b16 %v1242
    %v5326 = vunpack.c.l.b16 %v1243
    %v5327 = vunpack.c.l.b16 %v1244
    %v5328 = vunpack.c.h.b16 %v1244
    %v5329 = vunpack.c.l.b16 %v1245
    %v5330 = vunpack.c.h.b16 %v1245
    %v5331 = vunpack.c.l.b16 %v1246
    %v5332 = vunpack.c.h.b16 %v1246
    %v5333 = vunpack.c.l.b16 %v1247
    %v5334 = vunpack.c.l.b16 %v1248
    %v5335 = vunpack.c.h.b16 %v1248
    %v5336 = vunpack.c.l.b16 %v1249
    %v5337 = vunpack.c.h.b16 %v1249
    %v5338 = vunpack.c.l.b16 %v1250
    %v5339 = vunpack.c.h.b16 %v1250
    %v5340 = vunpack.c.l.b16 %v1251
    %v5341 = vunpack.c.l.b16 %v1252
    %v5342 = vunpack.c.h.b16 %v1252
    %v5343 = vunpack.c.l.b16 %v1253
    %v5344 = vunpack.c.h.b16 %v1253
    %v5345 = vunpack.c.l.b16 %v1254
    %v5346 = vunpack.c.h.b16 %v1254
    %v5347 = vunpack.c.l.b16 %v1255
    %v5348 = vunpack.c.l.b16 %v1256
    %v5349 = vunpack.c.h.b16 %v1256
    %v5350 = vunpack.c.l.b16 %v1257
    %v5351 = vunpack.c.h.b16 %v1257
    %v5352 = vunpack.c.l.b16 %v1258
    %v5353 = vunpack.c.h.b16 %v1258
    %v5354 = vunpack.c.l.b16 %v1259
    %v5355 = vunpack.c.l.b16 %v1260
    %v5356 = vunpack.c.h.b16 %v1260
    %v5357 = vunpack.c.l.b16 %v1261
    %v5358 = vunpack.c.h.b16 %v1261
    %v5359 = vunpack.c.l.b16 %v1262
    %v5360 = vunpack.c.h.b16 %v1262
    %v5361 = vunpack.c.l.b16 %v1263
    %v5362 = vunpack.c.l.b16 %v1264
    %v5363 = vunpack.c.h.b16 %v1264
    %v5364 = vunpack.c.l.b16 %v1265
    %v5365 = vunpack.c.h.b16 %v1265
    %v5366 = vunpack.c.l.b16 %v1266
    %v5367 = vunpack.c.h.b16 %v1266
    %v5368 = vunpack.c.l.b16 %v1267
    %v5369 = vunpack.c.l.b16 %v1268
    %v5370 = vunpack.c.h.b16 %v1268
    %v5371 = vunpack.c.l.b16 %v1269
    %v5372 = vunpack.c.h.b16 %v1269
    %v5373 = vunpack.c.l.b16 %v1270
    %v5374 = vunpack.c.h.b16 %v1270
    %v5375 = vunpack.c.l.b16 %v1271
    %v5376 = vunpack.c.l.b16 %v1272
    %v5377 = vunpack.c.h.b16 %v1272
    %v5378 = vunpack.c.l.b16 %v1273
    %v5379 = vunpack.c.h.b16 %v1273
    %v5380 = vunpack.c.l.b16 %v1274
    %v5381 = vunpack.c.h.b16 %v1274
    %v5382 = vunpack.c.l.b16 %v1275
    %v5383 = vunpack.c.l.b16 %v1276
    %v5384 = vunpack.c.h.b16 %v1276
    %v5385 = vunpack.c.l.b16 %v1277
    %v5386 = vunpack.c.h.b16 %v1277
    %v5387 = vunpack.c.l.b16 %v1278
    %v5388 = vunpack.c.h.b16 %v1278
    %v5389 = vunpack.c.l.b16 %v1279
    %v5390 = vunpack.c.l.b16 %v1280
    %v5391 = vunpack.c.h.b16 %v1280
    %v5392 = vunpack.c.l.b16 %v1281
    %v5393 = vunpack.c.h.b16 %v1281
    %v5394 = vunpack.c.l.b16 %v1282
    %v5395 = vunpack.c.h.b16 %v1282
    %v5396 = vunpack.c.l.b16 %v1283
    %v5397 = vunpack.c.l.b16 %v1284
    %v5398 = vunpack.c.h.b16 %v1284
    %v5399 = vunpack.c.l.b16 %v1285
    %v5400 = vunpack.c.h.b16 %v1285
    %v5401 = vunpack.c.l.b16 %v1286
    %v5402 = vunpack.c.h.b16 %v1286
    %v5403 = vunpack.c.l.b16 %v1287
    %v5404 = vunpack.c.l.b16 %v1288
    %v5405 = vunpack.c.h.b16 %v1288
    %v5406 = vunpack.c.l.b16 %v1289
    %v5407 = vunpack.c.h.b16 %v1289
    %v5408 = vunpack.c.l.b16 %v1290
    %v5409 = vunpack.c.h.b16 %v1290
    %v5410 = vunpack.c.l.b16 %v1291
    %v5411 = vunpack.c.l.b16 %v1292
    %v5412 = vunpack.c.h.b16 %v1292
    %v5413 = vunpack.c.l.b16 %v1293
    %v5414 = vunpack.c.h.b16 %v1293
    %v5415 = vunpack.c.l.b16 %v1294
    %v5416 = vunpack.c.h.b16 %v1294
    %v5417 = vunpack.c.l.b16 %v1295
    %v5418 = vunpack.c.l.b16 %v1296
    %v5419 = vunpack.c.h.b16 %v1296
    %v5420 = vunpack.c.l.b16 %v1297
    %v5421 = vunpack.c.h.b16 %v1297
    %v5422 = vunpack.c.l.b16 %v1298
    %v5423 = vunpack.c.h.b16 %v1298
    %v5424 = vunpack.c.l.b16 %v1299
    %v5425 = vunpack.c.l.b16 %v1300
    %v5426 = vunpack.c.h.b16 %v1300
    %v5427 = vunpack.c.l.b16 %v1301
    %v5428 = vunpack.c.h.b16 %v1301
    %v5429 = vunpack.c.l.b16 %v1302
    %v5430 = vunpack.c.h.b16 %v1302
    %v5431 = vunpack.c.l.b16 %v1303
    %v5432 = vunpack.c.l.b16 %v1304
    %v5433 = vunpack.c.h.b16 %v1304
    %v5434 = vunpack.c.l.b16 %v1305
    %v5435 = vunpack.c.h.b16 %v1305
    %v5436 = vunpack.c.l.b16 %v1306
    %v5437 = vunpack.c.h.b16 %v1306
    %v5438 = vunpack.c.l.b16 %v1307
    %v5439 = vunpack.c.l.b16 %v1308
    %v5440 = vunpack.c.h.b16 %v1308
    %v5441 = vunpack.c.l.b16 %v1309
    %v5442 = vunpack.c.h.b16 %v1309
    %v5443 = vunpack.c.l.b16 %v1310
    %v5444 = vunpack.c.h.b16 %v1310
    %v5445 = vunpack.c.l.b16 %v1311
    %v5446 = vunpack.c.l.b16 %v1312
    %v5447 = vunpack.c.h.b16 %v1312
    %v5448 = vunpack.c.l.b16 %v1313
    %v5449 = vunpack.c.h.b16 %v1313
    %v5450 = vunpack.c.l.b16 %v1314
    %v5451 = vunpack.c.h.b16 %v1314
    %v5452 = vunpack.c.l.b16 %v1315
    %v5453 = vunpack.c.l.b16 %v1316
    %v5454 = vunpack.c.h.b16 %v1316
    %v5455 = vunpack.c.l.b16 %v1317
    %v5456 = vunpack.c.h.b16 %v1317
    %v5457 = vunpack.c.l.b16 %v1318
    %v5458 = vunpack.c.h.b16 %v1318
    %v5459 = vunpack.c.l.b16 %v1319
    %v5460 = vunpack.c.l.b16 %v1320
    %v5461 = vunpack.c.h.b16 %v1320
    %v5462 = vunpack.c.l.b16 %v1321
    %v5463 = vunpack.c.h.b16 %v1321
    %v5464 = vunpack.c.l.b16 %v1322
    %v5465 = vunpack.c.h.b16 %v1322
    %v5466 = vunpack.c.l.b16 %v1323
    %v5467 = vunpack.c.l.b16 %v1324
    %v5468 = vunpack.c.h.b16 %v1324
    %v5469 = vunpack.c.l.b16 %v1325
    %v5470 = vunpack.c.h.b16 %v1325
    %v5471 = vunpack.c.l.b16 %v1326
    %v5472 = vunpack.c.h.b16 %v1326
    %v5473 = vunpack.c.l.b16 %v1327
    %v5474 = vunpack.c.l.b16 %v1328
    %v5475 = vunpack.c.h.b16 %v1328
    %v5476 = vunpack.c.l.b16 %v1329
    %v5477 = vunpack.c.h.b16 %v1329
    %v5478 = vunpack.c.l.b16 %v1330
    %v5479 = vunpack.c.h.b16 %v1330
    %v5480 = vunpack.c.l.b16 %v1331
    %v5481 = vunpack.c.l.b16 %v1332
    %v5482 = vunpack.c.h.b16 %v1332
    %v5483 = vunpack.c.l.b16 %v1333
    %v5484 = vunpack.c.h.b16 %v1333
    %v5485 = vunpack.c.l.b16 %v1334
    %v5486 = vunpack.c.h.b16 %v1334
    %v5487 = vunpack.c.l.b16 %v1335
    %v5488 = vunpack.c.l.b16 %v1336
    %v5489 = vunpack.c.h.b16 %v1336
    %v5490 = vunpack.c.l.b16 %v1337
    %v5491 = vunpack.c.h.b16 %v1337
    %v5492 = vunpack.c.l.b16 %v1338
    %v5493 = vunpack.c.h.b16 %v1338
    %v5494 = vunpack.c.l.b16 %v1339
    %v5495 = vunpack.c.l.b16 %v1340
    %v5496 = vunpack.c.h.b16 %v1340
    %v5497 = vunpack.c.l.b16 %v1341
    %v5498 = vunpack.c.h.b16 %v1341
    %v5499 = vunpack.c.l.b16 %v1342
    %v5500 = vunpack.c.h.b16 %v1342
    %v5501 = vunpack.c.l.b16 %v1343
    %v5502 = vunpack.c.l.b16 %v1344
    %v5503 = vunpack.c.h.b16 %v1344
    %v5504 = vunpack.c.l.b16 %v1345
    %v5505 = vunpack.c.h.b16 %v1345
    %v5506 = vunpack.c.l.b16 %v1346
    %v5507 = vunpack.c.h.b16 %v1346
    %v5508 = vunpack.c.l.b16 %v1347
    %v5509 = vunpack.c.l.b16 %v1348
    %v5510 = vunpack.c.h.b16 %v1348
    %v5511 = vunpack.c.l.b16 %v1349
    %v5512 = vunpack.c.h.b16 %v1349
    %v5513 = vunpack.c.l.b16 %v1350
    %v5514 = vunpack.c.h.b16 %v1350
    %v5515 = vunpack.c.l.b16 %v1351
    %v5516 = vunpack.c.l.b16 %v1352
    %v5517 = vunpack.c.h.b16 %v1352
    %v5518 = vunpack.c.l.b16 %v1353
    %v5519 = vunpack.c.h.b16 %v1353
    %v5520 = vunpack.c.l.b16 %v1354
    %v5521 = vunpack.c.h.b16 %v1354
    %v5522 = vunpack.c.l.b16 %v1355
    %v5523 = vunpack.c.l.b16 %v1356
    %v5524 = vunpack.c.h.b16 %v1356
    %v5525 = vunpack.c.l.b16 %v1357
    %v5526 = vunpack.c.h.b16 %v1357
    %v5527 = vunpack.c.l.b16 %v1358
    %v5528 = vunpack.c.h.b16 %v1358
    %v5529 = vunpack.c.l.b16 %v1359
    %v5530 = vunpack.c.l.b16 %v1360
    %v5531 = vunpack.c.h.b16 %v1360
    %v5532 = vunpack.c.l.b16 %v1361
    %v5533 = vunpack.c.h.b16 %v1361
    %v5534 = vunpack.c.l.b16 %v1362
    %v5535 = vunpack.c.h.b16 %v1362
    %v5536 = vunpack.c.l.b16 %v1363
    %v5537 = vunpack.c.l.b16 %v1364
    %v5538 = vunpack.c.h.b16 %v1364
    %v5539 = vunpack.c.l.b16 %v1365
    %v5540 = vunpack.c.h.b16 %v1365
    %v5541 = vunpack.c.l.b16 %v1366
    %v5542 = vunpack.c.h.b16 %v1366
    %v5543 = vunpack.c.l.b16 %v1367
    %v5544 = vunpack.c.l.b16 %v1368
    %v5545 = vunpack.c.h.b16 %v1368
    %v5546 = vunpack.c.l.b16 %v1369
    %v5547 = vunpack.c.h.b16 %v1369
    %v5548 = vunpack.c.l.b16 %v1370
    %v5549 = vunpack.c.h.b16 %v1370
    %v5550 = vunpack.c.l.b16 %v1371
    %v5551 = vunpack.c.l.b16 %v1372
    %v5552 = vunpack.c.h.b16 %v1372
    %v5553 = vunpack.c.l.b16 %v1373
    %v5554 = vunpack.c.h.b16 %v1373
    %v5555 = vunpack.c.l.b16 %v1374
    %v5556 = vunpack.c.h.b16 %v1374
    %v5557 = vunpack.c.l.b16 %v1375
    %v5558 = vunpack.c.l.b16 %v1376
    %v5559 = vunpack.c.h.b16 %v1376
    %v5560 = vunpack.c.l.b16 %v1377
    %v5561 = vunpack.c.h.b16 %v1377
    %v5562 = vunpack.c.l.b16 %v1378
    %v5563 = vunpack.c.h.b16 %v1378
    %v5564 = vunpack.c.l.b16 %v1379
    %v5565 = vunpack.c.l.b16 %v1380
    %v5566 = vunpack.c.h.b16 %v1380
    %v5567 = vunpack.c.l.b16 %v1381
    %v5568 = vunpack.c.h.b16 %v1381
    %v5569 = vunpack.c.l.b16 %v1382
    %v5570 = vunpack.c.h.b16 %v1382
    %v5571 = vunpack.c.l.b16 %v1383
    %v5572 = vunpack.c.l.b16 %v1384
    %v5573 = vunpack.c.h.b16 %v1384
    %v5574 = vunpack.c.l.b16 %v1385
    %v5575 = vunpack.c.h.b16 %v1385
    %v5576 = vunpack.c.l.b16 %v1386
    %v5577 = vunpack.c.h.b16 %v1386
    %v5578 = vunpack.c.l.b16 %v1387
    %v5579 = vunpack.c.l.b16 %v1388
    %v5580 = vunpack.c.h.b16 %v1388
    %v5581 = vunpack.c.l.b16 %v1389
    %v5582 = vunpack.c.h.b16 %v1389
    %v5583 = vunpack.c.l.b16 %v1390
    %v5584 = vunpack.c.h.b16 %v1390
    %v5585 = vunpack.c.l.b16 %v1391
    %v5586 = vunpack.c.l.b16 %v1392
    %v5587 = vunpack.c.h.b16 %v1392
    %v5588 = vunpack.c.l.b16 %v1393
    %v5589 = vunpack.c.h.b16 %v1393
    %v5590 = vunpack.c.l.b16 %v1394
    %v5591 = vunpack.c.h.b16 %v1394
    %v5592 = vunpack.c.l.b16 %v1395
    %v5593 = vunpack.c.l.b16 %v1396
    %v5594 = vunpack.c.h.b16 %v1396
    %v5595 = vunpack.c.l.b16 %v1397
    %v5596 = vunpack.c.h.b16 %v1397
    %v5597 = vunpack.c.l.b16 %v1398
    %v5598 = vunpack.c.h.b16 %v1398
    %v5599 = vunpack.c.l.b16 %v1399
    %v5600 = vunpack.c.l.b16 %v1400
    %v5601 = vunpack.c.h.b16 %v1400
    %v5602 = vunpack.c.l.b16 %v1401
    %v5603 = vunpack.c.h.b16 %v1401
    %v5604 = vunpack.c.l.b16 %v1402
    %v5605 = vunpack.c.h.b16 %v1402
    %v5606 = vunpack.c.l.b16 %v1403
    %v5607 = vunpack.c.l.b16 %v1404
    %v5608 = vunpack.c.h.b16 %v1404
    %v5609 = vunpack.c.l.b16 %v1405
    %v5610 = vunpack.c.h.b16 %v1405
    %v5611 = vunpack.c.l.b16 %v1406
    %v5612 = vunpack.c.h.b16 %v1406
    %v5613 = vunpack.c.l.b16 %v1407
    %v5614 = vunpack.c.l.b16 %v1408
    %v5615 = vunpack.c.h.b16 %v1408
    %v5616 = vunpack.c.l.b16 %v1409
    %v5617 = vunpack.c.h.b16 %v1409
    %v5618 = vunpack.c.l.b16 %v1410
    %v5619 = vunpack.c.h.b16 %v1410
    %v5620 = vunpack.c.l.b16 %v1411
    %v5621 = vunpack.c.l.b16 %v1412
    %v5622 = vunpack.c.h.b16 %v1412
    %v5623 = vunpack.c.l.b16 %v1413
    %v5624 = vunpack.c.h.b16 %v1413
    %v5625 = vunpack.c.l.b16 %v1414
    %v5626 = vunpack.c.h.b16 %v1414
    %v5627 = vunpack.c.l.b16 %v1415
    %v5628 = vunpack.c.l.b16 %v1416
    %v5629 = vunpack.c.h.b16 %v1416
    %v5630 = vunpack.c.l.b16 %v1417
    %v5631 = vunpack.c.h.b16 %v1417
    %v5632 = vunpack.c.l.b16 %v1418
    %v5633 = vunpack.c.h.b16 %v1418
    %v5634 = vunpack.c.l.b16 %v1419
    %v5635 = vunpack.c.l.b16 %v1420
    %v5636 = vunpack.c.h.b16 %v1420
    %v5637 = vunpack.c.l.b16 %v1421
    %v5638 = vunpack.c.h.b16 %v1421
    %v5639 = vunpack.c.l.b16 %v1422
    %v5640 = vunpack.c.h.b16 %v1422
    %v5641 = vunpack.c.l.b16 %v1423
    %v5642 = vunpack.c.l.b16 %v1424
    %v5643 = vunpack.c.h.b16 %v1424
    %v5644 = vunpack.c.l.b16 %v1425
    %v5645 = vunpack.c.h.b16 %v1425
    %v5646 = vunpack.c.l.b16 %v1426
    %v5647 = vunpack.c.h.b16 %v1426
    %v5648 = vunpack.c.l.b16 %v1427
    %v5649 = vunpack.c.l.b16 %v1428
    %v5650 = vunpack.c.h.b16 %v1428
    %v5651 = vunpack.c.l.b16 %v1429
    %v5652 = vunpack.c.h.b16 %v1429
    %v5653 = vunpack.c.l.b16 %v1430
    %v5654 = vunpack.c.h.b16 %v1430
    %v5655 = vunpack.c.l.b16 %v1431
    %v5656 = vunpack.c.l.b16 %v1432
    %v5657 = vunpack.c.h.b16 %v1432
    %v5658 = vunpack.c.l.b16 %v1433
    %v5659 = vunpack.c.h.b16 %v1433
    %v5660 = vunpack.c.l.b16 %v1434
    %v5661 = vunpack.c.h.b16 %v1434
    %v5662 = vunpack.c.l.b16 %v1435
    %v5663 = vunpack.c.l.b16 %v1436
    %v5664 = vunpack.c.h.b16 %v1436
    %v5665 = vunpack.c.l.b16 %v1437
    %v5666 = vunpack.c.h.b16 %v1437
    %v5667 = vunpack.c.l.b16 %v1438
    %v5668 = vunpack.c.h.b16 %v1438
    %v5669 = vunpack.c.l.b16 %v1439
    %v5670 = vunpack.c.l.b16 %v1440
    %v5671 = vunpack.c.h.b16 %v1440
    %v5672 = vunpack.c.l.b16 %v1441
    %v5673 = vunpack.c.h.b16 %v1441
    %v5674 = vunpack.c.l.b16 %v1442
    %v5675 = vunpack.c.h.b16 %v1442
    %v5676 = vunpack.c.l.b16 %v1443
    %v5677 = vunpack.c.l.b16 %v1444
    %v5678 = vunpack.c.h.b16 %v1444
    %v5679 = vunpack.c.l.b16 %v1445
    %v5680 = vunpack.c.h.b16 %v1445
    %v5681 = vunpack.c.l.b16 %v1446
    %v5682 = vunpack.c.h.b16 %v1446
    %v5683 = vunpack.c.l.b16 %v1447
    %v5684 = vunpack.c.l.b16 %v1448
    %v5685 = vunpack.c.h.b16 %v1448
    %v5686 = vunpack.c.l.b16 %v1449
    %v5687 = vunpack.c.h.b16 %v1449
    %v5688 = vunpack.c.l.b16 %v1450
    %v5689 = vunpack.c.h.b16 %v1450
    %v5690 = vunpack.c.l.b16 %v1451
    %v5691 = vunpack.c.l.b16 %v1452
    %v5692 = vunpack.c.h.b16 %v1452
    %v5693 = vunpack.c.l.b16 %v1453
    %v5694 = vunpack.c.h.b16 %v1453
    %v5695 = vunpack.c.l.b16 %v1454
    %v5696 = vunpack.c.h.b16 %v1454
    %v5697 = vunpack.c.l.b16 %v1455
    %v5698 = vunpack.c.l.b16 %v1456
    %v5699 = vunpack.c.h.b16 %v1456
    %v5700 = vunpack.c.l.b16 %v1457
    %v5701 = vunpack.c.h.b16 %v1457
    %v5702 = vunpack.c.l.b16 %v1458
    %v5703 = vunpack.c.h.b16 %v1458
    %v5704 = vunpack.c.l.b16 %v1459
    %v5705 = vunpack.c.l.b16 %v1460
    %v5706 = vunpack.c.h.b16 %v1460
    %v5707 = vunpack.c.l.b16 %v1461
    %v5708 = vunpack.c.h.b16 %v1461
    %v5709 = vunpack.c.l.b16 %v1462
    %v5710 = vunpack.c.h.b16 %v1462
    %v5711 = vunpack.c.l.b16 %v1463
    %v5712 = vunpack.c.l.b16 %v1464
    %v5713 = vunpack.c.h.b16 %v1464
    %v5714 = vunpack.c.l.b16 %v1465
    %v5715 = vunpack.c.h.b16 %v1465
    %v5716 = vunpack.c.l.b16 %v1466
    %v5717 = vunpack.c.h.b16 %v1466
    %v5718 = vunpack.c.l.b16 %v1467
    %v5719 = vunpack.c.l.b16 %v1468
    %v5720 = vunpack.c.h.b16 %v1468
    %v5721 = vunpack.c.l.b16 %v1469
    %v5722 = vunpack.c.h.b16 %v1469
    %v5723 = vunpack.c.l.b16 %v1470
    %v5724 = vunpack.c.h.b16 %v1470
    %v5725 = vunpack.c.l.b16 %v1471
    %v5726 = vunpack.c.l.b16 %v1472
    %v5727 = vunpack.c.h.b16 %v1472
    %v5728 = vunpack.c.l.b16 %v1473
    %v5729 = vunpack.c.h.b16 %v1473
    %v5730 = vunpack.c.l.b16 %v1474
    %v5731 = vunpack.c.h.b16 %v1474
    %v5732 = vunpack.c.l.b16 %v1475
    %v5733 = vunpack.c.l.b16 %v1476
    %v5734 = vunpack.c.h.b16 %v1476
    %v5735 = vunpack.c.l.b16 %v1477
    %v5736 = vunpack.c.h.b16 %v1477
    %v5737 = vunpack.c.l.b16 %v1478
    %v5738 = vunpack.c.h.b16 %v1478
    %v5739 = vunpack.c.l.b16 %v1479
    %v5740 = vunpack.c.l.b16 %v1480
    %v5741 = vunpack.c.h.b16 %v1480
    %v5742 = vunpack.c.l.b16 %v1481
    %v5743 = vunpack.c.h.b16 %v1481
    %v5744 = vunpack.c.l.b16 %v1482
    %v5745 = vunpack.c.h.b16 %v1482
    %v5746 = vunpack.c.l.b16 %v1483
    %v5747 = vunpack.c.l.b16 %v1484
    %v5748 = vunpack.c.h.b16 %v1484
    %v5749 = vunpack.c.l.b16 %v1485
    %v5750 = vunpack.c.h.b16 %v1485
    %v5751 = vunpack.c.l.b16 %v1486
    %v5752 = vunpack.c.h.b16 %v1486
    %v5753 = vunpack.c.l.b16 %v1487
    %v5754 = vunpack.c.l.b16 %v1488
    %v5755 = vunpack.c.h.b16 %v1488
    %v5756 = vunpack.c.l.b16 %v1489
    %v5757 = vunpack.c.h.b16 %v1489
    %v5758 = vunpack.c.l.b16 %v1490
    %v5759 = vunpack.c.h.b16 %v1490
    %v5760 = vunpack.c.l.b16 %v1491
    %v5761 = vunpack.c.l.b16 %v1492
    %v5762 = vunpack.c.h.b16 %v1492
    %v5763 = vunpack.c.l.b16 %v1493
    %v5764 = vunpack.c.h.b16 %v1493
    %v5765 = vunpack.c.l.b16 %v1494
    %v5766 = vunpack.c.h.b16 %v1494
    %v5767 = vunpack.c.l.b16 %v1495
    %v5768 = vunpack.c.l.b16 %v1496
    %v5769 = vunpack.c.h.b16 %v1496
    %v5770 = vunpack.c.l.b16 %v1497
    %v5771 = vunpack.c.h.b16 %v1497
    %v5772 = vunpack.c.l.b16 %v1498
    %v5773 = vunpack.c.h.b16 %v1498
    %v5774 = vunpack.c.l.b16 %v1499
    %v5775 = vunpack.c.l.b16 %v1500
    %v5776 = vunpack.c.h.b16 %v1500
    %v5777 = vunpack.c.l.b16 %v1501
    %v5778 = vunpack.c.h.b16 %v1501
    %v5779 = vunpack.c.l.b16 %v1502
    %v5780 = vunpack.c.h.b16 %v1502
    %v5781 = vunpack.c.l.b16 %v1503
    %v5782 = vunpack.c.l.b16 %v1504
    %v5783 = vunpack.c.h.b16 %v1504
    %v5784 = vunpack.c.l.b16 %v1505
    %v5785 = vunpack.c.h.b16 %v1505
    %v5786 = vunpack.c.l.b16 %v1506
    %v5787 = vunpack.c.h.b16 %v1506
    %v5788 = vunpack.c.l.b16 %v1507
    %v5789 = vunpack.c.l.b16 %v1508
    %v5790 = vunpack.c.h.b16 %v1508
    %v5791 = vunpack.c.l.b16 %v1509
    %v5792 = vunpack.c.h.b16 %v1509
    %v5793 = vunpack.c.l.b16 %v1510
    %v5794 = vunpack.c.h.b16 %v1510
    %v5795 = vunpack.c.l.b16 %v1511
    %v5796 = vunpack.c.l.b16 %v1512
    %v5797 = vunpack.c.h.b16 %v1512
    %v5798 = vunpack.c.l.b16 %v1513
    %v5799 = vunpack.c.h.b16 %v1513
    %v5800 = vunpack.c.l.b16 %v1514
    %v5801 = vunpack.c.h.b16 %v1514
    %v5802 = vunpack.c.l.b16 %v1515
    %v5803 = vunpack.c.l.b16 %v1516
    %v5804 = vunpack.c.h.b16 %v1516
    %v5805 = vunpack.c.l.b16 %v1517
    %v5806 = vunpack.c.h.b16 %v1517
    %v5807 = vunpack.c.l.b16 %v1518
    %v5808 = vunpack.c.h.b16 %v1518
    %v5809 = vunpack.c.l.b16 %v1519
    %v5810 = vunpack.c.l.b16 %v1520
    %v5811 = vunpack.c.h.b16 %v1520
    %v5812 = vunpack.c.l.b16 %v1521
    %v5813 = vunpack.c.h.b16 %v1521
    %v5814 = vunpack.c.l.b16 %v1522
    %v5815 = vunpack.c.h.b16 %v1522
    %v5816 = vunpack.c.l.b16 %v1523
    %v5817 = vunpack.c.l.b16 %v1524
    %v5818 = vunpack.c.h.b16 %v1524
    %v5819 = vunpack.c.l.b16 %v1525
    %v5820 = vunpack.c.h.b16 %v1525
    %v5821 = vunpack.c.l.b16 %v1526
    %v5822 = vunpack.c.h.b16 %v1526
    %v5823 = vunpack.c.l.b16 %v1527
    %v5824 = vunpack.c.l.b16 %v1528
    %v5825 = vunpack.c.h.b16 %v1528
    %v5826 = vunpack.c.l.b16 %v1529
    %v5827 = vunpack.c.h.b16 %v1529
    %v5828 = vunpack.c.l.b16 %v1530
    %v5829 = vunpack.c.h.b16 %v1530
    %v5830 = vunpack.c.l.b16 %v1531
    %v5831 = vunpack.c.l.b16 %v1532
    %v5832 = vunpack.c.h.b16 %v1532
    %v5833 = vunpack.c.l.b16 %v1533
    %v5834 = vunpack.c.h.b16 %v1533
    %v5835 = vunpack.c.l.b16 %v1534
    %v5836 = vunpack.c.h.b16 %v1534
    %v5837 = vunpack.c.l.b16 %v1535
    %v5838 = vunpack.c.l.b16 %v1536
    %v5839 = vunpack.c.h.b16 %v1536
    %v5840 = vunpack.c.l.b16 %v1537
    %v5841 = vunpack.c.h.b16 %v1537
    %v5842 = vunpack.c.l.b16 %v1538
    %v5843 = vunpack.c.h.b16 %v1538
    %v5844 = vunpack.c.l.b16 %v1539
    %v5845 = vunpack.c.l.b16 %v1540
    %v5846 = vunpack.c.h.b16 %v1540
    %v5847 = vunpack.c.l.b16 %v1541
    %v5848 = vunpack.c.h.b16 %v1541
    %v5849 = vunpack.c.l.b16 %v1542
    %v5850 = vunpack.c.h.b16 %v1542
    %v5851 = vunpack.c.l.b16 %v1543
    %v5852 = vunpack.c.l.b16 %v1544
    %v5853 = vunpack.c.h.b16 %v1544
    %v5854 = vunpack.c.l.b16 %v1545
    %v5855 = vunpack.c.h.b16 %v1545
    %v5856 = vunpack.c.l.b16 %v1546
    %v5857 = vunpack.c.h.b16 %v1546
    %v5858 = vunpack.c.l.b16 %v1547
    %v5859 = vunpack.c.l.b16 %v1548
    %v5860 = vunpack.c.h.b16 %v1548
    %v5861 = vunpack.c.l.b16 %v1549
    %v5862 = vunpack.c.h.b16 %v1549
    %v5863 = vunpack.c.l.b16 %v1550
    %v5864 = vunpack.c.h.b16 %v1550
    %v5865 = vunpack.c.l.b16 %v1551
    %v5866 = vunpack.c.l.b16 %v1552
    %v5867 = vunpack.c.h.b16 %v1552
    %v5868 = vunpack.c.l.b16 %v1553
    %v5869 = vunpack.c.h.b16 %v1553
    %v5870 = vunpack.c.l.b16 %v1554
    %v5871 = vunpack.c.h.b16 %v1554
    %v5872 = vunpack.c.l.b16 %v1555
    %v5873 = vunpack.c.l.b16 %v1556
    %v5874 = vunpack.c.h.b16 %v1556
    %v5875 = vunpack.c.l.b16 %v1557
    %v5876 = vunpack.c.h.b16 %v1557
    %v5877 = vunpack.c.l.b16 %v1558
    %v5878 = vunpack.c.h.b16 %v1558
    %v5879 = vunpack.c.l.b16 %v1559
    %v5880 = vunpack.c.l.b16 %v1560
    %v5881 = vunpack.c.h.b16 %v1560
    %v5882 = vunpack.c.l.b16 %v1561
    %v5883 = vunpack.c.h.b16 %v1561
    %v5884 = vunpack.c.l.b16 %v1562
    %v5885 = vunpack.c.h.b16 %v1562
    %v5886 = vunpack.c.l.b16 %v1563
    %v5887 = vunpack.c.l.b16 %v1564
    %v5888 = vunpack.c.h.b16 %v1564
    %v5889 = vunpack.c.l.b16 %v1565
    %v5890 = vunpack.c.h.b16 %v1565
    %v5891 = vunpack.c.l.b16 %v1566
    %v5892 = vunpack.c.h.b16 %v1566
    %v5893 = vunpack.c.l.b16 %v1567
    %v5894 = vunpack.c.l.b16 %v1568
    %v5895 = vunpack.c.h.b16 %v1568
    %v5896 = vunpack.c.l.b16 %v1569
    %v5897 = vunpack.c.h.b16 %v1569
    %v5898 = vunpack.c.l.b16 %v1570
    %v5899 = vunpack.c.h.b16 %v1570
    %v5900 = vunpack.c.l.b16 %v1571
    %v5901 = vunpack.c.l.b16 %v1572
    %v5902 = vunpack.c.h.b16 %v1572
    %v5903 = vunpack.c.l.b16 %v1573
    %v5904 = vunpack.c.h.b16 %v1573
    %v5905 = vunpack.c.l.b16 %v1574
    %v5906 = vunpack.c.h.b16 %v1574
    %v5907 = vunpack.c.l.b16 %v1575
    %v5908 = vunpack.c.l.b16 %v1576
    %v5909 = vunpack.c.h.b16 %v1576
    %v5910 = vunpack.c.l.b16 %v1577
    %v5911 = vunpack.c.h.b16 %v1577
    %v5912 = vunpack.c.l.b16 %v1578
    %v5913 = vunpack.c.h.b16 %v1578
    %v5914 = vunpack.c.l.b16 %v1579
    %v5915 = vpack.c.b16 %v3234, %v3227
    %v5916 = vpack.c.b16 %v3235, %v3228
    %v5917 = vpack.c.b16 %v3236, %v3229
    %v5918 = vpack.c.b16 %v3237, %v3230
    %v5919 = vpack.c.b16 %v3238, %v3231
    %v5920 = vpack.c.b16 %v3239, %v3232
    %v5921 = vpack.c.b16 %v3240, %v3233
    %v5922 = vpack.c.b16 %v3248, %v3241
    %v5923 = vpack.c.b16 %v3249, %v3242
    %v5924 = vpack.c.b16 %v3250, %v3243
    %v5925 = vpack.c.b16 %v3251, %v3244
    %v5926 = vpack.c.b16 %v3252, %v3245
    %v5927 = vpack.c.b16 %v3253, %v3246
    %v5928 = vpack.c.b16 %v3254, %v3247
    %v5929 = vpack.c.b16 %v3262, %v3255
    %v5930 = vpack.c.b16 %v3263, %v3256
    %v5931 = vpack.c.b16 %v3264, %v3257
    %v5932 = vpack.c.b16 %v3265, %v3258
    %v5933 = vpack.c.b16 %v3266, %v3259
    %v5934 = vpack.c.b16 %v3267, %v3260
    %v5935 = vpack.c.b16 %v3268, %v3261
    %v5936 = vpack.c.b16 %v3276, %v3269
    %v5937 = vpack.c.b16 %v3277, %v3270
    %v5938 = vpack.c.b16 %v3278, %v3271
    %v5939 = vpack.c.b16 %v3279, %v3272
    %v5940 = vpack.c.b16 %v3280, %v3273
    %v5941 = vpack.c.b16 %v3281, %v3274
    %v5942 = vpack.c.b16 %v3282, %v3275
    %v5943 = vpack.c.b16 %v3290, %v3283
    %v5944 = vpack.c.b16 %v3291, %v3284
    %v5945 = vpack.c.b16 %v3292, %v3285
    %v5946 = vpack.c.b16 %v3293, %v3286
    %v5947 = vpack.c.b16 %v3294, %v3287
    %v5948 = vpack.c.b16 %v3295, %v3288
    %v5949 = vpack.c.b16 %v3296, %v3289
    %v5950 = vpack.c.b16 %v3304, %v3297
    %v5951 = vpack.c.b16 %v3305, %v3298
    %v5952 = vpack.c.b16 %v3306, %v3299
    %v5953 = vpack.c.b16 %v3307, %v3300
    %v5954 = vpack.c.b16 %v3308, %v3301
    %v5955 = vpack.c.b16 %v3309, %v3302
    %v5956 = vpack.c.b16 %v3310, %v3303
    %v5957 = vpack.c.b16 %v3318, %v3311
    %v5958 = vpack.c.b16 %v3319, %v3312
    %v5959 = vpack.c.b16 %v3320, %v3313
    %v5960 = vpack.c.b16 %v3321, %v3314
    %v5961 = vpack.c.b16 %v3322, %v3315
    %v5962 = vpack.c.b16 %v3323, %v3316
    %v5963 = vpack.c.b16 %v3324, %v3317
    %v5964 = vpack.c.b16 %v3332, %v3325
    %v5965 = vpack.c.b16 %v3333, %v3326
    %v5966 = vpack.c.b16 %v3334, %v3327
    %v5967 = vpack.c.b16 %v3335, %v3328
    %v5968 = vpack.c.b16 %v3336, %v3329
    %v5969 = vpack.c.b16 %v3337, %v3330
    %v5970 = vpack.c.b16 %v3338, %v3331
    %v5971 = vpack.c.b16 %v3346, %v3339
    %v5972 = vpack.c.b16 %v3347, %v3340
    %v5973 = vpack.c.b16 %v3348, %v3341
    %v5974 = vpack.c.b16 %v3349, %v3342
    %v5975 = vpack.c.b16 %v3350, %v3343
    %v5976 = vpack.c.b16 %v3351, %v3344
    %v5977 = vpack.c.b16 %v3352, %v3345
    %v5978 = vpack.c.b16 %v3360, %v3353
    %v5979 = vpack.c.b16 %v3361, %v3354
    %v5980 = vpack.c.b16 %v3362, %v3355
    %v5981 = vpack.c.b16 %v3363, %v3356
    %v5982 = vpack.c.b16 %v3364, %v3357
    %v5983 = vpack.c.b16 %v3365, %v3358
    %v5984 = vpack.c.b16 %v3366, %v3359
    %v5985 = vpack.c.b16 %v3374, %v3367
    %v5986 = vpack.c.b16 %v3375, %v3368
    %v5987 = vpack.c.b16 %v3376, %v3369
    %v5988 = vpack.c.b16 %v3377, %v3370
    %v5989 = vpack.c.b16 %v3378, %v3371
    %v5990 = vpack.c.b16 %v3379, %v3372
    %v5991 = vpack.c.b16 %v3380, %v3373
    %v5992 = vpack.c.b16 %v3388, %v3381
    %v5993 = vpack.c.b16 %v3389, %v3382
    %v5994 = vpack.c.b16 %v3390, %v3383
    %v5995 = vpack.c.b16 %v3391, %v3384
    %v5996 = vpack.c.b16 %v3392, %v3385
    %v5997 = vpack.c.b16 %v3393, %v3386
    %v5998 = vpack.c.b16 %v3394, %v3387
    %v5999 = vpack.c.b16 %v3402, %v3395
    %v6000 = vpack.c.b16 %v3403, %v3396
    %v6001 = vpack.c.b16 %v3404, %v3397
    %v6002 = vpack.c.b16 %v3405, %v3398
    %v6003 = vpack.c.b16 %v3406, %v3399
    %v6004 = vpack.c.b16 %v3407, %v3400
    %v6005 = vpack.c.b16 %v3408, %v3401
    %v6006 = vpack.c.b16 %v3416, %v3409
    %v6007 = vpack.c.b16 %v3417, %v3410
    %v6008 = vpack.c.b16 %v3418, %v3411
    %v6009 = vpack.c.b16 %v3419, %v3412
    %v6010 = vpack.c.b16 %v3420, %v3413
    %v6011 = vpack.c.b16 %v3421, %v3414
    %v6012 = vpack.c.b16 %v3422, %v3415
    %v6013 = vpack.c.b16 %v3430, %v3423
    %v6014 = vpack.c.b16 %v3431, %v3424
    %v6015 = vpack.c.b16 %v3432, %v3425
    %v6016 = vpack.c.b16 %v3433, %v3426
    %v6017 = vpack.c.b16 %v3434, %v3427
    %v6018 = vpack.c.b16 %v3435, %v3428
    %v6019 = vpack.c.b16 %v3436, %v3429
    %v6020 = vpack.c.b16 %v3444, %v3437
    %v6021 = vpack.c.b16 %v3445, %v3438
    %v6022 = vpack.c.b16 %v3446, %v3439
    %v6023 = vpack.c.b16 %v3447, %v3440
    %v6024 = vpack.c.b16 %v3448, %v3441
    %v6025 = vpack.c.b16 %v3449, %v3442
    %v6026 = vpack.c.b16 %v3450, %v3443
    %v6027 = vpack.c.b16 %v3458, %v3451
    %v6028 = vpack.c.b16 %v3459, %v3452
    %v6029 = vpack.c.b16 %v3460, %v3453
    %v6030 = vpack.c.b16 %v3461, %v3454
    %v6031 = vpack.c.b16 %v3462, %v3455
    %v6032 = vpack.c.b16 %v3463, %v3456
    %v6033 = vpack.c.b16 %v3464, %v3457
    %v6034 = vpack.c.b16 %v3472, %v3465
    %v6035 = vpack.c.b16 %v3473, %v3466
    %v6036 = vpack.c.b16 %v3474, %v3467
    %v6037 = vpack.c.b16 %v3475, %v3468
    %v6038 = vpack.c.b16 %v3476, %v3469
    %v6039 = vpack.c.b16 %v3477, %v3470
    %v6040 = vpack.c.b16 %v3478, %v3471
    %v6041 = vpack.c.b16 %v3486, %v3479
    %v6042 = vpack.c.b16 %v3487, %v3480
    %v6043 = vpack.c.b16 %v3488, %v3481
    %v6044 = vpack.c.b16 %v3489, %v3482
    %v6045 = vpack.c.b16 %v3490, %v3483
    %v6046 = vpack.c.b16 %v3491, %v3484
    %v6047 = vpack.c.b16 %v3492, %v3485
    %v6048 = vpack.c.b16 %v3500, %v3493
    %v6049 = vpack.c.b16 %v3501, %v3494
    %v6050 = vpack.c.b16 %v3502, %v3495
    %v6051 = vpack.c.b16 %v3503, %v3496
    %v6052 = vpack.c.b16 %v3504, %v3497
    %v6053 = vpack.c.b16 %v3505, %v3498
    %v6054 = vpack.c.b16 %v3506, %v3499
    %v6055 = vpack.c.b16 %v3514, %v3507
    %v6056 = vpack.c.b16 %v3515, %v3508
    %v6057 = vpack.c.b16 %v3516, %v3509
    %v6058 = vpack.c.b16 %v3517, %v3510
    %v6059 = vpack.c.b16 %v3518, %v3511
    %v6060 = vpack.c.b16 %v3519, %v3512
    %v6061 = vpack.c.b16 %v3520, %v3513
    %v6062 = vpack.c.b16 %v3528, %v3521
    %v6063 = vpack.c.b16 %v3529, %v3522
    %v6064 = vpack.c.b16 %v3530, %v3523
    %v6065 = vpack.c.b16 %v3531, %v3524
    %v6066 = vpack.c.b16 %v3532, %v3525
    %v6067 = vpack.c.b16 %v3533, %v3526
    %v6068 = vpack.c.b16 %v3534, %v3527
    %v6069 = vpack.c.b16 %v3542, %v3535
    %v6070 = vpack.c.b16 %v3543, %v3536
    %v6071 = vpack.c.b16 %v3544, %v3537
    %v6072 = vpack.c.b16 %v3545, %v3538
    %v6073 = vpack.c.b16 %v3546, %v3539
    %v6074 = vpack.c.b16 %v3547, %v3540
    %v6075 = vpack.c.b16 %v3548, %v3541
    %v6076 = vpack.c.b16 %v3556, %v3549
    %v6077 = vpack.c.b16 %v3557, %v3550
    %v6078 = vpack.c.b16 %v3558, %v3551
    %v6079 = vpack.c.b16 %v3559, %v3552
    %v6080 = vpack.c.b16 %v3560, %v3553
    %v6081 = vpack.c.b16 %v3561, %v3554
    %v6082 = vpack.c.b16 %v3562, %v3555
    %v6083 = vpack.c.b16 %v3570, %v3563
    %v6084 = vpack.c.b16 %v3571, %v3564
    %v6085 = vpack.c.b16 %v3572, %v3565
    %v6086 = vpack.c.b16 %v3573, %v3566
    %v6087 = vpack.c.b16 %v3574, %v3567
    %v6088 = vpack.c.b16 %v3575, %v3568
    %v6089 = vpack.c.b16 %v3576, %v3569
    %v6090 = vpack.c.b16 %v3584, %v3577
    %v6091 = vpack.c.b16 %v3585, %v3578
    %v6092 = vpack.c.b16 %v3586, %v3579
    %v6093 = vpack.c.b16 %v3587, %v3580
    %v6094 = vpack.c.b16 %v3588, %v3581
    %v6095 = vpack.c.b16 %v3589, %v3582
    %v6096 = vpack.c.b16 %v3590, %v3583
    %v6097 = vpack.c.b16 %v3598, %v3591
    %v6098 = vpack.c.b16 %v3599, %v3592
    %v6099 = vpack.c.b16 %v3600, %v3593
    %v6100 = vpack.c.b16 %v3601, %v3594
    %v6101 = vpack.c.b16 %v3602, %v3595
    %v6102 = vpack.c.b16 %v3603, %v3596
    %v6103 = vpack.c.b16 %v3604, %v3597
    %v6104 = vpack.c.b16 %v3612, %v3605
    %v6105 = vpack.c.b16 %v3613, %v3606
    %v6106 = vpack.c.b16 %v3614, %v3607
    %v6107 = vpack.c.b16 %v3615, %v3608
    %v6108 = vpack.c.b16 %v3616, %v3609
    %v6109 = vpack.c.b16 %v3617, %v3610
    %v6110 = vpack.c.b16 %v3618, %v3611
    %v6111 = vpack.c.b16 %v3626, %v3619
    %v6112 = vpack.c.b16 %v3627, %v3620
    %v6113 = vpack.c.b16 %v3628, %v3621
    %v6114 = vpack.c.b16 %v3629, %v3622
    %v6115 = vpack.c.b16 %v3630, %v3623
    %v6116 = vpack.c.b16 %v3631, %v3624
    %v6117 = vpack.c.b16 %v3632, %v3625
    %v6118 = vpack.c.b16 %v3640, %v3633
    %v6119 = vpack.c.b16 %v3641, %v3634
    %v6120 = vpack.c.b16 %v3642, %v3635
    %v6121 = vpack.c.b16 %v3643, %v3636
    %v6122 = vpack.c.b16 %v3644, %v3637
    %v6123 = vpack.c.b16 %v3645, %v3638
    %v6124 = vpack.c.b16 %v3646, %v3639
    %v6125 = vpack.c.b16 %v3654, %v3647
    %v6126 = vpack.c.b16 %v3655, %v3648
    %v6127 = vpack.c.b16 %v3656, %v3649
    %v6128 = vpack.c.b16 %v3657, %v3650
    %v6129 = vpack.c.b16 %v3658, %v3651
    %v6130 = vpack.c.b16 %v3659, %v3652
    %v6131 = vpack.c.b16 %v3660, %v3653
    %v6132 = vpack.c.b16 %v3668, %v3661
    %v6133 = vpack.c.b16 %v3669, %v3662
    %v6134 = vpack.c.b16 %v3670, %v3663
    %v6135 = vpack.c.b16 %v3671, %v3664
    %v6136 = vpack.c.b16 %v3672, %v3665
    %v6137 = vpack.c.b16 %v3673, %v3666
    %v6138 = vpack.c.b16 %v3674, %v3667
    %v6139 = vpack.c.b16 %v3682, %v3675
    %v6140 = vpack.c.b16 %v3683, %v3676
    %v6141 = vpack.c.b16 %v3684, %v3677
    %v6142 = vpack.c.b16 %v3685, %v3678
    %v6143 = vpack.c.b16 %v3686, %v3679
    %v6144 = vpack.c.b16 %v3687, %v3680
    %v6145 = vpack.c.b16 %v3688, %v3681
    %v6146 = vpack.c.b16 %v3696, %v3689
    %v6147 = vpack.c.b16 %v3697, %v3690
    %v6148 = vpack.c.b16 %v3698, %v3691
    %v6149 = vpack.c.b16 %v3699, %v3692
    %v6150 = vpack.c.b16 %v3700, %v3693
    %v6151 = vpack.c.b16 %v3701, %v3694
    %v6152 = vpack.c.b16 %v3702, %v3695
    %v6153 = vpack.c.b16 %v3710, %v3703
    %v6154 = vpack.c.b16 %v3711, %v3704
    %v6155 = vpack.c.b16 %v3712, %v3705
    %v6156 = vpack.c.b16 %v3713, %v3706
    %v6157 = vpack.c.b16 %v3714, %v3707
    %v6158 = vpack.c.b16 %v3715, %v3708
    %v6159 = vpack.c.b16 %v3716, %v3709
    %v6160 = vpack.c.b16 %v3724, %v3717
    %v6161 = vpack.c.b16 %v3725, %v3718
    %v6162 = vpack.c.b16 %v3726, %v3719
    %v6163 = vpack.c.b16 %v3727, %v3720
    %v6164 = vpack.c.b16 %v3728, %v3721
    %v6165 = vpack.c.b16 %v3729, %v3722
    %v6166 = vpack.c.b16 %v3730, %v3723
    %v6167 = vpack.c.b16 %v3738, %v3731
    %v6168 = vpack.c.b16 %v3739, %v3732
    %v6169 = vpack.c.b16 %v3740, %v3733
    %v6170 = vpack.c.b16 %v3741, %v3734
    %v6171 = vpack.c.b16 %v3742, %v3735
    %v6172 = vpack.c.b16 %v3743, %v3736
    %v6173 = vpack.c.b16 %v3744, %v3737
    %v6174 = vpack.c.b16 %v3752, %v3745
    %v6175 = vpack.c.b16 %v3753, %v3746
    %v6176 = vpack.c.b16 %v3754, %v3747
    %v6177 = vpack.c.b16 %v3755, %v3748
    %v6178 = vpack.c.b16 %v3756, %v3749
    %v6179 = vpack.c.b16 %v3757, %v3750
    %v6180 = vpack.c.b16 %v3758, %v3751
    %v6181 = vpack.c.b16 %v3766, %v3759
    %v6182 = vpack.c.b16 %v3767, %v3760
    %v6183 = vpack.c.b16 %v3768, %v3761
    %v6184 = vpack.c.b16 %v3769, %v3762
    %v6185 = vpack.c.b16 %v3770, %v3763
    %v6186 = vpack.c.b16 %v3771, %v3764
    %v6187 = vpack.c.b16 %v3772, %v3765
    %v6188 = vpack.c.b16 %v3780, %v3773
    %v6189 = vpack.c.b16 %v3781, %v3774
    %v6190 = vpack.c.b16 %v3782, %v3775
    %v6191 = vpack.c.b16 %v3783, %v3776
    %v6192 = vpack.c.b16 %v3784, %v3777
    %v6193 = vpack.c.b16 %v3785, %v3778
    %v6194 = vpack.c.b16 %v3786, %v3779
    %v6195 = vpack.c.b16 %v3794, %v3787
    %v6196 = vpack.c.b16 %v3795, %v3788
    %v6197 = vpack.c.b16 %v3796, %v3789
    %v6198 = vpack.c.b16 %v3797, %v3790
    %v6199 = vpack.c.b16 %v3798, %v3791
    %v6200 = vpack.c.b16 %v3799, %v3792
    %v6201 = vpack.c.b16 %v3800, %v3793
    %v6202 = vpack.c.b16 %v3808, %v3801
    %v6203 = vpack.c.b16 %v3809, %v3802
    %v6204 = vpack.c.b16 %v3810, %v3803
    %v6205 = vpack.c.b16 %v3811, %v3804
    %v6206 = vpack.c.b16 %v3812, %v3805
    %v6207 = vpack.c.b16 %v3813, %v3806
    %v6208 = vpack.c.b16 %v3814, %v3807
    %v6209 = vpack.c.b16 %v3822, %v3815
    %v6210 = vpack.c.b16 %v3823, %v3816
    %v6211 = vpack.c.b16 %v3824, %v3817
    %v6212 = vpack.c.b16 %v3825, %v3818
    %v6213 = vpack.c.b16 %v3826, %v3819
    %v6214 = vpack.c.b16 %v3827, %v3820
    %v6215 = vpack.c.b16 %v3828, %v3821
    %v6216 = vpack.c.b16 %v3836, %v3829
    %v6217 = vpack.c.b16 %v3837, %v3830
    %v6218 = vpack.c.b16 %v3838, %v3831
    %v6219 = vpack.c.b16 %v3839, %v3832
    %v6220 = vpack.c.b16 %v3840, %v3833
    %v6221 = vpack.c.b16 %v3841, %v3834
    %v6222 = vpack.c.b16 %v3842, %v3835
    %v6223 = vpack.c.b16 %v3850, %v3843
    %v6224 = vpack.c.b16 %v3851, %v3844
    %v6225 = vpack.c.b16 %v3852, %v3845
    %v6226 = vpack.c.b16 %v3853, %v3846
    %v6227 = vpack.c.b16 %v3854, %v3847
    %v6228 = vpack.c.b16 %v3855, %v3848
    %v6229 = vpack.c.b16 %v3856, %v3849
    %v6230 = vpack.c.b16 %v3864, %v3857
    %v6231 = vpack.c.b16 %v3865, %v3858
    %v6232 = vpack.c.b16 %v3866, %v3859
    %v6233 = vpack.c.b16 %v3867, %v3860
    %v6234 = vpack.c.b16 %v3868, %v3861
    %v6235 = vpack.c.b16 %v3869, %v3862
    %v6236 = vpack.c.b16 %v3870, %v3863
    %v6237 = vpack.c.b16 %v3878, %v3871
    %v6238 = vpack.c.b16 %v3879, %v3872
    %v6239 = vpack.c.b16 %v3880, %v3873
    %v6240 = vpack.c.b16 %v3881, %v3874
    %v6241 = vpack.c.b16 %v3882, %v3875
    %v6242 = vpack.c.b16 %v3883, %v3876
    %v6243 = vpack.c.b16 %v3884, %v3877
    %v6244 = vpack.c.b16 %v3892, %v3885
    %v6245 = vpack.c.b16 %v3893, %v3886
    %v6246 = vpack.c.b16 %v3894, %v3887
    %v6247 = vpack.c.b16 %v3895, %v3888
    %v6248 = vpack.c.b16 %v3896, %v3889
    %v6249 = vpack.c.b16 %v3897, %v3890
    %v6250 = vpack.c.b16 %v3898, %v3891
    %v6251 = vpack.c.b16 %v3906, %v3899
    %v6252 = vpack.c.b16 %v3907, %v3900
    %v6253 = vpack.c.b16 %v3908, %v3901
    %v6254 = vpack.c.b16 %v3909, %v3902
    %v6255 = vpack.c.b16 %v3910, %v3903
    %v6256 = vpack.c.b16 %v3911, %v3904
    %v6257 = vpack.c.b16 %v3912, %v3905
    %v6258 = vpack.c.b16 %v3920, %v3913
    %v6259 = vpack.c.b16 %v3921, %v3914
    %v6260 = vpack.c.b16 %v3922, %v3915
    %v6261 = vpack.c.b16 %v3923, %v3916
    %v6262 = vpack.c.b16 %v3924, %v3917
    %v6263 = vpack.c.b16 %v3925, %v3918
    %v6264 = vpack.c.b16 %v3926, %v3919
    %v6265 = vpack.c.b16 %v3934, %v3927
    %v6266 = vpack.c.b16 %v3935, %v3928
    %v6267 = vpack.c.b16 %v3936, %v3929
    %v6268 = vpack.c.b16 %v3937, %v3930
    %v6269 = vpack.c.b16 %v3938, %v3931
    %v6270 = vpack.c.b16 %v3939, %v3932
    %v6271 = vpack.c.b16 %v3940, %v3933
    %v6272 = vpack.c.b16 %v3948, %v3941
    %v6273 = vpack.c.b16 %v3949, %v3942
    %v6274 = vpack.c.b16 %v3950, %v3943
    %v6275 = vpack.c.b16 %v3951, %v3944
    %v6276 = vpack.c.b16 %v3952, %v3945
    %v6277 = vpack.c.b16 %v3953, %v3946
    %v6278 = vpack.c.b16 %v3954, %v3947
    %v6279 = vpack.c.b16 %v3962, %v3955
    %v6280 = vpack.c.b16 %v3963, %v3956
    %v6281 = vpack.c.b16 %v3964, %v3957
    %v6282 = vpack.c.b16 %v3965, %v3958
    %v6283 = vpack.c.b16 %v3966, %v3959
    %v6284 = vpack.c.b16 %v3967, %v3960
    %v6285 = vpack.c.b16 %v3968, %v3961
    %v6286 = vpack.c.b16 %v3976, %v3969
    %v6287 = vpack.c.b16 %v3977, %v3970
    %v6288 = vpack.c.b16 %v3978, %v3971
    %v6289 = vpack.c.b16 %v3979, %v3972
    %v6290 = vpack.c.b16 %v3980, %v3973
    %v6291 = vpack.c.b16 %v3981, %v3974
    %v6292 = vpack.c.b16 %v3982, %v3975
    %v6293 = vpack.c.b16 %v3990, %v3983
    %v6294 = vpack.c.b16 %v3991, %v3984
    %v6295 = vpack.c.b16 %v3992, %v3985
    %v6296 = vpack.c.b16 %v3993, %v3986
    %v6297 = vpack.c.b16 %v3994, %v3987
    %v6298 = vpack.c.b16 %v3995, %v3988
    %v6299 = vpack.c.b16 %v3996, %v3989
    %v6300 = vpack.c.b16 %v4004, %v3997
    %v6301 = vpack.c.b16 %v4005, %v3998
    %v6302 = vpack.c.b16 %v4006, %v3999
    %v6303 = vpack.c.b16 %v4007, %v4000
    %v6304 = vpack.c.b16 %v4008, %v4001
    %v6305 = vpack.c.b16 %v4009, %v4002
    %v6306 = vpack.c.b16 %v4010, %v4003
    %v6307 = vpack.c.b16 %v4018, %v4011
    %v6308 = vpack.c.b16 %v4019, %v4012
    %v6309 = vpack.c.b16 %v4020, %v4013
    %v6310 = vpack.c.b16 %v4021, %v4014
    %v6311 = vpack.c.b16 %v4022, %v4015
    %v6312 = vpack.c.b16 %v4023, %v4016
    %v6313 = vpack.c.b16 %v4024, %v4017
    %v6314 = vpack.c.b16 %v4032, %v4025
    %v6315 = vpack.c.b16 %v4033, %v4026
    %v6316 = vpack.c.b16 %v4034, %v4027
    %v6317 = vpack.c.b16 %v4035, %v4028
    %v6318 = vpack.c.b16 %v4036, %v4029
    %v6319 = vpack.c.b16 %v4037, %v4030
    %v6320 = vpack.c.b16 %v4038, %v4031
    %v6321 = vpack.c.b16 %v4046, %v4039
    %v6322 = vpack.c.b16 %v4047, %v4040
    %v6323 = vpack.c.b16 %v4048, %v4041
    %v6324 = vpack.c.b16 %v4049, %v4042
    %v6325 = vpack.c.b16 %v4050, %v4043
    %v6326 = vpack.c.b16 %v4051, %v4044
    %v6327 = vpack.c.b16 %v4052, %v4045
    %v6328 = vpack.c.b16 %v4060, %v4053
    %v6329 = vpack.c.b16 %v4061, %v4054
    %v6330 = vpack.c.b16 %v4062, %v4055
    %v6331 = vpack.c.b16 %v4063, %v4056
    %v6332 = vpack.c.b16 %v4064, %v4057
    %v6333 = vpack.c.b16 %v4065, %v4058
    %v6334 = vpack.c.b16 %v4066, %v4059
    %v6335 = vpack.c.b16 %v4074, %v4067
    %v6336 = vpack.c.b16 %v4075, %v4068
    %v6337 = vpack.c.b16 %v4076, %v4069
    %v6338 = vpack.c.b16 %v4077, %v4070
    %v6339 = vpack.c.b16 %v4078, %v4071
    %v6340 = vpack.c.b16 %v4079, %v4072
    %v6341 = vpack.c.b16 %v4080, %v4073
    %v6342 = vpack.c.b16 %v4088, %v4081
    %v6343 = vpack.c.b16 %v4089, %v4082
    %v6344 = vpack.c.b16 %v4090, %v4083
    %v6345 = vpack.c.b16 %v4091, %v4084
    %v6346 = vpack.c.b16 %v4092, %v4085
    %v6347 = vpack.c.b16 %v4093, %v4086
    %v6348 = vpack.c.b16 %v4094, %v4087
    %v6349 = vpack.c.b16 %v4102, %v4095
    %v6350 = vpack.c.b16 %v4103, %v4096
    %v6351 = vpack.c.b16 %v4104, %v4097
    %v6352 = vpack.c.b16 %v4105, %v4098
    %v6353 = vpack.c.b16 %v4106, %v4099
    %v6354 = vpack.c.b16 %v4107, %v4100
    %v6355 = vpack.c.b16 %v4108, %v4101
    %v6356 = vpack.c.b16 %v4116, %v4109
    %v6357 = vpack.c.b16 %v4117, %v4110
    %v6358 = vpack.c.b16 %v4118, %v4111
    %v6359 = vpack.c.b16 %v4119, %v4112
    %v6360 = vpack.c.b16 %v4120, %v4113
    %v6361 = vpack.c.b16 %v4121, %v4114
    %v6362 = vpack.c.b16 %v4122, %v4115
    %v6363 = vpack.c.b16 %v4130, %v4123
    %v6364 = vpack.c.b16 %v4131, %v4124
    %v6365 = vpack.c.b16 %v4132, %v4125
    %v6366 = vpack.c.b16 %v4133, %v4126
    %v6367 = vpack.c.b16 %v4134, %v4127
    %v6368 = vpack.c.b16 %v4135, %v4128
    %v6369 = vpack.c.b16 %v4136, %v4129
    %v6370 = vpack.c.b16 %v4144, %v4137
    %v6371 = vpack.c.b16 %v4145, %v4138
    %v6372 = vpack.c.b16 %v4146, %v4139
    %v6373 = vpack.c.b16 %v4147, %v4140
    %v6374 = vpack.c.b16 %v4148, %v4141
    %v6375 = vpack.c.b16 %v4149, %v4142
    %v6376 = vpack.c.b16 %v4150, %v4143
    %v6377 = vpack.c.b16 %v4158, %v4151
    %v6378 = vpack.c.b16 %v4159, %v4152
    %v6379 = vpack.c.b16 %v4160, %v4153
    %v6380 = vpack.c.b16 %v4161, %v4154
    %v6381 = vpack.c.b16 %v4162, %v4155
    %v6382 = vpack.c.b16 %v4163, %v4156
    %v6383 = vpack.c.b16 %v4164, %v4157
    %v6384 = vpack.c.b16 %v4172, %v4165
    %v6385 = vpack.c.b16 %v4173, %v4166
    %v6386 = vpack.c.b16 %v4174, %v4167
    %v6387 = vpack.c.b16 %v4175, %v4168
    %v6388 = vpack.c.b16 %v4176, %v4169
    %v6389 = vpack.c.b16 %v4177, %v4170
    %v6390 = vpack.c.b16 %v4178, %v4171
    %v6391 = vpack.c.b16 %v4186, %v4179
    %v6392 = vpack.c.b16 %v4187, %v4180
    %v6393 = vpack.c.b16 %v4188, %v4181
    %v6394 = vpack.c.b16 %v4189, %v4182
    %v6395 = vpack.c.b16 %v4190, %v4183
    %v6396 = vpack.c.b16 %v4191, %v4184
    %v6397 = vpack.c.b16 %v4192, %v4185
    %v6398 = vpack.c.b16 %v4200, %v4193
    %v6399 = vpack.c.b16 %v4201, %v4194
    %v6400 = vpack.c.b16 %v4202, %v4195
    %v6401 = vpack.c.b16 %v4203, %v4196
    %v6402 = vpack.c.b16 %v4204, %v4197
    %v6403 = vpack.c.b16 %v4205, %v4198
    %v6404 = vpack.c.b16 %v4206, %v4199
    %v6405 = vpack.c.b16 %v4214, %v4207
    %v6406 = vpack.c.b16 %v4215, %v4208
    %v6407 = vpack.c.b16 %v4216, %v4209
    %v6408 = vpack.c.b16 %v4217, %v4210
    %v6409 = vpack.c.b16 %v4218, %v4211
    %v6410 = vpack.c.b16 %v4219, %v4212
    %v6411 = vpack.c.b16 %v4220, %v4213
    %v6412 = vpack.c.b16 %v4228, %v4221
    %v6413 = vpack.c.b16 %v4229, %v4222
    %v6414 = vpack.c.b16 %v4230, %v4223
    %v6415 = vpack.c.b16 %v4231, %v4224
    %v6416 = vpack.c.b16 %v4232, %v4225
    %v6417 = vpack.c.b16 %v4233, %v4226
    %v6418 = vpack.c.b16 %v4234, %v4227
    %v6419 = vpack.c.b16 %v4242, %v4235
    %v6420 = vpack.c.b16 %v4243, %v4236
    %v6421 = vpack.c.b16 %v4244, %v4237
    %v6422 = vpack.c.b16 %v4245, %v4238
    %v6423 = vpack.c.b16 %v4246, %v4239
    %v6424 = vpack.c.b16 %v4247, %v4240
    %v6425 = vpack.c.b16 %v4248, %v4241
    %v6426 = vpack.c.b16 %v4256, %v4249
    %v6427 = vpack.c.b16 %v4257, %v4250
    %v6428 = vpack.c.b16 %v4258, %v4251
    %v6429 = vpack.c.b16 %v4259, %v4252
    %v6430 = vpack.c.b16 %v4260, %v4253
    %v6431 = vpack.c.b16 %v4261, %v4254
    %v6432 = vpack.c.b16 %v4262, %v4255
    %v6433 = vpack.c.b16 %v4270, %v4263
    %v6434 = vpack.c.b16 %v4271, %v4264
    %v6435 = vpack.c.b16 %v4272, %v4265
    %v6436 = vpack.c.b16 %v4273, %v4266
    %v6437 = vpack.c.b16 %v4274, %v4267
    %v6438 = vpack.c.b16 %v4275, %v4268
    %v6439 = vpack.c.b16 %v4276, %v4269
    %v6440 = vpack.c.b16 %v4284, %v4277
    %v6441 = vpack.c.b16 %v4285, %v4278
    %v6442 = vpack.c.b16 %v4286, %v4279
    %v6443 = vpack.c.b16 %v4287, %v4280
    %v6444 = vpack.c.b16 %v4288, %v4281
    %v6445 = vpack.c.b16 %v4289, %v4282
    %v6446 = vpack.c.b16 %v4290, %v4283
    %v6447 = vpack.c.b16 %v4298, %v4291
    %v6448 = vpack.c.b16 %v4299, %v4292
    %v6449 = vpack.c.b16 %v4300, %v4293
    %v6450 = vpack.c.b16 %v4301, %v4294
    %v6451 = vpack.c.b16 %v4302, %v4295
    %v6452 = vpack.c.b16 %v4303, %v4296
    %v6453 = vpack.c.b16 %v4304, %v4297
    %v6454 = vpack.c.b16 %v4312, %v4305
    %v6455 = vpack.c.b16 %v4313, %v4306
    %v6456 = vpack.c.b16 %v4314, %v4307
    %v6457 = vpack.c.b16 %v4315, %v4308
    %v6458 = vpack.c.b16 %v4316, %v4309
    %v6459 = vpack.c.b16 %v4317, %v4310
    %v6460 = vpack.c.b16 %v4318, %v4311
    %v6461 = vpack.c.b16 %v4326, %v4319
    %v6462 = vpack.c.b16 %v4327, %v4320
    %v6463 = vpack.c.b16 %v4328, %v4321
    %v6464 = vpack.c.b16 %v4329, %v4322
    %v6465 = vpack.c.b16 %v4330, %v4323
    %v6466 = vpack.c.b16 %v4331, %v4324
    %v6467 = vpack.c.b16 %v4332, %v4325
    %v6468 = vpack.c.b16 %v4340, %v4333
    %v6469 = vpack.c.b16 %v4341, %v4334
    %v6470 = vpack.c.b16 %v4342, %v4335
    %v6471 = vpack.c.b16 %v4343, %v4336
    %v6472 = vpack.c.b16 %v4344, %v4337
    %v6473 = vpack.c.b16 %v4345, %v4338
    %v6474 = vpack.c.b16 %v4346, %v4339
    %v6475 = vpack.c.b16 %v4354, %v4347
    %v6476 = vpack.c.b16 %v4355, %v4348
    %v6477 = vpack.c.b16 %v4356, %v4349
    %v6478 = vpack.c.b16 %v4357, %v4350
    %v6479 = vpack.c.b16 %v4358, %v4351
    %v6480 = vpack.c.b16 %v4359, %v4352
    %v6481 = vpack.c.b16 %v4360, %v4353
    %v6482 = vpack.c.b16 %v4368, %v4361
    %v6483 = vpack.c.b16 %v4369, %v4362
    %v6484 = vpack.c.b16 %v4370, %v4363
    %v6485 = vpack.c.b16 %v4371, %v4364
    %v6486 = vpack.c.b16 %v4372, %v4365
    %v6487 = vpack.c.b16 %v4373, %v4366
    %v6488 = vpack.c.b16 %v4374, %v4367
    %v6489 = vpack.c.b16 %v4382, %v4375
    %v6490 = vpack.c.b16 %v4383, %v4376
    %v6491 = vpack.c.b16 %v4384, %v4377
    %v6492 = vpack.c.b16 %v4385, %v4378
    %v6493 = vpack.c.b16 %v4386, %v4379
    %v6494 = vpack.c.b16 %v4387, %v4380
    %v6495 = vpack.c.b16 %v4388, %v4381
    %v6496 = vpack.c.b16 %v4396, %v4389
    %v6497 = vpack.c.b16 %v4397, %v4390
    %v6498 = vpack.c.b16 %v4398, %v4391
    %v6499 = vpack.c.b16 %v4399, %v4392
    %v6500 = vpack.c.b16 %v4400, %v4393
    %v6501 = vpack.c.b16 %v4401, %v4394
    %v6502 = vpack.c.b16 %v4402, %v4395
    %v6503 = vpack.c.b16 %v4410, %v4403
    %v6504 = vpack.c.b16 %v4411, %v4404
    %v6505 = vpack.c.b16 %v4412, %v4405
    %v6506 = vpack.c.b16 %v4413, %v4406
    %v6507 = vpack.c.b16 %v4414, %v4407
    %v6508 = vpack.c.b16 %v4415, %v4408
    %v6509 = vpack.c.b16 %v4416, %v4409
    %v6510 = vpack.c.b16 %v4424, %v4417
    %v6511 = vpack.c.b16 %v4425, %v4418
    %v6512 = vpack.c.b16 %v4426, %v4419
    %v6513 = vpack.c.b16 %v4427, %v4420
    %v6514 = vpack.c.b16 %v4428, %v4421
    %v6515 = vpack.c.b16 %v4429, %v4422
    %v6516 = vpack.c.b16 %v4430, %v4423
    %v6517 = vpack.c.b16 %v4438, %v4431
    %v6518 = vpack.c.b16 %v4439, %v4432
    %v6519 = vpack.c.b16 %v4440, %v4433
    %v6520 = vpack.c.b16 %v4441, %v4434
    %v6521 = vpack.c.b16 %v4442, %v4435
    %v6522 = vpack.c.b16 %v4443, %v4436
    %v6523 = vpack.c.b16 %v4444, %v4437
    %v6524 = vpack.c.b16 %v4452, %v4445
    %v6525 = vpack.c.b16 %v4453, %v4446
    %v6526 = vpack.c.b16 %v4454, %v4447
    %v6527 = vpack.c.b16 %v4455, %v4448
    %v6528 = vpack.c.b16 %v4456, %v4449
    %v6529 = vpack.c.b16 %v4457, %v4450
    %v6530 = vpack.c.b16 %v4458, %v4451
    %v6531 = vpack.c.b16 %v4466, %v4459
    %v6532 = vpack.c.b16 %v4467, %v4460
    %v6533 = vpack.c.b16 %v4468, %v4461
    %v6534 = vpack.c.b16 %v4469, %v4462
    %v6535 = vpack.c.b16 %v4470, %v4463
    %v6536 = vpack.c.b16 %v4471, %v4464
    %v6537 = vpack.c.b16 %v4472, %v4465
    %v6538 = vpack.c.b16 %v4480, %v4473
    %v6539 = vpack.c.b16 %v4481, %v4474
    %v6540 = vpack.c.b16 %v4482, %v4475
    %v6541 = vpack.c.b16 %v4483, %v4476
    %v6542 = vpack.c.b16 %v4484, %v4477
    %v6543 = vpack.c.b16 %v4485, %v4478
    %v6544 = vpack.c.b16 %v4486, %v4479
    %v6545 = vpack.c.b16 %v4494, %v4487
    %v6546 = vpack.c.b16 %v4495, %v4488
    %v6547 = vpack.c.b16 %v4496, %v4489
    %v6548 = vpack.c.b16 %v4497, %v4490
    %v6549 = vpack.c.b16 %v4498, %v4491
    %v6550 = vpack.c.b16 %v4499, %v4492
    %v6551 = vpack.c.b16 %v4500, %v4493
    %v6552 = vpack.c.b16 %v4508, %v4501
    %v6553 = vpack.c.b16 %v4509, %v4502
    %v6554 = vpack.c.b16 %v4510, %v4503
    %v6555 = vpack.c.b16 %v4511, %v4504
    %v6556 = vpack.c.b16 %v4512, %v4505
    %v6557 = vpack.c.b16 %v4513, %v4506
    %v6558 = vpack.c.b16 %v4514, %v4507
    %v6559 = vpack.c.b16 %v4522, %v4515
    %v6560 = vpack.c.b16 %v4523, %v4516
    %v6561 = vpack.c.b16 %v4524, %v4517
    %v6562 = vpack.c.b16 %v4525, %v4518
    %v6563 = vpack.c.b16 %v4526, %v4519
    %v6564 = vpack.c.b16 %v4527, %v4520
    %v6565 = vpack.c.b16 %v4528, %v4521
    %v6566 = vpack.c.b16 %v4536, %v4529
    %v6567 = vpack.c.b16 %v4537, %v4530
    %v6568 = vpack.c.b16 %v4538, %v4531
    %v6569 = vpack.c.b16 %v4539, %v4532
    %v6570 = vpack.c.b16 %v4540, %v4533
    %v6571 = vpack.c.b16 %v4541, %v4534
    %v6572 = vpack.c.b16 %v4542, %v4535
    %v6573 = vpack.c.b16 %v4550, %v4543
    %v6574 = vpack.c.b16 %v4551, %v4544
    %v6575 = vpack.c.b16 %v4552, %v4545
    %v6576 = vpack.c.b16 %v4553, %v4546
    %v6577 = vpack.c.b16 %v4554, %v4547
    %v6578 = vpack.c.b16 %v4555, %v4548
    %v6579 = vpack.c.b16 %v4556, %v4549
    %v6580 = vpack.c.b16 %v4564, %v4557
    %v6581 = vpack.c.b16 %v4565, %v4558
    %v6582 = vpack.c.b16 %v4566, %v4559
    %v6583 = vpack.c.b16 %v4567, %v4560
    %v6584 = vpack.c.b16 %v4568, %v4561
    %v6585 = vpack.c.b16 %v4569, %v4562
    %v6586 = vpack.c.b16 %v4570, %v4563
    %v6587 = vpack.c.b16 %v4578, %v4571
    %v6588 = vpack.c.b16 %v4579, %v4572
    %v6589 = vpack.c.b16 %v4580, %v4573
    %v6590 = vpack.c.b16 %v4581, %v4574
    %v6591 = vpack.c.b16 %v4582, %v4575
    %v6592 = vpack.c.b16 %v4583, %v4576
    %v6593 = vpack.c.b16 %v4584, %v4577
    %v6594 = vpack.c.b16 %v4592, %v4585
    %v6595 = vpack.c.b16 %v4593, %v4586
    %v6596 = vpack.c.b16 %v4594, %v4587
    %v6597 = vpack.c.b16 %v4595, %v4588
    %v6598 = vpack.c.b16 %v4596, %v4589
    %v6599 = vpack.c.b16 %v4597, %v4590
    %v6600 = vpack.c.b16 %v4598, %v4591
    %v6601 = vpack.c.b16 %v4606, %v4599
    %v6602 = vpack.c.b16 %v4607, %v4600
    %v6603 = vpack.c.b16 %v4608, %v4601
    %v6604 = vpack.c.b16 %v4609, %v4602
    %v6605 = vpack.c.b16 %v4610, %v4603
    %v6606 = vpack.c.b16 %v4611, %v4604
    %v6607 = vpack.c.b16 %v4612, %v4605
    %v6608 = vpack.c.b16 %v4620, %v4613
    %v6609 = vpack.c.b16 %v4621, %v4614
    %v6610 = vpack.c.b16 %v4622, %v4615
    %v6611 = vpack.c.b16 %v4623, %v4616
    %v6612 = vpack.c.b16 %v4624, %v4617
    %v6613 = vpack.c.b16 %v4625, %v4618
    %v6614 = vpack.c.b16 %v4626, %v4619
    %v6615 = vpack.c.b16 %v4634, %v4627
    %v6616 = vpack.c.b16 %v4635, %v4628
    %v6617 = vpack.c.b16 %v4636, %v4629
    %v6618 = vpack.c.b16 %v4637, %v4630
    %v6619 = vpack.c.b16 %v4638, %v4631
    %v6620 = vpack.c.b16 %v4639, %v4632
    %v6621 = vpack.c.b16 %v4640, %v4633
    %v6622 = vpack.c.b16 %v4648, %v4641
    %v6623 = vpack.c.b16 %v4649, %v4642
    %v6624 = vpack.c.b16 %v4650, %v4643
    %v6625 = vpack.c.b16 %v4651, %v4644
    %v6626 = vpack.c.b16 %v4652, %v4645
    %v6627 = vpack.c.b16 %v4653, %v4646
    %v6628 = vpack.c.b16 %v4654, %v4647
    %v6629 = vpack.c.b16 %v4662, %v4655
    %v6630 = vpack.c.b16 %v4663, %v4656
    %v6631 = vpack.c.b16 %v4664, %v4657
    %v6632 = vpack.c.b16 %v4665, %v4658
    %v6633 = vpack.c.b16 %v4666, %v4659
    %v6634 = vpack.c.b16 %v4667, %v4660
    %v6635 = vpack.c.b16 %v4668, %v4661
    %v6636 = vpack.c.b16 %v4676, %v4669
    %v6637 = vpack.c.b16 %v4677, %v4670
    %v6638 = vpack.c.b16 %v4678, %v4671
    %v6639 = vpack.c.b16 %v4679, %v4672
    %v6640 = vpack.c.b16 %v4680, %v4673
    %v6641 = vpack.c.b16 %v4681, %v4674
    %v6642 = vpack.c.b16 %v4682, %v4675
    %v6643 = vpack.c.b16 %v4690, %v4683
    %v6644 = vpack.c.b16 %v4691, %v4684
    %v6645 = vpack.c.b16 %v4692, %v4685
    %v6646 = vpack.c.b16 %v4693, %v4686
    %v6647 = vpack.c.b16 %v4694, %v4687
    %v6648 = vpack.c.b16 %v4695, %v4688
    %v6649 = vpack.c.b16 %v4696, %v4689
    %v6650 = vpack.c.b16 %v4704, %v4697
    %v6651 = vpack.c.b16 %v4705, %v4698
    %v6652 = vpack.c.b16 %v4706, %v4699
    %v6653 = vpack.c.b16 %v4707, %v4700
    %v6654 = vpack.c.b16 %v4708, %v4701
    %v6655 = vpack.c.b16 %v4709, %v4702
    %v6656 = vpack.c.b16 %v4710, %v4703
    %v6657 = vpack.c.b16 %v4718, %v4711
    %v6658 = vpack.c.b16 %v4719, %v4712
    %v6659 = vpack.c.b16 %v4720, %v4713
    %v6660 = vpack.c.b16 %v4721, %v4714
    %v6661 = vpack.c.b16 %v4722, %v4715
    %v6662 = vpack.c.b16 %v4723, %v4716
    %v6663 = vpack.c.b16 %v4724, %v4717
    %v6664 = vpack.c.b16 %v4732, %v4725
    %v6665 = vpack.c.b16 %v4733, %v4726
    %v6666 = vpack.c.b16 %v4734, %v4727
    %v6667 = vpack.c.b16 %v4735, %v4728
    %v6668 = vpack.c.b16 %v4736, %v4729
    %v6669 = vpack.c.b16 %v4737, %v4730
    %v6670 = vpack.c.b16 %v4738, %v4731
    %v6671 = vpack.c.b16 %v4746, %v4739
    %v6672 = vpack.c.b16 %v4747, %v4740
    %v6673 = vpack.c.b16 %v4748, %v4741
    %v6674 = vpack.c.b16 %v4749, %v4742
    %v6675 = vpack.c.b16 %v4750, %v4743
    %v6676 = vpack.c.b16 %v4751, %v4744
    %v6677 = vpack.c.b16 %v4752, %v4745
    %v6678 = vpack.c.b16 %v4760, %v4753
    %v6679 = vpack.c.b16 %v4761, %v4754
    %v6680 = vpack.c.b16 %v4762, %v4755
    %v6681 = vpack.c.b16 %v4763, %v4756
    %v6682 = vpack.c.b16 %v4764, %v4757
    %v6683 = vpack.c.b16 %v4765, %v4758
    %v6684 = vpack.c.b16 %v4766, %v4759
    %v6685 = vpack.c.b16 %v4774, %v4767
    %v6686 = vpack.c.b16 %v4775, %v4768
    %v6687 = vpack.c.b16 %v4776, %v4769
    %v6688 = vpack.c.b16 %v4777, %v4770
    %v6689 = vpack.c.b16 %v4778, %v4771
    %v6690 = vpack.c.b16 %v4779, %v4772
    %v6691 = vpack.c.b16 %v4780, %v4773
    %v6692 = vpack.c.b16 %v4788, %v4781
    %v6693 = vpack.c.b16 %v4789, %v4782
    %v6694 = vpack.c.b16 %v4790, %v4783
    %v6695 = vpack.c.b16 %v4791, %v4784
    %v6696 = vpack.c.b16 %v4792, %v4785
    %v6697 = vpack.c.b16 %v4793, %v4786
    %v6698 = vpack.c.b16 %v4794, %v4787
    %v6699 = vpack.c.b16 %v4802, %v4795
    %v6700 = vpack.c.b16 %v4803, %v4796
    %v6701 = vpack.c.b16 %v4804, %v4797
    %v6702 = vpack.c.b16 %v4805, %v4798
    %v6703 = vpack.c.b16 %v4806, %v4799
    %v6704 = vpack.c.b16 %v4807, %v4800
    %v6705 = vpack.c.b16 %v4808, %v4801
    %v6706 = vpack.c.b16 %v4816, %v4809
    %v6707 = vpack.c.b16 %v4817, %v4810
    %v6708 = vpack.c.b16 %v4818, %v4811
    %v6709 = vpack.c.b16 %v4819, %v4812
    %v6710 = vpack.c.b16 %v4820, %v4813
    %v6711 = vpack.c.b16 %v4821, %v4814
    %v6712 = vpack.c.b16 %v4822, %v4815
    %v6713 = vpack.c.b16 %v4830, %v4823
    %v6714 = vpack.c.b16 %v4831, %v4824
    %v6715 = vpack.c.b16 %v4832, %v4825
    %v6716 = vpack.c.b16 %v4833, %v4826
    %v6717 = vpack.c.b16 %v4834, %v4827
    %v6718 = vpack.c.b16 %v4835, %v4828
    %v6719 = vpack.c.b16 %v4836, %v4829
    %v6720 = vpack.c.b16 %v4844, %v4837
    %v6721 = vpack.c.b16 %v4845, %v4838
    %v6722 = vpack.c.b16 %v4846, %v4839
    %v6723 = vpack.c.b16 %v4847, %v4840
    %v6724 = vpack.c.b16 %v4848, %v4841
    %v6725 = vpack.c.b16 %v4849, %v4842
    %v6726 = vpack.c.b16 %v4850, %v4843
    %v6727 = vpack.c.b16 %v4858, %v4851
    %v6728 = vpack.c.b16 %v4859, %v4852
    %v6729 = vpack.c.b16 %v4860, %v4853
    %v6730 = vpack.c.b16 %v4861, %v4854
    %v6731 = vpack.c.b16 %v4862, %v4855
    %v6732 = vpack.c.b16 %v4863, %v4856
    %v6733 = vpack.c.b16 %v4864, %v4857
    %v6734 = vpack.c.b16 %v4872, %v4865
    %v6735 = vpack.c.b16 %v4873, %v4866
    %v6736 = vpack.c.b16 %v4874, %v4867
    %v6737 = vpack.c.b16 %v4875, %v4868
    %v6738 = vpack.c.b16 %v4876, %v4869
    %v6739 = vpack.c.b16 %v4877, %v4870
    %v6740 = vpack.c.b16 %v4878, %v4871
    %v6741 = vpack.c.b16 %v4886, %v4879
    %v6742 = vpack.c.b16 %v4887, %v4880
    %v6743 = vpack.c.b16 %v4888, %v4881
    %v6744 = vpack.c.b16 %v4889, %v4882
    %v6745 = vpack.c.b16 %v4890, %v4883
    %v6746 = vpack.c.b16 %v4891, %v4884
    %v6747 = vpack.c.b16 %v4892, %v4885
    %v6748 = vpack.c.b16 %v4900, %v4893
    %v6749 = vpack.c.b16 %v4901, %v4894
    %v6750 = vpack.c.b16 %v4902, %v4895
    %v6751 = vpack.c.b16 %v4903, %v4896
    %v6752 = vpack.c.b16 %v4904, %v4897
    %v6753 = vpack.c.b16 %v4905, %v4898
    %v6754 = vpack.c.b16 %v4906, %v4899
    %v6755 = vpack.c.b16 %v4914, %v4907
    %v6756 = vpack.c.b16 %v4915, %v4908
    %v6757 = vpack.c.b16 %v4916, %v4909
    %v6758 = vpack.c.b16 %v4917, %v4910
    %v6759 = vpack.c.b16 %v4918, %v4911
    %v6760 = vpack.c.b16 %v4919, %v4912
    %v6761 = vpack.c.b16 %v4920, %v4913
    %v6762 = vpack.c.b16 %v4928, %v4921
    %v6763 = vpack.c.b16 %v4929, %v4922
    %v6764 = vpack.c.b16 %v4930, %v4923
    %v6765 = vpack.c.b16 %v4931, %v4924
    %v6766 = vpack.c.b16 %v4932, %v4925
    %v6767 = vpack.c.b16 %v4933, %v4926
    %v6768 = vpack.c.b16 %v4934, %v4927
    %v6769 = vpack.c.b16 %v4942, %v4935
    %v6770 = vpack.c.b16 %v4943, %v4936
    %v6771 = vpack.c.b16 %v4944, %v4937
    %v6772 = vpack.c.b16 %v4945, %v4938
    %v6773 = vpack.c.b16 %v4946, %v4939
    %v6774 = vpack.c.b16 %v4947, %v4940
    %v6775 = vpack.c.b16 %v4948, %v4941
    %v6776 = vpack.c.b16 %v4956, %v4949
    %v6777 = vpack.c.b16 %v4957, %v4950
    %v6778 = vpack.c.b16 %v4958, %v4951
    %v6779 = vpack.c.b16 %v4959, %v4952
    %v6780 = vpack.c.b16 %v4960, %v4953
    %v6781 = vpack.c.b16 %v4961, %v4954
    %v6782 = vpack.c.b16 %v4962, %v4955
    %v6783 = vpack.c.b16 %v4970, %v4963
    %v6784 = vpack.c.b16 %v4971, %v4964
    %v6785 = vpack.c.b16 %v4972, %v4965
    %v6786 = vpack.c.b16 %v4973, %v4966
    %v6787 = vpack.c.b16 %v4974, %v4967
    %v6788 = vpack.c.b16 %v4975, %v4968
    %v6789 = vpack.c.b16 %v4976, %v4969
    %v6790 = vpack.c.b16 %v4984, %v4977
    %v6791 = vpack.c.b16 %v4985, %v4978
    %v6792 = vpack.c.b16 %v4986, %v4979
    %v6793 = vpack.c.b16 %v4987, %v4980
    %v6794 = vpack.c.b16 %v4988, %v4981
    %v6795 = vpack.c.b16 %v4989, %v4982
    %v6796 = vpack.c.b16 %v4990, %v4983
    %v6797 = vpack.c.b16 %v4998, %v4991
    %v6798 = vpack.c.b16 %v4999, %v4992
    %v6799 = vpack.c.b16 %v5000, %v4993
    %v6800 = vpack.c.b16 %v5001, %v4994
    %v6801 = vpack.c.b16 %v5002, %v4995
    %v6802 = vpack.c.b16 %v5003, %v4996
    %v6803 = vpack.c.b16 %v5004, %v4997
    %v6804 = vpack.c.b16 %v5012, %v5005
    %v6805 = vpack.c.b16 %v5013, %v5006
    %v6806 = vpack.c.b16 %v5014, %v5007
    %v6807 = vpack.c.b16 %v5015, %v5008
    %v6808 = vpack.c.b16 %v5016, %v5009
    %v6809 = vpack.c.b16 %v5017, %v5010
    %v6810 = vpack.c.b16 %v5018, %v5011
    %v6811 = vpack.c.b16 %v5026, %v5019
    %v6812 = vpack.c.b16 %v5027, %v5020
    %v6813 = vpack.c.b16 %v5028, %v5021
    %v6814 = vpack.c.b16 %v5029, %v5022
    %v6815 = vpack.c.b16 %v5030, %v5023
    %v6816 = vpack.c.b16 %v5031, %v5024
    %v6817 = vpack.c.b16 %v5032, %v5025
    %v6818 = vpack.c.b16 %v5040, %v5033
    %v6819 = vpack.c.b16 %v5041, %v5034
    %v6820 = vpack.c.b16 %v5042, %v5035
    %v6821 = vpack.c.b16 %v5043, %v5036
    %v6822 = vpack.c.b16 %v5044, %v5037
    %v6823 = vpack.c.b16 %v5045, %v5038
    %v6824 = vpack.c.b16 %v5046, %v5039
    %v6825 = vpack.c.b16 %v5054, %v5047
    %v6826 = vpack.c.b16 %v5055, %v5048
    %v6827 = vpack.c.b16 %v5056, %v5049
    %v6828 = vpack.c.b16 %v5057, %v5050
    %v6829 = vpack.c.b16 %v5058, %v5051
    %v6830 = vpack.c.b16 %v5059, %v5052
    %v6831 = vpack.c.b16 %v5060, %v5053
    %v6832 = vpack.c.b16 %v5068, %v5061
    %v6833 = vpack.c.b16 %v5069, %v5062
    %v6834 = vpack.c.b16 %v5070, %v5063
    %v6835 = vpack.c.b16 %v5071, %v5064
    %v6836 = vpack.c.b16 %v5072, %v5065
    %v6837 = vpack.c.b16 %v5073, %v5066
    %v6838 = vpack.c.b16 %v5074, %v5067
    %v6839 = vpack.c.b16 %v5082, %v5075
    %v6840 = vpack.c.b16 %v5083, %v5076
    %v6841 = vpack.c.b16 %v5084, %v5077
    %v6842 = vpack.c.b16 %v5085, %v5078
    %v6843 = vpack.c.b16 %v5086, %v5079
    %v6844 = vpack.c.b16 %v5087, %v5080
    %v6845 = vpack.c.b16 %v5088, %v5081
    %v6846 = vpack.c.b16 %v5096, %v5089
    %v6847 = vpack.c.b16 %v5097, %v5090
    %v6848 = vpack.c.b16 %v5098, %v5091
    %v6849 = vpack.c.b16 %v5099, %v5092
    %v6850 = vpack.c.b16 %v5100, %v5093
    %v6851 = vpack.c.b16 %v5101, %v5094
    %v6852 = vpack.c.b16 %v5102, %v5095
    %v6853 = vpack.c.b16 %v5110, %v5103
    %v6854 = vpack.c.b16 %v5111, %v5104
    %v6855 = vpack.c.b16 %v5112, %v5105
    %v6856 = vpack.c.b16 %v5113, %v5106
    %v6857 = vpack.c.b16 %v5114, %v5107
    %v6858 = vpack.c.b16 %v5115, %v5108
    %v6859 = vpack.c.b16 %v5116, %v5109
    %v6860 = vpack.c.b16 %v5124, %v5117
    %v6861 = vpack.c.b16 %v5125, %v5118
    %v6862 = vpack.c.b16 %v5126, %v5119
    %v6863 = vpack.c.b16 %v5127, %v5120
    %v6864 = vpack.c.b16 %v5128, %v5121
    %v6865 = vpack.c.b16 %v5129, %v5122
    %v6866 = vpack.c.b16 %v5130, %v5123
    %v6867 = vpack.c.b16 %v5138, %v5131
    %v6868 = vpack.c.b16 %v5139, %v5132
    %v6869 = vpack.c.b16 %v5140, %v5133
    %v6870 = vpack.c.b16 %v5141, %v5134
    %v6871 = vpack.c.b16 %v5142, %v5135
    %v6872 = vpack.c.b16 %v5143, %v5136
    %v6873 = vpack.c.b16 %v5144, %v5137
    %v6874 = vpack.c.b16 %v5152, %v5145
    %v6875 = vpack.c.b16 %v5153, %v5146
    %v6876 = vpack.c.b16 %v5154, %v5147
    %v6877 = vpack.c.b16 %v5155, %v5148
    %v6878 = vpack.c.b16 %v5156, %v5149
    %v6879 = vpack.c.b16 %v5157, %v5150
    %v6880 = vpack.c.b16 %v5158, %v5151
    %v6881 = vpack.c.b16 %v5166, %v5159
    %v6882 = vpack.c.b16 %v5167, %v5160
    %v6883 = vpack.c.b16 %v5168, %v5161
    %v6884 = vpack.c.b16 %v5169, %v5162
    %v6885 = vpack.c.b16 %v5170, %v5163
    %v6886 = vpack.c.b16 %v5171, %v5164
    %v6887 = vpack.c.b16 %v5172, %v5165
    %v6888 = vpack.c.b16 %v5180, %v5173
    %v6889 = vpack.c.b16 %v5181, %v5174
    %v6890 = vpack.c.b16 %v5182, %v5175
    %v6891 = vpack.c.b16 %v5183, %v5176
    %v6892 = vpack.c.b16 %v5184, %v5177
    %v6893 = vpack.c.b16 %v5185, %v5178
    %v6894 = vpack.c.b16 %v5186, %v5179
    %v6895 = vpack.c.b16 %v5194, %v5187
    %v6896 = vpack.c.b16 %v5195, %v5188
    %v6897 = vpack.c.b16 %v5196, %v5189
    %v6898 = vpack.c.b16 %v5197, %v5190
    %v6899 = vpack.c.b16 %v5198, %v5191
    %v6900 = vpack.c.b16 %v5199, %v5192
    %v6901 = vpack.c.b16 %v5200, %v5193
    %v6902 = vpack.c.b16 %v5208, %v5201
    %v6903 = vpack.c.b16 %v5209, %v5202
    %v6904 = vpack.c.b16 %v5210, %v5203
    %v6905 = vpack.c.b16 %v5211, %v5204
    %v6906 = vpack.c.b16 %v5212, %v5205
    %v6907 = vpack.c.b16 %v5213, %v5206
    %v6908 = vpack.c.b16 %v5214, %v5207
    %v6909 = vpack.c.b16 %v5222, %v5215
    %v6910 = vpack.c.b16 %v5223, %v5216
    %v6911 = vpack.c.b16 %v5224, %v5217
    %v6912 = vpack.c.b16 %v5225, %v5218
    %v6913 = vpack.c.b16 %v5226, %v5219
    %v6914 = vpack.c.b16 %v5227, %v5220
    %v6915 = vpack.c.b16 %v5228, %v5221
    %v6916 = vpack.c.b16 %v5236, %v5229
    %v6917 = vpack.c.b16 %v5237, %v5230
    %v6918 = vpack.c.b16 %v5238, %v5231
    %v6919 = vpack.c.b16 %v5239, %v5232
    %v6920 = vpack.c.b16 %v5240, %v5233
    %v6921 = vpack.c.b16 %v5241, %v5234
    %v6922 = vpack.c.b16 %v5242, %v5235
    %v6923 = vpack.c.b16 %v5250, %v5243
    %v6924 = vpack.c.b16 %v5251, %v5244
    %v6925 = vpack.c.b16 %v5252, %v5245
    %v6926 = vpack.c.b16 %v5253, %v5246
    %v6927 = vpack.c.b16 %v5254, %v5247
    %v6928 = vpack.c.b16 %v5255, %v5248
    %v6929 = vpack.c.b16 %v5256, %v5249
    %v6930 = vpack.c.b16 %v5264, %v5257
    %v6931 = vpack.c.b16 %v5265, %v5258
    %v6932 = vpack.c.b16 %v5266, %v5259
    %v6933 = vpack.c.b16 %v5267, %v5260
    %v6934 = vpack.c.b16 %v5268, %v5261
    %v6935 = vpack.c.b16 %v5269, %v5262
    %v6936 = vpack.c.b16 %v5270, %v5263
    %v6937 = vpack.c.b16 %v5278, %v5271
    %v6938 = vpack.c.b16 %v5279, %v5272
    %v6939 = vpack.c.b16 %v5280, %v5273
    %v6940 = vpack.c.b16 %v5281, %v5274
    %v6941 = vpack.c.b16 %v5282, %v5275
    %v6942 = vpack.c.b16 %v5283, %v5276
    %v6943 = vpack.c.b16 %v5284, %v5277
    %v6944 = vpack.c.b16 %v5292, %v5285
    %v6945 = vpack.c.b16 %v5293, %v5286
    %v6946 = vpack.c.b16 %v5294, %v5287
    %v6947 = vpack.c.b16 %v5295, %v5288
    %v6948 = vpack.c.b16 %v5296, %v5289
    %v6949 = vpack.c.b16 %v5297, %v5290
    %v6950 = vpack.c.b16 %v5298, %v5291
    %v6951 = vpack.c.b16 %v5306, %v5299
    %v6952 = vpack.c.b16 %v5307, %v5300
    %v6953 = vpack.c.b16 %v5308, %v5301
    %v6954 = vpack.c.b16 %v5309, %v5302
    %v6955 = vpack.c.b16 %v5310, %v5303
    %v6956 = vpack.c.b16 %v5311, %v5304
    %v6957 = vpack.c.b16 %v5312, %v5305
    %v6958 = vpack.c.b16 %v5320, %v5313
    %v6959 = vpack.c.b16 %v5321, %v5314
    %v6960 = vpack.c.b16 %v5322, %v5315
    %v6961 = vpack.c.b16 %v5323, %v5316
    %v6962 = vpack.c.b16 %v5324, %v5317
    %v6963 = vpack.c.b16 %v5325, %v5318
    %v6964 = vpack.c.b16 %v5326, %v5319
    %v6965 = vpack.c.b16 %v5334, %v5327
    %v6966 = vpack.c.b16 %v5335, %v5328
    %v6967 = vpack.c.b16 %v5336, %v5329
    %v6968 = vpack.c.b16 %v5337, %v5330
    %v6969 = vpack.c.b16 %v5338, %v5331
    %v6970 = vpack.c.b16 %v5339, %v5332
    %v6971 = vpack.c.b16 %v5340, %v5333
    %v6972 = vpack.c.b16 %v5348, %v5341
    %v6973 = vpack.c.b16 %v5349, %v5342
    %v6974 = vpack.c.b16 %v5350, %v5343
    %v6975 = vpack.c.b16 %v5351, %v5344
    %v6976 = vpack.c.b16 %v5352, %v5345
    %v6977 = vpack.c.b16 %v5353, %v5346
    %v6978 = vpack.c.b16 %v5354, %v5347
    %v6979 = vpack.c.b16 %v5362, %v5355
    %v6980 = vpack.c.b16 %v5363, %v5356
    %v6981 = vpack.c.b16 %v5364, %v5357
    %v6982 = vpack.c.b16 %v5365, %v5358
    %v6983 = vpack.c.b16 %v5366, %v5359
    %v6984 = vpack.c.b16 %v5367, %v5360
    %v6985 = vpack.c.b16 %v5368, %v5361
    %v6986 = vpack.c.b16 %v5376, %v5369
    %v6987 = vpack.c.b16 %v5377, %v5370
    %v6988 = vpack.c.b16 %v5378, %v5371
    %v6989 = vpack.c.b16 %v5379, %v5372
    %v6990 = vpack.c.b16 %v5380, %v5373
    %v6991 = vpack.c.b16 %v5381, %v5374
    %v6992 = vpack.c.b16 %v5382, %v5375
    %v6993 = vpack.c.b16 %v5390, %v5383
    %v6994 = vpack.c.b16 %v5391, %v5384
    %v6995 = vpack.c.b16 %v5392, %v5385
    %v6996 = vpack.c.b16 %v5393, %v5386
    %v6997 = vpack.c.b16 %v5394, %v5387
    %v6998 = vpack.c.b16 %v5395, %v5388
    %v6999 = vpack.c.b16 %v5396, %v5389
    %v7000 = vpack.c.b16 %v5404, %v5397
    %v7001 = vpack.c.b16 %v5405, %v5398
    %v7002 = vpack.c.b16 %v5406, %v5399
    %v7003 = vpack.c.b16 %v5407, %v5400
    %v7004 = vpack.c.b16 %v5408, %v5401
    %v7005 = vpack.c.b16 %v5409, %v5402
    %v7006 = vpack.c.b16 %v5410, %v5403
    %v7007 = vpack.c.b16 %v5418, %v5411
    %v7008 = vpack.c.b16 %v5419, %v5412
    %v7009 = vpack.c.b16 %v5420, %v5413
    %v7010 = vpack.c.b16 %v5421, %v5414
    %v7011 = vpack.c.b16 %v5422, %v5415
    %v7012 = vpack.c.b16 %v5423, %v5416
    %v7013 = vpack.c.b16 %v5424, %v5417
    %v7014 = vpack.c.b16 %v5432, %v5425
    %v7015 = vpack.c.b16 %v5433, %v5426
    %v7016 = vpack.c.b16 %v5434, %v5427
    %v7017 = vpack.c.b16 %v5435, %v5428
    %v7018 = vpack.c.b16 %v5436, %v5429
    %v7019 = vpack.c.b16 %v5437, %v5430
    %v7020 = vpack.c.b16 %v5438, %v5431
    %v7021 = vpack.c.b16 %v5446, %v5439
    %v7022 = vpack.c.b16 %v5447, %v5440
    %v7023 = vpack.c.b16 %v5448, %v5441
    %v7024 = vpack.c.b16 %v5449, %v5442
    %v7025 = vpack.c.b16 %v5450, %v5443
    %v7026 = vpack.c.b16 %v5451, %v5444
    %v7027 = vpack.c.b16 %v5452, %v5445
    %v7028 = vpack.c.b16 %v5460, %v5453
    %v7029 = vpack.c.b16 %v5461, %v5454
    %v7030 = vpack.c.b16 %v5462, %v5455
    %v7031 = vpack.c.b16 %v5463, %v5456
    %v7032 = vpack.c.b16 %v5464, %v5457
    %v7033 = vpack.c.b16 %v5465, %v5458
    %v7034 = vpack.c.b16 %v5466, %v5459
    %v7035 = vpack.c.b16 %v5474, %v5467
    %v7036 = vpack.c.b16 %v5475, %v5468
    %v7037 = vpack.c.b16 %v5476, %v5469
    %v7038 = vpack.c.b16 %v5477, %v5470
    %v7039 = vpack.c.b16 %v5478, %v5471
    %v7040 = vpack.c.b16 %v5479, %v5472
    %v7041 = vpack.c.b16 %v5480, %v5473
    %v7042 = vpack.c.b16 %v5488, %v5481
    %v7043 = vpack.c.b16 %v5489, %v5482
    %v7044 = vpack.c.b16 %v5490, %v5483
    %v7045 = vpack.c.b16 %v5491, %v5484
    %v7046 = vpack.c.b16 %v5492, %v5485
    %v7047 = vpack.c.b16 %v5493, %v5486
    %v7048 = vpack.c.b16 %v5494, %v5487
    %v7049 = vpack.c.b16 %v5502, %v5495
    %v7050 = vpack.c.b16 %v5503, %v5496
    %v7051 = vpack.c.b16 %v5504, %v5497
    %v7052 = vpack.c.b16 %v5505, %v5498
    %v7053 = vpack.c.b16 %v5506, %v5499
    %v7054 = vpack.c.b16 %v5507, %v5500
    %v7055 = vpack.c.b16 %v5508, %v5501
    %v7056 = vpack.c.b16 %v5516, %v5509
    %v7057 = vpack.c.b16 %v5517, %v5510
    %v7058 = vpack.c.b16 %v5518, %v5511
    %v7059 = vpack.c.b16 %v5519, %v5512
    %v7060 = vpack.c.b16 %v5520, %v5513
    %v7061 = vpack.c.b16 %v5521, %v5514
    %v7062 = vpack.c.b16 %v5522, %v5515
    %v7063 = vpack.c.b16 %v5530, %v5523
    %v7064 = vpack.c.b16 %v5531, %v5524
    %v7065 = vpack.c.b16 %v5532, %v5525
    %v7066 = vpack.c.b16 %v5533, %v5526
    %v7067 = vpack.c.b16 %v5534, %v5527
    %v7068 = vpack.c.b16 %v5535, %v5528
    %v7069 = vpack.c.b16 %v5536, %v5529
    %v7070 = vpack.c.b16 %v5544, %v5537
    %v7071 = vpack.c.b16 %v5545, %v5538
    %v7072 = vpack.c.b16 %v5546, %v5539
    %v7073 = vpack.c.b16 %v5547, %v5540
    %v7074 = vpack.c.b16 %v5548, %v5541
    %v7075 = vpack.c.b16 %v5549, %v5542
    %v7076 = vpack.c.b16 %v5550, %v5543
    %v7077 = vpack.c.b16 %v5558, %v5551
    %v7078 = vpack.c.b16 %v5559, %v5552
    %v7079 = vpack.c.b16 %v5560, %v5553
    %v7080 = vpack.c.b16 %v5561, %v5554
    %v7081 = vpack.c.b16 %v5562, %v5555
    %v7082 = vpack.c.b16 %v5563, %v5556
    %v7083 = vpack.c.b16 %v5564, %v5557
    %v7084 = vpack.c.b16 %v5572, %v5565
    %v7085 = vpack.c.b16 %v5573, %v5566
    %v7086 = vpack.c.b16 %v5574, %v5567
    %v7087 = vpack.c.b16 %v5575, %v5568
    %v7088 = vpack.c.b16 %v5576, %v5569
    %v7089 = vpack.c.b16 %v5577, %v5570
    %v7090 = vpack.c.b16 %v5578, %v5571
    %v7091 = vpack.c.b16 %v5586, %v5579
    %v7092 = vpack.c.b16 %v5587, %v5580
    %v7093 = vpack.c.b16 %v5588, %v5581
    %v7094 = vpack.c.b16 %v5589, %v5582
    %v7095 = vpack.c.b16 %v5590, %v5583
    %v7096 = vpack.c.b16 %v5591, %v5584
    %v7097 = vpack.c.b16 %v5592, %v5585
    %v7098 = vpack.c.b16 %v5600, %v5593
    %v7099 = vpack.c.b16 %v5601, %v5594
    %v7100 = vpack.c.b16 %v5602, %v5595
    %v7101 = vpack.c.b16 %v5603, %v5596
    %v7102 = vpack.c.b16 %v5604, %v5597
    %v7103 = vpack.c.b16 %v5605, %v5598
    %v7104 = vpack.c.b16 %v5606, %v5599
    %v7105 = vpack.c.b16 %v5614, %v5607
    %v7106 = vpack.c.b16 %v5615, %v5608
    %v7107 = vpack.c.b16 %v5616, %v5609
    %v7108 = vpack.c.b16 %v5617, %v5610
    %v7109 = vpack.c.b16 %v5618, %v5611
    %v7110 = vpack.c.b16 %v5619, %v5612
    %v7111 = vpack.c.b16 %v5620, %v5613
    %v7112 = vpack.c.b16 %v5628, %v5621
    %v7113 = vpack.c.b16 %v5629, %v5622
    %v7114 = vpack.c.b16 %v5630, %v5623
    %v7115 = vpack.c.b16 %v5631, %v5624
    %v7116 = vpack.c.b16 %v5632, %v5625
    %v7117 = vpack.c.b16 %v5633, %v5626
    %v7118 = vpack.c.b16 %v5634, %v5627
    %v7119 = vpack.c.b16 %v5642, %v5635
    %v7120 = vpack.c.b16 %v5643, %v5636
    %v7121 = vpack.c.b16 %v5644, %v5637
    %v7122 = vpack.c.b16 %v5645, %v5638
    %v7123 = vpack.c.b16 %v5646, %v5639
    %v7124 = vpack.c.b16 %v5647, %v5640
    %v7125 = vpack.c.b16 %v5648, %v5641
    %v7126 = vpack.c.b16 %v5656, %v5649
    %v7127 = vpack.c.b16 %v5657, %v5650
    %v7128 = vpack.c.b16 %v5658, %v5651
    %v7129 = vpack.c.b16 %v5659, %v5652
    %v7130 = vpack.c.b16 %v5660, %v5653
    %v7131 = vpack.c.b16 %v5661, %v5654
    %v7132 = vpack.c.b16 %v5662, %v5655
    %v7133 = vpack.c.b16 %v5670, %v5663
    %v7134 = vpack.c.b16 %v5671, %v5664
    %v7135 = vpack.c.b16 %v5672, %v5665
    %v7136 = vpack.c.b16 %v5673, %v5666
    %v7137 = vpack.c.b16 %v5674, %v5667
    %v7138 = vpack.c.b16 %v5675, %v5668
    %v7139 = vpack.c.b16 %v5676, %v5669
    %v7140 = vpack.c.b16 %v5684, %v5677
    %v7141 = vpack.c.b16 %v5685, %v5678
    %v7142 = vpack.c.b16 %v5686, %v5679
    %v7143 = vpack.c.b16 %v5687, %v5680
    %v7144 = vpack.c.b16 %v5688, %v5681
    %v7145 = vpack.c.b16 %v5689, %v5682
    %v7146 = vpack.c.b16 %v5690, %v5683
    %v7147 = vpack.c.b16 %v5698, %v5691
    %v7148 = vpack.c.b16 %v5699, %v5692
    %v7149 = vpack.c.b16 %v5700, %v5693
    %v7150 = vpack.c.b16 %v5701, %v5694
    %v7151 = vpack.c.b16 %v5702, %v5695
    %v7152 = vpack.c.b16 %v5703, %v5696
    %v7153 = vpack.c.b16 %v5704, %v5697
    %v7154 = vpack.c.b16 %v5712, %v5705
    %v7155 = vpack.c.b16 %v5713, %v5706
    %v7156 = vpack.c.b16 %v5714, %v5707
    %v7157 = vpack.c.b16 %v5715, %v5708
    %v7158 = vpack.c.b16 %v5716, %v5709
    %v7159 = vpack.c.b16 %v5717, %v5710
    %v7160 = vpack.c.b16 %v5718, %v5711
    %v7161 = vpack.c.b16 %v5726, %v5719
    %v7162 = vpack.c.b16 %v5727, %v5720
    %v7163 = vpack.c.b16 %v5728, %v5721
    %v7164 = vpack.c.b16 %v5729, %v5722
    %v7165 = vpack.c.b16 %v5730, %v5723
    %v7166 = vpack.c.b16 %v5731, %v5724
    %v7167 = vpack.c.b16 %v5732, %v5725
    %v7168 = vpack.c.b16 %v5740, %v5733
    %v7169 = vpack.c.b16 %v5741, %v5734
    %v7170 = vpack.c.b16 %v5742, %v5735
    %v7171 = vpack.c.b16 %v5743, %v5736
    %v7172 = vpack.c.b16 %v5744, %v5737
    %v7173 = vpack.c.b16 %v5745, %v5738
    %v7174 = vpack.c.b16 %v5746, %v5739
    %v7175 = vpack.c.b16 %v5754, %v5747
    %v7176 = vpack.c.b16 %v5755, %v5748
    %v7177 = vpack.c.b16 %v5756, %v5749
    %v7178 = vpack.c.b16 %v5757, %v5750
    %v7179 = vpack.c.b16 %v5758, %v5751
    %v7180 = vpack.c.b16 %v5759, %v5752
    %v7181 = vpack.c.b16 %v5760, %v5753
    %v7182 = vpack.c.b16 %v5768, %v5761
    %v7183 = vpack.c.b16 %v5769, %v5762
    %v7184 = vpack.c.b16 %v5770, %v5763
    %v7185 = vpack.c.b16 %v5771, %v5764
    %v7186 = vpack.c.b16 %v5772, %v5765
    %v7187 = vpack.c.b16 %v5773, %v5766
    %v7188 = vpack.c.b16 %v5774, %v5767
    %v7189 = vpack.c.b16 %v5782, %v5775
    %v7190 = vpack.c.b16 %v5783, %v5776
    %v7191 = vpack.c.b16 %v5784, %v5777
    %v7192 = vpack.c.b16 %v5785, %v5778
    %v7193 = vpack.c.b16 %v5786, %v5779
    %v7194 = vpack.c.b16 %v5787, %v5780
    %v7195 = vpack.c.b16 %v5788, %v5781
    %v7196 = vpack.c.b16 %v5796, %v5789
    %v7197 = vpack.c.b16 %v5797, %v5790
    %v7198 = vpack.c.b16 %v5798, %v5791
    %v7199 = vpack.c.b16 %v5799, %v5792
    %v7200 = vpack.c.b16 %v5800, %v5793
    %v7201 = vpack.c.b16 %v5801, %v5794
    %v7202 = vpack.c.b16 %v5802, %v5795
    %v7203 = vpack.c.b16 %v5810, %v5803
    %v7204 = vpack.c.b16 %v5811, %v5804
    %v7205 = vpack.c.b16 %v5812, %v5805
    %v7206 = vpack.c.b16 %v5813, %v5806
    %v7207 = vpack.c.b16 %v5814, %v5807
    %v7208 = vpack.c.b16 %v5815, %v5808
    %v7209 = vpack.c.b16 %v5816, %v5809
    %v7210 = vpack.c.b16 %v5824, %v5817
    %v7211 = vpack.c.b16 %v5825, %v5818
    %v7212 = vpack.c.b16 %v5826, %v5819
    %v7213 = vpack.c.b16 %v5827, %v5820
    %v7214 = vpack.c.b16 %v5828, %v5821
    %v7215 = vpack.c.b16 %v5829, %v5822
    %v7216 = vpack.c.b16 %v5830, %v5823
    %v7217 = vpack.c.b16 %v5838, %v5831
    %v7218 = vpack.c.b16 %v5839, %v5832
    %v7219 = vpack.c.b16 %v5840, %v5833
    %v7220 = vpack.c.b16 %v5841, %v5834
    %v7221 = vpack.c.b16 %v5842, %v5835
    %v7222 = vpack.c.b16 %v5843, %v5836
    %v7223 = vpack.c.b16 %v5844, %v5837
    %v7224 = vpack.c.b16 %v5852, %v5845
    %v7225 = vpack.c.b16 %v5853, %v5846
    %v7226 = vpack.c.b16 %v5854, %v5847
    %v7227 = vpack.c.b16 %v5855, %v5848
    %v7228 = vpack.c.b16 %v5856, %v5849
    %v7229 = vpack.c.b16 %v5857, %v5850
    %v7230 = vpack.c.b16 %v5858, %v5851
    %v7231 = vpack.c.b16 %v5866, %v5859
    %v7232 = vpack.c.b16 %v5867, %v5860
    %v7233 = vpack.c.b16 %v5868, %v5861
    %v7234 = vpack.c.b16 %v5869, %v5862
    %v7235 = vpack.c.b16 %v5870, %v5863
    %v7236 = vpack.c.b16 %v5871, %v5864
    %v7237 = vpack.c.b16 %v5872, %v5865
    %v7238 = vpack.c.b16 %v5880, %v5873
    %v7239 = vpack.c.b16 %v5881, %v5874
    %v7240 = vpack.c.b16 %v5882, %v5875
    %v7241 = vpack.c.b16 %v5883, %v5876
    %v7242 = vpack.c.b16 %v5884, %v5877
    %v7243 = vpack.c.b16 %v5885, %v5878
    %v7244 = vpack.c.b16 %v5886, %v5879
    %v7245 = vpack.c.b16 %v5894, %v5887
    %v7246 = vpack.c.b16 %v5895, %v5888
    %v7247 = vpack.c.b16 %v5896, %v5889
    %v7248 = vpack.c.b16 %v5897, %v5890
    %v7249 = vpack.c.b16 %v5898, %v5891
    %v7250 = vpack.c.b16 %v5899, %v5892
    %v7251 = vpack.c.b16 %v5900, %v5893
    %v7252 = vpack.c.b16 %v5908, %v5901
    %v7253 = vpack.c.b16 %v5909, %v5902
    %v7254 = vpack.c.b16 %v5910, %v5903
    %v7255 = vpack.c.b16 %v5911, %v5904
    %v7256 = vpack.c.b16 %v5912, %v5905
    %v7257 = vpack.c.b16 %v5913, %v5906
    %v7258 = vpack.c.b16 %v5914, %v5907
    %8603 = vmatpush.bf16.msra.mxu0 %v5964
    %8604 = vmatpush.bf16.msra.mxu0 %v5957
    %8605 = vmatpush.bf16.msra.mxu0 %v5950
    %8606 = vmatpush.bf16.msra.mxu0 %v5943
    %8607 = vmatpush.bf16.msra.mxu0 %v5936
    %8608 = vmatpush.bf16.msra.mxu0 %v5929
    %8609 = vmatpush.bf16.msra.mxu0 %v5922
    %8610 = vmatpush.bf16.msra.mxu0 %v5915
    %8611 = vmatmul.bf16.gmra.mxu0 %v1647
    %v8612 = vpop.f32.mrf.mxu0
    %v8613 = vadd.f32 %v1677, %v8612
    %v8614 = vpop.f32.mrf.mxu0
    %8615 = vdwg.mxu0
    %8616 = vmatpush.bf16.msra.mxu0 %v6020
    %8617 = vmatpush.bf16.msra.mxu0 %v6013
    %8618 = vmatpush.bf16.msra.mxu0 %v6006
    %8619 = vmatpush.bf16.msra.mxu0 %v5999
    %8620 = vmatpush.bf16.msra.mxu0 %v5992
    %8621 = vmatpush.bf16.msra.mxu0 %v5985
    %8622 = vmatpush.bf16.msra.mxu0 %v5978
    %8623 = vmatpush.bf16.msra.mxu0 %v5971
    %8624 = vmatmul.bf16.gmra.mxu0 %v1648
    %v8625 = vpop.f32.mrf.mxu0
    %v8626 = vadd.f32 %v8613, %v8625
    %v8627 = vpop.f32.mrf.mxu0
    %8628 = vdwg.mxu0
    %8629 = vmatpush.bf16.msra.mxu0 %v6076
    %8630 = vmatpush.bf16.msra.mxu0 %v6069
    %8631 = vmatpush.bf16.msra.mxu0 %v6062
    %8632 = vmatpush.bf16.msra.mxu0 %v6055
    %8633 = vmatpush.bf16.msra.mxu0 %v6048
    %8634 = vmatpush.bf16.msra.mxu0 %v6041
    %8635 = vmatpush.bf16.msra.mxu0 %v6034
    %8636 = vmatpush.bf16.msra.mxu0 %v6027
    %8637 = vmatmul.bf16.gmra.mxu0 %v1649
    %v8638 = vpop.f32.mrf.mxu0
    %v8639 = vadd.f32 %v8626, %v8638
    %v8640 = vpop.f32.mrf.mxu0
    %8641 = vdwg.mxu0
    %8642 = vmatpush.bf16.msra.mxu0 %v6132
    %8643 = vmatpush.bf16.msra.mxu0 %v6125
    %8644 = vmatpush.bf16.msra.mxu0 %v6118
    %8645 = vmatpush.bf16.msra.mxu0 %v6111
    %8646 = vmatpush.bf16.msra.mxu0 %v6104
    %8647 = vmatpush.bf16.msra.mxu0 %v6097
    %8648 = vmatpush.bf16.msra.mxu0 %v6090
    %8649 = vmatpush.bf16.msra.mxu0 %v6083
    %8650 = vmatmul.bf16.gmra.mxu0 %v1650
    %v8651 = vpop.f32.mrf.mxu0
    %v8652 = vadd.f32 %v8639, %v8651
    %v8653 = vpop.f32.mrf.mxu0
    %8654 = vdwg.mxu0
    %8655 = vmatpush.bf16.msra.mxu0 %v6188
    %8656 = vmatpush.bf16.msra.mxu0 %v6181
    %8657 = vmatpush.bf16.msra.mxu0 %v6174
    %8658 = vmatpush.bf16.msra.mxu0 %v6167
    %8659 = vmatpush.bf16.msra.mxu0 %v6160
    %8660 = vmatpush.bf16.msra.mxu0 %v6153
    %8661 = vmatpush.bf16.msra.mxu0 %v6146
    %8662 = vmatpush.bf16.msra.mxu0 %v6139
    %8663 = vmatmul.bf16.gmra.mxu0 %v1651
    %v8664 = vpop.f32.mrf.mxu0
    %v8665 = vadd.f32 %v8652, %v8664
    %v8666 = vpop.f32.mrf.mxu0
    %8667 = vdwg.mxu0
    %8668 = vmatpush.bf16.msra.mxu0 %v6244
    %8669 = vmatpush.bf16.msra.mxu0 %v6237
    %8670 = vmatpush.bf16.msra.mxu0 %v6230
    %8671 = vmatpush.bf16.msra.mxu0 %v6223
    %8672 = vmatpush.bf16.msra.mxu0 %v6216
    %8673 = vmatpush.bf16.msra.mxu0 %v6209
    %8674 = vmatpush.bf16.msra.mxu0 %v6202
    %8675 = vmatpush.bf16.msra.mxu0 %v6195
    %8676 = vmatmul.bf16.gmra.mxu0 %v1652
    %v8677 = vpop.f32.mrf.mxu0
    %v8678 = vadd.f32 %v8665, %v8677
    %v8679 = vpop.f32.mrf.mxu0
    %8680 = vdwg.mxu0
    %8681 = vmatpush.bf16.msra.mxu0 %v6300
    %8682 = vmatpush.bf16.msra.mxu0 %v6293
    %8683 = vmatpush.bf16.msra.mxu0 %v6286
    %8684 = vmatpush.bf16.msra.mxu0 %v6279
    %8685 = vmatpush.bf16.msra.mxu0 %v6272
    %8686 = vmatpush.bf16.msra.mxu0 %v6265
    %8687 = vmatpush.bf16.msra.mxu0 %v6258
    %8688 = vmatpush.bf16.msra.mxu0 %v6251
    %8689 = vmatmul.bf16.gmra.mxu0 %v1653
    %v8690 = vpop.f32.mrf.mxu0
    %v8691 = vadd.f32 %v8678, %v8690
    %v8692 = vpop.f32.mrf.mxu0
    %8693 = vdwg.mxu0
    %8694 = vmatpush.bf16.msra.mxu0 %v6356
    %8695 = vmatpush.bf16.msra.mxu0 %v6349
    %8696 = vmatpush.bf16.msra.mxu0 %v6342
    %8697 = vmatpush.bf16.msra.mxu0 %v6335
    %8698 = vmatpush.bf16.msra.mxu0 %v6328
    %8699 = vmatpush.bf16.msra.mxu0 %v6321
    %8700 = vmatpush.bf16.msra.mxu0 %v6314
    %8701 = vmatpush.bf16.msra.mxu0 %v6307
    %8702 = vmatmul.bf16.gmra.mxu0 %v1654
    %v8703 = vpop.f32.mrf.mxu0
    %v8704 = vadd.f32 %v8691, %v8703
    %v8705 = vpop.f32.mrf.mxu0
    %8706 = vdwg.mxu0
    %8707 = vmatpush.bf16.msra.mxu0 %v6412
    %8708 = vmatpush.bf16.msra.mxu0 %v6405
    %8709 = vmatpush.bf16.msra.mxu0 %v6398
    %8710 = vmatpush.bf16.msra.mxu0 %v6391
    %8711 = vmatpush.bf16.msra.mxu0 %v6384
    %8712 = vmatpush.bf16.msra.mxu0 %v6377
    %8713 = vmatpush.bf16.msra.mxu0 %v6370
    %8714 = vmatpush.bf16.msra.mxu0 %v6363
    %8715 = vmatmul.bf16.gmra.mxu0 %v1655
    %v8716 = vpop.f32.mrf.mxu0
    %v8717 = vadd.f32 %v8704, %v8716
    %v8718 = vpop.f32.mrf.mxu0
    %8719 = vdwg.mxu0
    %8720 = vmatpush.bf16.msra.mxu0 %v6468
    %8721 = vmatpush.bf16.msra.mxu0 %v6461
    %8722 = vmatpush.bf16.msra.mxu0 %v6454
    %8723 = vmatpush.bf16.msra.mxu0 %v6447
    %8724 = vmatpush.bf16.msra.mxu0 %v6440
    %8725 = vmatpush.bf16.msra.mxu0 %v6433
    %8726 = vmatpush.bf16.msra.mxu0 %v6426
    %8727 = vmatpush.bf16.msra.mxu0 %v6419
    %8728 = vmatmul.bf16.gmra.mxu0 %v1656
    %v8729 = vpop.f32.mrf.mxu0
    %v8730 = vadd.f32 %v8717, %v8729
    %v8731 = vpop.f32.mrf.mxu0
    %8732 = vdwg.mxu0
    %8733 = vmatpush.bf16.msra.mxu0 %v6524
    %8734 = vmatpush.bf16.msra.mxu0 %v6517
    %8735 = vmatpush.bf16.msra.mxu0 %v6510
    %8736 = vmatpush.bf16.msra.mxu0 %v6503
    %8737 = vmatpush.bf16.msra.mxu0 %v6496
    %8738 = vmatpush.bf16.msra.mxu0 %v6489
    %8739 = vmatpush.bf16.msra.mxu0 %v6482
    %8740 = vmatpush.bf16.msra.mxu0 %v6475
    %8741 = vmatmul.bf16.gmra.mxu0 %v1657
    %v8742 = vpop.f32.mrf.mxu0
    %v8743 = vadd.f32 %v8730, %v8742
    %v8744 = vpop.f32.mrf.mxu0
    %8745 = vdwg.mxu0
    %8746 = vmatpush.bf16.msra.mxu0 %v6580
    %8747 = vmatpush.bf16.msra.mxu0 %v6573
    %8748 = vmatpush.bf16.msra.mxu0 %v6566
    %8749 = vmatpush.bf16.msra.mxu0 %v6559
    %8750 = vmatpush.bf16.msra.mxu0 %v6552
    %8751 = vmatpush.bf16.msra.mxu0 %v6545
    %8752 = vmatpush.bf16.msra.mxu0 %v6538
    %8753 = vmatpush.bf16.msra.mxu0 %v6531
    %8754 = vmatmul.bf16.gmra.mxu0 %v1658
    %v8755 = vpop.f32.mrf.mxu0
    %v8756 = vadd.f32 %v8743, %v8755
    %v8757 = vpop.f32.mrf.mxu0
    %8758 = vdwg.mxu0
    %8759 = vmatpush.bf16.msra.mxu0 %v6636
    %8760 = vmatpush.bf16.msra.mxu0 %v6629
    %8761 = vmatpush.bf16.msra.mxu0 %v6622
    %8762 = vmatpush.bf16.msra.mxu0 %v6615
    %8763 = vmatpush.bf16.msra.mxu0 %v6608
    %8764 = vmatpush.bf16.msra.mxu0 %v6601
    %8765 = vmatpush.bf16.msra.mxu0 %v6594
    %8766 = vmatpush.bf16.msra.mxu0 %v6587
    %8767 = vmatmul.bf16.gmra.mxu0 %v1659
    %v8768 = vpop.f32.mrf.mxu0
    %v8769 = vadd.f32 %v8756, %v8768
    %v8770 = vpop.f32.mrf.mxu0
    %8771 = vdwg.mxu0
    %8772 = vmatpush.bf16.msra.mxu0 %v6692
    %8773 = vmatpush.bf16.msra.mxu0 %v6685
    %8774 = vmatpush.bf16.msra.mxu0 %v6678
    %8775 = vmatpush.bf16.msra.mxu0 %v6671
    %8776 = vmatpush.bf16.msra.mxu0 %v6664
    %8777 = vmatpush.bf16.msra.mxu0 %v6657
    %8778 = vmatpush.bf16.msra.mxu0 %v6650
    %8779 = vmatpush.bf16.msra.mxu0 %v6643
    %8780 = vmatmul.bf16.gmra.mxu0 %v1660
    %v8781 = vpop.f32.mrf.mxu0
    %v8782 = vadd.f32 %v8769, %v8781
    %v8783 = vpop.f32.mrf.mxu0
    %8784 = vdwg.mxu0
    %8785 = vmatpush.bf16.msra.mxu0 %v6748
    %8786 = vmatpush.bf16.msra.mxu0 %v6741
    %8787 = vmatpush.bf16.msra.mxu0 %v6734
    %8788 = vmatpush.bf16.msra.mxu0 %v6727
    %8789 = vmatpush.bf16.msra.mxu0 %v6720
    %8790 = vmatpush.bf16.msra.mxu0 %v6713
    %8791 = vmatpush.bf16.msra.mxu0 %v6706
    %8792 = vmatpush.bf16.msra.mxu0 %v6699
    %8793 = vmatmul.bf16.gmra.mxu0 %v1661
    %v8794 = vpop.f32.mrf.mxu0
    %v8795 = vadd.f32 %v8782, %v8794
    %v8796 = vpop.f32.mrf.mxu0
    %8797 = vdwg.mxu0
    %8798 = vmatpush.bf16.msra.mxu0 %v6804
    %8799 = vmatpush.bf16.msra.mxu0 %v6797
    %8800 = vmatpush.bf16.msra.mxu0 %v6790
    %8801 = vmatpush.bf16.msra.mxu0 %v6783
    %8802 = vmatpush.bf16.msra.mxu0 %v6776
    %8803 = vmatpush.bf16.msra.mxu0 %v6769
    %8804 = vmatpush.bf16.msra.mxu0 %v6762
    %8805 = vmatpush.bf16.msra.mxu0 %v6755
    %8806 = vmatmul.bf16.gmra.mxu0 %v1662
    %v8807 = vpop.f32.mrf.mxu0
    %v8808 = vadd.f32 %v8795, %v8807
    %v8809 = vpop.f32.mrf.mxu0
    %8810 = vdwg.mxu0
    %8811 = vmatpush.bf16.msra.mxu0 %v6860
    %8812 = vmatpush.bf16.msra.mxu0 %v6853
    %8813 = vmatpush.bf16.msra.mxu0 %v6846
    %8814 = vmatpush.bf16.msra.mxu0 %v6839
    %8815 = vmatpush.bf16.msra.mxu0 %v6832
    %8816 = vmatpush.bf16.msra.mxu0 %v6825
    %8817 = vmatpush.bf16.msra.mxu0 %v6818
    %8818 = vmatpush.bf16.msra.mxu0 %v6811
    %8819 = vmatmul.bf16.gmra.mxu0 %v1663
    %v8820 = vpop.f32.mrf.mxu0
    %v8821 = vadd.f32 %v8808, %v8820
    %v8822 = vpop.f32.mrf.mxu0
    %8823 = vdwg.mxu0
    %8824 = vmatpush.bf16.msra.mxu0 %v6916
    %8825 = vmatpush.bf16.msra.mxu0 %v6909
    %8826 = vmatpush.bf16.msra.mxu0 %v6902
    %8827 = vmatpush.bf16.msra.mxu0 %v6895
    %8828 = vmatpush.bf16.msra.mxu0 %v6888
    %8829 = vmatpush.bf16.msra.mxu0 %v6881
    %8830 = vmatpush.bf16.msra.mxu0 %v6874
    %8831 = vmatpush.bf16.msra.mxu0 %v6867
    %8832 = vmatmul.bf16.gmra.mxu0 %v1664
    %v8833 = vpop.f32.mrf.mxu0
    %v8834 = vadd.f32 %v8821, %v8833
    %v8835 = vpop.f32.mrf.mxu0
    %8836 = vdwg.mxu0
    %8837 = vmatpush.bf16.msra.mxu0 %v6972
    %8838 = vmatpush.bf16.msra.mxu0 %v6965
    %8839 = vmatpush.bf16.msra.mxu0 %v6958
    %8840 = vmatpush.bf16.msra.mxu0 %v6951
    %8841 = vmatpush.bf16.msra.mxu0 %v6944
    %8842 = vmatpush.bf16.msra.mxu0 %v6937
    %8843 = vmatpush.bf16.msra.mxu0 %v6930
    %8844 = vmatpush.bf16.msra.mxu0 %v6923
    %8845 = vmatmul.bf16.gmra.mxu0 %v1665
    %v8846 = vpop.f32.mrf.mxu0
    %v8847 = vadd.f32 %v8834, %v8846
    %v8848 = vpop.f32.mrf.mxu0
    %8849 = vdwg.mxu0
    %8850 = vmatpush.bf16.msra.mxu0 %v7028
    %8851 = vmatpush.bf16.msra.mxu0 %v7021
    %8852 = vmatpush.bf16.msra.mxu0 %v7014
    %8853 = vmatpush.bf16.msra.mxu0 %v7007
    %8854 = vmatpush.bf16.msra.mxu0 %v7000
    %8855 = vmatpush.bf16.msra.mxu0 %v6993
    %8856 = vmatpush.bf16.msra.mxu0 %v6986
    %8857 = vmatpush.bf16.msra.mxu0 %v6979
    %8858 = vmatmul.bf16.gmra.mxu0 %v1666
    %v8859 = vpop.f32.mrf.mxu0
    %v8860 = vadd.f32 %v8847, %v8859
    %v8861 = vpop.f32.mrf.mxu0
    %8862 = vdwg.mxu0
    %8863 = vmatpush.bf16.msra.mxu0 %v7084
    %8864 = vmatpush.bf16.msra.mxu0 %v7077
    %8865 = vmatpush.bf16.msra.mxu0 %v7070
    %8866 = vmatpush.bf16.msra.mxu0 %v7063
    %8867 = vmatpush.bf16.msra.mxu0 %v7056
    %8868 = vmatpush.bf16.msra.mxu0 %v7049
    %8869 = vmatpush.bf16.msra.mxu0 %v7042
    %8870 = vmatpush.bf16.msra.mxu0 %v7035
    %8871 = vmatmul.bf16.gmra.mxu0 %v1667
    %v8872 = vpop.f32.mrf.mxu0
    %v8873 = vadd.f32 %v8860, %v8872
    %v8874 = vpop.f32.mrf.mxu0
    %8875 = vdwg.mxu0
    %8876 = vmatpush.bf16.msra.mxu0 %v7140
    %8877 = vmatpush.bf16.msra.mxu0 %v7133
    %8878 = vmatpush.bf16.msra.mxu0 %v7126
    %8879 = vmatpush.bf16.msra.mxu0 %v7119
    %8880 = vmatpush.bf16.msra.mxu0 %v7112
    %8881 = vmatpush.bf16.msra.mxu0 %v7105
    %8882 = vmatpush.bf16.msra.mxu0 %v7098
    %8883 = vmatpush.bf16.msra.mxu0 %v7091
    %8884 = vmatmul.bf16.gmra.mxu0 %v1668
    %v8885 = vpop.f32.mrf.mxu0
    %v8886 = vadd.f32 %v8873, %v8885
    %v8887 = vpop.f32.mrf.mxu0
    %8888 = vdwg.mxu0
    %8889 = vmatpush.bf16.msra.mxu0 %v7196
    %8890 = vmatpush.bf16.msra.mxu0 %v7189
    %8891 = vmatpush.bf16.msra.mxu0 %v7182
    %8892 = vmatpush.bf16.msra.mxu0 %v7175
    %8893 = vmatpush.bf16.msra.mxu0 %v7168
    %8894 = vmatpush.bf16.msra.mxu0 %v7161
    %8895 = vmatpush.bf16.msra.mxu0 %v7154
    %8896 = vmatpush.bf16.msra.mxu0 %v7147
    %8897 = vmatmul.bf16.gmra.mxu0 %v1669
    %v8898 = vpop.f32.mrf.mxu0
    %v8899 = vadd.f32 %v8886, %v8898
    %v8900 = vpop.f32.mrf.mxu0
    %8901 = vdwg.mxu0
    %8902 = vmatpush.bf16.msra.mxu0 %v7252
    %8903 = vmatpush.bf16.msra.mxu0 %v7245
    %8904 = vmatpush.bf16.msra.mxu0 %v7238
    %8905 = vmatpush.bf16.msra.mxu0 %v7231
    %8906 = vmatpush.bf16.msra.mxu0 %v7224
    %8907 = vmatpush.bf16.msra.mxu0 %v7217
    %8908 = vmatpush.bf16.msra.mxu0 %v7210
    %8909 = vmatpush.bf16.msra.mxu0 %v7203
    %8910 = vmatmul.bf16.gmra.mxu0 %v1670
    %v8911 = vpop.f32.mrf.mxu0
    %v8912 = vadd.f32 %v8899, %v8911
    %v8913 = vpop.f32.mrf.mxu0
    %8914 = vdwg.mxu0
    %8915 = vmatpush.bf16.msra.mxu0 %v5965
    %8916 = vmatpush.bf16.msra.mxu0 %v5958
    %8917 = vmatpush.bf16.msra.mxu0 %v5951
    %8918 = vmatpush.bf16.msra.mxu0 %v5944
    %8919 = vmatpush.bf16.msra.mxu0 %v5937
    %8920 = vmatpush.bf16.msra.mxu0 %v5930
    %8921 = vmatpush.bf16.msra.mxu0 %v5923
    %8922 = vmatpush.bf16.msra.mxu0 %v5916
    %8923 = vmatmul.bf16.gmra.mxu0 %v1647
    %v8924 = vpop.f32.mrf.mxu0
    %v8925 = vadd.f32 %v1678, %v8924
    %v8926 = vpop.f32.mrf.mxu0
    %8927 = vdwg.mxu0
    %8928 = vmatpush.bf16.msra.mxu0 %v6021
    %8929 = vmatpush.bf16.msra.mxu0 %v6014
    %8930 = vmatpush.bf16.msra.mxu0 %v6007
    %8931 = vmatpush.bf16.msra.mxu0 %v6000
    %8932 = vmatpush.bf16.msra.mxu0 %v5993
    %8933 = vmatpush.bf16.msra.mxu0 %v5986
    %8934 = vmatpush.bf16.msra.mxu0 %v5979
    %8935 = vmatpush.bf16.msra.mxu0 %v5972
    %8936 = vmatmul.bf16.gmra.mxu0 %v1648
    %v8937 = vpop.f32.mrf.mxu0
    %v8938 = vadd.f32 %v8925, %v8937
    %v8939 = vpop.f32.mrf.mxu0
    %8940 = vdwg.mxu0
    %8941 = vmatpush.bf16.msra.mxu0 %v6077
    %8942 = vmatpush.bf16.msra.mxu0 %v6070
    %8943 = vmatpush.bf16.msra.mxu0 %v6063
    %8944 = vmatpush.bf16.msra.mxu0 %v6056
    %8945 = vmatpush.bf16.msra.mxu0 %v6049
    %8946 = vmatpush.bf16.msra.mxu0 %v6042
    %8947 = vmatpush.bf16.msra.mxu0 %v6035
    %8948 = vmatpush.bf16.msra.mxu0 %v6028
    %8949 = vmatmul.bf16.gmra.mxu0 %v1649
    %v8950 = vpop.f32.mrf.mxu0
    %v8951 = vadd.f32 %v8938, %v8950
    %v8952 = vpop.f32.mrf.mxu0
    %8953 = vdwg.mxu0
    %8954 = vmatpush.bf16.msra.mxu0 %v6133
    %8955 = vmatpush.bf16.msra.mxu0 %v6126
    %8956 = vmatpush.bf16.msra.mxu0 %v6119
    %8957 = vmatpush.bf16.msra.mxu0 %v6112
    %8958 = vmatpush.bf16.msra.mxu0 %v6105
    %8959 = vmatpush.bf16.msra.mxu0 %v6098
    %8960 = vmatpush.bf16.msra.mxu0 %v6091
    %8961 = vmatpush.bf16.msra.mxu0 %v6084
    %8962 = vmatmul.bf16.gmra.mxu0 %v1650
    %v8963 = vpop.f32.mrf.mxu0
    %v8964 = vadd.f32 %v8951, %v8963
    %v8965 = vpop.f32.mrf.mxu0
    %8966 = vdwg.mxu0
    %8967 = vmatpush.bf16.msra.mxu0 %v6189
    %8968 = vmatpush.bf16.msra.mxu0 %v6182
    %8969 = vmatpush.bf16.msra.mxu0 %v6175
    %8970 = vmatpush.bf16.msra.mxu0 %v6168
    %8971 = vmatpush.bf16.msra.mxu0 %v6161
    %8972 = vmatpush.bf16.msra.mxu0 %v6154
    %8973 = vmatpush.bf16.msra.mxu0 %v6147
    %8974 = vmatpush.bf16.msra.mxu0 %v6140
    %8975 = vmatmul.bf16.gmra.mxu0 %v1651
    %v8976 = vpop.f32.mrf.mxu0
    %v8977 = vadd.f32 %v8964, %v8976
    %v8978 = vpop.f32.mrf.mxu0
    %8979 = vdwg.mxu0
    %8980 = vmatpush.bf16.msra.mxu0 %v6245
    %8981 = vmatpush.bf16.msra.mxu0 %v6238
    %8982 = vmatpush.bf16.msra.mxu0 %v6231
    %8983 = vmatpush.bf16.msra.mxu0 %v6224
    %8984 = vmatpush.bf16.msra.mxu0 %v6217
    %8985 = vmatpush.bf16.msra.mxu0 %v6210
    %8986 = vmatpush.bf16.msra.mxu0 %v6203
    %8987 = vmatpush.bf16.msra.mxu0 %v6196
    %8988 = vmatmul.bf16.gmra.mxu0 %v1652
    %v8989 = vpop.f32.mrf.mxu0
    %v8990 = vadd.f32 %v8977, %v8989
    %v8991 = vpop.f32.mrf.mxu0
    %8992 = vdwg.mxu0
    %8993 = vmatpush.bf16.msra.mxu0 %v6301
    %8994 = vmatpush.bf16.msra.mxu0 %v6294
    %8995 = vmatpush.bf16.msra.mxu0 %v6287
    %8996 = vmatpush.bf16.msra.mxu0 %v6280
    %8997 = vmatpush.bf16.msra.mxu0 %v6273
    %8998 = vmatpush.bf16.msra.mxu0 %v6266
    %8999 = vmatpush.bf16.msra.mxu0 %v6259
    %9000 = vmatpush.bf16.msra.mxu0 %v6252
    %9001 = vmatmul.bf16.gmra.mxu0 %v1653
    %v9002 = vpop.f32.mrf.mxu0
    %v9003 = vadd.f32 %v8990, %v9002
    %v9004 = vpop.f32.mrf.mxu0
    %9005 = vdwg.mxu0
    %9006 = vmatpush.bf16.msra.mxu0 %v6357
    %9007 = vmatpush.bf16.msra.mxu0 %v6350
    %9008 = vmatpush.bf16.msra.mxu0 %v6343
    %9009 = vmatpush.bf16.msra.mxu0 %v6336
    %9010 = vmatpush.bf16.msra.mxu0 %v6329
    %9011 = vmatpush.bf16.msra.mxu0 %v6322
    %9012 = vmatpush.bf16.msra.mxu0 %v6315
    %9013 = vmatpush.bf16.msra.mxu0 %v6308
    %9014 = vmatmul.bf16.gmra.mxu0 %v1654
    %v9015 = vpop.f32.mrf.mxu0
    %v9016 = vadd.f32 %v9003, %v9015
    %v9017 = vpop.f32.mrf.mxu0
    %9018 = vdwg.mxu0
    %9019 = vmatpush.bf16.msra.mxu0 %v6413
    %9020 = vmatpush.bf16.msra.mxu0 %v6406
    %9021 = vmatpush.bf16.msra.mxu0 %v6399
    %9022 = vmatpush.bf16.msra.mxu0 %v6392
    %9023 = vmatpush.bf16.msra.mxu0 %v6385
    %9024 = vmatpush.bf16.msra.mxu0 %v6378
    %9025 = vmatpush.bf16.msra.mxu0 %v6371
    %9026 = vmatpush.bf16.msra.mxu0 %v6364
    %9027 = vmatmul.bf16.gmra.mxu0 %v1655
    %v9028 = vpop.f32.mrf.mxu0
    %v9029 = vadd.f32 %v9016, %v9028
    %v9030 = vpop.f32.mrf.mxu0
    %9031 = vdwg.mxu0
    %9032 = vmatpush.bf16.msra.mxu0 %v6469
    %9033 = vmatpush.bf16.msra.mxu0 %v6462
    %9034 = vmatpush.bf16.msra.mxu0 %v6455
    %9035 = vmatpush.bf16.msra.mxu0 %v6448
    %9036 = vmatpush.bf16.msra.mxu0 %v6441
    %9037 = vmatpush.bf16.msra.mxu0 %v6434
    %9038 = vmatpush.bf16.msra.mxu0 %v6427
    %9039 = vmatpush.bf16.msra.mxu0 %v6420
    %9040 = vmatmul.bf16.gmra.mxu0 %v1656
    %v9041 = vpop.f32.mrf.mxu0
    %v9042 = vadd.f32 %v9029, %v9041
    %v9043 = vpop.f32.mrf.mxu0
    %9044 = vdwg.mxu0
    %9045 = vmatpush.bf16.msra.mxu0 %v6525
    %9046 = vmatpush.bf16.msra.mxu0 %v6518
    %9047 = vmatpush.bf16.msra.mxu0 %v6511
    %9048 = vmatpush.bf16.msra.mxu0 %v6504
    %9049 = vmatpush.bf16.msra.mxu0 %v6497
    %9050 = vmatpush.bf16.msra.mxu0 %v6490
    %9051 = vmatpush.bf16.msra.mxu0 %v6483
    %9052 = vmatpush.bf16.msra.mxu0 %v6476
    %9053 = vmatmul.bf16.gmra.mxu0 %v1657
    %v9054 = vpop.f32.mrf.mxu0
    %v9055 = vadd.f32 %v9042, %v9054
    %v9056 = vpop.f32.mrf.mxu0
    %9057 = vdwg.mxu0
    %9058 = vmatpush.bf16.msra.mxu0 %v6581
    %9059 = vmatpush.bf16.msra.mxu0 %v6574
    %9060 = vmatpush.bf16.msra.mxu0 %v6567
    %9061 = vmatpush.bf16.msra.mxu0 %v6560
    %9062 = vmatpush.bf16.msra.mxu0 %v6553
    %9063 = vmatpush.bf16.msra.mxu0 %v6546
    %9064 = vmatpush.bf16.msra.mxu0 %v6539
    %9065 = vmatpush.bf16.msra.mxu0 %v6532
    %9066 = vmatmul.bf16.gmra.mxu0 %v1658
    %v9067 = vpop.f32.mrf.mxu0
    %v9068 = vadd.f32 %v9055, %v9067
    %v9069 = vpop.f32.mrf.mxu0
    %9070 = vdwg.mxu0
    %9071 = vmatpush.bf16.msra.mxu0 %v6637
    %9072 = vmatpush.bf16.msra.mxu0 %v6630
    %9073 = vmatpush.bf16.msra.mxu0 %v6623
    %9074 = vmatpush.bf16.msra.mxu0 %v6616
    %9075 = vmatpush.bf16.msra.mxu0 %v6609
    %9076 = vmatpush.bf16.msra.mxu0 %v6602
    %9077 = vmatpush.bf16.msra.mxu0 %v6595
    %9078 = vmatpush.bf16.msra.mxu0 %v6588
    %9079 = vmatmul.bf16.gmra.mxu0 %v1659
    %v9080 = vpop.f32.mrf.mxu0
    %v9081 = vadd.f32 %v9068, %v9080
    %v9082 = vpop.f32.mrf.mxu0
    %9083 = vdwg.mxu0
    %9084 = vmatpush.bf16.msra.mxu0 %v6693
    %9085 = vmatpush.bf16.msra.mxu0 %v6686
    %9086 = vmatpush.bf16.msra.mxu0 %v6679
    %9087 = vmatpush.bf16.msra.mxu0 %v6672
    %9088 = vmatpush.bf16.msra.mxu0 %v6665
    %9089 = vmatpush.bf16.msra.mxu0 %v6658
    %9090 = vmatpush.bf16.msra.mxu0 %v6651
    %9091 = vmatpush.bf16.msra.mxu0 %v6644
    %9092 = vmatmul.bf16.gmra.mxu0 %v1660
    %v9093 = vpop.f32.mrf.mxu0
    %v9094 = vadd.f32 %v9081, %v9093
    %v9095 = vpop.f32.mrf.mxu0
    %9096 = vdwg.mxu0
    %9097 = vmatpush.bf16.msra.mxu0 %v6749
    %9098 = vmatpush.bf16.msra.mxu0 %v6742
    %9099 = vmatpush.bf16.msra.mxu0 %v6735
    %9100 = vmatpush.bf16.msra.mxu0 %v6728
    %9101 = vmatpush.bf16.msra.mxu0 %v6721
    %9102 = vmatpush.bf16.msra.mxu0 %v6714
    %9103 = vmatpush.bf16.msra.mxu0 %v6707
    %9104 = vmatpush.bf16.msra.mxu0 %v6700
    %9105 = vmatmul.bf16.gmra.mxu0 %v1661
    %v9106 = vpop.f32.mrf.mxu0
    %v9107 = vadd.f32 %v9094, %v9106
    %v9108 = vpop.f32.mrf.mxu0
    %9109 = vdwg.mxu0
    %9110 = vmatpush.bf16.msra.mxu0 %v6805
    %9111 = vmatpush.bf16.msra.mxu0 %v6798
    %9112 = vmatpush.bf16.msra.mxu0 %v6791
    %9113 = vmatpush.bf16.msra.mxu0 %v6784
    %9114 = vmatpush.bf16.msra.mxu0 %v6777
    %9115 = vmatpush.bf16.msra.mxu0 %v6770
    %9116 = vmatpush.bf16.msra.mxu0 %v6763
    %9117 = vmatpush.bf16.msra.mxu0 %v6756
    %9118 = vmatmul.bf16.gmra.mxu0 %v1662
    %v9119 = vpop.f32.mrf.mxu0
    %v9120 = vadd.f32 %v9107, %v9119
    %v9121 = vpop.f32.mrf.mxu0
    %9122 = vdwg.mxu0
    %9123 = vmatpush.bf16.msra.mxu0 %v6861
    %9124 = vmatpush.bf16.msra.mxu0 %v6854
    %9125 = vmatpush.bf16.msra.mxu0 %v6847
    %9126 = vmatpush.bf16.msra.mxu0 %v6840
    %9127 = vmatpush.bf16.msra.mxu0 %v6833
    %9128 = vmatpush.bf16.msra.mxu0 %v6826
    %9129 = vmatpush.bf16.msra.mxu0 %v6819
    %9130 = vmatpush.bf16.msra.mxu0 %v6812
    %9131 = vmatmul.bf16.gmra.mxu0 %v1663
    %v9132 = vpop.f32.mrf.mxu0
    %v9133 = vadd.f32 %v9120, %v9132
    %v9134 = vpop.f32.mrf.mxu0
    %9135 = vdwg.mxu0
    %9136 = vmatpush.bf16.msra.mxu0 %v6917
    %9137 = vmatpush.bf16.msra.mxu0 %v6910
    %9138 = vmatpush.bf16.msra.mxu0 %v6903
    %9139 = vmatpush.bf16.msra.mxu0 %v6896
    %9140 = vmatpush.bf16.msra.mxu0 %v6889
    %9141 = vmatpush.bf16.msra.mxu0 %v6882
    %9142 = vmatpush.bf16.msra.mxu0 %v6875
    %9143 = vmatpush.bf16.msra.mxu0 %v6868
    %9144 = vmatmul.bf16.gmra.mxu0 %v1664
    %v9145 = vpop.f32.mrf.mxu0
    %v9146 = vadd.f32 %v9133, %v9145
    %v9147 = vpop.f32.mrf.mxu0
    %9148 = vdwg.mxu0
    %9149 = vmatpush.bf16.msra.mxu0 %v6973
    %9150 = vmatpush.bf16.msra.mxu0 %v6966
    %9151 = vmatpush.bf16.msra.mxu0 %v6959
    %9152 = vmatpush.bf16.msra.mxu0 %v6952
    %9153 = vmatpush.bf16.msra.mxu0 %v6945
    %9154 = vmatpush.bf16.msra.mxu0 %v6938
    %9155 = vmatpush.bf16.msra.mxu0 %v6931
    %9156 = vmatpush.bf16.msra.mxu0 %v6924
    %9157 = vmatmul.bf16.gmra.mxu0 %v1665
    %v9158 = vpop.f32.mrf.mxu0
    %v9159 = vadd.f32 %v9146, %v9158
    %v9160 = vpop.f32.mrf.mxu0
    %9161 = vdwg.mxu0
    %9162 = vmatpush.bf16.msra.mxu0 %v7029
    %9163 = vmatpush.bf16.msra.mxu0 %v7022
    %9164 = vmatpush.bf16.msra.mxu0 %v7015
    %9165 = vmatpush.bf16.msra.mxu0 %v7008
    %9166 = vmatpush.bf16.msra.mxu0 %v7001
    %9167 = vmatpush.bf16.msra.mxu0 %v6994
    %9168 = vmatpush.bf16.msra.mxu0 %v6987
    %9169 = vmatpush.bf16.msra.mxu0 %v6980
    %9170 = vmatmul.bf16.gmra.mxu0 %v1666
    %v9171 = vpop.f32.mrf.mxu0
    %v9172 = vadd.f32 %v9159, %v9171
    %v9173 = vpop.f32.mrf.mxu0
    %9174 = vdwg.mxu0
    %9175 = vmatpush.bf16.msra.mxu0 %v7085
    %9176 = vmatpush.bf16.msra.mxu0 %v7078
    %9177 = vmatpush.bf16.msra.mxu0 %v7071
    %9178 = vmatpush.bf16.msra.mxu0 %v7064
    %9179 = vmatpush.bf16.msra.mxu0 %v7057
    %9180 = vmatpush.bf16.msra.mxu0 %v7050
    %9181 = vmatpush.bf16.msra.mxu0 %v7043
    %9182 = vmatpush.bf16.msra.mxu0 %v7036
    %9183 = vmatmul.bf16.gmra.mxu0 %v1667
    %v9184 = vpop.f32.mrf.mxu0
    %v9185 = vadd.f32 %v9172, %v9184
    %v9186 = vpop.f32.mrf.mxu0
    %9187 = vdwg.mxu0
    %9188 = vmatpush.bf16.msra.mxu0 %v7141
    %9189 = vmatpush.bf16.msra.mxu0 %v7134
    %9190 = vmatpush.bf16.msra.mxu0 %v7127
    %9191 = vmatpush.bf16.msra.mxu0 %v7120
    %9192 = vmatpush.bf16.msra.mxu0 %v7113
    %9193 = vmatpush.bf16.msra.mxu0 %v7106
    %9194 = vmatpush.bf16.msra.mxu0 %v7099
    %9195 = vmatpush.bf16.msra.mxu0 %v7092
    %9196 = vmatmul.bf16.gmra.mxu0 %v1668
    %v9197 = vpop.f32.mrf.mxu0
    %v9198 = vadd.f32 %v9185, %v9197
    %v9199 = vpop.f32.mrf.mxu0
    %9200 = vdwg.mxu0
    %9201 = vmatpush.bf16.msra.mxu0 %v7197
    %9202 = vmatpush.bf16.msra.mxu0 %v7190
    %9203 = vmatpush.bf16.msra.mxu0 %v7183
    %9204 = vmatpush.bf16.msra.mxu0 %v7176
    %9205 = vmatpush.bf16.msra.mxu0 %v7169
    %9206 = vmatpush.bf16.msra.mxu0 %v7162
    %9207 = vmatpush.bf16.msra.mxu0 %v7155
    %9208 = vmatpush.bf16.msra.mxu0 %v7148
    %9209 = vmatmul.bf16.gmra.mxu0 %v1669
    %v9210 = vpop.f32.mrf.mxu0
    %v9211 = vadd.f32 %v9198, %v9210
    %v9212 = vpop.f32.mrf.mxu0
    %9213 = vdwg.mxu0
    %9214 = vmatpush.bf16.msra.mxu0 %v7253
    %9215 = vmatpush.bf16.msra.mxu0 %v7246
    %9216 = vmatpush.bf16.msra.mxu0 %v7239
    %9217 = vmatpush.bf16.msra.mxu0 %v7232
    %9218 = vmatpush.bf16.msra.mxu0 %v7225
    %9219 = vmatpush.bf16.msra.mxu0 %v7218
    %9220 = vmatpush.bf16.msra.mxu0 %v7211
    %9221 = vmatpush.bf16.msra.mxu0 %v7204
    %9222 = vmatmul.bf16.gmra.mxu0 %v1670
    %v9223 = vpop.f32.mrf.mxu0
    %v9224 = vadd.f32 %v9211, %v9223
    %v9225 = vpop.f32.mrf.mxu0
    %9226 = vdwg.mxu0
    %9227 = vmatpush.bf16.msra.mxu0 %v5966
    %9228 = vmatpush.bf16.msra.mxu0 %v5959
    %9229 = vmatpush.bf16.msra.mxu0 %v5952
    %9230 = vmatpush.bf16.msra.mxu0 %v5945
    %9231 = vmatpush.bf16.msra.mxu0 %v5938
    %9232 = vmatpush.bf16.msra.mxu0 %v5931
    %9233 = vmatpush.bf16.msra.mxu0 %v5924
    %9234 = vmatpush.bf16.msra.mxu0 %v5917
    %9235 = vmatmul.bf16.gmra.mxu0 %v1647
    %v9236 = vpop.f32.mrf.mxu0
    %v9237 = vadd.f32 %v1679, %v9236
    %v9238 = vpop.f32.mrf.mxu0
    %9239 = vdwg.mxu0
    %9240 = vmatpush.bf16.msra.mxu0 %v6022
    %9241 = vmatpush.bf16.msra.mxu0 %v6015
    %9242 = vmatpush.bf16.msra.mxu0 %v6008
    %9243 = vmatpush.bf16.msra.mxu0 %v6001
    %9244 = vmatpush.bf16.msra.mxu0 %v5994
    %9245 = vmatpush.bf16.msra.mxu0 %v5987
    %9246 = vmatpush.bf16.msra.mxu0 %v5980
    %9247 = vmatpush.bf16.msra.mxu0 %v5973
    %9248 = vmatmul.bf16.gmra.mxu0 %v1648
    %v9249 = vpop.f32.mrf.mxu0
    %v9250 = vadd.f32 %v9237, %v9249
    %v9251 = vpop.f32.mrf.mxu0
    %9252 = vdwg.mxu0
    %9253 = vmatpush.bf16.msra.mxu0 %v6078
    %9254 = vmatpush.bf16.msra.mxu0 %v6071
    %9255 = vmatpush.bf16.msra.mxu0 %v6064
    %9256 = vmatpush.bf16.msra.mxu0 %v6057
    %9257 = vmatpush.bf16.msra.mxu0 %v6050
    %9258 = vmatpush.bf16.msra.mxu0 %v6043
    %9259 = vmatpush.bf16.msra.mxu0 %v6036
    %9260 = vmatpush.bf16.msra.mxu0 %v6029
    %9261 = vmatmul.bf16.gmra.mxu0 %v1649
    %v9262 = vpop.f32.mrf.mxu0
    %v9263 = vadd.f32 %v9250, %v9262
    %v9264 = vpop.f32.mrf.mxu0
    %9265 = vdwg.mxu0
    %9266 = vmatpush.bf16.msra.mxu0 %v6134
    %9267 = vmatpush.bf16.msra.mxu0 %v6127
    %9268 = vmatpush.bf16.msra.mxu0 %v6120
    %9269 = vmatpush.bf16.msra.mxu0 %v6113
    %9270 = vmatpush.bf16.msra.mxu0 %v6106
    %9271 = vmatpush.bf16.msra.mxu0 %v6099
    %9272 = vmatpush.bf16.msra.mxu0 %v6092
    %9273 = vmatpush.bf16.msra.mxu0 %v6085
    %9274 = vmatmul.bf16.gmra.mxu0 %v1650
    %v9275 = vpop.f32.mrf.mxu0
    %v9276 = vadd.f32 %v9263, %v9275
    %v9277 = vpop.f32.mrf.mxu0
    %9278 = vdwg.mxu0
    %9279 = vmatpush.bf16.msra.mxu0 %v6190
    %9280 = vmatpush.bf16.msra.mxu0 %v6183
    %9281 = vmatpush.bf16.msra.mxu0 %v6176
    %9282 = vmatpush.bf16.msra.mxu0 %v6169
    %9283 = vmatpush.bf16.msra.mxu0 %v6162
    %9284 = vmatpush.bf16.msra.mxu0 %v6155
    %9285 = vmatpush.bf16.msra.mxu0 %v6148
    %9286 = vmatpush.bf16.msra.mxu0 %v6141
    %9287 = vmatmul.bf16.gmra.mxu0 %v1651
    %v9288 = vpop.f32.mrf.mxu0
    %v9289 = vadd.f32 %v9276, %v9288
    %v9290 = vpop.f32.mrf.mxu0
    %9291 = vdwg.mxu0
    %9292 = vmatpush.bf16.msra.mxu0 %v6246
    %9293 = vmatpush.bf16.msra.mxu0 %v6239
    %9294 = vmatpush.bf16.msra.mxu0 %v6232
    %9295 = vmatpush.bf16.msra.mxu0 %v6225
    %9296 = vmatpush.bf16.msra.mxu0 %v6218
    %9297 = vmatpush.bf16.msra.mxu0 %v6211
    %9298 = vmatpush.bf16.msra.mxu0 %v6204
    %9299 = vmatpush.bf16.msra.mxu0 %v6197
    %9300 = vmatmul.bf16.gmra.mxu0 %v1652
    %v9301 = vpop.f32.mrf.mxu0
    %v9302 = vadd.f32 %v9289, %v9301
    %v9303 = vpop.f32.mrf.mxu0
    %9304 = vdwg.mxu0
    %9305 = vmatpush.bf16.msra.mxu0 %v6302
    %9306 = vmatpush.bf16.msra.mxu0 %v6295
    %9307 = vmatpush.bf16.msra.mxu0 %v6288
    %9308 = vmatpush.bf16.msra.mxu0 %v6281
    %9309 = vmatpush.bf16.msra.mxu0 %v6274
    %9310 = vmatpush.bf16.msra.mxu0 %v6267
    %9311 = vmatpush.bf16.msra.mxu0 %v6260
    %9312 = vmatpush.bf16.msra.mxu0 %v6253
    %9313 = vmatmul.bf16.gmra.mxu0 %v1653
    %v9314 = vpop.f32.mrf.mxu0
    %v9315 = vadd.f32 %v9302, %v9314
    %v9316 = vpop.f32.mrf.mxu0
    %9317 = vdwg.mxu0
    %9318 = vmatpush.bf16.msra.mxu0 %v6358
    %9319 = vmatpush.bf16.msra.mxu0 %v6351
    %9320 = vmatpush.bf16.msra.mxu0 %v6344
    %9321 = vmatpush.bf16.msra.mxu0 %v6337
    %9322 = vmatpush.bf16.msra.mxu0 %v6330
    %9323 = vmatpush.bf16.msra.mxu0 %v6323
    %9324 = vmatpush.bf16.msra.mxu0 %v6316
    %9325 = vmatpush.bf16.msra.mxu0 %v6309
    %9326 = vmatmul.bf16.gmra.mxu0 %v1654
    %v9327 = vpop.f32.mrf.mxu0
    %v9328 = vadd.f32 %v9315, %v9327
    %v9329 = vpop.f32.mrf.mxu0
    %9330 = vdwg.mxu0
    %9331 = vmatpush.bf16.msra.mxu0 %v6414
    %9332 = vmatpush.bf16.msra.mxu0 %v6407
    %9333 = vmatpush.bf16.msra.mxu0 %v6400
    %9334 = vmatpush.bf16.msra.mxu0 %v6393
    %9335 = vmatpush.bf16.msra.mxu0 %v6386
    %9336 = vmatpush.bf16.msra.mxu0 %v6379
    %9337 = vmatpush.bf16.msra.mxu0 %v6372
    %9338 = vmatpush.bf16.msra.mxu0 %v6365
    %9339 = vmatmul.bf16.gmra.mxu0 %v1655
    %v9340 = vpop.f32.mrf.mxu0
    %v9341 = vadd.f32 %v9328, %v9340
    %v9342 = vpop.f32.mrf.mxu0
    %9343 = vdwg.mxu0
    %9344 = vmatpush.bf16.msra.mxu0 %v6470
    %9345 = vmatpush.bf16.msra.mxu0 %v6463
    %9346 = vmatpush.bf16.msra.mxu0 %v6456
    %9347 = vmatpush.bf16.msra.mxu0 %v6449
    %9348 = vmatpush.bf16.msra.mxu0 %v6442
    %9349 = vmatpush.bf16.msra.mxu0 %v6435
    %9350 = vmatpush.bf16.msra.mxu0 %v6428
    %9351 = vmatpush.bf16.msra.mxu0 %v6421
    %9352 = vmatmul.bf16.gmra.mxu0 %v1656
    %v9353 = vpop.f32.mrf.mxu0
    %v9354 = vadd.f32 %v9341, %v9353
    %v9355 = vpop.f32.mrf.mxu0
    %9356 = vdwg.mxu0
    %9357 = vmatpush.bf16.msra.mxu0 %v6526
    %9358 = vmatpush.bf16.msra.mxu0 %v6519
    %9359 = vmatpush.bf16.msra.mxu0 %v6512
    %9360 = vmatpush.bf16.msra.mxu0 %v6505
    %9361 = vmatpush.bf16.msra.mxu0 %v6498
    %9362 = vmatpush.bf16.msra.mxu0 %v6491
    %9363 = vmatpush.bf16.msra.mxu0 %v6484
    %9364 = vmatpush.bf16.msra.mxu0 %v6477
    %9365 = vmatmul.bf16.gmra.mxu0 %v1657
    %v9366 = vpop.f32.mrf.mxu0
    %v9367 = vadd.f32 %v9354, %v9366
    %v9368 = vpop.f32.mrf.mxu0
    %9369 = vdwg.mxu0
    %9370 = vmatpush.bf16.msra.mxu0 %v6582
    %9371 = vmatpush.bf16.msra.mxu0 %v6575
    %9372 = vmatpush.bf16.msra.mxu0 %v6568
    %9373 = vmatpush.bf16.msra.mxu0 %v6561
    %9374 = vmatpush.bf16.msra.mxu0 %v6554
    %9375 = vmatpush.bf16.msra.mxu0 %v6547
    %9376 = vmatpush.bf16.msra.mxu0 %v6540
    %9377 = vmatpush.bf16.msra.mxu0 %v6533
    %9378 = vmatmul.bf16.gmra.mxu0 %v1658
    %v9379 = vpop.f32.mrf.mxu0
    %v9380 = vadd.f32 %v9367, %v9379
    %v9381 = vpop.f32.mrf.mxu0
    %9382 = vdwg.mxu0
    %9383 = vmatpush.bf16.msra.mxu0 %v6638
    %9384 = vmatpush.bf16.msra.mxu0 %v6631
    %9385 = vmatpush.bf16.msra.mxu0 %v6624
    %9386 = vmatpush.bf16.msra.mxu0 %v6617
    %9387 = vmatpush.bf16.msra.mxu0 %v6610
    %9388 = vmatpush.bf16.msra.mxu0 %v6603
    %9389 = vmatpush.bf16.msra.mxu0 %v6596
    %9390 = vmatpush.bf16.msra.mxu0 %v6589
    %9391 = vmatmul.bf16.gmra.mxu0 %v1659
    %v9392 = vpop.f32.mrf.mxu0
    %v9393 = vadd.f32 %v9380, %v9392
    %v9394 = vpop.f32.mrf.mxu0
    %9395 = vdwg.mxu0
    %9396 = vmatpush.bf16.msra.mxu0 %v6694
    %9397 = vmatpush.bf16.msra.mxu0 %v6687
    %9398 = vmatpush.bf16.msra.mxu0 %v6680
    %9399 = vmatpush.bf16.msra.mxu0 %v6673
    %9400 = vmatpush.bf16.msra.mxu0 %v6666
    %9401 = vmatpush.bf16.msra.mxu0 %v6659
    %9402 = vmatpush.bf16.msra.mxu0 %v6652
    %9403 = vmatpush.bf16.msra.mxu0 %v6645
    %9404 = vmatmul.bf16.gmra.mxu0 %v1660
    %v9405 = vpop.f32.mrf.mxu0
    %v9406 = vadd.f32 %v9393, %v9405
    %v9407 = vpop.f32.mrf.mxu0
    %9408 = vdwg.mxu0
    %9409 = vmatpush.bf16.msra.mxu0 %v6750
    %9410 = vmatpush.bf16.msra.mxu0 %v6743
    %9411 = vmatpush.bf16.msra.mxu0 %v6736
    %9412 = vmatpush.bf16.msra.mxu0 %v6729
    %9413 = vmatpush.bf16.msra.mxu0 %v6722
    %9414 = vmatpush.bf16.msra.mxu0 %v6715
    %9415 = vmatpush.bf16.msra.mxu0 %v6708
    %9416 = vmatpush.bf16.msra.mxu0 %v6701
    %9417 = vmatmul.bf16.gmra.mxu0 %v1661
    %v9418 = vpop.f32.mrf.mxu0
    %v9419 = vadd.f32 %v9406, %v9418
    %v9420 = vpop.f32.mrf.mxu0
    %9421 = vdwg.mxu0
    %9422 = vmatpush.bf16.msra.mxu0 %v6806
    %9423 = vmatpush.bf16.msra.mxu0 %v6799
    %9424 = vmatpush.bf16.msra.mxu0 %v6792
    %9425 = vmatpush.bf16.msra.mxu0 %v6785
    %9426 = vmatpush.bf16.msra.mxu0 %v6778
    %9427 = vmatpush.bf16.msra.mxu0 %v6771
    %9428 = vmatpush.bf16.msra.mxu0 %v6764
    %9429 = vmatpush.bf16.msra.mxu0 %v6757
    %9430 = vmatmul.bf16.gmra.mxu0 %v1662
    %v9431 = vpop.f32.mrf.mxu0
    %v9432 = vadd.f32 %v9419, %v9431
    %v9433 = vpop.f32.mrf.mxu0
    %9434 = vdwg.mxu0
    %9435 = vmatpush.bf16.msra.mxu0 %v6862
    %9436 = vmatpush.bf16.msra.mxu0 %v6855
    %9437 = vmatpush.bf16.msra.mxu0 %v6848
    %9438 = vmatpush.bf16.msra.mxu0 %v6841
    %9439 = vmatpush.bf16.msra.mxu0 %v6834
    %9440 = vmatpush.bf16.msra.mxu0 %v6827
    %9441 = vmatpush.bf16.msra.mxu0 %v6820
    %9442 = vmatpush.bf16.msra.mxu0 %v6813
    %9443 = vmatmul.bf16.gmra.mxu0 %v1663
    %v9444 = vpop.f32.mrf.mxu0
    %v9445 = vadd.f32 %v9432, %v9444
    %v9446 = vpop.f32.mrf.mxu0
    %9447 = vdwg.mxu0
    %9448 = vmatpush.bf16.msra.mxu0 %v6918
    %9449 = vmatpush.bf16.msra.mxu0 %v6911
    %9450 = vmatpush.bf16.msra.mxu0 %v6904
    %9451 = vmatpush.bf16.msra.mxu0 %v6897
    %9452 = vmatpush.bf16.msra.mxu0 %v6890
    %9453 = vmatpush.bf16.msra.mxu0 %v6883
    %9454 = vmatpush.bf16.msra.mxu0 %v6876
    %9455 = vmatpush.bf16.msra.mxu0 %v6869
    %9456 = vmatmul.bf16.gmra.mxu0 %v1664
    %v9457 = vpop.f32.mrf.mxu0
    %v9458 = vadd.f32 %v9445, %v9457
    %v9459 = vpop.f32.mrf.mxu0
    %9460 = vdwg.mxu0
    %9461 = vmatpush.bf16.msra.mxu0 %v6974
    %9462 = vmatpush.bf16.msra.mxu0 %v6967
    %9463 = vmatpush.bf16.msra.mxu0 %v6960
    %9464 = vmatpush.bf16.msra.mxu0 %v6953
    %9465 = vmatpush.bf16.msra.mxu0 %v6946
    %9466 = vmatpush.bf16.msra.mxu0 %v6939
    %9467 = vmatpush.bf16.msra.mxu0 %v6932
    %9468 = vmatpush.bf16.msra.mxu0 %v6925
    %9469 = vmatmul.bf16.gmra.mxu0 %v1665
    %v9470 = vpop.f32.mrf.mxu0
    %v9471 = vadd.f32 %v9458, %v9470
    %v9472 = vpop.f32.mrf.mxu0
    %9473 = vdwg.mxu0
    %9474 = vmatpush.bf16.msra.mxu0 %v7030
    %9475 = vmatpush.bf16.msra.mxu0 %v7023
    %9476 = vmatpush.bf16.msra.mxu0 %v7016
    %9477 = vmatpush.bf16.msra.mxu0 %v7009
    %9478 = vmatpush.bf16.msra.mxu0 %v7002
    %9479 = vmatpush.bf16.msra.mxu0 %v6995
    %9480 = vmatpush.bf16.msra.mxu0 %v6988
    %9481 = vmatpush.bf16.msra.mxu0 %v6981
    %9482 = vmatmul.bf16.gmra.mxu0 %v1666
    %v9483 = vpop.f32.mrf.mxu0
    %v9484 = vadd.f32 %v9471, %v9483
    %v9485 = vpop.f32.mrf.mxu0
    %9486 = vdwg.mxu0
    %9487 = vmatpush.bf16.msra.mxu0 %v7086
    %9488 = vmatpush.bf16.msra.mxu0 %v7079
    %9489 = vmatpush.bf16.msra.mxu0 %v7072
    %9490 = vmatpush.bf16.msra.mxu0 %v7065
    %9491 = vmatpush.bf16.msra.mxu0 %v7058
    %9492 = vmatpush.bf16.msra.mxu0 %v7051
    %9493 = vmatpush.bf16.msra.mxu0 %v7044
    %9494 = vmatpush.bf16.msra.mxu0 %v7037
    %9495 = vmatmul.bf16.gmra.mxu0 %v1667
    %v9496 = vpop.f32.mrf.mxu0
    %v9497 = vadd.f32 %v9484, %v9496
    %v9498 = vpop.f32.mrf.mxu0
    %9499 = vdwg.mxu0
    %9500 = vmatpush.bf16.msra.mxu0 %v7142
    %9501 = vmatpush.bf16.msra.mxu0 %v7135
    %9502 = vmatpush.bf16.msra.mxu0 %v7128
    %9503 = vmatpush.bf16.msra.mxu0 %v7121
    %9504 = vmatpush.bf16.msra.mxu0 %v7114
    %9505 = vmatpush.bf16.msra.mxu0 %v7107
    %9506 = vmatpush.bf16.msra.mxu0 %v7100
    %9507 = vmatpush.bf16.msra.mxu0 %v7093
    %9508 = vmatmul.bf16.gmra.mxu0 %v1668
    %v9509 = vpop.f32.mrf.mxu0
    %v9510 = vadd.f32 %v9497, %v9509
    %v9511 = vpop.f32.mrf.mxu0
    %9512 = vdwg.mxu0
    %9513 = vmatpush.bf16.msra.mxu0 %v7198
    %9514 = vmatpush.bf16.msra.mxu0 %v7191
    %9515 = vmatpush.bf16.msra.mxu0 %v7184
    %9516 = vmatpush.bf16.msra.mxu0 %v7177
    %9517 = vmatpush.bf16.msra.mxu0 %v7170
    %9518 = vmatpush.bf16.msra.mxu0 %v7163
    %9519 = vmatpush.bf16.msra.mxu0 %v7156
    %9520 = vmatpush.bf16.msra.mxu0 %v7149
    %9521 = vmatmul.bf16.gmra.mxu0 %v1669
    %v9522 = vpop.f32.mrf.mxu0
    %v9523 = vadd.f32 %v9510, %v9522
    %v9524 = vpop.f32.mrf.mxu0
    %9525 = vdwg.mxu0
    %9526 = vmatpush.bf16.msra.mxu0 %v7254
    %9527 = vmatpush.bf16.msra.mxu0 %v7247
    %9528 = vmatpush.bf16.msra.mxu0 %v7240
    %9529 = vmatpush.bf16.msra.mxu0 %v7233
    %9530 = vmatpush.bf16.msra.mxu0 %v7226
    %9531 = vmatpush.bf16.msra.mxu0 %v7219
    %9532 = vmatpush.bf16.msra.mxu0 %v7212
    %9533 = vmatpush.bf16.msra.mxu0 %v7205
    %9534 = vmatmul.bf16.gmra.mxu0 %v1670
    %v9535 = vpop.f32.mrf.mxu0
    %v9536 = vadd.f32 %v9523, %v9535
    %v9537 = vpop.f32.mrf.mxu0
    %9538 = vdwg.mxu0
    %9539 = vmatpush.bf16.msra.mxu0 %v5967
    %9540 = vmatpush.bf16.msra.mxu0 %v5960
    %9541 = vmatpush.bf16.msra.mxu0 %v5953
    %9542 = vmatpush.bf16.msra.mxu0 %v5946
    %9543 = vmatpush.bf16.msra.mxu0 %v5939
    %9544 = vmatpush.bf16.msra.mxu0 %v5932
    %9545 = vmatpush.bf16.msra.mxu0 %v5925
    %9546 = vmatpush.bf16.msra.mxu0 %v5918
    %9547 = vmatmul.bf16.gmra.mxu0 %v1647
    %v9548 = vpop.f32.mrf.mxu0
    %v9549 = vadd.f32 %v1680, %v9548
    %v9550 = vpop.f32.mrf.mxu0
    %9551 = vdwg.mxu0
    %9552 = vmatpush.bf16.msra.mxu0 %v6023
    %9553 = vmatpush.bf16.msra.mxu0 %v6016
    %9554 = vmatpush.bf16.msra.mxu0 %v6009
    %9555 = vmatpush.bf16.msra.mxu0 %v6002
    %9556 = vmatpush.bf16.msra.mxu0 %v5995
    %9557 = vmatpush.bf16.msra.mxu0 %v5988
    %9558 = vmatpush.bf16.msra.mxu0 %v5981
    %9559 = vmatpush.bf16.msra.mxu0 %v5974
    %9560 = vmatmul.bf16.gmra.mxu0 %v1648
    %v9561 = vpop.f32.mrf.mxu0
    %v9562 = vadd.f32 %v9549, %v9561
    %v9563 = vpop.f32.mrf.mxu0
    %9564 = vdwg.mxu0
    %9565 = vmatpush.bf16.msra.mxu0 %v6079
    %9566 = vmatpush.bf16.msra.mxu0 %v6072
    %9567 = vmatpush.bf16.msra.mxu0 %v6065
    %9568 = vmatpush.bf16.msra.mxu0 %v6058
    %9569 = vmatpush.bf16.msra.mxu0 %v6051
    %9570 = vmatpush.bf16.msra.mxu0 %v6044
    %9571 = vmatpush.bf16.msra.mxu0 %v6037
    %9572 = vmatpush.bf16.msra.mxu0 %v6030
    %9573 = vmatmul.bf16.gmra.mxu0 %v1649
    %v9574 = vpop.f32.mrf.mxu0
    %v9575 = vadd.f32 %v9562, %v9574
    %v9576 = vpop.f32.mrf.mxu0
    %9577 = vdwg.mxu0
    %9578 = vmatpush.bf16.msra.mxu0 %v6135
    %9579 = vmatpush.bf16.msra.mxu0 %v6128
    %9580 = vmatpush.bf16.msra.mxu0 %v6121
    %9581 = vmatpush.bf16.msra.mxu0 %v6114
    %9582 = vmatpush.bf16.msra.mxu0 %v6107
    %9583 = vmatpush.bf16.msra.mxu0 %v6100
    %9584 = vmatpush.bf16.msra.mxu0 %v6093
    %9585 = vmatpush.bf16.msra.mxu0 %v6086
    %9586 = vmatmul.bf16.gmra.mxu0 %v1650
    %v9587 = vpop.f32.mrf.mxu0
    %v9588 = vadd.f32 %v9575, %v9587
    %v9589 = vpop.f32.mrf.mxu0
    %9590 = vdwg.mxu0
    %9591 = vmatpush.bf16.msra.mxu0 %v6191
    %9592 = vmatpush.bf16.msra.mxu0 %v6184
    %9593 = vmatpush.bf16.msra.mxu0 %v6177
    %9594 = vmatpush.bf16.msra.mxu0 %v6170
    %9595 = vmatpush.bf16.msra.mxu0 %v6163
    %9596 = vmatpush.bf16.msra.mxu0 %v6156
    %9597 = vmatpush.bf16.msra.mxu0 %v6149
    %9598 = vmatpush.bf16.msra.mxu0 %v6142
    %9599 = vmatmul.bf16.gmra.mxu0 %v1651
    %v9600 = vpop.f32.mrf.mxu0
    %v9601 = vadd.f32 %v9588, %v9600
    %v9602 = vpop.f32.mrf.mxu0
    %9603 = vdwg.mxu0
    %9604 = vmatpush.bf16.msra.mxu0 %v6247
    %9605 = vmatpush.bf16.msra.mxu0 %v6240
    %9606 = vmatpush.bf16.msra.mxu0 %v6233
    %9607 = vmatpush.bf16.msra.mxu0 %v6226
    %9608 = vmatpush.bf16.msra.mxu0 %v6219
    %9609 = vmatpush.bf16.msra.mxu0 %v6212
    %9610 = vmatpush.bf16.msra.mxu0 %v6205
    %9611 = vmatpush.bf16.msra.mxu0 %v6198
    %9612 = vmatmul.bf16.gmra.mxu0 %v1652
    %v9613 = vpop.f32.mrf.mxu0
    %v9614 = vadd.f32 %v9601, %v9613
    %v9615 = vpop.f32.mrf.mxu0
    %9616 = vdwg.mxu0
    %9617 = vmatpush.bf16.msra.mxu0 %v6303
    %9618 = vmatpush.bf16.msra.mxu0 %v6296
    %9619 = vmatpush.bf16.msra.mxu0 %v6289
    %9620 = vmatpush.bf16.msra.mxu0 %v6282
    %9621 = vmatpush.bf16.msra.mxu0 %v6275
    %9622 = vmatpush.bf16.msra.mxu0 %v6268
    %9623 = vmatpush.bf16.msra.mxu0 %v6261
    %9624 = vmatpush.bf16.msra.mxu0 %v6254
    %9625 = vmatmul.bf16.gmra.mxu0 %v1653
    %v9626 = vpop.f32.mrf.mxu0
    %v9627 = vadd.f32 %v9614, %v9626
    %v9628 = vpop.f32.mrf.mxu0
    %9629 = vdwg.mxu0
    %9630 = vmatpush.bf16.msra.mxu0 %v6359
    %9631 = vmatpush.bf16.msra.mxu0 %v6352
    %9632 = vmatpush.bf16.msra.mxu0 %v6345
    %9633 = vmatpush.bf16.msra.mxu0 %v6338
    %9634 = vmatpush.bf16.msra.mxu0 %v6331
    %9635 = vmatpush.bf16.msra.mxu0 %v6324
    %9636 = vmatpush.bf16.msra.mxu0 %v6317
    %9637 = vmatpush.bf16.msra.mxu0 %v6310
    %9638 = vmatmul.bf16.gmra.mxu0 %v1654
    %v9639 = vpop.f32.mrf.mxu0
    %v9640 = vadd.f32 %v9627, %v9639
    %v9641 = vpop.f32.mrf.mxu0
    %9642 = vdwg.mxu0
    %9643 = vmatpush.bf16.msra.mxu0 %v6415
    %9644 = vmatpush.bf16.msra.mxu0 %v6408
    %9645 = vmatpush.bf16.msra.mxu0 %v6401
    %9646 = vmatpush.bf16.msra.mxu0 %v6394
    %9647 = vmatpush.bf16.msra.mxu0 %v6387
    %9648 = vmatpush.bf16.msra.mxu0 %v6380
    %9649 = vmatpush.bf16.msra.mxu0 %v6373
    %9650 = vmatpush.bf16.msra.mxu0 %v6366
    %9651 = vmatmul.bf16.gmra.mxu0 %v1655
    %v9652 = vpop.f32.mrf.mxu0
    %v9653 = vadd.f32 %v9640, %v9652
    %v9654 = vpop.f32.mrf.mxu0
    %9655 = vdwg.mxu0
    %9656 = vmatpush.bf16.msra.mxu0 %v6471
    %9657 = vmatpush.bf16.msra.mxu0 %v6464
    %9658 = vmatpush.bf16.msra.mxu0 %v6457
    %9659 = vmatpush.bf16.msra.mxu0 %v6450
    %9660 = vmatpush.bf16.msra.mxu0 %v6443
    %9661 = vmatpush.bf16.msra.mxu0 %v6436
    %9662 = vmatpush.bf16.msra.mxu0 %v6429
    %9663 = vmatpush.bf16.msra.mxu0 %v6422
    %9664 = vmatmul.bf16.gmra.mxu0 %v1656
    %v9665 = vpop.f32.mrf.mxu0
    %v9666 = vadd.f32 %v9653, %v9665
    %v9667 = vpop.f32.mrf.mxu0
    %9668 = vdwg.mxu0
    %9669 = vmatpush.bf16.msra.mxu0 %v6527
    %9670 = vmatpush.bf16.msra.mxu0 %v6520
    %9671 = vmatpush.bf16.msra.mxu0 %v6513
    %9672 = vmatpush.bf16.msra.mxu0 %v6506
    %9673 = vmatpush.bf16.msra.mxu0 %v6499
    %9674 = vmatpush.bf16.msra.mxu0 %v6492
    %9675 = vmatpush.bf16.msra.mxu0 %v6485
    %9676 = vmatpush.bf16.msra.mxu0 %v6478
    %9677 = vmatmul.bf16.gmra.mxu0 %v1657
    %v9678 = vpop.f32.mrf.mxu0
    %v9679 = vadd.f32 %v9666, %v9678
    %v9680 = vpop.f32.mrf.mxu0
    %9681 = vdwg.mxu0
    %9682 = vmatpush.bf16.msra.mxu0 %v6583
    %9683 = vmatpush.bf16.msra.mxu0 %v6576
    %9684 = vmatpush.bf16.msra.mxu0 %v6569
    %9685 = vmatpush.bf16.msra.mxu0 %v6562
    %9686 = vmatpush.bf16.msra.mxu0 %v6555
    %9687 = vmatpush.bf16.msra.mxu0 %v6548
    %9688 = vmatpush.bf16.msra.mxu0 %v6541
    %9689 = vmatpush.bf16.msra.mxu0 %v6534
    %9690 = vmatmul.bf16.gmra.mxu0 %v1658
    %v9691 = vpop.f32.mrf.mxu0
    %v9692 = vadd.f32 %v9679, %v9691
    %v9693 = vpop.f32.mrf.mxu0
    %9694 = vdwg.mxu0
    %9695 = vmatpush.bf16.msra.mxu0 %v6639
    %9696 = vmatpush.bf16.msra.mxu0 %v6632
    %9697 = vmatpush.bf16.msra.mxu0 %v6625
    %9698 = vmatpush.bf16.msra.mxu0 %v6618
    %9699 = vmatpush.bf16.msra.mxu0 %v6611
    %9700 = vmatpush.bf16.msra.mxu0 %v6604
    %9701 = vmatpush.bf16.msra.mxu0 %v6597
    %9702 = vmatpush.bf16.msra.mxu0 %v6590
    %9703 = vmatmul.bf16.gmra.mxu0 %v1659
    %v9704 = vpop.f32.mrf.mxu0
    %v9705 = vadd.f32 %v9692, %v9704
    %v9706 = vpop.f32.mrf.mxu0
    %9707 = vdwg.mxu0
    %9708 = vmatpush.bf16.msra.mxu0 %v6695
    %9709 = vmatpush.bf16.msra.mxu0 %v6688
    %9710 = vmatpush.bf16.msra.mxu0 %v6681
    %9711 = vmatpush.bf16.msra.mxu0 %v6674
    %9712 = vmatpush.bf16.msra.mxu0 %v6667
    %9713 = vmatpush.bf16.msra.mxu0 %v6660
    %9714 = vmatpush.bf16.msra.mxu0 %v6653
    %9715 = vmatpush.bf16.msra.mxu0 %v6646
    %9716 = vmatmul.bf16.gmra.mxu0 %v1660
    %v9717 = vpop.f32.mrf.mxu0
    %v9718 = vadd.f32 %v9705, %v9717
    %v9719 = vpop.f32.mrf.mxu0
    %9720 = vdwg.mxu0
    %9721 = vmatpush.bf16.msra.mxu0 %v6751
    %9722 = vmatpush.bf16.msra.mxu0 %v6744
    %9723 = vmatpush.bf16.msra.mxu0 %v6737
    %9724 = vmatpush.bf16.msra.mxu0 %v6730
    %9725 = vmatpush.bf16.msra.mxu0 %v6723
    %9726 = vmatpush.bf16.msra.mxu0 %v6716
    %9727 = vmatpush.bf16.msra.mxu0 %v6709
    %9728 = vmatpush.bf16.msra.mxu0 %v6702
    %9729 = vmatmul.bf16.gmra.mxu0 %v1661
    %v9730 = vpop.f32.mrf.mxu0
    %v9731 = vadd.f32 %v9718, %v9730
    %v9732 = vpop.f32.mrf.mxu0
    %9733 = vdwg.mxu0
    %9734 = vmatpush.bf16.msra.mxu0 %v6807
    %9735 = vmatpush.bf16.msra.mxu0 %v6800
    %9736 = vmatpush.bf16.msra.mxu0 %v6793
    %9737 = vmatpush.bf16.msra.mxu0 %v6786
    %9738 = vmatpush.bf16.msra.mxu0 %v6779
    %9739 = vmatpush.bf16.msra.mxu0 %v6772
    %9740 = vmatpush.bf16.msra.mxu0 %v6765
    %9741 = vmatpush.bf16.msra.mxu0 %v6758
    %9742 = vmatmul.bf16.gmra.mxu0 %v1662
    %v9743 = vpop.f32.mrf.mxu0
    %v9744 = vadd.f32 %v9731, %v9743
    %v9745 = vpop.f32.mrf.mxu0
    %9746 = vdwg.mxu0
    %9747 = vmatpush.bf16.msra.mxu0 %v6863
    %9748 = vmatpush.bf16.msra.mxu0 %v6856
    %9749 = vmatpush.bf16.msra.mxu0 %v6849
    %9750 = vmatpush.bf16.msra.mxu0 %v6842
    %9751 = vmatpush.bf16.msra.mxu0 %v6835
    %9752 = vmatpush.bf16.msra.mxu0 %v6828
    %9753 = vmatpush.bf16.msra.mxu0 %v6821
    %9754 = vmatpush.bf16.msra.mxu0 %v6814
    %9755 = vmatmul.bf16.gmra.mxu0 %v1663
    %v9756 = vpop.f32.mrf.mxu0
    %v9757 = vadd.f32 %v9744, %v9756
    %v9758 = vpop.f32.mrf.mxu0
    %9759 = vdwg.mxu0
    %9760 = vmatpush.bf16.msra.mxu0 %v6919
    %9761 = vmatpush.bf16.msra.mxu0 %v6912
    %9762 = vmatpush.bf16.msra.mxu0 %v6905
    %9763 = vmatpush.bf16.msra.mxu0 %v6898
    %9764 = vmatpush.bf16.msra.mxu0 %v6891
    %9765 = vmatpush.bf16.msra.mxu0 %v6884
    %9766 = vmatpush.bf16.msra.mxu0 %v6877
    %9767 = vmatpush.bf16.msra.mxu0 %v6870
    %9768 = vmatmul.bf16.gmra.mxu0 %v1664
    %v9769 = vpop.f32.mrf.mxu0
    %v9770 = vadd.f32 %v9757, %v9769
    %v9771 = vpop.f32.mrf.mxu0
    %9772 = vdwg.mxu0
    %9773 = vmatpush.bf16.msra.mxu0 %v6975
    %9774 = vmatpush.bf16.msra.mxu0 %v6968
    %9775 = vmatpush.bf16.msra.mxu0 %v6961
    %9776 = vmatpush.bf16.msra.mxu0 %v6954
    %9777 = vmatpush.bf16.msra.mxu0 %v6947
    %9778 = vmatpush.bf16.msra.mxu0 %v6940
    %9779 = vmatpush.bf16.msra.mxu0 %v6933
    %9780 = vmatpush.bf16.msra.mxu0 %v6926
    %9781 = vmatmul.bf16.gmra.mxu0 %v1665
    %v9782 = vpop.f32.mrf.mxu0
    %v9783 = vadd.f32 %v9770, %v9782
    %v9784 = vpop.f32.mrf.mxu0
    %9785 = vdwg.mxu0
    %9786 = vmatpush.bf16.msra.mxu0 %v7031
    %9787 = vmatpush.bf16.msra.mxu0 %v7024
    %9788 = vmatpush.bf16.msra.mxu0 %v7017
    %9789 = vmatpush.bf16.msra.mxu0 %v7010
    %9790 = vmatpush.bf16.msra.mxu0 %v7003
    %9791 = vmatpush.bf16.msra.mxu0 %v6996
    %9792 = vmatpush.bf16.msra.mxu0 %v6989
    %9793 = vmatpush.bf16.msra.mxu0 %v6982
    %9794 = vmatmul.bf16.gmra.mxu0 %v1666
    %v9795 = vpop.f32.mrf.mxu0
    %v9796 = vadd.f32 %v9783, %v9795
    %v9797 = vpop.f32.mrf.mxu0
    %9798 = vdwg.mxu0
    %9799 = vmatpush.bf16.msra.mxu0 %v7087
    %9800 = vmatpush.bf16.msra.mxu0 %v7080
    %9801 = vmatpush.bf16.msra.mxu0 %v7073
    %9802 = vmatpush.bf16.msra.mxu0 %v7066
    %9803 = vmatpush.bf16.msra.mxu0 %v7059
    %9804 = vmatpush.bf16.msra.mxu0 %v7052
    %9805 = vmatpush.bf16.msra.mxu0 %v7045
    %9806 = vmatpush.bf16.msra.mxu0 %v7038
    %9807 = vmatmul.bf16.gmra.mxu0 %v1667
    %v9808 = vpop.f32.mrf.mxu0
    %v9809 = vadd.f32 %v9796, %v9808
    %v9810 = vpop.f32.mrf.mxu0
    %9811 = vdwg.mxu0
    %9812 = vmatpush.bf16.msra.mxu0 %v7143
    %9813 = vmatpush.bf16.msra.mxu0 %v7136
    %9814 = vmatpush.bf16.msra.mxu0 %v7129
    %9815 = vmatpush.bf16.msra.mxu0 %v7122
    %9816 = vmatpush.bf16.msra.mxu0 %v7115
    %9817 = vmatpush.bf16.msra.mxu0 %v7108
    %9818 = vmatpush.bf16.msra.mxu0 %v7101
    %9819 = vmatpush.bf16.msra.mxu0 %v7094
    %9820 = vmatmul.bf16.gmra.mxu0 %v1668
    %v9821 = vpop.f32.mrf.mxu0
    %v9822 = vadd.f32 %v9809, %v9821
    %v9823 = vpop.f32.mrf.mxu0
    %9824 = vdwg.mxu0
    %9825 = vmatpush.bf16.msra.mxu0 %v7199
    %9826 = vmatpush.bf16.msra.mxu0 %v7192
    %9827 = vmatpush.bf16.msra.mxu0 %v7185
    %9828 = vmatpush.bf16.msra.mxu0 %v7178
    %9829 = vmatpush.bf16.msra.mxu0 %v7171
    %9830 = vmatpush.bf16.msra.mxu0 %v7164
    %9831 = vmatpush.bf16.msra.mxu0 %v7157
    %9832 = vmatpush.bf16.msra.mxu0 %v7150
    %9833 = vmatmul.bf16.gmra.mxu0 %v1669
    %v9834 = vpop.f32.mrf.mxu0
    %v9835 = vadd.f32 %v9822, %v9834
    %v9836 = vpop.f32.mrf.mxu0
    %9837 = vdwg.mxu0
    %9838 = vmatpush.bf16.msra.mxu0 %v7255
    %9839 = vmatpush.bf16.msra.mxu0 %v7248
    %9840 = vmatpush.bf16.msra.mxu0 %v7241
    %9841 = vmatpush.bf16.msra.mxu0 %v7234
    %9842 = vmatpush.bf16.msra.mxu0 %v7227
    %9843 = vmatpush.bf16.msra.mxu0 %v7220
    %9844 = vmatpush.bf16.msra.mxu0 %v7213
    %9845 = vmatpush.bf16.msra.mxu0 %v7206
    %9846 = vmatmul.bf16.gmra.mxu0 %v1670
    %v9847 = vpop.f32.mrf.mxu0
    %v9848 = vadd.f32 %v9835, %v9847
    %v9849 = vpop.f32.mrf.mxu0
    %9850 = vdwg.mxu0
    %9851 = vmatpush.bf16.msra.mxu0 %v5968
    %9852 = vmatpush.bf16.msra.mxu0 %v5961
    %9853 = vmatpush.bf16.msra.mxu0 %v5954
    %9854 = vmatpush.bf16.msra.mxu0 %v5947
    %9855 = vmatpush.bf16.msra.mxu0 %v5940
    %9856 = vmatpush.bf16.msra.mxu0 %v5933
    %9857 = vmatpush.bf16.msra.mxu0 %v5926
    %9858 = vmatpush.bf16.msra.mxu0 %v5919
    %9859 = vmatmul.bf16.gmra.mxu0 %v1647
    %v9860 = vpop.f32.mrf.mxu0
    %v9861 = vadd.f32 %v1681, %v9860
    %v9862 = vpop.f32.mrf.mxu0
    %9863 = vdwg.mxu0
    %9864 = vmatpush.bf16.msra.mxu0 %v6024
    %9865 = vmatpush.bf16.msra.mxu0 %v6017
    %9866 = vmatpush.bf16.msra.mxu0 %v6010
    %9867 = vmatpush.bf16.msra.mxu0 %v6003
    %9868 = vmatpush.bf16.msra.mxu0 %v5996
    %9869 = vmatpush.bf16.msra.mxu0 %v5989
    %9870 = vmatpush.bf16.msra.mxu0 %v5982
    %9871 = vmatpush.bf16.msra.mxu0 %v5975
    %9872 = vmatmul.bf16.gmra.mxu0 %v1648
    %v9873 = vpop.f32.mrf.mxu0
    %v9874 = vadd.f32 %v9861, %v9873
    %v9875 = vpop.f32.mrf.mxu0
    %9876 = vdwg.mxu0
    %9877 = vmatpush.bf16.msra.mxu0 %v6080
    %9878 = vmatpush.bf16.msra.mxu0 %v6073
    %9879 = vmatpush.bf16.msra.mxu0 %v6066
    %9880 = vmatpush.bf16.msra.mxu0 %v6059
    %9881 = vmatpush.bf16.msra.mxu0 %v6052
    %9882 = vmatpush.bf16.msra.mxu0 %v6045
    %9883 = vmatpush.bf16.msra.mxu0 %v6038
    %9884 = vmatpush.bf16.msra.mxu0 %v6031
    %9885 = vmatmul.bf16.gmra.mxu0 %v1649
    %v9886 = vpop.f32.mrf.mxu0
    %v9887 = vadd.f32 %v9874, %v9886
    %v9888 = vpop.f32.mrf.mxu0
    %9889 = vdwg.mxu0
    %9890 = vmatpush.bf16.msra.mxu0 %v6136
    %9891 = vmatpush.bf16.msra.mxu0 %v6129
    %9892 = vmatpush.bf16.msra.mxu0 %v6122
    %9893 = vmatpush.bf16.msra.mxu0 %v6115
    %9894 = vmatpush.bf16.msra.mxu0 %v6108
    %9895 = vmatpush.bf16.msra.mxu0 %v6101
    %9896 = vmatpush.bf16.msra.mxu0 %v6094
    %9897 = vmatpush.bf16.msra.mxu0 %v6087
    %9898 = vmatmul.bf16.gmra.mxu0 %v1650
    %v9899 = vpop.f32.mrf.mxu0
    %v9900 = vadd.f32 %v9887, %v9899
    %v9901 = vpop.f32.mrf.mxu0
    %9902 = vdwg.mxu0
    %9903 = vmatpush.bf16.msra.mxu0 %v6192
    %9904 = vmatpush.bf16.msra.mxu0 %v6185
    %9905 = vmatpush.bf16.msra.mxu0 %v6178
    %9906 = vmatpush.bf16.msra.mxu0 %v6171
    %9907 = vmatpush.bf16.msra.mxu0 %v6164
    %9908 = vmatpush.bf16.msra.mxu0 %v6157
    %9909 = vmatpush.bf16.msra.mxu0 %v6150
    %9910 = vmatpush.bf16.msra.mxu0 %v6143
    %9911 = vmatmul.bf16.gmra.mxu0 %v1651
    %v9912 = vpop.f32.mrf.mxu0
    %v9913 = vadd.f32 %v9900, %v9912
    %v9914 = vpop.f32.mrf.mxu0
    %9915 = vdwg.mxu0
    %9916 = vmatpush.bf16.msra.mxu0 %v6248
    %9917 = vmatpush.bf16.msra.mxu0 %v6241
    %9918 = vmatpush.bf16.msra.mxu0 %v6234
    %9919 = vmatpush.bf16.msra.mxu0 %v6227
    %9920 = vmatpush.bf16.msra.mxu0 %v6220
    %9921 = vmatpush.bf16.msra.mxu0 %v6213
    %9922 = vmatpush.bf16.msra.mxu0 %v6206
    %9923 = vmatpush.bf16.msra.mxu0 %v6199
    %9924 = vmatmul.bf16.gmra.mxu0 %v1652
    %v9925 = vpop.f32.mrf.mxu0
    %v9926 = vadd.f32 %v9913, %v9925
    %v9927 = vpop.f32.mrf.mxu0
    %9928 = vdwg.mxu0
    %9929 = vmatpush.bf16.msra.mxu0 %v6304
    %9930 = vmatpush.bf16.msra.mxu0 %v6297
    %9931 = vmatpush.bf16.msra.mxu0 %v6290
    %9932 = vmatpush.bf16.msra.mxu0 %v6283
    %9933 = vmatpush.bf16.msra.mxu0 %v6276
    %9934 = vmatpush.bf16.msra.mxu0 %v6269
    %9935 = vmatpush.bf16.msra.mxu0 %v6262
    %9936 = vmatpush.bf16.msra.mxu0 %v6255
    %9937 = vmatmul.bf16.gmra.mxu0 %v1653
    %v9938 = vpop.f32.mrf.mxu0
    %v9939 = vadd.f32 %v9926, %v9938
    %v9940 = vpop.f32.mrf.mxu0
    %9941 = vdwg.mxu0
    %9942 = vmatpush.bf16.msra.mxu0 %v6360
    %9943 = vmatpush.bf16.msra.mxu0 %v6353
    %9944 = vmatpush.bf16.msra.mxu0 %v6346
    %9945 = vmatpush.bf16.msra.mxu0 %v6339
    %9946 = vmatpush.bf16.msra.mxu0 %v6332
    %9947 = vmatpush.bf16.msra.mxu0 %v6325
    %9948 = vmatpush.bf16.msra.mxu0 %v6318
    %9949 = vmatpush.bf16.msra.mxu0 %v6311
    %9950 = vmatmul.bf16.gmra.mxu0 %v1654
    %v9951 = vpop.f32.mrf.mxu0
    %v9952 = vadd.f32 %v9939, %v9951
    %v9953 = vpop.f32.mrf.mxu0
    %9954 = vdwg.mxu0
    %9955 = vmatpush.bf16.msra.mxu0 %v6416
    %9956 = vmatpush.bf16.msra.mxu0 %v6409
    %9957 = vmatpush.bf16.msra.mxu0 %v6402
    %9958 = vmatpush.bf16.msra.mxu0 %v6395
    %9959 = vmatpush.bf16.msra.mxu0 %v6388
    %9960 = vmatpush.bf16.msra.mxu0 %v6381
    %9961 = vmatpush.bf16.msra.mxu0 %v6374
    %9962 = vmatpush.bf16.msra.mxu0 %v6367
    %9963 = vmatmul.bf16.gmra.mxu0 %v1655
    %v9964 = vpop.f32.mrf.mxu0
    %v9965 = vadd.f32 %v9952, %v9964
    %v9966 = vpop.f32.mrf.mxu0
    %9967 = vdwg.mxu0
    %9968 = vmatpush.bf16.msra.mxu0 %v6472
    %9969 = vmatpush.bf16.msra.mxu0 %v6465
    %9970 = vmatpush.bf16.msra.mxu0 %v6458
    %9971 = vmatpush.bf16.msra.mxu0 %v6451
    %9972 = vmatpush.bf16.msra.mxu0 %v6444
    %9973 = vmatpush.bf16.msra.mxu0 %v6437
    %9974 = vmatpush.bf16.msra.mxu0 %v6430
    %9975 = vmatpush.bf16.msra.mxu0 %v6423
    %9976 = vmatmul.bf16.gmra.mxu0 %v1656
    %v9977 = vpop.f32.mrf.mxu0
    %v9978 = vadd.f32 %v9965, %v9977
    %v9979 = vpop.f32.mrf.mxu0
    %9980 = vdwg.mxu0
    %9981 = vmatpush.bf16.msra.mxu0 %v6528
    %9982 = vmatpush.bf16.msra.mxu0 %v6521
    %9983 = vmatpush.bf16.msra.mxu0 %v6514
    %9984 = vmatpush.bf16.msra.mxu0 %v6507
    %9985 = vmatpush.bf16.msra.mxu0 %v6500
    %9986 = vmatpush.bf16.msra.mxu0 %v6493
    %9987 = vmatpush.bf16.msra.mxu0 %v6486
    %9988 = vmatpush.bf16.msra.mxu0 %v6479
    %9989 = vmatmul.bf16.gmra.mxu0 %v1657
    %v9990 = vpop.f32.mrf.mxu0
    %v9991 = vadd.f32 %v9978, %v9990
    %v9992 = vpop.f32.mrf.mxu0
    %9993 = vdwg.mxu0
    %9994 = vmatpush.bf16.msra.mxu0 %v6584
    %9995 = vmatpush.bf16.msra.mxu0 %v6577
    %9996 = vmatpush.bf16.msra.mxu0 %v6570
    %9997 = vmatpush.bf16.msra.mxu0 %v6563
    %9998 = vmatpush.bf16.msra.mxu0 %v6556
    %9999 = vmatpush.bf16.msra.mxu0 %v6549
    %10000 = vmatpush.bf16.msra.mxu0 %v6542
    %10001 = vmatpush.bf16.msra.mxu0 %v6535
    %10002 = vmatmul.bf16.gmra.mxu0 %v1658
    %v10003 = vpop.f32.mrf.mxu0
    %v10004 = vadd.f32 %v9991, %v10003
    %v10005 = vpop.f32.mrf.mxu0
    %10006 = vdwg.mxu0
    %10007 = vmatpush.bf16.msra.mxu0 %v6640
    %10008 = vmatpush.bf16.msra.mxu0 %v6633
    %10009 = vmatpush.bf16.msra.mxu0 %v6626
    %10010 = vmatpush.bf16.msra.mxu0 %v6619
    %10011 = vmatpush.bf16.msra.mxu0 %v6612
    %10012 = vmatpush.bf16.msra.mxu0 %v6605
    %10013 = vmatpush.bf16.msra.mxu0 %v6598
    %10014 = vmatpush.bf16.msra.mxu0 %v6591
    %10015 = vmatmul.bf16.gmra.mxu0 %v1659
    %v10016 = vpop.f32.mrf.mxu0
    %v10017 = vadd.f32 %v10004, %v10016
    %v10018 = vpop.f32.mrf.mxu0
    %10019 = vdwg.mxu0
    %10020 = vmatpush.bf16.msra.mxu0 %v6696
    %10021 = vmatpush.bf16.msra.mxu0 %v6689
    %10022 = vmatpush.bf16.msra.mxu0 %v6682
    %10023 = vmatpush.bf16.msra.mxu0 %v6675
    %10024 = vmatpush.bf16.msra.mxu0 %v6668
    %10025 = vmatpush.bf16.msra.mxu0 %v6661
    %10026 = vmatpush.bf16.msra.mxu0 %v6654
    %10027 = vmatpush.bf16.msra.mxu0 %v6647
    %10028 = vmatmul.bf16.gmra.mxu0 %v1660
    %v10029 = vpop.f32.mrf.mxu0
    %v10030 = vadd.f32 %v10017, %v10029
    %v10031 = vpop.f32.mrf.mxu0
    %10032 = vdwg.mxu0
    %10033 = vmatpush.bf16.msra.mxu0 %v6752
    %10034 = vmatpush.bf16.msra.mxu0 %v6745
    %10035 = vmatpush.bf16.msra.mxu0 %v6738
    %10036 = vmatpush.bf16.msra.mxu0 %v6731
    %10037 = vmatpush.bf16.msra.mxu0 %v6724
    %10038 = vmatpush.bf16.msra.mxu0 %v6717
    %10039 = vmatpush.bf16.msra.mxu0 %v6710
    %10040 = vmatpush.bf16.msra.mxu0 %v6703
    %10041 = vmatmul.bf16.gmra.mxu0 %v1661
    %v10042 = vpop.f32.mrf.mxu0
    %v10043 = vadd.f32 %v10030, %v10042
    %v10044 = vpop.f32.mrf.mxu0
    %10045 = vdwg.mxu0
    %10046 = vmatpush.bf16.msra.mxu0 %v6808
    %10047 = vmatpush.bf16.msra.mxu0 %v6801
    %10048 = vmatpush.bf16.msra.mxu0 %v6794
    %10049 = vmatpush.bf16.msra.mxu0 %v6787
    %10050 = vmatpush.bf16.msra.mxu0 %v6780
    %10051 = vmatpush.bf16.msra.mxu0 %v6773
    %10052 = vmatpush.bf16.msra.mxu0 %v6766
    %10053 = vmatpush.bf16.msra.mxu0 %v6759
    %10054 = vmatmul.bf16.gmra.mxu0 %v1662
    %v10055 = vpop.f32.mrf.mxu0
    %v10056 = vadd.f32 %v10043, %v10055
    %v10057 = vpop.f32.mrf.mxu0
    %10058 = vdwg.mxu0
    %10059 = vmatpush.bf16.msra.mxu0 %v6864
    %10060 = vmatpush.bf16.msra.mxu0 %v6857
    %10061 = vmatpush.bf16.msra.mxu0 %v6850
    %10062 = vmatpush.bf16.msra.mxu0 %v6843
    %10063 = vmatpush.bf16.msra.mxu0 %v6836
    %10064 = vmatpush.bf16.msra.mxu0 %v6829
    %10065 = vmatpush.bf16.msra.mxu0 %v6822
    %10066 = vmatpush.bf16.msra.mxu0 %v6815
    %10067 = vmatmul.bf16.gmra.mxu0 %v1663
    %v10068 = vpop.f32.mrf.mxu0
    %v10069 = vadd.f32 %v10056, %v10068
    %v10070 = vpop.f32.mrf.mxu0
    %10071 = vdwg.mxu0
    %10072 = vmatpush.bf16.msra.mxu0 %v6920
    %10073 = vmatpush.bf16.msra.mxu0 %v6913
    %10074 = vmatpush.bf16.msra.mxu0 %v6906
    %10075 = vmatpush.bf16.msra.mxu0 %v6899
    %10076 = vmatpush.bf16.msra.mxu0 %v6892
    %10077 = vmatpush.bf16.msra.mxu0 %v6885
    %10078 = vmatpush.bf16.msra.mxu0 %v6878
    %10079 = vmatpush.bf16.msra.mxu0 %v6871
    %10080 = vmatmul.bf16.gmra.mxu0 %v1664
    %v10081 = vpop.f32.mrf.mxu0
    %v10082 = vadd.f32 %v10069, %v10081
    %v10083 = vpop.f32.mrf.mxu0
    %10084 = vdwg.mxu0
    %10085 = vmatpush.bf16.msra.mxu0 %v6976
    %10086 = vmatpush.bf16.msra.mxu0 %v6969
    %10087 = vmatpush.bf16.msra.mxu0 %v6962
    %10088 = vmatpush.bf16.msra.mxu0 %v6955
    %10089 = vmatpush.bf16.msra.mxu0 %v6948
    %10090 = vmatpush.bf16.msra.mxu0 %v6941
    %10091 = vmatpush.bf16.msra.mxu0 %v6934
    %10092 = vmatpush.bf16.msra.mxu0 %v6927
    %10093 = vmatmul.bf16.gmra.mxu0 %v1665
    %v10094 = vpop.f32.mrf.mxu0
    %v10095 = vadd.f32 %v10082, %v10094
    %v10096 = vpop.f32.mrf.mxu0
    %10097 = vdwg.mxu0
    %10098 = vmatpush.bf16.msra.mxu0 %v7032
    %10099 = vmatpush.bf16.msra.mxu0 %v7025
    %10100 = vmatpush.bf16.msra.mxu0 %v7018
    %10101 = vmatpush.bf16.msra.mxu0 %v7011
    %10102 = vmatpush.bf16.msra.mxu0 %v7004
    %10103 = vmatpush.bf16.msra.mxu0 %v6997
    %10104 = vmatpush.bf16.msra.mxu0 %v6990
    %10105 = vmatpush.bf16.msra.mxu0 %v6983
    %10106 = vmatmul.bf16.gmra.mxu0 %v1666
    %v10107 = vpop.f32.mrf.mxu0
    %v10108 = vadd.f32 %v10095, %v10107
    %v10109 = vpop.f32.mrf.mxu0
    %10110 = vdwg.mxu0
    %10111 = vmatpush.bf16.msra.mxu0 %v7088
    %10112 = vmatpush.bf16.msra.mxu0 %v7081
    %10113 = vmatpush.bf16.msra.mxu0 %v7074
    %10114 = vmatpush.bf16.msra.mxu0 %v7067
    %10115 = vmatpush.bf16.msra.mxu0 %v7060
    %10116 = vmatpush.bf16.msra.mxu0 %v7053
    %10117 = vmatpush.bf16.msra.mxu0 %v7046
    %10118 = vmatpush.bf16.msra.mxu0 %v7039
    %10119 = vmatmul.bf16.gmra.mxu0 %v1667
    %v10120 = vpop.f32.mrf.mxu0
    %v10121 = vadd.f32 %v10108, %v10120
    %v10122 = vpop.f32.mrf.mxu0
    %10123 = vdwg.mxu0
    %10124 = vmatpush.bf16.msra.mxu0 %v7144
    %10125 = vmatpush.bf16.msra.mxu0 %v7137
    %10126 = vmatpush.bf16.msra.mxu0 %v7130
    %10127 = vmatpush.bf16.msra.mxu0 %v7123
    %10128 = vmatpush.bf16.msra.mxu0 %v7116
    %10129 = vmatpush.bf16.msra.mxu0 %v7109
    %10130 = vmatpush.bf16.msra.mxu0 %v7102
    %10131 = vmatpush.bf16.msra.mxu0 %v7095
    %10132 = vmatmul.bf16.gmra.mxu0 %v1668
    %v10133 = vpop.f32.mrf.mxu0
    %v10134 = vadd.f32 %v10121, %v10133
    %v10135 = vpop.f32.mrf.mxu0
    %10136 = vdwg.mxu0
    %10137 = vmatpush.bf16.msra.mxu0 %v7200
    %10138 = vmatpush.bf16.msra.mxu0 %v7193
    %10139 = vmatpush.bf16.msra.mxu0 %v7186
    %10140 = vmatpush.bf16.msra.mxu0 %v7179
    %10141 = vmatpush.bf16.msra.mxu0 %v7172
    %10142 = vmatpush.bf16.msra.mxu0 %v7165
    %10143 = vmatpush.bf16.msra.mxu0 %v7158
    %10144 = vmatpush.bf16.msra.mxu0 %v7151
    %10145 = vmatmul.bf16.gmra.mxu0 %v1669
    %v10146 = vpop.f32.mrf.mxu0
    %v10147 = vadd.f32 %v10134, %v10146
    %v10148 = vpop.f32.mrf.mxu0
    %10149 = vdwg.mxu0
    %10150 = vmatpush.bf16.msra.mxu0 %v7256
    %10151 = vmatpush.bf16.msra.mxu0 %v7249
    %10152 = vmatpush.bf16.msra.mxu0 %v7242
    %10153 = vmatpush.bf16.msra.mxu0 %v7235
    %10154 = vmatpush.bf16.msra.mxu0 %v7228
    %10155 = vmatpush.bf16.msra.mxu0 %v7221
    %10156 = vmatpush.bf16.msra.mxu0 %v7214
    %10157 = vmatpush.bf16.msra.mxu0 %v7207
    %10158 = vmatmul.bf16.gmra.mxu0 %v1670
    %v10159 = vpop.f32.mrf.mxu0
    %v10160 = vadd.f32 %v10147, %v10159
    %v10161 = vpop.f32.mrf.mxu0
    %10162 = vdwg.mxu0
    %10163 = vmatpush.bf16.msra.mxu0 %v5969
    %10164 = vmatpush.bf16.msra.mxu0 %v5962
    %10165 = vmatpush.bf16.msra.mxu0 %v5955
    %10166 = vmatpush.bf16.msra.mxu0 %v5948
    %10167 = vmatpush.bf16.msra.mxu0 %v5941
    %10168 = vmatpush.bf16.msra.mxu0 %v5934
    %10169 = vmatpush.bf16.msra.mxu0 %v5927
    %10170 = vmatpush.bf16.msra.mxu0 %v5920
    %10171 = vmatmul.bf16.gmra.mxu0 %v1647
    %v10172 = vpop.f32.mrf.mxu0
    %v10173 = vadd.f32 %v1682, %v10172
    %v10174 = vpop.f32.mrf.mxu0
    %10175 = vdwg.mxu0
    %10176 = vmatpush.bf16.msra.mxu0 %v6025
    %10177 = vmatpush.bf16.msra.mxu0 %v6018
    %10178 = vmatpush.bf16.msra.mxu0 %v6011
    %10179 = vmatpush.bf16.msra.mxu0 %v6004
    %10180 = vmatpush.bf16.msra.mxu0 %v5997
    %10181 = vmatpush.bf16.msra.mxu0 %v5990
    %10182 = vmatpush.bf16.msra.mxu0 %v5983
    %10183 = vmatpush.bf16.msra.mxu0 %v5976
    %10184 = vmatmul.bf16.gmra.mxu0 %v1648
    %v10185 = vpop.f32.mrf.mxu0
    %v10186 = vadd.f32 %v10173, %v10185
    %v10187 = vpop.f32.mrf.mxu0
    %10188 = vdwg.mxu0
    %10189 = vmatpush.bf16.msra.mxu0 %v6081
    %10190 = vmatpush.bf16.msra.mxu0 %v6074
    %10191 = vmatpush.bf16.msra.mxu0 %v6067
    %10192 = vmatpush.bf16.msra.mxu0 %v6060
    %10193 = vmatpush.bf16.msra.mxu0 %v6053
    %10194 = vmatpush.bf16.msra.mxu0 %v6046
    %10195 = vmatpush.bf16.msra.mxu0 %v6039
    %10196 = vmatpush.bf16.msra.mxu0 %v6032
    %10197 = vmatmul.bf16.gmra.mxu0 %v1649
    %v10198 = vpop.f32.mrf.mxu0
    %v10199 = vadd.f32 %v10186, %v10198
    %v10200 = vpop.f32.mrf.mxu0
    %10201 = vdwg.mxu0
    %10202 = vmatpush.bf16.msra.mxu0 %v6137
    %10203 = vmatpush.bf16.msra.mxu0 %v6130
    %10204 = vmatpush.bf16.msra.mxu0 %v6123
    %10205 = vmatpush.bf16.msra.mxu0 %v6116
    %10206 = vmatpush.bf16.msra.mxu0 %v6109
    %10207 = vmatpush.bf16.msra.mxu0 %v6102
    %10208 = vmatpush.bf16.msra.mxu0 %v6095
    %10209 = vmatpush.bf16.msra.mxu0 %v6088
    %10210 = vmatmul.bf16.gmra.mxu0 %v1650
    %v10211 = vpop.f32.mrf.mxu0
    %v10212 = vadd.f32 %v10199, %v10211
    %v10213 = vpop.f32.mrf.mxu0
    %10214 = vdwg.mxu0
    %10215 = vmatpush.bf16.msra.mxu0 %v6193
    %10216 = vmatpush.bf16.msra.mxu0 %v6186
    %10217 = vmatpush.bf16.msra.mxu0 %v6179
    %10218 = vmatpush.bf16.msra.mxu0 %v6172
    %10219 = vmatpush.bf16.msra.mxu0 %v6165
    %10220 = vmatpush.bf16.msra.mxu0 %v6158
    %10221 = vmatpush.bf16.msra.mxu0 %v6151
    %10222 = vmatpush.bf16.msra.mxu0 %v6144
    %10223 = vmatmul.bf16.gmra.mxu0 %v1651
    %v10224 = vpop.f32.mrf.mxu0
    %v10225 = vadd.f32 %v10212, %v10224
    %v10226 = vpop.f32.mrf.mxu0
    %10227 = vdwg.mxu0
    %10228 = vmatpush.bf16.msra.mxu0 %v6249
    %10229 = vmatpush.bf16.msra.mxu0 %v6242
    %10230 = vmatpush.bf16.msra.mxu0 %v6235
    %10231 = vmatpush.bf16.msra.mxu0 %v6228
    %10232 = vmatpush.bf16.msra.mxu0 %v6221
    %10233 = vmatpush.bf16.msra.mxu0 %v6214
    %10234 = vmatpush.bf16.msra.mxu0 %v6207
    %10235 = vmatpush.bf16.msra.mxu0 %v6200
    %10236 = vmatmul.bf16.gmra.mxu0 %v1652
    %v10237 = vpop.f32.mrf.mxu0
    %v10238 = vadd.f32 %v10225, %v10237
    %v10239 = vpop.f32.mrf.mxu0
    %10240 = vdwg.mxu0
    %10241 = vmatpush.bf16.msra.mxu0 %v6305
    %10242 = vmatpush.bf16.msra.mxu0 %v6298
    %10243 = vmatpush.bf16.msra.mxu0 %v6291
    %10244 = vmatpush.bf16.msra.mxu0 %v6284
    %10245 = vmatpush.bf16.msra.mxu0 %v6277
    %10246 = vmatpush.bf16.msra.mxu0 %v6270
    %10247 = vmatpush.bf16.msra.mxu0 %v6263
    %10248 = vmatpush.bf16.msra.mxu0 %v6256
    %10249 = vmatmul.bf16.gmra.mxu0 %v1653
    %v10250 = vpop.f32.mrf.mxu0
    %v10251 = vadd.f32 %v10238, %v10250
    %v10252 = vpop.f32.mrf.mxu0
    %10253 = vdwg.mxu0
    %10254 = vmatpush.bf16.msra.mxu0 %v6361
    %10255 = vmatpush.bf16.msra.mxu0 %v6354
    %10256 = vmatpush.bf16.msra.mxu0 %v6347
    %10257 = vmatpush.bf16.msra.mxu0 %v6340
    %10258 = vmatpush.bf16.msra.mxu0 %v6333
    %10259 = vmatpush.bf16.msra.mxu0 %v6326
    %10260 = vmatpush.bf16.msra.mxu0 %v6319
    %10261 = vmatpush.bf16.msra.mxu0 %v6312
    %10262 = vmatmul.bf16.gmra.mxu0 %v1654
    %v10263 = vpop.f32.mrf.mxu0
    %v10264 = vadd.f32 %v10251, %v10263
    %v10265 = vpop.f32.mrf.mxu0
    %10266 = vdwg.mxu0
    %10267 = vmatpush.bf16.msra.mxu0 %v6417
    %10268 = vmatpush.bf16.msra.mxu0 %v6410
    %10269 = vmatpush.bf16.msra.mxu0 %v6403
    %10270 = vmatpush.bf16.msra.mxu0 %v6396
    %10271 = vmatpush.bf16.msra.mxu0 %v6389
    %10272 = vmatpush.bf16.msra.mxu0 %v6382
    %10273 = vmatpush.bf16.msra.mxu0 %v6375
    %10274 = vmatpush.bf16.msra.mxu0 %v6368
    %10275 = vmatmul.bf16.gmra.mxu0 %v1655
    %v10276 = vpop.f32.mrf.mxu0
    %v10277 = vadd.f32 %v10264, %v10276
    %v10278 = vpop.f32.mrf.mxu0
    %10279 = vdwg.mxu0
    %10280 = vmatpush.bf16.msra.mxu0 %v6473
    %10281 = vmatpush.bf16.msra.mxu0 %v6466
    %10282 = vmatpush.bf16.msra.mxu0 %v6459
    %10283 = vmatpush.bf16.msra.mxu0 %v6452
    %10284 = vmatpush.bf16.msra.mxu0 %v6445
    %10285 = vmatpush.bf16.msra.mxu0 %v6438
    %10286 = vmatpush.bf16.msra.mxu0 %v6431
    %10287 = vmatpush.bf16.msra.mxu0 %v6424
    %10288 = vmatmul.bf16.gmra.mxu0 %v1656
    %v10289 = vpop.f32.mrf.mxu0
    %v10290 = vadd.f32 %v10277, %v10289
    %v10291 = vpop.f32.mrf.mxu0
    %10292 = vdwg.mxu0
    %10293 = vmatpush.bf16.msra.mxu0 %v6529
    %10294 = vmatpush.bf16.msra.mxu0 %v6522
    %10295 = vmatpush.bf16.msra.mxu0 %v6515
    %10296 = vmatpush.bf16.msra.mxu0 %v6508
    %10297 = vmatpush.bf16.msra.mxu0 %v6501
    %10298 = vmatpush.bf16.msra.mxu0 %v6494
    %10299 = vmatpush.bf16.msra.mxu0 %v6487
    %10300 = vmatpush.bf16.msra.mxu0 %v6480
    %10301 = vmatmul.bf16.gmra.mxu0 %v1657
    %v10302 = vpop.f32.mrf.mxu0
    %v10303 = vadd.f32 %v10290, %v10302
    %v10304 = vpop.f32.mrf.mxu0
    %10305 = vdwg.mxu0
    %10306 = vmatpush.bf16.msra.mxu0 %v6585
    %10307 = vmatpush.bf16.msra.mxu0 %v6578
    %10308 = vmatpush.bf16.msra.mxu0 %v6571
    %10309 = vmatpush.bf16.msra.mxu0 %v6564
    %10310 = vmatpush.bf16.msra.mxu0 %v6557
    %10311 = vmatpush.bf16.msra.mxu0 %v6550
    %10312 = vmatpush.bf16.msra.mxu0 %v6543
    %10313 = vmatpush.bf16.msra.mxu0 %v6536
    %10314 = vmatmul.bf16.gmra.mxu0 %v1658
    %v10315 = vpop.f32.mrf.mxu0
    %v10316 = vadd.f32 %v10303, %v10315
    %v10317 = vpop.f32.mrf.mxu0
    %10318 = vdwg.mxu0
    %10319 = vmatpush.bf16.msra.mxu0 %v6641
    %10320 = vmatpush.bf16.msra.mxu0 %v6634
    %10321 = vmatpush.bf16.msra.mxu0 %v6627
    %10322 = vmatpush.bf16.msra.mxu0 %v6620
    %10323 = vmatpush.bf16.msra.mxu0 %v6613
    %10324 = vmatpush.bf16.msra.mxu0 %v6606
    %10325 = vmatpush.bf16.msra.mxu0 %v6599
    %10326 = vmatpush.bf16.msra.mxu0 %v6592
    %10327 = vmatmul.bf16.gmra.mxu0 %v1659
    %v10328 = vpop.f32.mrf.mxu0
    %v10329 = vadd.f32 %v10316, %v10328
    %v10330 = vpop.f32.mrf.mxu0
    %10331 = vdwg.mxu0
    %10332 = vmatpush.bf16.msra.mxu0 %v6697
    %10333 = vmatpush.bf16.msra.mxu0 %v6690
    %10334 = vmatpush.bf16.msra.mxu0 %v6683
    %10335 = vmatpush.bf16.msra.mxu0 %v6676
    %10336 = vmatpush.bf16.msra.mxu0 %v6669
    %10337 = vmatpush.bf16.msra.mxu0 %v6662
    %10338 = vmatpush.bf16.msra.mxu0 %v6655
    %10339 = vmatpush.bf16.msra.mxu0 %v6648
    %10340 = vmatmul.bf16.gmra.mxu0 %v1660
    %v10341 = vpop.f32.mrf.mxu0
    %v10342 = vadd.f32 %v10329, %v10341
    %v10343 = vpop.f32.mrf.mxu0
    %10344 = vdwg.mxu0
    %10345 = vmatpush.bf16.msra.mxu0 %v6753
    %10346 = vmatpush.bf16.msra.mxu0 %v6746
    %10347 = vmatpush.bf16.msra.mxu0 %v6739
    %10348 = vmatpush.bf16.msra.mxu0 %v6732
    %10349 = vmatpush.bf16.msra.mxu0 %v6725
    %10350 = vmatpush.bf16.msra.mxu0 %v6718
    %10351 = vmatpush.bf16.msra.mxu0 %v6711
    %10352 = vmatpush.bf16.msra.mxu0 %v6704
    %10353 = vmatmul.bf16.gmra.mxu0 %v1661
    %v10354 = vpop.f32.mrf.mxu0
    %v10355 = vadd.f32 %v10342, %v10354
    %v10356 = vpop.f32.mrf.mxu0
    %10357 = vdwg.mxu0
    %10358 = vmatpush.bf16.msra.mxu0 %v6809
    %10359 = vmatpush.bf16.msra.mxu0 %v6802
    %10360 = vmatpush.bf16.msra.mxu0 %v6795
    %10361 = vmatpush.bf16.msra.mxu0 %v6788
    %10362 = vmatpush.bf16.msra.mxu0 %v6781
    %10363 = vmatpush.bf16.msra.mxu0 %v6774
    %10364 = vmatpush.bf16.msra.mxu0 %v6767
    %10365 = vmatpush.bf16.msra.mxu0 %v6760
    %10366 = vmatmul.bf16.gmra.mxu0 %v1662
    %v10367 = vpop.f32.mrf.mxu0
    %v10368 = vadd.f32 %v10355, %v10367
    %v10369 = vpop.f32.mrf.mxu0
    %10370 = vdwg.mxu0
    %10371 = vmatpush.bf16.msra.mxu0 %v6865
    %10372 = vmatpush.bf16.msra.mxu0 %v6858
    %10373 = vmatpush.bf16.msra.mxu0 %v6851
    %10374 = vmatpush.bf16.msra.mxu0 %v6844
    %10375 = vmatpush.bf16.msra.mxu0 %v6837
    %10376 = vmatpush.bf16.msra.mxu0 %v6830
    %10377 = vmatpush.bf16.msra.mxu0 %v6823
    %10378 = vmatpush.bf16.msra.mxu0 %v6816
    %10379 = vmatmul.bf16.gmra.mxu0 %v1663
    %v10380 = vpop.f32.mrf.mxu0
    %v10381 = vadd.f32 %v10368, %v10380
    %v10382 = vpop.f32.mrf.mxu0
    %10383 = vdwg.mxu0
    %10384 = vmatpush.bf16.msra.mxu0 %v6921
    %10385 = vmatpush.bf16.msra.mxu0 %v6914
    %10386 = vmatpush.bf16.msra.mxu0 %v6907
    %10387 = vmatpush.bf16.msra.mxu0 %v6900
    %10388 = vmatpush.bf16.msra.mxu0 %v6893
    %10389 = vmatpush.bf16.msra.mxu0 %v6886
    %10390 = vmatpush.bf16.msra.mxu0 %v6879
    %10391 = vmatpush.bf16.msra.mxu0 %v6872
    %10392 = vmatmul.bf16.gmra.mxu0 %v1664
    %v10393 = vpop.f32.mrf.mxu0
    %v10394 = vadd.f32 %v10381, %v10393
    %v10395 = vpop.f32.mrf.mxu0
    %10396 = vdwg.mxu0
    %10397 = vmatpush.bf16.msra.mxu0 %v6977
    %10398 = vmatpush.bf16.msra.mxu0 %v6970
    %10399 = vmatpush.bf16.msra.mxu0 %v6963
    %10400 = vmatpush.bf16.msra.mxu0 %v6956
    %10401 = vmatpush.bf16.msra.mxu0 %v6949
    %10402 = vmatpush.bf16.msra.mxu0 %v6942
    %10403 = vmatpush.bf16.msra.mxu0 %v6935
    %10404 = vmatpush.bf16.msra.mxu0 %v6928
    %10405 = vmatmul.bf16.gmra.mxu0 %v1665
    %v10406 = vpop.f32.mrf.mxu0
    %v10407 = vadd.f32 %v10394, %v10406
    %v10408 = vpop.f32.mrf.mxu0
    %10409 = vdwg.mxu0
    %10410 = vmatpush.bf16.msra.mxu0 %v7033
    %10411 = vmatpush.bf16.msra.mxu0 %v7026
    %10412 = vmatpush.bf16.msra.mxu0 %v7019
    %10413 = vmatpush.bf16.msra.mxu0 %v7012
    %10414 = vmatpush.bf16.msra.mxu0 %v7005
    %10415 = vmatpush.bf16.msra.mxu0 %v6998
    %10416 = vmatpush.bf16.msra.mxu0 %v6991
    %10417 = vmatpush.bf16.msra.mxu0 %v6984
    %10418 = vmatmul.bf16.gmra.mxu0 %v1666
    %v10419 = vpop.f32.mrf.mxu0
    %v10420 = vadd.f32 %v10407, %v10419
    %v10421 = vpop.f32.mrf.mxu0
    %10422 = vdwg.mxu0
    %10423 = vmatpush.bf16.msra.mxu0 %v7089
    %10424 = vmatpush.bf16.msra.mxu0 %v7082
    %10425 = vmatpush.bf16.msra.mxu0 %v7075
    %10426 = vmatpush.bf16.msra.mxu0 %v7068
    %10427 = vmatpush.bf16.msra.mxu0 %v7061
    %10428 = vmatpush.bf16.msra.mxu0 %v7054
    %10429 = vmatpush.bf16.msra.mxu0 %v7047
    %10430 = vmatpush.bf16.msra.mxu0 %v7040
    %10431 = vmatmul.bf16.gmra.mxu0 %v1667
    %v10432 = vpop.f32.mrf.mxu0
    %v10433 = vadd.f32 %v10420, %v10432
    %v10434 = vpop.f32.mrf.mxu0
    %10435 = vdwg.mxu0
    %10436 = vmatpush.bf16.msra.mxu0 %v7145
    %10437 = vmatpush.bf16.msra.mxu0 %v7138
    %10438 = vmatpush.bf16.msra.mxu0 %v7131
    %10439 = vmatpush.bf16.msra.mxu0 %v7124
    %10440 = vmatpush.bf16.msra.mxu0 %v7117
    %10441 = vmatpush.bf16.msra.mxu0 %v7110
    %10442 = vmatpush.bf16.msra.mxu0 %v7103
    %10443 = vmatpush.bf16.msra.mxu0 %v7096
    %10444 = vmatmul.bf16.gmra.mxu0 %v1668
    %v10445 = vpop.f32.mrf.mxu0
    %v10446 = vadd.f32 %v10433, %v10445
    %v10447 = vpop.f32.mrf.mxu0
    %10448 = vdwg.mxu0
    %10449 = vmatpush.bf16.msra.mxu0 %v7201
    %10450 = vmatpush.bf16.msra.mxu0 %v7194
    %10451 = vmatpush.bf16.msra.mxu0 %v7187
    %10452 = vmatpush.bf16.msra.mxu0 %v7180
    %10453 = vmatpush.bf16.msra.mxu0 %v7173
    %10454 = vmatpush.bf16.msra.mxu0 %v7166
    %10455 = vmatpush.bf16.msra.mxu0 %v7159
    %10456 = vmatpush.bf16.msra.mxu0 %v7152
    %10457 = vmatmul.bf16.gmra.mxu0 %v1669
    %v10458 = vpop.f32.mrf.mxu0
    %v10459 = vadd.f32 %v10446, %v10458
    %v10460 = vpop.f32.mrf.mxu0
    %10461 = vdwg.mxu0
    %10462 = vmatpush.bf16.msra.mxu0 %v7257
    %10463 = vmatpush.bf16.msra.mxu0 %v7250
    %10464 = vmatpush.bf16.msra.mxu0 %v7243
    %10465 = vmatpush.bf16.msra.mxu0 %v7236
    %10466 = vmatpush.bf16.msra.mxu0 %v7229
    %10467 = vmatpush.bf16.msra.mxu0 %v7222
    %10468 = vmatpush.bf16.msra.mxu0 %v7215
    %10469 = vmatpush.bf16.msra.mxu0 %v7208
    %10470 = vmatmul.bf16.gmra.mxu0 %v1670
    %v10471 = vpop.f32.mrf.mxu0
    %v10472 = vadd.f32 %v10459, %v10471
    %v10473 = vpop.f32.mrf.mxu0
    %10474 = vdwg.mxu0
    %10475 = vmatpush.bf16.msra.mxu0 %v5970
    %10476 = vmatpush.bf16.msra.mxu0 %v5963
    %10477 = vmatpush.bf16.msra.mxu0 %v5956
    %10478 = vmatpush.bf16.msra.mxu0 %v5949
    %10479 = vmatpush.bf16.msra.mxu0 %v5942
    %10480 = vmatpush.bf16.msra.mxu0 %v5935
    %10481 = vmatpush.bf16.msra.mxu0 %v5928
    %10482 = vmatpush.bf16.msra.mxu0 %v5921
    %10483 = vmatmul.bf16.gmra.mxu0 %v1647
    %v10484 = vpop.f32.mrf.mxu0
    %v10485 = vadd.f32 %v1683, %v10484
    %v10486 = vpop.f32.mrf.mxu0
    %10487 = vdwg.mxu0
    %10488 = vmatpush.bf16.msra.mxu0 %v6026
    %10489 = vmatpush.bf16.msra.mxu0 %v6019
    %10490 = vmatpush.bf16.msra.mxu0 %v6012
    %10491 = vmatpush.bf16.msra.mxu0 %v6005
    %10492 = vmatpush.bf16.msra.mxu0 %v5998
    %10493 = vmatpush.bf16.msra.mxu0 %v5991
    %10494 = vmatpush.bf16.msra.mxu0 %v5984
    %10495 = vmatpush.bf16.msra.mxu0 %v5977
    %10496 = vmatmul.bf16.gmra.mxu0 %v1648
    %v10497 = vpop.f32.mrf.mxu0
    %v10498 = vadd.f32 %v10485, %v10497
    %v10499 = vpop.f32.mrf.mxu0
    %10500 = vdwg.mxu0
    %10501 = vmatpush.bf16.msra.mxu0 %v6082
    %10502 = vmatpush.bf16.msra.mxu0 %v6075
    %10503 = vmatpush.bf16.msra.mxu0 %v6068
    %10504 = vmatpush.bf16.msra.mxu0 %v6061
    %10505 = vmatpush.bf16.msra.mxu0 %v6054
    %10506 = vmatpush.bf16.msra.mxu0 %v6047
    %10507 = vmatpush.bf16.msra.mxu0 %v6040
    %10508 = vmatpush.bf16.msra.mxu0 %v6033
    %10509 = vmatmul.bf16.gmra.mxu0 %v1649
    %v10510 = vpop.f32.mrf.mxu0
    %v10511 = vadd.f32 %v10498, %v10510
    %v10512 = vpop.f32.mrf.mxu0
    %10513 = vdwg.mxu0
    %10514 = vmatpush.bf16.msra.mxu0 %v6138
    %10515 = vmatpush.bf16.msra.mxu0 %v6131
    %10516 = vmatpush.bf16.msra.mxu0 %v6124
    %10517 = vmatpush.bf16.msra.mxu0 %v6117
    %10518 = vmatpush.bf16.msra.mxu0 %v6110
    %10519 = vmatpush.bf16.msra.mxu0 %v6103
    %10520 = vmatpush.bf16.msra.mxu0 %v6096
    %10521 = vmatpush.bf16.msra.mxu0 %v6089
    %10522 = vmatmul.bf16.gmra.mxu0 %v1650
    %v10523 = vpop.f32.mrf.mxu0
    %v10524 = vadd.f32 %v10511, %v10523
    %v10525 = vpop.f32.mrf.mxu0
    %10526 = vdwg.mxu0
    %10527 = vmatpush.bf16.msra.mxu0 %v6194
    %10528 = vmatpush.bf16.msra.mxu0 %v6187
    %10529 = vmatpush.bf16.msra.mxu0 %v6180
    %10530 = vmatpush.bf16.msra.mxu0 %v6173
    %10531 = vmatpush.bf16.msra.mxu0 %v6166
    %10532 = vmatpush.bf16.msra.mxu0 %v6159
    %10533 = vmatpush.bf16.msra.mxu0 %v6152
    %10534 = vmatpush.bf16.msra.mxu0 %v6145
    %10535 = vmatmul.bf16.gmra.mxu0 %v1651
    %v10536 = vpop.f32.mrf.mxu0
    %v10537 = vadd.f32 %v10524, %v10536
    %v10538 = vpop.f32.mrf.mxu0
    %10539 = vdwg.mxu0
    %10540 = vmatpush.bf16.msra.mxu0 %v6250
    %10541 = vmatpush.bf16.msra.mxu0 %v6243
    %10542 = vmatpush.bf16.msra.mxu0 %v6236
    %10543 = vmatpush.bf16.msra.mxu0 %v6229
    %10544 = vmatpush.bf16.msra.mxu0 %v6222
    %10545 = vmatpush.bf16.msra.mxu0 %v6215
    %10546 = vmatpush.bf16.msra.mxu0 %v6208
    %10547 = vmatpush.bf16.msra.mxu0 %v6201
    %10548 = vmatmul.bf16.gmra.mxu0 %v1652
    %v10549 = vpop.f32.mrf.mxu0
    %v10550 = vadd.f32 %v10537, %v10549
    %v10551 = vpop.f32.mrf.mxu0
    %10552 = vdwg.mxu0
    %10553 = vmatpush.bf16.msra.mxu0 %v6306
    %10554 = vmatpush.bf16.msra.mxu0 %v6299
    %10555 = vmatpush.bf16.msra.mxu0 %v6292
    %10556 = vmatpush.bf16.msra.mxu0 %v6285
    %10557 = vmatpush.bf16.msra.mxu0 %v6278
    %10558 = vmatpush.bf16.msra.mxu0 %v6271
    %10559 = vmatpush.bf16.msra.mxu0 %v6264
    %10560 = vmatpush.bf16.msra.mxu0 %v6257
    %10561 = vmatmul.bf16.gmra.mxu0 %v1653
    %v10562 = vpop.f32.mrf.mxu0
    %v10563 = vadd.f32 %v10550, %v10562
    %v10564 = vpop.f32.mrf.mxu0
    %10565 = vdwg.mxu0
    %10566 = vmatpush.bf16.msra.mxu0 %v6362
    %10567 = vmatpush.bf16.msra.mxu0 %v6355
    %10568 = vmatpush.bf16.msra.mxu0 %v6348
    %10569 = vmatpush.bf16.msra.mxu0 %v6341
    %10570 = vmatpush.bf16.msra.mxu0 %v6334
    %10571 = vmatpush.bf16.msra.mxu0 %v6327
    %10572 = vmatpush.bf16.msra.mxu0 %v6320
    %10573 = vmatpush.bf16.msra.mxu0 %v6313
    %10574 = vmatmul.bf16.gmra.mxu0 %v1654
    %v10575 = vpop.f32.mrf.mxu0
    %v10576 = vadd.f32 %v10563, %v10575
    %v10577 = vpop.f32.mrf.mxu0
    %10578 = vdwg.mxu0
    %10579 = vmatpush.bf16.msra.mxu0 %v6418
    %10580 = vmatpush.bf16.msra.mxu0 %v6411
    %10581 = vmatpush.bf16.msra.mxu0 %v6404
    %10582 = vmatpush.bf16.msra.mxu0 %v6397
    %10583 = vmatpush.bf16.msra.mxu0 %v6390
    %10584 = vmatpush.bf16.msra.mxu0 %v6383
    %10585 = vmatpush.bf16.msra.mxu0 %v6376
    %10586 = vmatpush.bf16.msra.mxu0 %v6369
    %10587 = vmatmul.bf16.gmra.mxu0 %v1655
    %v10588 = vpop.f32.mrf.mxu0
    %v10589 = vadd.f32 %v10576, %v10588
    %v10590 = vpop.f32.mrf.mxu0
    %10591 = vdwg.mxu0
    %10592 = vmatpush.bf16.msra.mxu0 %v6474
    %10593 = vmatpush.bf16.msra.mxu0 %v6467
    %10594 = vmatpush.bf16.msra.mxu0 %v6460
    %10595 = vmatpush.bf16.msra.mxu0 %v6453
    %10596 = vmatpush.bf16.msra.mxu0 %v6446
    %10597 = vmatpush.bf16.msra.mxu0 %v6439
    %10598 = vmatpush.bf16.msra.mxu0 %v6432
    %10599 = vmatpush.bf16.msra.mxu0 %v6425
    %10600 = vmatmul.bf16.gmra.mxu0 %v1656
    %v10601 = vpop.f32.mrf.mxu0
    %v10602 = vadd.f32 %v10589, %v10601
    %v10603 = vpop.f32.mrf.mxu0
    %10604 = vdwg.mxu0
    %10605 = vmatpush.bf16.msra.mxu0 %v6530
    %10606 = vmatpush.bf16.msra.mxu0 %v6523
    %10607 = vmatpush.bf16.msra.mxu0 %v6516
    %10608 = vmatpush.bf16.msra.mxu0 %v6509
    %10609 = vmatpush.bf16.msra.mxu0 %v6502
    %10610 = vmatpush.bf16.msra.mxu0 %v6495
    %10611 = vmatpush.bf16.msra.mxu0 %v6488
    %10612 = vmatpush.bf16.msra.mxu0 %v6481
    %10613 = vmatmul.bf16.gmra.mxu0 %v1657
    %v10614 = vpop.f32.mrf.mxu0
    %v10615 = vadd.f32 %v10602, %v10614
    %v10616 = vpop.f32.mrf.mxu0
    %10617 = vdwg.mxu0
    %10618 = vmatpush.bf16.msra.mxu0 %v6586
    %10619 = vmatpush.bf16.msra.mxu0 %v6579
    %10620 = vmatpush.bf16.msra.mxu0 %v6572
    %10621 = vmatpush.bf16.msra.mxu0 %v6565
    %10622 = vmatpush.bf16.msra.mxu0 %v6558
    %10623 = vmatpush.bf16.msra.mxu0 %v6551
    %10624 = vmatpush.bf16.msra.mxu0 %v6544
    %10625 = vmatpush.bf16.msra.mxu0 %v6537
    %10626 = vmatmul.bf16.gmra.mxu0 %v1658
    %v10627 = vpop.f32.mrf.mxu0
    %v10628 = vadd.f32 %v10615, %v10627
    %v10629 = vpop.f32.mrf.mxu0
    %10630 = vdwg.mxu0
    %10631 = vmatpush.bf16.msra.mxu0 %v6642
    %10632 = vmatpush.bf16.msra.mxu0 %v6635
    %10633 = vmatpush.bf16.msra.mxu0 %v6628
    %10634 = vmatpush.bf16.msra.mxu0 %v6621
    %10635 = vmatpush.bf16.msra.mxu0 %v6614
    %10636 = vmatpush.bf16.msra.mxu0 %v6607
    %10637 = vmatpush.bf16.msra.mxu0 %v6600
    %10638 = vmatpush.bf16.msra.mxu0 %v6593
    %10639 = vmatmul.bf16.gmra.mxu0 %v1659
    %v10640 = vpop.f32.mrf.mxu0
    %v10641 = vadd.f32 %v10628, %v10640
    %v10642 = vpop.f32.mrf.mxu0
    %10643 = vdwg.mxu0
    %10644 = vmatpush.bf16.msra.mxu0 %v6698
    %10645 = vmatpush.bf16.msra.mxu0 %v6691
    %10646 = vmatpush.bf16.msra.mxu0 %v6684
    %10647 = vmatpush.bf16.msra.mxu0 %v6677
    %10648 = vmatpush.bf16.msra.mxu0 %v6670
    %10649 = vmatpush.bf16.msra.mxu0 %v6663
    %10650 = vmatpush.bf16.msra.mxu0 %v6656
    %10651 = vmatpush.bf16.msra.mxu0 %v6649
    %10652 = vmatmul.bf16.gmra.mxu0 %v1660
    %v10653 = vpop.f32.mrf.mxu0
    %v10654 = vadd.f32 %v10641, %v10653
    %v10655 = vpop.f32.mrf.mxu0
    %10656 = vdwg.mxu0
    %10657 = vmatpush.bf16.msra.mxu0 %v6754
    %10658 = vmatpush.bf16.msra.mxu0 %v6747
    %10659 = vmatpush.bf16.msra.mxu0 %v6740
    %10660 = vmatpush.bf16.msra.mxu0 %v6733
    %10661 = vmatpush.bf16.msra.mxu0 %v6726
    %10662 = vmatpush.bf16.msra.mxu0 %v6719
    %10663 = vmatpush.bf16.msra.mxu0 %v6712
    %10664 = vmatpush.bf16.msra.mxu0 %v6705
    %10665 = vmatmul.bf16.gmra.mxu0 %v1661
    %v10666 = vpop.f32.mrf.mxu0
    %v10667 = vadd.f32 %v10654, %v10666
    %v10668 = vpop.f32.mrf.mxu0
    %10669 = vdwg.mxu0
    %10670 = vmatpush.bf16.msra.mxu0 %v6810
    %10671 = vmatpush.bf16.msra.mxu0 %v6803
    %10672 = vmatpush.bf16.msra.mxu0 %v6796
    %10673 = vmatpush.bf16.msra.mxu0 %v6789
    %10674 = vmatpush.bf16.msra.mxu0 %v6782
    %10675 = vmatpush.bf16.msra.mxu0 %v6775
    %10676 = vmatpush.bf16.msra.mxu0 %v6768
    %10677 = vmatpush.bf16.msra.mxu0 %v6761
    %10678 = vmatmul.bf16.gmra.mxu0 %v1662
    %v10679 = vpop.f32.mrf.mxu0
    %v10680 = vadd.f32 %v10667, %v10679
    %v10681 = vpop.f32.mrf.mxu0
    %10682 = vdwg.mxu0
    %10683 = vmatpush.bf16.msra.mxu0 %v6866
    %10684 = vmatpush.bf16.msra.mxu0 %v6859
    %10685 = vmatpush.bf16.msra.mxu0 %v6852
    %10686 = vmatpush.bf16.msra.mxu0 %v6845
    %10687 = vmatpush.bf16.msra.mxu0 %v6838
    %10688 = vmatpush.bf16.msra.mxu0 %v6831
    %10689 = vmatpush.bf16.msra.mxu0 %v6824
    %10690 = vmatpush.bf16.msra.mxu0 %v6817
    %10691 = vmatmul.bf16.gmra.mxu0 %v1663
    %v10692 = vpop.f32.mrf.mxu0
    %v10693 = vadd.f32 %v10680, %v10692
    %v10694 = vpop.f32.mrf.mxu0
    %10695 = vdwg.mxu0
    %10696 = vmatpush.bf16.msra.mxu0 %v6922
    %10697 = vmatpush.bf16.msra.mxu0 %v6915
    %10698 = vmatpush.bf16.msra.mxu0 %v6908
    %10699 = vmatpush.bf16.msra.mxu0 %v6901
    %10700 = vmatpush.bf16.msra.mxu0 %v6894
    %10701 = vmatpush.bf16.msra.mxu0 %v6887
    %10702 = vmatpush.bf16.msra.mxu0 %v6880
    %10703 = vmatpush.bf16.msra.mxu0 %v6873
    %10704 = vmatmul.bf16.gmra.mxu0 %v1664
    %v10705 = vpop.f32.mrf.mxu0
    %v10706 = vadd.f32 %v10693, %v10705
    %v10707 = vpop.f32.mrf.mxu0
    %10708 = vdwg.mxu0
    %10709 = vmatpush.bf16.msra.mxu0 %v6978
    %10710 = vmatpush.bf16.msra.mxu0 %v6971
    %10711 = vmatpush.bf16.msra.mxu0 %v6964
    %10712 = vmatpush.bf16.msra.mxu0 %v6957
    %10713 = vmatpush.bf16.msra.mxu0 %v6950
    %10714 = vmatpush.bf16.msra.mxu0 %v6943
    %10715 = vmatpush.bf16.msra.mxu0 %v6936
    %10716 = vmatpush.bf16.msra.mxu0 %v6929
    %10717 = vmatmul.bf16.gmra.mxu0 %v1665
    %v10718 = vpop.f32.mrf.mxu0
    %v10719 = vadd.f32 %v10706, %v10718
    %v10720 = vpop.f32.mrf.mxu0
    %10721 = vdwg.mxu0
    %10722 = vmatpush.bf16.msra.mxu0 %v7034
    %10723 = vmatpush.bf16.msra.mxu0 %v7027
    %10724 = vmatpush.bf16.msra.mxu0 %v7020
    %10725 = vmatpush.bf16.msra.mxu0 %v7013
    %10726 = vmatpush.bf16.msra.mxu0 %v7006
    %10727 = vmatpush.bf16.msra.mxu0 %v6999
    %10728 = vmatpush.bf16.msra.mxu0 %v6992
    %10729 = vmatpush.bf16.msra.mxu0 %v6985
    %10730 = vmatmul.bf16.gmra.mxu0 %v1666
    %v10731 = vpop.f32.mrf.mxu0
    %v10732 = vadd.f32 %v10719, %v10731
    %v10733 = vpop.f32.mrf.mxu0
    %10734 = vdwg.mxu0
    %10735 = vmatpush.bf16.msra.mxu0 %v7090
    %10736 = vmatpush.bf16.msra.mxu0 %v7083
    %10737 = vmatpush.bf16.msra.mxu0 %v7076
    %10738 = vmatpush.bf16.msra.mxu0 %v7069
    %10739 = vmatpush.bf16.msra.mxu0 %v7062
    %10740 = vmatpush.bf16.msra.mxu0 %v7055
    %10741 = vmatpush.bf16.msra.mxu0 %v7048
    %10742 = vmatpush.bf16.msra.mxu0 %v7041
    %10743 = vmatmul.bf16.gmra.mxu0 %v1667
    %v10744 = vpop.f32.mrf.mxu0
    %v10745 = vadd.f32 %v10732, %v10744
    %v10746 = vpop.f32.mrf.mxu0
    %10747 = vdwg.mxu0
    %10748 = vmatpush.bf16.msra.mxu0 %v7146
    %10749 = vmatpush.bf16.msra.mxu0 %v7139
    %10750 = vmatpush.bf16.msra.mxu0 %v7132
    %10751 = vmatpush.bf16.msra.mxu0 %v7125
    %10752 = vmatpush.bf16.msra.mxu0 %v7118
    %10753 = vmatpush.bf16.msra.mxu0 %v7111
    %10754 = vmatpush.bf16.msra.mxu0 %v7104
    %10755 = vmatpush.bf16.msra.mxu0 %v7097
    %10756 = vmatmul.bf16.gmra.mxu0 %v1668
    %v10757 = vpop.f32.mrf.mxu0
    %v10758 = vadd.f32 %v10745, %v10757
    %v10759 = vpop.f32.mrf.mxu0
    %10760 = vdwg.mxu0
    %10761 = vmatpush.bf16.msra.mxu0 %v7202
    %10762 = vmatpush.bf16.msra.mxu0 %v7195
    %10763 = vmatpush.bf16.msra.mxu0 %v7188
    %10764 = vmatpush.bf16.msra.mxu0 %v7181
    %10765 = vmatpush.bf16.msra.mxu0 %v7174
    %10766 = vmatpush.bf16.msra.mxu0 %v7167
    %10767 = vmatpush.bf16.msra.mxu0 %v7160
    %10768 = vmatpush.bf16.msra.mxu0 %v7153
    %10769 = vmatmul.bf16.gmra.mxu0 %v1669
    %v10770 = vpop.f32.mrf.mxu0
    %v10771 = vadd.f32 %v10758, %v10770
    %v10772 = vpop.f32.mrf.mxu0
    %10773 = vdwg.mxu0
    %10774 = vmatpush.bf16.msra.mxu0 %v7258
    %10775 = vmatpush.bf16.msra.mxu0 %v7251
    %10776 = vmatpush.bf16.msra.mxu0 %v7244
    %10777 = vmatpush.bf16.msra.mxu0 %v7237
    %10778 = vmatpush.bf16.msra.mxu0 %v7230
    %10779 = vmatpush.bf16.msra.mxu0 %v7223
    %10780 = vmatpush.bf16.msra.mxu0 %v7216
    %10781 = vmatpush.bf16.msra.mxu0 %v7209
    %10782 = vmatmul.bf16.gmra.mxu0 %v1670
    %v10783 = vpop.f32.mrf.mxu0
    %v10784 = vadd.f32 %v10771, %v10783
    %v10785 = vpop.f32.mrf.mxu0
    %10786 = vdwg.mxu0
    %v10794 = vrot.slane %v9224, 6
    %v10795 = vrot.slane %v9536, 4
    %v10796 = vrot.slane %v9848, 2
    %v10797 = vrot.slane %v10472, 6
    %v10798 = vrot.slane %v10784, 4
    %vm10799 = vcmask 1041408
    %v10800 = vsel %vm10799, %v8912, %v10794
    %vm10801 = vcmask 1045508
    %v10802 = vsel %vm10801, %v10795, %v10796
    %vm10803 = vcmask 1043456
    %v10804 = vsel %vm10803, %v10800, %v10802
    %v10805 = vsel %vm10799, %v10160, %v10797
    %v10806 = vsel %vm10803, %v10805, %v10798
    %10809 = vst [vmem:[%s3] sm:$0xff] %v10804
    %vm10810 = vcmask 1043458
    %vm10811 = vmor %vm10810, %vm10799
    %vm10812 = vcmask 128004
    %vm10813 = vmor %vm10812, %vm10811
    %10814 = vst.msk [vmem:[%s3 + $0x8] sm:$0x3f] %vm10813, %v10806
    // Predicated region
    $region22: #{_lambda_.1} parent=1 // pred_check
      _
    $region23: #{_lambda_.1} parent=1 // pred_check_branch
      %10816 = sbr.rel (0) target = $region25
    $region24: #{_lambda_.1} parent=1 // pred_region
      _
    $region25: #{_lambda_.1} parent=1 // pred_fallthru
      _
    // Predicated region
    $region26: #{_lambda_.1} parent=1 // pred_check
      _
    $region27: #{_lambda_.1} parent=1 // pred_check_branch
      %10818 = sbr.rel (0) target = $region29
    $region28: #{_lambda_.1} parent=1 // pred_region
      _
    $region29: #{_lambda_.1} parent=1 // pred_fallthru
      _
    %10819 = vsyncpa [#allocation3], 1
    %10820 = vsyncpa [#allocation5], 1

</llo_original>
